<compile_context>
chip_gen: v7x
topology: tpu7x:2x2x1
jax: 0.10.0
libtpu: 0.0.40
codegen_flags: <defaults>
</compile_context>

<pallas_src>
import functools
import math

import jax
import jax.numpy as jnp
from jax import lax
from jax.experimental import pallas as pl
from jax.experimental.pallas import tpu as pltpu

# Full-precision f32 matmuls in both kernel and reference so the tolerance check only
# reflects op-ordering noise.
jax.config.update("jax_default_matmul_precision", "highest")

# dot_general dimension_numbers (consume the PyTorch (out, in) weight layout directly,
# so no transposes are emitted inside the kernel).
_NT = (((1,), (1,)), ((), ()))   # (N, K) x (O, K) -> (N, O)
_NN = (((1,), (0,)), ((), ()))   # (N, K) x (K, M) -> (N, M)


def encoder1_kernel(x_ref, we_ref, be_ref, wqkv_ref, bqkv_ref, wo_ref, bo_ref,
                    o_ref, *, n_layers: int, num_heads: int, x_scale: float):
    """Entire Encoder1 forward; all weights/activations resident in VMEM.

    Inputs (all VMEM):
      x_ref    : (N, 2*x_dim)        pre-concatenated [x1, x2]
      we_ref   : (h, 2*x_dim)        embedding Linear weight (PyTorch layout)
      be_ref   : (1, h)              embedding bias
      wqkv_ref : (L, 3h, h)          stacked MHA in_proj weights
      bqkv_ref : (L, 1, 3h)          stacked MHA in_proj biases (lane-dense rows)
      wo_ref   : (L, h, h)           stacked MHA out_proj weights
      bo_ref   : (L, 1, h)           stacked MHA out_proj biases
    Output:
      o_ref    : (1, h)              row mean of the final activations
    """
    h_dim = we_ref.shape[0]
    head_dim = h_dim // num_heads
    scale = 1.0 / math.sqrt(head_dim)

    x = x_ref[...]
    if x_scale != 1.0:                                   # static Python branch
        x = x * x_scale

    # netA embedding: single matmul Linear(2*x_dim, h_dim) on the concatenated input.
    y = (lax.dot_general(x, we_ref[...], _NT, preferred_element_type=jnp.float32)
         + be_ref[...])                                  # (N, h)

    for layer in range(n_layers):                        # static unroll, n_layers small
        # --- QKV projection: ONE lane-dense matmul + ONE bias add -------------------
        qkv = (lax.dot_general(y, wqkv_ref[layer], _NT,
                               preferred_element_type=jnp.float32)
               + bqkv_ref[layer])                        # (N, 3h)
        q = qkv[:, :h_dim]                               # (N, h)  heads folded in lanes
        k = qkv[:, h_dim:2 * h_dim]
        v = qkv[:, 2 * h_dim:]

        # --- per-head scaled dot-product attention (inherently per-head matmuls) ----
        heads = []
        for hh in range(num_heads):                      # static loop, H small
            lo = hh * head_dim
            hi = lo + head_dim
            q_h = q[:, lo:hi]                            # (N, d)
            k_h = k[:, lo:hi]
            v_h = v[:, lo:hi]
            s = lax.dot_general(q_h, k_h, _NT,
                                preferred_element_type=jnp.float32) * scale   # (N, N)
            s = s - jnp.max(s, axis=-1, keepdims=True)
            p = jnp.exp(s)
            # exact reciprocal (EUP either way; avoids approx drift flagged in review)
            p = p * pl.reciprocal(jnp.sum(p, axis=-1, keepdims=True), approx=False)
            heads.append(lax.dot_general(p, v_h, _NN,
                                         preferred_element_type=jnp.float32))  # (N, d)

        # --- head merge (lane concat) + ONE out-projection matmul -------------------
        att = jnp.concatenate(heads, axis=-1)            # (N, h) lane-contiguous
        y = (lax.dot_general(att, wo_ref[layer], _NT,
                             preferred_element_type=jnp.float32)
             + bo_ref[layer])                            # (N, h)

    # Encoder1 epilogue: store ONLY the row mean; the .expand(N, y_dim) broadcast is
    # done outside the kernel (no redundant N-row masked stores / HBM writeback).
    o_ref[...] = jnp.mean(y, axis=0, keepdims=True)      # (1, h)


# ----------------------------------------------------------------------------
# Parameters (PyTorch layout) and one-time re-layout for the kernel
# ----------------------------------------------------------------------------
def init_params(key, x_dim, h_dim, n_layers):
    """Parameters in PyTorch convention (W: (out, in))."""
    params = {}
    k = key
    k, k1, k2 = jax.random.split(k, 3)
    bound = 1.0 / math.sqrt(2 * x_dim)               # Linear(2*x_dim, h_dim) default init
    params["embed_w"] = jax.random.uniform(k1, (h_dim, 2 * x_dim), jnp.float32, -bound, bound)
    params["embed_b"] = jax.random.uniform(k2, (h_dim,), jnp.float32, -bound, bound)
    params["layers"] = []
    for _ in range(n_layers):
        k, ka, kb, kc, kd = jax.random.split(k, 5)
        lim = math.sqrt(6.0 / (3 * h_dim + h_dim))   # xavier_uniform over (3h, h)
        wqkv = jax.random.uniform(ka, (3 * h_dim, h_dim), jnp.float32, -lim, lim)
        # PyTorch MHA zeroes these biases; use small random values so the bias paths
        # are actually exercised by the numerical check.
        bqkv = 0.02 * jax.random.normal(kb, (3 * h_dim,), jnp.float32)
        ob = 1.0 / math.sqrt(h_dim)
        wo = jax.random.uniform(kc, (h_dim, h_dim), jnp.float32, -ob, ob)
        bo = 0.02 * jax.random.normal(kd, (h_dim,), jnp.float32)
        params["layers"].append((wqkv, bqkv, wo, bo))
    return params


def prepare_params(params):
    """One-time re-layout of PyTorch weights into the kernel's stacked layout
    (done outside the kernel; in a real model this happens at weight-load time)."""
    h_dim = params["embed_w"].shape[0]
    wqkv = jnp.stack([l[0] for l in params["layers"]])   # (L, 3h, h)
    bqkv = jnp.stack([l[1] for l in params["layers"]])   # (L, 3h)
    wo = jnp.stack([l[2] for l in params["layers"]])     # (L, h, h)
    bo = jnp.stack([l[3] for l in params["layers"]])     # (L, h)
    L = wqkv.shape[0]
    return {
        "we": params["embed_w"],                          # (h, 2*x_dim)
        "be": params["embed_b"].reshape(1, h_dim),        # (1, h)
        "wqkv": wqkv,                                     # (L, 3h, h)
        "bqkv": bqkv.reshape(L, 1, 3 * h_dim),            # (L, 1, 3h) lane-dense rows
        "wo": wo,                                         # (L, h, h)
        "bo": bo.reshape(L, 1, h_dim),                    # (L, 1, h)
    }


def encoder1_forward(prepped, x1, x2, *, n_layers, num_heads, x_scale, y_dim):
    n = x1.shape[0]
    h_dim = prepped["we"].shape[0]
    # Encoder1 does y.mean(0).expand(N, y_dim): only valid when netA output dim == y_dim.
    assert y_dim == h_dim, "Encoder1 .expand(N, y_dim) requires netA output dim == y_dim"
    assert h_dim % num_heads == 0

    # Concatenate once outside the kernel (single embedding matmul, one fewer DMA).
    x = jnp.concatenate([x1, x2], axis=1)                 # (N, 2*x_dim)

    vmem = pl.BlockSpec(memory_space=pltpu.MemorySpace.VMEM)
    kernel = functools.partial(encoder1_kernel, n_layers=n_layers,
                               num_heads=num_heads, x_scale=float(x_scale))
    mean = pl.pallas_call(
        kernel,
        out_shape=jax.ShapeDtypeStruct((1, h_dim), jnp.float32),
        in_specs=[vmem] * 7,
        out_specs=vmem,
    )(x, prepped["we"], prepped["be"], prepped["wqkv"], prepped["bqkv"],
      prepped["wo"], prepped["bo"])

    # .expand(N, y_dim) done outside the kernel (free / fusable in XLA).
    return jnp.broadcast_to(mean, (n, y_dim))


# ----------------------------------------------------------------------------
# Pure-JAX reference (PyTorch layout) for a sanity check
# ----------------------------------------------------------------------------
def reference_forward(params, x1, x2, *, num_heads, x_scale, y_dim):
    if x_scale != 1:
        x1 = x1 * x_scale
        x2 = x2 * x_scale
    x = jnp.concatenate([x1, x2], axis=1)
    y = x @ params["embed_w"].T + params["embed_b"]
    _, h_dim = y.shape
    d = h_dim // num_heads
    for (wqkv, bqkv, wo, bo) in params["layers"]:
        qkv = y @ wqkv.T + bqkv
        q, k, v = qkv[:, :h_dim], qkv[:, h_dim:2 * h_dim], qkv[:, 2 * h_dim:]
        outs = []
        for hh in range(num_heads):
            sl = slice(hh * d, (hh + 1) * d)
            s = (q[:, sl] / math.sqrt(d)) @ k[:, sl].T
            p = jax.nn.softmax(s, axis=-1)
            outs.append(p @ v[:, sl])
        y = jnp.concatenate(outs, axis=-1) @ wo.T + bo
    y = jnp.mean(y, axis=0, keepdims=True)
    return jnp.broadcast_to(y, (x1.shape[0], y_dim))


if __name__ == "__main__":
    # Small shapes consistent with the module: x1, x2 (N, x_dim) -> output (N, y_dim).
    N, x_dim, h_dim, n_layers, num_heads = 8, 16, 32, 2, 4
    y_dim = h_dim          # required by Encoder1's .expand(N, y_dim)
    x_scale = 1.0

    key = jax.random.PRNGKey(0)
    kp, kx1, kx2 = jax.random.split(key, 3)
    params = init_params(kp, x_dim, h_dim, n_layers)
    prepped = prepare_params(params)
    x1 = jax.random.normal(kx1, (N, x_dim), jnp.float32)
    x2 = jax.random.normal(kx2, (N, x_dim), jnp.float32)

    out = encoder1_forward(prepped, x1, x2, n_layers=n_layers,
                           num_heads=num_heads, x_scale=x_scale, y_dim=y_dim)
    out = jax.block_until_ready(out)

    ref = reference_forward(params, x1, x2, num_heads=num_heads,
                            x_scale=x_scale, y_dim=y_dim)
    assert out.shape == (N, y_dim)
    assert jnp.allclose(out, ref, rtol=2e-3, atol=2e-3), "mismatch vs reference"

    print("KERNEL_OK")
</pallas_src>

<mosaic_0001>
module attributes {stable_mosaic.version = 11 : i64} {
  func.func @encoder1_kernel(%arg0: memref<8x32xf32, #tpu.memory_space<vmem>>, %arg1: memref<32x32xf32, #tpu.memory_space<vmem>>, %arg2: memref<1x32xf32, #tpu.memory_space<vmem>>, %arg3: memref<2x96x32xf32, #tpu.memory_space<vmem>>, %arg4: memref<2x1x96xf32, #tpu.memory_space<vmem>>, %arg5: memref<2x32x32xf32, #tpu.memory_space<vmem>>, %arg6: memref<2x1x32xf32, #tpu.memory_space<vmem>>, %arg7: memref<1x32xf32, #tpu.memory_space<vmem>>) attributes {dimension_semantics = [], scalar_prefetch = 0 : i64, scratch_operands = 0 : i64, tpu.core_type = #tpu.core_type<tc>} {
    %c0 = arith.constant 0 : index
    %c0_0 = arith.constant 0 : index
    %0 = vector.load %arg0[%c0, %c0_0] : memref<8x32xf32, #tpu.memory_space<vmem>>, vector<8x32xf32>
    %c0_1 = arith.constant 0 : index
    %c0_2 = arith.constant 0 : index
    %1 = vector.load %arg1[%c0_1, %c0_2] : memref<32x32xf32, #tpu.memory_space<vmem>>, vector<32x32xf32>
    %cst = arith.constant dense<0.000000e+00> : vector<8x32xf32>
    %2 = tpu.matmul %0, %1, %cst {dimension_numbers = #tpu.dot_dimension_numbers<[1], [1], [0], [0], [0, 0, 1, 0], [], []>, precision = #tpu.contract_precision<fp32>} : vector<8x32xf32>, vector<32x32xf32>, vector<8x32xf32> -> vector<8x32xf32>
    %c0_3 = arith.constant 0 : index
    %c0_4 = arith.constant 0 : index
    %3 = vector.load %arg2[%c0_3, %c0_4] : memref<1x32xf32, #tpu.memory_space<vmem>>, vector<1x32xf32>
    %4 = vector.broadcast %3 : vector<1x32xf32> to vector<8x32xf32>
    %5 = arith.addf %2, %4 : vector<8x32xf32>
    %c0_5 = arith.constant 0 : index
    %c0_6 = arith.constant 0 : index
    %c0_7 = arith.constant 0 : index
    %6 = vector.load %arg3[%c0_5, %c0_6, %c0_7] : memref<2x96x32xf32, #tpu.memory_space<vmem>>, vector<1x96x32xf32>
    %7 = vector.shape_cast %6 : vector<1x96x32xf32> to vector<96x32xf32>
    %cst_8 = arith.constant dense<0.000000e+00> : vector<8x96xf32>
    %8 = tpu.matmul %5, %7, %cst_8 {dimension_numbers = #tpu.dot_dimension_numbers<[1], [1], [0], [0], [0, 0, 1, 0], [], []>, precision = #tpu.contract_precision<fp32>} : vector<8x32xf32>, vector<96x32xf32>, vector<8x96xf32> -> vector<8x96xf32>
    %c0_9 = arith.constant 0 : index
    %c0_10 = arith.constant 0 : index
    %c0_11 = arith.constant 0 : index
    %9 = vector.load %arg4[%c0_9, %c0_10, %c0_11] : memref<2x1x96xf32, #tpu.memory_space<vmem>>, vector<1x1x96xf32>
    %10 = vector.shape_cast %9 : vector<1x1x96xf32> to vector<1x96xf32>
    %11 = vector.broadcast %10 : vector<1x96xf32> to vector<8x96xf32>
    %12 = arith.addf %8, %11 : vector<8x96xf32>
    %13 = vector.extract_strided_slice %12 {offsets = [0, 0], sizes = [8, 32], strides = [1, 1]} : vector<8x96xf32> to vector<8x32xf32>
    %14 = vector.extract_strided_slice %12 {offsets = [0, 32], sizes = [8, 32], strides = [1, 1]} : vector<8x96xf32> to vector<8x32xf32>
    %15 = vector.extract_strided_slice %12 {offsets = [0, 64], sizes = [8, 32], strides = [1, 1]} : vector<8x96xf32> to vector<8x32xf32>
    %16 = vector.extract_strided_slice %13 {offsets = [0, 0], sizes = [8, 8], strides = [1, 1]} : vector<8x32xf32> to vector<8x8xf32>
    %17 = vector.extract_strided_slice %14 {offsets = [0, 0], sizes = [8, 8], strides = [1, 1]} : vector<8x32xf32> to vector<8x8xf32>
    %18 = vector.extract_strided_slice %15 {offsets = [0, 0], sizes = [8, 8], strides = [1, 1]} : vector<8x32xf32> to vector<8x8xf32>
    %cst_12 = arith.constant dense<0.000000e+00> : vector<8x8xf32>
    %19 = tpu.matmul %16, %17, %cst_12 {dimension_numbers = #tpu.dot_dimension_numbers<[1], [1], [0], [0], [0, 0, 1, 0], [], []>, precision = #tpu.contract_precision<fp32>} : vector<8x8xf32>, vector<8x8xf32>, vector<8x8xf32> -> vector<8x8xf32>
    %cst_13 = arith.constant 0.353553385 : f32
    %20 = vector.broadcast %cst_13 : f32 to vector<8x8xf32>
    %21 = arith.mulf %19, %20 : vector<8x8xf32>
    %cst_14 = arith.constant dense<0xFF800000> : vector<8xf32>
    %22 = vector.multi_reduction <maximumf>, %21, %cst_14 [1] : vector<8x8xf32> to vector<8xf32>
    %23 = vector.shape_cast %22 : vector<8xf32> to vector<8x1xf32>
    %24 = vector.broadcast %23 : vector<8x1xf32> to vector<8x8xf32>
    %25 = arith.subf %21, %24 : vector<8x8xf32>
    %26 = math.exp %25 : vector<8x8xf32>
    %cst_15 = arith.constant dense<0.000000e+00> : vector<8xf32>
    %27 = vector.multi_reduction <add>, %26, %cst_15 [1] : vector<8x8xf32> to vector<8xf32>
    %28 = vector.shape_cast %27 : vector<8xf32> to vector<8x1xf32>
    %29 = tpu.reciprocal %28 : vector<8x1xf32> -> vector<8x1xf32>
    %30 = vector.broadcast %29 : vector<8x1xf32> to vector<8x8xf32>
    %31 = arith.mulf %26, %30 : vector<8x8xf32>
    %cst_16 = arith.constant dense<0.000000e+00> : vector<8x8xf32>
    %32 = tpu.matmul %31, %18, %cst_16 {dimension_numbers = #tpu.dot_dimension_numbers<[1], [0], [0], [1], [0, 0, 1, 1], [], []>, precision = #tpu.contract_precision<fp32>} : vector<8x8xf32>, vector<8x8xf32>, vector<8x8xf32> -> vector<8x8xf32>
    %33 = vector.extract_strided_slice %13 {offsets = [0, 8], sizes = [8, 8], strides = [1, 1]} : vector<8x32xf32> to vector<8x8xf32>
    %34 = vector.extract_strided_slice %14 {offsets = [0, 8], sizes = [8, 8], strides = [1, 1]} : vector<8x32xf32> to vector<8x8xf32>
    %35 = vector.extract_strided_slice %15 {offsets = [0, 8], sizes = [8, 8], strides = [1, 1]} : vector<8x32xf32> to vector<8x8xf32>
    %cst_17 = arith.constant dense<0.000000e+00> : vector<8x8xf32>
    %36 = tpu.matmul %33, %34, %cst_17 {dimension_numbers = #tpu.dot_dimension_numbers<[1], [1], [0], [0], [0, 0, 1, 0], [], []>, precision = #tpu.contract_precision<fp32>} : vector<8x8xf32>, vector<8x8xf32>, vector<8x8xf32> -> vector<8x8xf32>
    %cst_18 = arith.constant 0.353553385 : f32
    %37 = vector.broadcast %cst_18 : f32 to vector<8x8xf32>
    %38 = arith.mulf %36, %37 : vector<8x8xf32>
    %cst_19 = arith.constant dense<0xFF800000> : vector<8xf32>
    %39 = vector.multi_reduction <maximumf>, %38, %cst_19 [1] : vector<8x8xf32> to vector<8xf32>
    %40 = vector.shape_cast %39 : vector<8xf32> to vector<8x1xf32>
    %41 = vector.broadcast %40 : vector<8x1xf32> to vector<8x8xf32>
    %42 = arith.subf %38, %41 : vector<8x8xf32>
    %43 = math.exp %42 : vector<8x8xf32>
    %cst_20 = arith.constant dense<0.000000e+00> : vector<8xf32>
    %44 = vector.multi_reduction <add>, %43, %cst_20 [1] : vector<8x8xf32> to vector<8xf32>
    %45 = vector.shape_cast %44 : vector<8xf32> to vector<8x1xf32>
    %46 = tpu.reciprocal %45 : vector<8x1xf32> -> vector<8x1xf32>
    %47 = vector.broadcast %46 : vector<8x1xf32> to vector<8x8xf32>
    %48 = arith.mulf %43, %47 : vector<8x8xf32>
    %cst_21 = arith.constant dense<0.000000e+00> : vector<8x8xf32>
    %49 = tpu.matmul %48, %35, %cst_21 {dimension_numbers = #tpu.dot_dimension_numbers<[1], [0], [0], [1], [0, 0, 1, 1], [], []>, precision = #tpu.contract_precision<fp32>} : vector<8x8xf32>, vector<8x8xf32>, vector<8x8xf32> -> vector<8x8xf32>
    %50 = vector.extract_strided_slice %13 {offsets = [0, 16], sizes = [8, 8], strides = [1, 1]} : vector<8x32xf32> to vector<8x8xf32>
    %51 = vector.extract_strided_slice %14 {offsets = [0, 16], sizes = [8, 8], strides = [1, 1]} : vector<8x32xf32> to vector<8x8xf32>
    %52 = vector.extract_strided_slice %15 {offsets = [0, 16], sizes = [8, 8], strides = [1, 1]} : vector<8x32xf32> to vector<8x8xf32>
    %cst_22 = arith.constant dense<0.000000e+00> : vector<8x8xf32>
    %53 = tpu.matmul %50, %51, %cst_22 {dimension_numbers = #tpu.dot_dimension_numbers<[1], [1], [0], [0], [0, 0, 1, 0], [], []>, precision = #tpu.contract_precision<fp32>} : vector<8x8xf32>, vector<8x8xf32>, vector<8x8xf32> -> vector<8x8xf32>
    %cst_23 = arith.constant 0.353553385 : f32
    %54 = vector.broadcast %cst_23 : f32 to vector<8x8xf32>
    %55 = arith.mulf %53, %54 : vector<8x8xf32>
    %cst_24 = arith.constant dense<0xFF800000> : vector<8xf32>
    %56 = vector.multi_reduction <maximumf>, %55, %cst_24 [1] : vector<8x8xf32> to vector<8xf32>
    %57 = vector.shape_cast %56 : vector<8xf32> to vector<8x1xf32>
    %58 = vector.broadcast %57 : vector<8x1xf32> to vector<8x8xf32>
    %59 = arith.subf %55, %58 : vector<8x8xf32>
    %60 = math.exp %59 : vector<8x8xf32>
    %cst_25 = arith.constant dense<0.000000e+00> : vector<8xf32>
    %61 = vector.multi_reduction <add>, %60, %cst_25 [1] : vector<8x8xf32> to vector<8xf32>
    %62 = vector.shape_cast %61 : vector<8xf32> to vector<8x1xf32>
    %63 = tpu.reciprocal %62 : vector<8x1xf32> -> vector<8x1xf32>
    %64 = vector.broadcast %63 : vector<8x1xf32> to vector<8x8xf32>
    %65 = arith.mulf %60, %64 : vector<8x8xf32>
    %cst_26 = arith.constant dense<0.000000e+00> : vector<8x8xf32>
    %66 = tpu.matmul %65, %52, %cst_26 {dimension_numbers = #tpu.dot_dimension_numbers<[1], [0], [0], [1], [0, 0, 1, 1], [], []>, precision = #tpu.contract_precision<fp32>} : vector<8x8xf32>, vector<8x8xf32>, vector<8x8xf32> -> vector<8x8xf32>
    %67 = vector.extract_strided_slice %13 {offsets = [0, 24], sizes = [8, 8], strides = [1, 1]} : vector<8x32xf32> to vector<8x8xf32>
    %68 = vector.extract_strided_slice %14 {offsets = [0, 24], sizes = [8, 8], strides = [1, 1]} : vector<8x32xf32> to vector<8x8xf32>
    %69 = vector.extract_strided_slice %15 {offsets = [0, 24], sizes = [8, 8], strides = [1, 1]} : vector<8x32xf32> to vector<8x8xf32>
    %cst_27 = arith.constant dense<0.000000e+00> : vector<8x8xf32>
    %70 = tpu.matmul %67, %68, %cst_27 {dimension_numbers = #tpu.dot_dimension_numbers<[1], [1], [0], [0], [0, 0, 1, 0], [], []>, precision = #tpu.contract_precision<fp32>} : vector<8x8xf32>, vector<8x8xf32>, vector<8x8xf32> -> vector<8x8xf32>
    %cst_28 = arith.constant 0.353553385 : f32
    %71 = vector.broadcast %cst_28 : f32 to vector<8x8xf32>
    %72 = arith.mulf %70, %71 : vector<8x8xf32>
    %cst_29 = arith.constant dense<0xFF800000> : vector<8xf32>
    %73 = vector.multi_reduction <maximumf>, %72, %cst_29 [1] : vector<8x8xf32> to vector<8xf32>
    %74 = vector.shape_cast %73 : vector<8xf32> to vector<8x1xf32>
    %75 = vector.broadcast %74 : vector<8x1xf32> to vector<8x8xf32>
    %76 = arith.subf %72, %75 : vector<8x8xf32>
    %77 = math.exp %76 : vector<8x8xf32>
    %cst_30 = arith.constant dense<0.000000e+00> : vector<8xf32>
    %78 = vector.multi_reduction <add>, %77, %cst_30 [1] : vector<8x8xf32> to vector<8xf32>
    %79 = vector.shape_cast %78 : vector<8xf32> to vector<8x1xf32>
    %80 = tpu.reciprocal %79 : vector<8x1xf32> -> vector<8x1xf32>
    %81 = vector.broadcast %80 : vector<8x1xf32> to vector<8x8xf32>
    %82 = arith.mulf %77, %81 : vector<8x8xf32>
    %cst_31 = arith.constant dense<0.000000e+00> : vector<8x8xf32>
    %83 = tpu.matmul %82, %69, %cst_31 {dimension_numbers = #tpu.dot_dimension_numbers<[1], [0], [0], [1], [0, 0, 1, 1], [], []>, precision = #tpu.contract_precision<fp32>} : vector<8x8xf32>, vector<8x8xf32>, vector<8x8xf32> -> vector<8x8xf32>
    %84 = tpu.concatenate %32, %49, %66, %83 in 1 : vector<8x8xf32>, vector<8x8xf32>, vector<8x8xf32>, vector<8x8xf32> -> vector<8x32xf32>
    %c0_32 = arith.constant 0 : index
    %c0_33 = arith.constant 0 : index
    %c0_34 = arith.constant 0 : index
    %85 = vector.load %arg5[%c0_32, %c0_33, %c0_34] : memref<2x32x32xf32, #tpu.memory_space<vmem>>, vector<1x32x32xf32>
    %86 = vector.shape_cast %85 : vector<1x32x32xf32> to vector<32x32xf32>
    %cst_35 = arith.constant dense<0.000000e+00> : vector<8x32xf32>
    %87 = tpu.matmul %84, %86, %cst_35 {dimension_numbers = #tpu.dot_dimension_numbers<[1], [1], [0], [0], [0, 0, 1, 0], [], []>, precision = #tpu.contract_precision<fp32>} : vector<8x32xf32>, vector<32x32xf32>, vector<8x32xf32> -> vector<8x32xf32>
    %c0_36 = arith.constant 0 : index
    %c0_37 = arith.constant 0 : index
    %c0_38 = arith.constant 0 : index
    %88 = vector.load %arg6[%c0_36, %c0_37, %c0_38] : memref<2x1x32xf32, #tpu.memory_space<vmem>>, vector<1x1x32xf32>
    %89 = vector.shape_cast %88 : vector<1x1x32xf32> to vector<1x32xf32>
    %90 = vector.broadcast %89 : vector<1x32xf32> to vector<8x32xf32>
    %91 = arith.addf %87, %90 : vector<8x32xf32>
    %c1 = arith.constant 1 : index
    %c0_39 = arith.constant 0 : index
    %c0_40 = arith.constant 0 : index
    %92 = vector.load %arg3[%c1, %c0_39, %c0_40] : memref<2x96x32xf32, #tpu.memory_space<vmem>>, vector<1x96x32xf32>
    %93 = vector.shape_cast %92 : vector<1x96x32xf32> to vector<96x32xf32>
    %cst_41 = arith.constant dense<0.000000e+00> : vector<8x96xf32>
    %94 = tpu.matmul %91, %93, %cst_41 {dimension_numbers = #tpu.dot_dimension_numbers<[1], [1], [0], [0], [0, 0, 1, 0], [], []>, precision = #tpu.contract_precision<fp32>} : vector<8x32xf32>, vector<96x32xf32>, vector<8x96xf32> -> vector<8x96xf32>
    %c1_42 = arith.constant 1 : index
    %c0_43 = arith.constant 0 : index
    %c0_44 = arith.constant 0 : index
    %95 = vector.load %arg4[%c1_42, %c0_43, %c0_44] : memref<2x1x96xf32, #tpu.memory_space<vmem>>, vector<1x1x96xf32>
    %96 = vector.shape_cast %95 : vector<1x1x96xf32> to vector<1x96xf32>
    %97 = vector.broadcast %96 : vector<1x96xf32> to vector<8x96xf32>
    %98 = arith.addf %94, %97 : vector<8x96xf32>
    %99 = vector.extract_strided_slice %98 {offsets = [0, 0], sizes = [8, 32], strides = [1, 1]} : vector<8x96xf32> to vector<8x32xf32>
    %100 = vector.extract_strided_slice %98 {offsets = [0, 32], sizes = [8, 32], strides = [1, 1]} : vector<8x96xf32> to vector<8x32xf32>
    %101 = vector.extract_strided_slice %98 {offsets = [0, 64], sizes = [8, 32], strides = [1, 1]} : vector<8x96xf32> to vector<8x32xf32>
    %102 = vector.extract_strided_slice %99 {offsets = [0, 0], sizes = [8, 8], strides = [1, 1]} : vector<8x32xf32> to vector<8x8xf32>
    %103 = vector.extract_strided_slice %100 {offsets = [0, 0], sizes = [8, 8], strides = [1, 1]} : vector<8x32xf32> to vector<8x8xf32>
    %104 = vector.extract_strided_slice %101 {offsets = [0, 0], sizes = [8, 8], strides = [1, 1]} : vector<8x32xf32> to vector<8x8xf32>
    %cst_45 = arith.constant dense<0.000000e+00> : vector<8x8xf32>
    %105 = tpu.matmul %102, %103, %cst_45 {dimension_numbers = #tpu.dot_dimension_numbers<[1], [1], [0], [0], [0, 0, 1, 0], [], []>, precision = #tpu.contract_precision<fp32>} : vector<8x8xf32>, vector<8x8xf32>, vector<8x8xf32> -> vector<8x8xf32>
    %cst_46 = arith.constant 0.353553385 : f32
    %106 = vector.broadcast %cst_46 : f32 to vector<8x8xf32>
    %107 = arith.mulf %105, %106 : vector<8x8xf32>
    %cst_47 = arith.constant dense<0xFF800000> : vector<8xf32>
    %108 = vector.multi_reduction <maximumf>, %107, %cst_47 [1] : vector<8x8xf32> to vector<8xf32>
    %109 = vector.shape_cast %108 : vector<8xf32> to vector<8x1xf32>
    %110 = vector.broadcast %109 : vector<8x1xf32> to vector<8x8xf32>
    %111 = arith.subf %107, %110 : vector<8x8xf32>
    %112 = math.exp %111 : vector<8x8xf32>
    %cst_48 = arith.constant dense<0.000000e+00> : vector<8xf32>
    %113 = vector.multi_reduction <add>, %112, %cst_48 [1] : vector<8x8xf32> to vector<8xf32>
    %114 = vector.shape_cast %113 : vector<8xf32> to vector<8x1xf32>
    %115 = tpu.reciprocal %114 : vector<8x1xf32> -> vector<8x1xf32>
    %116 = vector.broadcast %115 : vector<8x1xf32> to vector<8x8xf32>
    %117 = arith.mulf %112, %116 : vector<8x8xf32>
    %cst_49 = arith.constant dense<0.000000e+00> : vector<8x8xf32>
    %118 = tpu.matmul %117, %104, %cst_49 {dimension_numbers = #tpu.dot_dimension_numbers<[1], [0], [0], [1], [0, 0, 1, 1], [], []>, precision = #tpu.contract_precision<fp32>} : vector<8x8xf32>, vector<8x8xf32>, vector<8x8xf32> -> vector<8x8xf32>
    %119 = vector.extract_strided_slice %99 {offsets = [0, 8], sizes = [8, 8], strides = [1, 1]} : vector<8x32xf32> to vector<8x8xf32>
    %120 = vector.extract_strided_slice %100 {offsets = [0, 8], sizes = [8, 8], strides = [1, 1]} : vector<8x32xf32> to vector<8x8xf32>
    %121 = vector.extract_strided_slice %101 {offsets = [0, 8], sizes = [8, 8], strides = [1, 1]} : vector<8x32xf32> to vector<8x8xf32>
    %cst_50 = arith.constant dense<0.000000e+00> : vector<8x8xf32>
    %122 = tpu.matmul %119, %120, %cst_50 {dimension_numbers = #tpu.dot_dimension_numbers<[1], [1], [0], [0], [0, 0, 1, 0], [], []>, precision = #tpu.contract_precision<fp32>} : vector<8x8xf32>, vector<8x8xf32>, vector<8x8xf32> -> vector<8x8xf32>
    %cst_51 = arith.constant 0.353553385 : f32
    %123 = vector.broadcast %cst_51 : f32 to vector<8x8xf32>
    %124 = arith.mulf %122, %123 : vector<8x8xf32>
    %cst_52 = arith.constant dense<0xFF800000> : vector<8xf32>
    %125 = vector.multi_reduction <maximumf>, %124, %cst_52 [1] : vector<8x8xf32> to vector<8xf32>
    %126 = vector.shape_cast %125 : vector<8xf32> to vector<8x1xf32>
    %127 = vector.broadcast %126 : vector<8x1xf32> to vector<8x8xf32>
    %128 = arith.subf %124, %127 : vector<8x8xf32>
    %129 = math.exp %128 : vector<8x8xf32>
    %cst_53 = arith.constant dense<0.000000e+00> : vector<8xf32>
    %130 = vector.multi_reduction <add>, %129, %cst_53 [1] : vector<8x8xf32> to vector<8xf32>
    %131 = vector.shape_cast %130 : vector<8xf32> to vector<8x1xf32>
    %132 = tpu.reciprocal %131 : vector<8x1xf32> -> vector<8x1xf32>
    %133 = vector.broadcast %132 : vector<8x1xf32> to vector<8x8xf32>
    %134 = arith.mulf %129, %133 : vector<8x8xf32>
    %cst_54 = arith.constant dense<0.000000e+00> : vector<8x8xf32>
    %135 = tpu.matmul %134, %121, %cst_54 {dimension_numbers = #tpu.dot_dimension_numbers<[1], [0], [0], [1], [0, 0, 1, 1], [], []>, precision = #tpu.contract_precision<fp32>} : vector<8x8xf32>, vector<8x8xf32>, vector<8x8xf32> -> vector<8x8xf32>
    %136 = vector.extract_strided_slice %99 {offsets = [0, 16], sizes = [8, 8], strides = [1, 1]} : vector<8x32xf32> to vector<8x8xf32>
    %137 = vector.extract_strided_slice %100 {offsets = [0, 16], sizes = [8, 8], strides = [1, 1]} : vector<8x32xf32> to vector<8x8xf32>
    %138 = vector.extract_strided_slice %101 {offsets = [0, 16], sizes = [8, 8], strides = [1, 1]} : vector<8x32xf32> to vector<8x8xf32>
    %cst_55 = arith.constant dense<0.000000e+00> : vector<8x8xf32>
    %139 = tpu.matmul %136, %137, %cst_55 {dimension_numbers = #tpu.dot_dimension_numbers<[1], [1], [0], [0], [0, 0, 1, 0], [], []>, precision = #tpu.contract_precision<fp32>} : vector<8x8xf32>, vector<8x8xf32>, vector<8x8xf32> -> vector<8x8xf32>
    %cst_56 = arith.constant 0.353553385 : f32
    %140 = vector.broadcast %cst_56 : f32 to vector<8x8xf32>
    %141 = arith.mulf %139, %140 : vector<8x8xf32>
    %cst_57 = arith.constant dense<0xFF800000> : vector<8xf32>
    %142 = vector.multi_reduction <maximumf>, %141, %cst_57 [1] : vector<8x8xf32> to vector<8xf32>
    %143 = vector.shape_cast %142 : vector<8xf32> to vector<8x1xf32>
    %144 = vector.broadcast %143 : vector<8x1xf32> to vector<8x8xf32>
    %145 = arith.subf %141, %144 : vector<8x8xf32>
    %146 = math.exp %145 : vector<8x8xf32>
    %cst_58 = arith.constant dense<0.000000e+00> : vector<8xf32>
    %147 = vector.multi_reduction <add>, %146, %cst_58 [1] : vector<8x8xf32> to vector<8xf32>
    %148 = vector.shape_cast %147 : vector<8xf32> to vector<8x1xf32>
    %149 = tpu.reciprocal %148 : vector<8x1xf32> -> vector<8x1xf32>
    %150 = vector.broadcast %149 : vector<8x1xf32> to vector<8x8xf32>
    %151 = arith.mulf %146, %150 : vector<8x8xf32>
    %cst_59 = arith.constant dense<0.000000e+00> : vector<8x8xf32>
    %152 = tpu.matmul %151, %138, %cst_59 {dimension_numbers = #tpu.dot_dimension_numbers<[1], [0], [0], [1], [0, 0, 1, 1], [], []>, precision = #tpu.contract_precision<fp32>} : vector<8x8xf32>, vector<8x8xf32>, vector<8x8xf32> -> vector<8x8xf32>
    %153 = vector.extract_strided_slice %99 {offsets = [0, 24], sizes = [8, 8], strides = [1, 1]} : vector<8x32xf32> to vector<8x8xf32>
    %154 = vector.extract_strided_slice %100 {offsets = [0, 24], sizes = [8, 8], strides = [1, 1]} : vector<8x32xf32> to vector<8x8xf32>
    %155 = vector.extract_strided_slice %101 {offsets = [0, 24], sizes = [8, 8], strides = [1, 1]} : vector<8x32xf32> to vector<8x8xf32>
    %cst_60 = arith.constant dense<0.000000e+00> : vector<8x8xf32>
    %156 = tpu.matmul %153, %154, %cst_60 {dimension_numbers = #tpu.dot_dimension_numbers<[1], [1], [0], [0], [0, 0, 1, 0], [], []>, precision = #tpu.contract_precision<fp32>} : vector<8x8xf32>, vector<8x8xf32>, vector<8x8xf32> -> vector<8x8xf32>
    %cst_61 = arith.constant 0.353553385 : f32
    %157 = vector.broadcast %cst_61 : f32 to vector<8x8xf32>
    %158 = arith.mulf %156, %157 : vector<8x8xf32>
    %cst_62 = arith.constant dense<0xFF800000> : vector<8xf32>
    %159 = vector.multi_reduction <maximumf>, %158, %cst_62 [1] : vector<8x8xf32> to vector<8xf32>
    %160 = vector.shape_cast %159 : vector<8xf32> to vector<8x1xf32>
    %161 = vector.broadcast %160 : vector<8x1xf32> to vector<8x8xf32>
    %162 = arith.subf %158, %161 : vector<8x8xf32>
    %163 = math.exp %162 : vector<8x8xf32>
    %cst_63 = arith.constant dense<0.000000e+00> : vector<8xf32>
    %164 = vector.multi_reduction <add>, %163, %cst_63 [1] : vector<8x8xf32> to vector<8xf32>
    %165 = vector.shape_cast %164 : vector<8xf32> to vector<8x1xf32>
    %166 = tpu.reciprocal %165 : vector<8x1xf32> -> vector<8x1xf32>
    %167 = vector.broadcast %166 : vector<8x1xf32> to vector<8x8xf32>
    %168 = arith.mulf %163, %167 : vector<8x8xf32>
    %cst_64 = arith.constant dense<0.000000e+00> : vector<8x8xf32>
    %169 = tpu.matmul %168, %155, %cst_64 {dimension_numbers = #tpu.dot_dimension_numbers<[1], [0], [0], [1], [0, 0, 1, 1], [], []>, precision = #tpu.contract_precision<fp32>} : vector<8x8xf32>, vector<8x8xf32>, vector<8x8xf32> -> vector<8x8xf32>
    %170 = tpu.concatenate %118, %135, %152, %169 in 1 : vector<8x8xf32>, vector<8x8xf32>, vector<8x8xf32>, vector<8x8xf32> -> vector<8x32xf32>
    %c1_65 = arith.constant 1 : index
    %c0_66 = arith.constant 0 : index
    %c0_67 = arith.constant 0 : index
    %171 = vector.load %arg5[%c1_65, %c0_66, %c0_67] : memref<2x32x32xf32, #tpu.memory_space<vmem>>, vector<1x32x32xf32>
    %172 = vector.shape_cast %171 : vector<1x32x32xf32> to vector<32x32xf32>
    %cst_68 = arith.constant dense<0.000000e+00> : vector<8x32xf32>
    %173 = tpu.matmul %170, %172, %cst_68 {dimension_numbers = #tpu.dot_dimension_numbers<[1], [1], [0], [0], [0, 0, 1, 0], [], []>, precision = #tpu.contract_precision<fp32>} : vector<8x32xf32>, vector<32x32xf32>, vector<8x32xf32> -> vector<8x32xf32>
    %c1_69 = arith.constant 1 : index
    %c0_70 = arith.constant 0 : index
    %c0_71 = arith.constant 0 : index
    %174 = vector.load %arg6[%c1_69, %c0_70, %c0_71] : memref<2x1x32xf32, #tpu.memory_space<vmem>>, vector<1x1x32xf32>
    %175 = vector.shape_cast %174 : vector<1x1x32xf32> to vector<1x32xf32>
    %176 = vector.broadcast %175 : vector<1x32xf32> to vector<8x32xf32>
    %177 = arith.addf %173, %176 : vector<8x32xf32>
    %cst_72 = arith.constant dense<0.000000e+00> : vector<32xf32>
    %178 = vector.multi_reduction <add>, %177, %cst_72 [0] : vector<8x32xf32> to vector<32xf32>
    %179 = vector.shape_cast %178 : vector<32xf32> to vector<1x32xf32>
    %cst_73 = arith.constant 8.000000e+00 : f32
    %180 = vector.broadcast %cst_73 : f32 to vector<1x32xf32>
    %181 = arith.divf %179, %180 : vector<1x32xf32>
    %c0_74 = arith.constant 0 : index
    %c0_75 = arith.constant 0 : index
    %182 = vector.load %arg7[%c0_74, %c0_75] : memref<1x32xf32, #tpu.memory_space<vmem>>, vector<1x32xf32>
    tpu.vector_store %arg7[%c0_74, %c0_75], %181 {strides = array<i32>} : memref<1x32xf32, #tpu.memory_space<vmem>>, vector<1x32xf32>,
    return
  }
}

</mosaic_0001>

<llo_original>
// kernel: tpu_custom_call.1
$region0: #{tpu_custom_call.1}
  #allocation0 [shape = 'u32[]', space=smem, size = 0x4, offset = 0x4, fixed_abs, tag = 'smem constant byte address 0x4 - core index']
  #allocation1 [shape = 'u32[144,128]{1,0:T(1,128)}', space=vmem, size = 0x12000, scoped, tag = 'internal scratch']
  %s0 = inlined_call_operand.vmem [shape: f32[8,32], index: 0, kind: input, shape index: {}]
  %s1 = inlined_call_operand.vmem [shape: f32[32,32], index: 1, kind: input, shape index: {}]
  %s2 = inlined_call_operand.vmem [shape: f32[1,32], index: 2, kind: input, shape index: {}]
  %s3 = inlined_call_operand.vmem [shape: f32[2,96,32], index: 3, kind: input, shape index: {}]
  %s4 = inlined_call_operand.vmem [shape: f32[2,1,96], index: 4, kind: input, shape index: {}]
  %s5 = inlined_call_operand.vmem [shape: f32[2,32,32], index: 5, kind: input, shape index: {}]
  %s6 = inlined_call_operand.vmem [shape: f32[2,1,32], index: 6, kind: input, shape index: {}]
  %s7 = inlined_call_operand.hbm [shape: f32[1,32], index: 7, kind: output, shape index: {}]
  %s8 = sld [smem:[#allocation0]]
  $region38: #{tpu_custom_call.1} parent=0
    _
  %s10 = ssub.s32 1, %s8
  %s11 = scalar_select 0, %s10, %s8
  $region1: #{tpu_custom_call.1} parent=0
    #allocation2 [shape = 'u8[512]{0}', space=vmem, size = 0x400, scoped, tag = 'output window, operand 0, single buffered']
    #allocation3 [shape = 's32[1]{0}', space=sflag, size = 0x4, scoped, tag = 'scoped memory for tpu_custom_call.1']
    %12 = vsyncpa [#allocation3], 0
    // Predicated region
    $region2: #{tpu_custom_call.1} parent=1 // pred_check
      _
    $region3: #{tpu_custom_call.1} parent=1 // pred_check_branch
      %14 = sbr.rel (0) target = $region5
    $region4: #{tpu_custom_call.1} parent=1 // pred_region
      _
    $region5: #{tpu_custom_call.1} parent=1 // pred_fallthru
      _
    // Predicated region
    $region6: #{tpu_custom_call.1} parent=1 // pred_check
      _
    $region7: #{tpu_custom_call.1} parent=1 // pred_check_branch
      %16 = sbr.rel (0) target = $region9
    $region8: #{tpu_custom_call.1} parent=1 // pred_region
      _
    $region9: #{tpu_custom_call.1} parent=1 // pred_fallthru
      _
    // Predicated region
    $region10: #{tpu_custom_call.1} parent=1 // pred_check
      _
    $region11: #{tpu_custom_call.1} parent=1 // pred_check_branch
      %18 = sbr.rel (0) target = $region13
    $region12: #{tpu_custom_call.1} parent=1 // pred_region
      _
    $region13: #{tpu_custom_call.1} parent=1 // pred_fallthru
      _
    // Predicated region
    $region14: #{tpu_custom_call.1} parent=1 // pred_check
      _
    $region15: #{tpu_custom_call.1} parent=1 // pred_check_branch
      %20 = sbr.rel (0) target = $region17
    $region16: #{tpu_custom_call.1} parent=1 // pred_region
      _
    $region17: #{tpu_custom_call.1} parent=1 // pred_fallthru
      _
    // Predicated region
    $region18: #{tpu_custom_call.1} parent=1 // pred_check
      _
    $region19: #{tpu_custom_call.1} parent=1 // pred_check_branch
      %22 = sbr.rel (0) target = $region21
    $region20: #{tpu_custom_call.1} parent=1 // pred_region
      _
    $region21: #{tpu_custom_call.1} parent=1 // pred_fallthru
      _
    // Predicated region
    $region22: #{tpu_custom_call.1} parent=1 // pred_check
      _
    $region23: #{tpu_custom_call.1} parent=1 // pred_check_branch
      %24 = sbr.rel (0) target = $region25
    $region24: #{tpu_custom_call.1} parent=1 // pred_region
      _
    $region25: #{tpu_custom_call.1} parent=1 // pred_fallthru
      _
    // Predicated region
    $region26: #{tpu_custom_call.1} parent=1 // pred_check
      _
    $region27: #{tpu_custom_call.1} parent=1 // pred_check_branch
      %26 = sbr.rel (0) target = $region29
    $region28: #{tpu_custom_call.1} parent=1 // pred_region
      _
    $region29: #{tpu_custom_call.1} parent=1 // pred_fallthru
      _
    %v27 = vld [vmem:[%s0] sm:$0xff]
    %v28 = vld [vmem:[%s1] sm:$0xff]
    %v29 = vld [vmem:[%s1 + $0x8] sm:$0xff]
    %v30 = vld [vmem:[%s1 + $0x10] sm:$0xff]
    %v31 = vld [vmem:[%s1 + $0x18] sm:$0xff]
    %v32 = vld [vmem:[%s2] sm:$0x1]
    %v34 = vlaneseq
    %v35 = vshrl.u32 %v34, 7
    %v36 = vsub.s32 0, %v35
    %v37 = vrot.slane %v32, %v36
    %vm39 = vcmask 261120
    %v41 = vsel %vm39, %v27, 0
    %v44 = vsel %vm39, %v28, 0
    %v47 = vsel %vm39, %v29, 0
    %v50 = vsel %vm39, %v30, 0
    %v53 = vsel %vm39, %v31, 0
    %55 = vmatprep.subr.mxu0 0.0
    %v56 = vand.u32 %v44, 4294901760
    %57 = vmatpush1.xpose.msra.mxu0 %v56
    %58 = vmatprep.subr.mxu0 0.0
    %v59 = vand.u32 %v47, 4294901760
    %60 = vmatpush1.xpose.msra.mxu0 %v59
    %61 = vmatprep.subr.mxu0 0.0
    %v62 = vand.u32 %v50, 4294901760
    %63 = vmatpush1.xpose.msra.mxu0 %v62
    %64 = vmatprep.subr.mxu0 0.0
    %v65 = vand.u32 %v53, 4294901760
    %66 = vmatpush1.xpose.msra.mxu0 %v65
    %67 = vmatprep.subr.mxu0 0.0
    %68 = vmatpush1.xpose.msra.mxu0 0.0
    %69 = vmatprep.subr.mxu0 0.0
    %70 = vmatpush1.xpose.msra.mxu0 0.0
    %71 = vmatprep.subr.mxu0 0.0
    %72 = vmatpush1.xpose.msra.mxu0 0.0
    %73 = vmatprep.subr.mxu0 0.0
    %74 = vmatpush1.xpose.msra.mxu0 0.0
    %75 = vmatprep.subr.mxu0 0.0
    %76 = vmatpush1.xpose.msra.mxu0 0.0
    %77 = vmatprep.subr.mxu0 0.0
    %78 = vmatpush1.xpose.msra.mxu0 0.0
    %79 = vmatprep.subr.mxu0 0.0
    %80 = vmatpush1.xpose.msra.mxu0 0.0
    %81 = vmatprep.subr.mxu0 0.0
    %82 = vmatpush1.xpose.msra.mxu0 0.0
    %83 = vmatprep.subr.mxu0 0.0
    %84 = vmatpush1.xpose.msra.mxu0 0.0
    %85 = vmatprep.subr.mxu0 0.0
    %86 = vmatpush1.xpose.msra.mxu0 0.0
    %87 = vmatprep.subr.mxu0 0.0
    %88 = vmatpush1.xpose.msra.mxu0 0.0
    %89 = vmatprep.subr.mxu0 0.0
    %90 = vmatpush1.xpose.msra.mxu0 0.0
    %91 = vmatprep.subr.mxu0 0.0
    %92 = vmatpush1.xpose.msra.mxu0 0.0
    %93 = vmatprep.subr.mxu0 0.0
    %94 = vmatpush1.xpose.msra.mxu0 0.0
    %95 = vmatprep.subr.mxu0 0.0
    %96 = vmatpush1.xpose.msra.mxu0 0.0
    %97 = vmatprep.subr.mxu0 0.0
    %98 = vmatpush1.xpose.msra.mxu0 0.0
    %99 = vmatprep.subr.mxu0 0.0
    %100 = vmatpush1.xpose.msra.mxu0 0.0
    %101 = vmatprep.subr.mxu0 0.0
    %102 = vmatpush1.xpose.msra.mxu0 0.0
    %103 = vmatprep.subr.mxu0 0.0
    %104 = vmatpush1.xpose.msra.mxu0 0.0
    %105 = vmatprep.subr.mxu0 0.0
    %106 = vmatpush1.xpose.msra.mxu0 0.0
    %107 = vmatprep.subr.mxu0 0.0
    %108 = vmatpush1.xpose.msra.mxu0 0.0
    %109 = vmatprep.subr.mxu0 0.0
    %110 = vmatpush1.xpose.msra.mxu0 0.0
    %111 = vmatprep.subr.mxu0 0.0
    %112 = vmatpush1.xpose.msra.mxu0 0.0
    %113 = vmatprep.subr.mxu0 0.0
    %114 = vmatpush1.xpose.msra.mxu0 0.0
    %115 = vmatprep.subr.mxu0 0.0
    %116 = vmatpush1.xpose.msra.mxu0 0.0
    %117 = vmatprep.subr.mxu0 0.0
    %118 = vmatpush1.xpose.msra.mxu0 0.0
    %119 = vmatprep.subr.mxu0 0.0
    %120 = vmatpush1.xpose.msra.mxu0 0.0
    %121 = vmatprep.subr.mxu0 0.0
    %122 = vmatpush1.xpose.msra.mxu0 0.0
    %123 = vmatprep.mubr.f32.mxu0 0.0
    %v124 = vand.u32 %v41, 4294901760
    %v125 = vsub.f32 %v41, %v124
    %v126 = vand.u32 %v125, 4294901760
    %v127 = vsub.f32 %v125, %v126
    %v128 = vand.u32 %v127, 4294901760
    %129 = vmatmul.mubr.f32.gmra.mrb[0].mxu0 %v128
    %v130 = vpop.f32.mrb[0].mxu0
    %v131 = vadd.f32 %v37, %v130
    %v132 = vpop.f32.mrb[0].mxu0
    %133 = vdwg.mxu0
    %134 = vmatprep.subr.mxu0 0.0
    %v135 = vand.u32 %v44, 4294901760
    %v136 = vsub.f32 %v44, %v135
    %v137 = vand.u32 %v136, 4294901760
    %v138 = vsub.f32 %v136, %v137
    %v139 = vand.u32 %v138, 4294901760
    %140 = vmatpush1.xpose.msra.mxu0 %v139
    %141 = vmatprep.subr.mxu0 0.0
    %v142 = vand.u32 %v47, 4294901760
    %v143 = vsub.f32 %v47, %v142
    %v144 = vand.u32 %v143, 4294901760
    %v145 = vsub.f32 %v143, %v144
    %v146 = vand.u32 %v145, 4294901760
    %147 = vmatpush1.xpose.msra.mxu0 %v146
    %148 = vmatprep.subr.mxu0 0.0
    %v149 = vand.u32 %v50, 4294901760
    %v150 = vsub.f32 %v50, %v149
    %v151 = vand.u32 %v150, 4294901760
    %v152 = vsub.f32 %v150, %v151
    %v153 = vand.u32 %v152, 4294901760
    %154 = vmatpush1.xpose.msra.mxu0 %v153
    %155 = vmatprep.subr.mxu0 0.0
    %v156 = vand.u32 %v53, 4294901760
    %v157 = vsub.f32 %v53, %v156
    %v158 = vand.u32 %v157, 4294901760
    %v159 = vsub.f32 %v157, %v158
    %v160 = vand.u32 %v159, 4294901760
    %161 = vmatpush1.xpose.msra.mxu0 %v160
    %162 = vmatprep.subr.mxu0 0.0
    %163 = vmatpush1.xpose.msra.mxu0 0.0
    %164 = vmatprep.subr.mxu0 0.0
    %165 = vmatpush1.xpose.msra.mxu0 0.0
    %166 = vmatprep.subr.mxu0 0.0
    %167 = vmatpush1.xpose.msra.mxu0 0.0
    %168 = vmatprep.subr.mxu0 0.0
    %169 = vmatpush1.xpose.msra.mxu0 0.0
    %170 = vmatprep.subr.mxu0 0.0
    %171 = vmatpush1.xpose.msra.mxu0 0.0
    %172 = vmatprep.subr.mxu0 0.0
    %173 = vmatpush1.xpose.msra.mxu0 0.0
    %174 = vmatprep.subr.mxu0 0.0
    %175 = vmatpush1.xpose.msra.mxu0 0.0
    %176 = vmatprep.subr.mxu0 0.0
    %177 = vmatpush1.xpose.msra.mxu0 0.0
    %178 = vmatprep.subr.mxu0 0.0
    %179 = vmatpush1.xpose.msra.mxu0 0.0
    %180 = vmatprep.subr.mxu0 0.0
    %181 = vmatpush1.xpose.msra.mxu0 0.0
    %182 = vmatprep.subr.mxu0 0.0
    %183 = vmatpush1.xpose.msra.mxu0 0.0
    %184 = vmatprep.subr.mxu0 0.0
    %185 = vmatpush1.xpose.msra.mxu0 0.0
    %186 = vmatprep.subr.mxu0 0.0
    %187 = vmatpush1.xpose.msra.mxu0 0.0
    %188 = vmatprep.subr.mxu0 0.0
    %189 = vmatpush1.xpose.msra.mxu0 0.0
    %190 = vmatprep.subr.mxu0 0.0
    %191 = vmatpush1.xpose.msra.mxu0 0.0
    %192 = vmatprep.subr.mxu0 0.0
    %193 = vmatpush1.xpose.msra.mxu0 0.0
    %194 = vmatprep.subr.mxu0 0.0
    %195 = vmatpush1.xpose.msra.mxu0 0.0
    %196 = vmatprep.subr.mxu0 0.0
    %197 = vmatpush1.xpose.msra.mxu0 0.0
    %198 = vmatprep.subr.mxu0 0.0
    %199 = vmatpush1.xpose.msra.mxu0 0.0
    %200 = vmatprep.subr.mxu0 0.0
    %201 = vmatpush1.xpose.msra.mxu0 0.0
    %202 = vmatprep.subr.mxu0 0.0
    %203 = vmatpush1.xpose.msra.mxu0 0.0
    %204 = vmatprep.subr.mxu0 0.0
    %205 = vmatpush1.xpose.msra.mxu0 0.0
    %206 = vmatprep.subr.mxu0 0.0
    %207 = vmatpush1.xpose.msra.mxu0 0.0
    %208 = vmatprep.subr.mxu0 0.0
    %209 = vmatpush1.xpose.msra.mxu0 0.0
    %210 = vmatprep.subr.mxu0 0.0
    %211 = vmatpush1.xpose.msra.mxu0 0.0
    %212 = vmatprep.subr.mxu0 0.0
    %213 = vmatpush1.xpose.msra.mxu0 0.0
    %214 = vmatprep.subr.mxu0 0.0
    %215 = vmatpush1.xpose.msra.mxu0 0.0
    %216 = vmatprep.subr.mxu0 0.0
    %217 = vmatpush1.xpose.msra.mxu0 0.0
    %218 = vmatprep.mubr.f32.mxu0 0.0
    %v219 = vand.u32 %v41, 4294901760
    %220 = vmatmul.mubr.f32.gmra.mrb[0].mxu0 %v219
    %v221 = vpop.f32.mrb[0].mxu0
    %v222 = vadd.f32 %v131, %v221
    %v223 = vpop.f32.mrb[0].mxu0
    %224 = vdwg.mxu0
    %225 = vmatprep.subr.mxu0 0.0
    %v226 = vand.u32 %v44, 4294901760
    %v227 = vsub.f32 %v44, %v226
    %228 = vmatpush1.xpose.msra.mxu0 %v227
    %229 = vmatprep.subr.mxu0 0.0
    %v230 = vand.u32 %v47, 4294901760
    %v231 = vsub.f32 %v47, %v230
    %232 = vmatpush1.xpose.msra.mxu0 %v231
    %233 = vmatprep.subr.mxu0 0.0
    %v234 = vand.u32 %v50, 4294901760
    %v235 = vsub.f32 %v50, %v234
    %236 = vmatpush1.xpose.msra.mxu0 %v235
    %237 = vmatprep.subr.mxu0 0.0
    %v238 = vand.u32 %v53, 4294901760
    %v239 = vsub.f32 %v53, %v238
    %240 = vmatpush1.xpose.msra.mxu0 %v239
    %241 = vmatprep.subr.mxu0 0.0
    %242 = vmatpush1.xpose.msra.mxu0 0.0
    %243 = vmatprep.subr.mxu0 0.0
    %244 = vmatpush1.xpose.msra.mxu0 0.0
    %245 = vmatprep.subr.mxu0 0.0
    %246 = vmatpush1.xpose.msra.mxu0 0.0
    %247 = vmatprep.subr.mxu0 0.0
    %248 = vmatpush1.xpose.msra.mxu0 0.0
    %249 = vmatprep.subr.mxu0 0.0
    %250 = vmatpush1.xpose.msra.mxu0 0.0
    %251 = vmatprep.subr.mxu0 0.0
    %252 = vmatpush1.xpose.msra.mxu0 0.0
    %253 = vmatprep.subr.mxu0 0.0
    %254 = vmatpush1.xpose.msra.mxu0 0.0
    %255 = vmatprep.subr.mxu0 0.0
    %256 = vmatpush1.xpose.msra.mxu0 0.0
    %257 = vmatprep.subr.mxu0 0.0
    %258 = vmatpush1.xpose.msra.mxu0 0.0
    %259 = vmatprep.subr.mxu0 0.0
    %260 = vmatpush1.xpose.msra.mxu0 0.0
    %261 = vmatprep.subr.mxu0 0.0
    %262 = vmatpush1.xpose.msra.mxu0 0.0
    %263 = vmatprep.subr.mxu0 0.0
    %264 = vmatpush1.xpose.msra.mxu0 0.0
    %265 = vmatprep.subr.mxu0 0.0
    %266 = vmatpush1.xpose.msra.mxu0 0.0
    %267 = vmatprep.subr.mxu0 0.0
    %268 = vmatpush1.xpose.msra.mxu0 0.0
    %269 = vmatprep.subr.mxu0 0.0
    %270 = vmatpush1.xpose.msra.mxu0 0.0
    %271 = vmatprep.subr.mxu0 0.0
    %272 = vmatpush1.xpose.msra.mxu0 0.0
    %273 = vmatprep.subr.mxu0 0.0
    %274 = vmatpush1.xpose.msra.mxu0 0.0
    %275 = vmatprep.subr.mxu0 0.0
    %276 = vmatpush1.xpose.msra.mxu0 0.0
    %277 = vmatprep.subr.mxu0 0.0
    %278 = vmatpush1.xpose.msra.mxu0 0.0
    %279 = vmatprep.subr.mxu0 0.0
    %280 = vmatpush1.xpose.msra.mxu0 0.0
    %281 = vmatprep.subr.mxu0 0.0
    %282 = vmatpush1.xpose.msra.mxu0 0.0
    %283 = vmatprep.subr.mxu0 0.0
    %284 = vmatpush1.xpose.msra.mxu0 0.0
    %285 = vmatprep.subr.mxu0 0.0
    %286 = vmatpush1.xpose.msra.mxu0 0.0
    %287 = vmatprep.subr.mxu0 0.0
    %288 = vmatpush1.xpose.msra.mxu0 0.0
    %289 = vmatprep.subr.mxu0 0.0
    %290 = vmatpush1.xpose.msra.mxu0 0.0
    %291 = vmatprep.subr.mxu0 0.0
    %292 = vmatpush1.xpose.msra.mxu0 0.0
    %293 = vmatprep.subr.mxu0 0.0
    %294 = vmatpush1.xpose.msra.mxu0 0.0
    %295 = vmatprep.subr.mxu0 0.0
    %296 = vmatpush1.xpose.msra.mxu0 0.0
    %297 = vmatprep.mubr.f32.mxu0 0.0
    %v298 = vand.u32 %v41, 4294901760
    %v299 = vsub.f32 %v41, %v298
    %300 = vmatmul.mubr.f32.gmra.mrb[0].mxu0 %v299
    %v301 = vpop.f32.mrb[0].mxu0
    %v302 = vadd.f32 %v222, %v301
    %v303 = vpop.f32.mrb[0].mxu0
    %304 = vdwg.mxu0
    %305 = vmatprep.subr.mxu0 0.0
    %v306 = vand.u32 %v44, 4294901760
    %307 = vmatpush1.xpose.msra.mxu0 %v306
    %308 = vmatprep.subr.mxu0 0.0
    %v309 = vand.u32 %v47, 4294901760
    %310 = vmatpush1.xpose.msra.mxu0 %v309
    %311 = vmatprep.subr.mxu0 0.0
    %v312 = vand.u32 %v50, 4294901760
    %313 = vmatpush1.xpose.msra.mxu0 %v312
    %314 = vmatprep.subr.mxu0 0.0
    %v315 = vand.u32 %v53, 4294901760
    %316 = vmatpush1.xpose.msra.mxu0 %v315
    %317 = vmatprep.subr.mxu0 0.0
    %318 = vmatpush1.xpose.msra.mxu0 0.0
    %319 = vmatprep.subr.mxu0 0.0
    %320 = vmatpush1.xpose.msra.mxu0 0.0
    %321 = vmatprep.subr.mxu0 0.0
    %322 = vmatpush1.xpose.msra.mxu0 0.0
    %323 = vmatprep.subr.mxu0 0.0
    %324 = vmatpush1.xpose.msra.mxu0 0.0
    %325 = vmatprep.subr.mxu0 0.0
    %326 = vmatpush1.xpose.msra.mxu0 0.0
    %327 = vmatprep.subr.mxu0 0.0
    %328 = vmatpush1.xpose.msra.mxu0 0.0
    %329 = vmatprep.subr.mxu0 0.0
    %330 = vmatpush1.xpose.msra.mxu0 0.0
    %331 = vmatprep.subr.mxu0 0.0
    %332 = vmatpush1.xpose.msra.mxu0 0.0
    %333 = vmatprep.subr.mxu0 0.0
    %334 = vmatpush1.xpose.msra.mxu0 0.0
    %335 = vmatprep.subr.mxu0 0.0
    %336 = vmatpush1.xpose.msra.mxu0 0.0
    %337 = vmatprep.subr.mxu0 0.0
    %338 = vmatpush1.xpose.msra.mxu0 0.0
    %339 = vmatprep.subr.mxu0 0.0
    %340 = vmatpush1.xpose.msra.mxu0 0.0
    %341 = vmatprep.subr.mxu0 0.0
    %342 = vmatpush1.xpose.msra.mxu0 0.0
    %343 = vmatprep.subr.mxu0 0.0
    %344 = vmatpush1.xpose.msra.mxu0 0.0
    %345 = vmatprep.subr.mxu0 0.0
    %346 = vmatpush1.xpose.msra.mxu0 0.0
    %347 = vmatprep.subr.mxu0 0.0
    %348 = vmatpush1.xpose.msra.mxu0 0.0
    %349 = vmatprep.subr.mxu0 0.0
    %350 = vmatpush1.xpose.msra.mxu0 0.0
    %351 = vmatprep.subr.mxu0 0.0
    %352 = vmatpush1.xpose.msra.mxu0 0.0
    %353 = vmatprep.subr.mxu0 0.0
    %354 = vmatpush1.xpose.msra.mxu0 0.0
    %355 = vmatprep.subr.mxu0 0.0
    %356 = vmatpush1.xpose.msra.mxu0 0.0
    %357 = vmatprep.subr.mxu0 0.0
    %358 = vmatpush1.xpose.msra.mxu0 0.0
    %359 = vmatprep.subr.mxu0 0.0
    %360 = vmatpush1.xpose.msra.mxu0 0.0
    %361 = vmatprep.subr.mxu0 0.0
    %362 = vmatpush1.xpose.msra.mxu0 0.0
    %363 = vmatprep.subr.mxu0 0.0
    %364 = vmatpush1.xpose.msra.mxu0 0.0
    %365 = vmatprep.subr.mxu0 0.0
    %366 = vmatpush1.xpose.msra.mxu0 0.0
    %367 = vmatprep.subr.mxu0 0.0
    %368 = vmatpush1.xpose.msra.mxu0 0.0
    %369 = vmatprep.subr.mxu0 0.0
    %370 = vmatpush1.xpose.msra.mxu0 0.0
    %371 = vmatprep.subr.mxu0 0.0
    %372 = vmatpush1.xpose.msra.mxu0 0.0
    %373 = vmatprep.mubr.f32.mxu0 0.0
    %v374 = vand.u32 %v41, 4294901760
    %v375 = vsub.f32 %v41, %v374
    %v376 = vand.u32 %v375, 4294901760
    %377 = vmatmul.mubr.f32.gmra.mrb[0].mxu0 %v376
    %v378 = vpop.f32.mrb[0].mxu0
    %v379 = vadd.f32 %v302, %v378
    %v380 = vpop.f32.mrb[0].mxu0
    %381 = vdwg.mxu0
    %382 = vmatprep.subr.mxu0 0.0
    %v383 = vand.u32 %v44, 4294901760
    %v384 = vsub.f32 %v44, %v383
    %v385 = vand.u32 %v384, 4294901760
    %386 = vmatpush1.xpose.msra.mxu0 %v385
    %387 = vmatprep.subr.mxu0 0.0
    %v388 = vand.u32 %v47, 4294901760
    %v389 = vsub.f32 %v47, %v388
    %v390 = vand.u32 %v389, 4294901760
    %391 = vmatpush1.xpose.msra.mxu0 %v390
    %392 = vmatprep.subr.mxu0 0.0
    %v393 = vand.u32 %v50, 4294901760
    %v394 = vsub.f32 %v50, %v393
    %v395 = vand.u32 %v394, 4294901760
    %396 = vmatpush1.xpose.msra.mxu0 %v395
    %397 = vmatprep.subr.mxu0 0.0
    %v398 = vand.u32 %v53, 4294901760
    %v399 = vsub.f32 %v53, %v398
    %v400 = vand.u32 %v399, 4294901760
    %401 = vmatpush1.xpose.msra.mxu0 %v400
    %402 = vmatprep.subr.mxu0 0.0
    %403 = vmatpush1.xpose.msra.mxu0 0.0
    %404 = vmatprep.subr.mxu0 0.0
    %405 = vmatpush1.xpose.msra.mxu0 0.0
    %406 = vmatprep.subr.mxu0 0.0
    %407 = vmatpush1.xpose.msra.mxu0 0.0
    %408 = vmatprep.subr.mxu0 0.0
    %409 = vmatpush1.xpose.msra.mxu0 0.0
    %410 = vmatprep.subr.mxu0 0.0
    %411 = vmatpush1.xpose.msra.mxu0 0.0
    %412 = vmatprep.subr.mxu0 0.0
    %413 = vmatpush1.xpose.msra.mxu0 0.0
    %414 = vmatprep.subr.mxu0 0.0
    %415 = vmatpush1.xpose.msra.mxu0 0.0
    %416 = vmatprep.subr.mxu0 0.0
    %417 = vmatpush1.xpose.msra.mxu0 0.0
    %418 = vmatprep.subr.mxu0 0.0
    %419 = vmatpush1.xpose.msra.mxu0 0.0
    %420 = vmatprep.subr.mxu0 0.0
    %421 = vmatpush1.xpose.msra.mxu0 0.0
    %422 = vmatprep.subr.mxu0 0.0
    %423 = vmatpush1.xpose.msra.mxu0 0.0
    %424 = vmatprep.subr.mxu0 0.0
    %425 = vmatpush1.xpose.msra.mxu0 0.0
    %426 = vmatprep.subr.mxu0 0.0
    %427 = vmatpush1.xpose.msra.mxu0 0.0
    %428 = vmatprep.subr.mxu0 0.0
    %429 = vmatpush1.xpose.msra.mxu0 0.0
    %430 = vmatprep.subr.mxu0 0.0
    %431 = vmatpush1.xpose.msra.mxu0 0.0
    %432 = vmatprep.subr.mxu0 0.0
    %433 = vmatpush1.xpose.msra.mxu0 0.0
    %434 = vmatprep.subr.mxu0 0.0
    %435 = vmatpush1.xpose.msra.mxu0 0.0
    %436 = vmatprep.subr.mxu0 0.0
    %437 = vmatpush1.xpose.msra.mxu0 0.0
    %438 = vmatprep.subr.mxu0 0.0
    %439 = vmatpush1.xpose.msra.mxu0 0.0
    %440 = vmatprep.subr.mxu0 0.0
    %441 = vmatpush1.xpose.msra.mxu0 0.0
    %442 = vmatprep.subr.mxu0 0.0
    %443 = vmatpush1.xpose.msra.mxu0 0.0
    %444 = vmatprep.subr.mxu0 0.0
    %445 = vmatpush1.xpose.msra.mxu0 0.0
    %446 = vmatprep.subr.mxu0 0.0
    %447 = vmatpush1.xpose.msra.mxu0 0.0
    %448 = vmatprep.subr.mxu0 0.0
    %449 = vmatpush1.xpose.msra.mxu0 0.0
    %450 = vmatprep.subr.mxu0 0.0
    %451 = vmatpush1.xpose.msra.mxu0 0.0
    %452 = vmatprep.subr.mxu0 0.0
    %453 = vmatpush1.xpose.msra.mxu0 0.0
    %454 = vmatprep.subr.mxu0 0.0
    %455 = vmatpush1.xpose.msra.mxu0 0.0
    %456 = vmatprep.subr.mxu0 0.0
    %457 = vmatpush1.xpose.msra.mxu0 0.0
    %458 = vmatprep.mubr.f32.mxu0 0.0
    %v459 = vand.u32 %v41, 4294901760
    %460 = vmatmul.mubr.f32.gmra.mrb[0].mxu0 %v459
    %v461 = vpop.f32.mrb[0].mxu0
    %v462 = vadd.f32 %v379, %v461
    %v463 = vpop.f32.mrb[0].mxu0
    %464 = vdwg.mxu0
    %465 = vmatprep.subr.mxu0 0.0
    %v466 = vand.u32 %v44, 4294901760
    %467 = vmatpush1.xpose.msra.mxu0 %v466
    %468 = vmatprep.subr.mxu0 0.0
    %v469 = vand.u32 %v47, 4294901760
    %470 = vmatpush1.xpose.msra.mxu0 %v469
    %471 = vmatprep.subr.mxu0 0.0
    %v472 = vand.u32 %v50, 4294901760
    %473 = vmatpush1.xpose.msra.mxu0 %v472
    %474 = vmatprep.subr.mxu0 0.0
    %v475 = vand.u32 %v53, 4294901760
    %476 = vmatpush1.xpose.msra.mxu0 %v475
    %477 = vmatprep.subr.mxu0 0.0
    %478 = vmatpush1.xpose.msra.mxu0 0.0
    %479 = vmatprep.subr.mxu0 0.0
    %480 = vmatpush1.xpose.msra.mxu0 0.0
    %481 = vmatprep.subr.mxu0 0.0
    %482 = vmatpush1.xpose.msra.mxu0 0.0
    %483 = vmatprep.subr.mxu0 0.0
    %484 = vmatpush1.xpose.msra.mxu0 0.0
    %485 = vmatprep.subr.mxu0 0.0
    %486 = vmatpush1.xpose.msra.mxu0 0.0
    %487 = vmatprep.subr.mxu0 0.0
    %488 = vmatpush1.xpose.msra.mxu0 0.0
    %489 = vmatprep.subr.mxu0 0.0
    %490 = vmatpush1.xpose.msra.mxu0 0.0
    %491 = vmatprep.subr.mxu0 0.0
    %492 = vmatpush1.xpose.msra.mxu0 0.0
    %493 = vmatprep.subr.mxu0 0.0
    %494 = vmatpush1.xpose.msra.mxu0 0.0
    %495 = vmatprep.subr.mxu0 0.0
    %496 = vmatpush1.xpose.msra.mxu0 0.0
    %497 = vmatprep.subr.mxu0 0.0
    %498 = vmatpush1.xpose.msra.mxu0 0.0
    %499 = vmatprep.subr.mxu0 0.0
    %500 = vmatpush1.xpose.msra.mxu0 0.0
    %501 = vmatprep.subr.mxu0 0.0
    %502 = vmatpush1.xpose.msra.mxu0 0.0
    %503 = vmatprep.subr.mxu0 0.0
    %504 = vmatpush1.xpose.msra.mxu0 0.0
    %505 = vmatprep.subr.mxu0 0.0
    %506 = vmatpush1.xpose.msra.mxu0 0.0
    %507 = vmatprep.subr.mxu0 0.0
    %508 = vmatpush1.xpose.msra.mxu0 0.0
    %509 = vmatprep.subr.mxu0 0.0
    %510 = vmatpush1.xpose.msra.mxu0 0.0
    %511 = vmatprep.subr.mxu0 0.0
    %512 = vmatpush1.xpose.msra.mxu0 0.0
    %513 = vmatprep.subr.mxu0 0.0
    %514 = vmatpush1.xpose.msra.mxu0 0.0
    %515 = vmatprep.subr.mxu0 0.0
    %516 = vmatpush1.xpose.msra.mxu0 0.0
    %517 = vmatprep.subr.mxu0 0.0
    %518 = vmatpush1.xpose.msra.mxu0 0.0
    %519 = vmatprep.subr.mxu0 0.0
    %520 = vmatpush1.xpose.msra.mxu0 0.0
    %521 = vmatprep.subr.mxu0 0.0
    %522 = vmatpush1.xpose.msra.mxu0 0.0
    %523 = vmatprep.subr.mxu0 0.0
    %524 = vmatpush1.xpose.msra.mxu0 0.0
    %525 = vmatprep.subr.mxu0 0.0
    %526 = vmatpush1.xpose.msra.mxu0 0.0
    %527 = vmatprep.subr.mxu0 0.0
    %528 = vmatpush1.xpose.msra.mxu0 0.0
    %529 = vmatprep.subr.mxu0 0.0
    %530 = vmatpush1.xpose.msra.mxu0 0.0
    %531 = vmatprep.subr.mxu0 0.0
    %532 = vmatpush1.xpose.msra.mxu0 0.0
    %533 = vmatprep.mubr.f32.mxu0 0.0
    %v534 = vand.u32 %v41, 4294901760
    %535 = vmatmul.mubr.f32.gmra.mrb[0].mxu0 %v534
    %v536 = vpop.f32.mrb[0].mxu0
    %v537 = vadd.f32 %v462, %v536
    %v538 = vpop.f32.mrb[0].mxu0
    %539 = vdwg.mxu0
    %v540 = vld [vmem:[%s3] sm:$0xff]
    %v541 = vld [vmem:[%s3 + $0x8] sm:$0xff]
    %v542 = vld [vmem:[%s3 + $0x10] sm:$0xff]
    %v543 = vld [vmem:[%s3 + $0x18] sm:$0xff]
    %v544 = vld [vmem:[%s3 + $0x20] sm:$0xff]
    %v545 = vld [vmem:[%s3 + $0x28] sm:$0xff]
    %v546 = vld [vmem:[%s3 + $0x30] sm:$0xff]
    %v547 = vld [vmem:[%s3 + $0x38] sm:$0xff]
    %v548 = vld [vmem:[%s3 + $0x40] sm:$0xff]
    %v549 = vld [vmem:[%s3 + $0x48] sm:$0xff]
    %v550 = vld [vmem:[%s3 + $0x50] sm:$0xff]
    %v551 = vld [vmem:[%s3 + $0x58] sm:$0xff]
    %v552 = vld [vmem:[%s4] sm:$0x1]
    %v554 = vlaneseq
    %v555 = vshrl.u32 %v554, 7
    %v556 = vsub.s32 0, %v555
    %v557 = vrot.slane %v552, %v556
    %v560 = vsel %vm39, %v537, 0
    %v563 = vsel %vm39, %v540, 0
    %v566 = vsel %vm39, %v541, 0
    %v569 = vsel %vm39, %v542, 0
    %v572 = vsel %vm39, %v543, 0
    %v575 = vsel %vm39, %v544, 0
    %v578 = vsel %vm39, %v545, 0
    %v581 = vsel %vm39, %v546, 0
    %v584 = vsel %vm39, %v547, 0
    %v587 = vsel %vm39, %v548, 0
    %v590 = vsel %vm39, %v549, 0
    %v593 = vsel %vm39, %v550, 0
    %v596 = vsel %vm39, %v551, 0
    %598 = vmatprep.subr.mxu0 0.0
    %v599 = vand.u32 %v563, 4294901760
    %600 = vmatpush1.xpose.msra.mxu0 %v599
    %601 = vmatprep.subr.mxu0 0.0
    %v602 = vand.u32 %v566, 4294901760
    %603 = vmatpush1.xpose.msra.mxu0 %v602
    %604 = vmatprep.subr.mxu0 0.0
    %v605 = vand.u32 %v569, 4294901760
    %606 = vmatpush1.xpose.msra.mxu0 %v605
    %607 = vmatprep.subr.mxu0 0.0
    %v608 = vand.u32 %v572, 4294901760
    %609 = vmatpush1.xpose.msra.mxu0 %v608
    %610 = vmatprep.subr.mxu0 0.0
    %v611 = vand.u32 %v575, 4294901760
    %612 = vmatpush1.xpose.msra.mxu0 %v611
    %613 = vmatprep.subr.mxu0 0.0
    %v614 = vand.u32 %v578, 4294901760
    %615 = vmatpush1.xpose.msra.mxu0 %v614
    %616 = vmatprep.subr.mxu0 0.0
    %v617 = vand.u32 %v581, 4294901760
    %618 = vmatpush1.xpose.msra.mxu0 %v617
    %619 = vmatprep.subr.mxu0 0.0
    %v620 = vand.u32 %v584, 4294901760
    %621 = vmatpush1.xpose.msra.mxu0 %v620
    %622 = vmatprep.subr.mxu0 0.0
    %v623 = vand.u32 %v587, 4294901760
    %624 = vmatpush1.xpose.msra.mxu0 %v623
    %625 = vmatprep.subr.mxu0 0.0
    %v626 = vand.u32 %v590, 4294901760
    %627 = vmatpush1.xpose.msra.mxu0 %v626
    %628 = vmatprep.subr.mxu0 0.0
    %v629 = vand.u32 %v593, 4294901760
    %630 = vmatpush1.xpose.msra.mxu0 %v629
    %631 = vmatprep.subr.mxu0 0.0
    %v632 = vand.u32 %v596, 4294901760
    %633 = vmatpush1.xpose.msra.mxu0 %v632
    %634 = vmatprep.subr.mxu0 0.0
    %635 = vmatpush1.xpose.msra.mxu0 0.0
    %636 = vmatprep.subr.mxu0 0.0
    %637 = vmatpush1.xpose.msra.mxu0 0.0
    %638 = vmatprep.subr.mxu0 0.0
    %639 = vmatpush1.xpose.msra.mxu0 0.0
    %640 = vmatprep.subr.mxu0 0.0
    %641 = vmatpush1.xpose.msra.mxu0 0.0
    %642 = vmatprep.subr.mxu0 0.0
    %643 = vmatpush1.xpose.msra.mxu0 0.0
    %644 = vmatprep.subr.mxu0 0.0
    %645 = vmatpush1.xpose.msra.mxu0 0.0
    %646 = vmatprep.subr.mxu0 0.0
    %647 = vmatpush1.xpose.msra.mxu0 0.0
    %648 = vmatprep.subr.mxu0 0.0
    %649 = vmatpush1.xpose.msra.mxu0 0.0
    %650 = vmatprep.subr.mxu0 0.0
    %651 = vmatpush1.xpose.msra.mxu0 0.0
    %652 = vmatprep.subr.mxu0 0.0
    %653 = vmatpush1.xpose.msra.mxu0 0.0
    %654 = vmatprep.subr.mxu0 0.0
    %655 = vmatpush1.xpose.msra.mxu0 0.0
    %656 = vmatprep.subr.mxu0 0.0
    %657 = vmatpush1.xpose.msra.mxu0 0.0
    %658 = vmatprep.subr.mxu0 0.0
    %659 = vmatpush1.xpose.msra.mxu0 0.0
    %660 = vmatprep.subr.mxu0 0.0
    %661 = vmatpush1.xpose.msra.mxu0 0.0
    %662 = vmatprep.subr.mxu0 0.0
    %663 = vmatpush1.xpose.msra.mxu0 0.0
    %664 = vmatprep.subr.mxu0 0.0
    %665 = vmatpush1.xpose.msra.mxu0 0.0
    %666 = vmatprep.subr.mxu0 0.0
    %667 = vmatpush1.xpose.msra.mxu0 0.0
    %668 = vmatprep.subr.mxu0 0.0
    %669 = vmatpush1.xpose.msra.mxu0 0.0
    %670 = vmatprep.subr.mxu0 0.0
    %671 = vmatpush1.xpose.msra.mxu0 0.0
    %672 = vmatprep.subr.mxu0 0.0
    %673 = vmatpush1.xpose.msra.mxu0 0.0
    %674 = vmatprep.mubr.f32.mxu0 0.0
    %v675 = vand.u32 %v560, 4294901760
    %v676 = vsub.f32 %v560, %v675
    %v677 = vand.u32 %v676, 4294901760
    %v678 = vsub.f32 %v676, %v677
    %v679 = vand.u32 %v678, 4294901760
    %680 = vmatmul.mubr.f32.gmra.mrb[0].mxu0 %v679
    %v681 = vpop.f32.mrb[0].mxu0
    %v682 = vadd.f32 %v557, %v681
    %v683 = vpop.f32.mrb[0].mxu0
    %684 = vdwg.mxu0
    %685 = vmatprep.subr.mxu0 0.0
    %v686 = vand.u32 %v563, 4294901760
    %v687 = vsub.f32 %v563, %v686
    %v688 = vand.u32 %v687, 4294901760
    %v689 = vsub.f32 %v687, %v688
    %v690 = vand.u32 %v689, 4294901760
    %691 = vmatpush1.xpose.msra.mxu0 %v690
    %692 = vmatprep.subr.mxu0 0.0
    %v693 = vand.u32 %v566, 4294901760
    %v694 = vsub.f32 %v566, %v693
    %v695 = vand.u32 %v694, 4294901760
    %v696 = vsub.f32 %v694, %v695
    %v697 = vand.u32 %v696, 4294901760
    %698 = vmatpush1.xpose.msra.mxu0 %v697
    %699 = vmatprep.subr.mxu0 0.0
    %v700 = vand.u32 %v569, 4294901760
    %v701 = vsub.f32 %v569, %v700
    %v702 = vand.u32 %v701, 4294901760
    %v703 = vsub.f32 %v701, %v702
    %v704 = vand.u32 %v703, 4294901760
    %705 = vmatpush1.xpose.msra.mxu0 %v704
    %706 = vmatprep.subr.mxu0 0.0
    %v707 = vand.u32 %v572, 4294901760
    %v708 = vsub.f32 %v572, %v707
    %v709 = vand.u32 %v708, 4294901760
    %v710 = vsub.f32 %v708, %v709
    %v711 = vand.u32 %v710, 4294901760
    %712 = vmatpush1.xpose.msra.mxu0 %v711
    %713 = vmatprep.subr.mxu0 0.0
    %v714 = vand.u32 %v575, 4294901760
    %v715 = vsub.f32 %v575, %v714
    %v716 = vand.u32 %v715, 4294901760
    %v717 = vsub.f32 %v715, %v716
    %v718 = vand.u32 %v717, 4294901760
    %719 = vmatpush1.xpose.msra.mxu0 %v718
    %720 = vmatprep.subr.mxu0 0.0
    %v721 = vand.u32 %v578, 4294901760
    %v722 = vsub.f32 %v578, %v721
    %v723 = vand.u32 %v722, 4294901760
    %v724 = vsub.f32 %v722, %v723
    %v725 = vand.u32 %v724, 4294901760
    %726 = vmatpush1.xpose.msra.mxu0 %v725
    %727 = vmatprep.subr.mxu0 0.0
    %v728 = vand.u32 %v581, 4294901760
    %v729 = vsub.f32 %v581, %v728
    %v730 = vand.u32 %v729, 4294901760
    %v731 = vsub.f32 %v729, %v730
    %v732 = vand.u32 %v731, 4294901760
    %733 = vmatpush1.xpose.msra.mxu0 %v732
    %734 = vmatprep.subr.mxu0 0.0
    %v735 = vand.u32 %v584, 4294901760
    %v736 = vsub.f32 %v584, %v735
    %v737 = vand.u32 %v736, 4294901760
    %v738 = vsub.f32 %v736, %v737
    %v739 = vand.u32 %v738, 4294901760
    %740 = vmatpush1.xpose.msra.mxu0 %v739
    %741 = vmatprep.subr.mxu0 0.0
    %v742 = vand.u32 %v587, 4294901760
    %v743 = vsub.f32 %v587, %v742
    %v744 = vand.u32 %v743, 4294901760
    %v745 = vsub.f32 %v743, %v744
    %v746 = vand.u32 %v745, 4294901760
    %747 = vmatpush1.xpose.msra.mxu0 %v746
    %748 = vmatprep.subr.mxu0 0.0
    %v749 = vand.u32 %v590, 4294901760
    %v750 = vsub.f32 %v590, %v749
    %v751 = vand.u32 %v750, 4294901760
    %v752 = vsub.f32 %v750, %v751
    %v753 = vand.u32 %v752, 4294901760
    %754 = vmatpush1.xpose.msra.mxu0 %v753
    %755 = vmatprep.subr.mxu0 0.0
    %v756 = vand.u32 %v593, 4294901760
    %v757 = vsub.f32 %v593, %v756
    %v758 = vand.u32 %v757, 4294901760
    %v759 = vsub.f32 %v757, %v758
    %v760 = vand.u32 %v759, 4294901760
    %761 = vmatpush1.xpose.msra.mxu0 %v760
    %762 = vmatprep.subr.mxu0 0.0
    %v763 = vand.u32 %v596, 4294901760
    %v764 = vsub.f32 %v596, %v763
    %v765 = vand.u32 %v764, 4294901760
    %v766 = vsub.f32 %v764, %v765
    %v767 = vand.u32 %v766, 4294901760
    %768 = vmatpush1.xpose.msra.mxu0 %v767
    %769 = vmatprep.subr.mxu0 0.0
    %770 = vmatpush1.xpose.msra.mxu0 0.0
    %771 = vmatprep.subr.mxu0 0.0
    %772 = vmatpush1.xpose.msra.mxu0 0.0
    %773 = vmatprep.subr.mxu0 0.0
    %774 = vmatpush1.xpose.msra.mxu0 0.0
    %775 = vmatprep.subr.mxu0 0.0
    %776 = vmatpush1.xpose.msra.mxu0 0.0
    %777 = vmatprep.subr.mxu0 0.0
    %778 = vmatpush1.xpose.msra.mxu0 0.0
    %779 = vmatprep.subr.mxu0 0.0
    %780 = vmatpush1.xpose.msra.mxu0 0.0
    %781 = vmatprep.subr.mxu0 0.0
    %782 = vmatpush1.xpose.msra.mxu0 0.0
    %783 = vmatprep.subr.mxu0 0.0
    %784 = vmatpush1.xpose.msra.mxu0 0.0
    %785 = vmatprep.subr.mxu0 0.0
    %786 = vmatpush1.xpose.msra.mxu0 0.0
    %787 = vmatprep.subr.mxu0 0.0
    %788 = vmatpush1.xpose.msra.mxu0 0.0
    %789 = vmatprep.subr.mxu0 0.0
    %790 = vmatpush1.xpose.msra.mxu0 0.0
    %791 = vmatprep.subr.mxu0 0.0
    %792 = vmatpush1.xpose.msra.mxu0 0.0
    %793 = vmatprep.subr.mxu0 0.0
    %794 = vmatpush1.xpose.msra.mxu0 0.0
    %795 = vmatprep.subr.mxu0 0.0
    %796 = vmatpush1.xpose.msra.mxu0 0.0
    %797 = vmatprep.subr.mxu0 0.0
    %798 = vmatpush1.xpose.msra.mxu0 0.0
    %799 = vmatprep.subr.mxu0 0.0
    %800 = vmatpush1.xpose.msra.mxu0 0.0
    %801 = vmatprep.subr.mxu0 0.0
    %802 = vmatpush1.xpose.msra.mxu0 0.0
    %803 = vmatprep.subr.mxu0 0.0
    %804 = vmatpush1.xpose.msra.mxu0 0.0
    %805 = vmatprep.subr.mxu0 0.0
    %806 = vmatpush1.xpose.msra.mxu0 0.0
    %807 = vmatprep.subr.mxu0 0.0
    %808 = vmatpush1.xpose.msra.mxu0 0.0
    %809 = vmatprep.mubr.f32.mxu0 0.0
    %v810 = vand.u32 %v560, 4294901760
    %811 = vmatmul.mubr.f32.gmra.mrb[0].mxu0 %v810
    %v812 = vpop.f32.mrb[0].mxu0
    %v813 = vadd.f32 %v682, %v812
    %v814 = vpop.f32.mrb[0].mxu0
    %815 = vdwg.mxu0
    %816 = vmatprep.subr.mxu0 0.0
    %v817 = vand.u32 %v563, 4294901760
    %v818 = vsub.f32 %v563, %v817
    %819 = vmatpush1.xpose.msra.mxu0 %v818
    %820 = vmatprep.subr.mxu0 0.0
    %v821 = vand.u32 %v566, 4294901760
    %v822 = vsub.f32 %v566, %v821
    %823 = vmatpush1.xpose.msra.mxu0 %v822
    %824 = vmatprep.subr.mxu0 0.0
    %v825 = vand.u32 %v569, 4294901760
    %v826 = vsub.f32 %v569, %v825
    %827 = vmatpush1.xpose.msra.mxu0 %v826
    %828 = vmatprep.subr.mxu0 0.0
    %v829 = vand.u32 %v572, 4294901760
    %v830 = vsub.f32 %v572, %v829
    %831 = vmatpush1.xpose.msra.mxu0 %v830
    %832 = vmatprep.subr.mxu0 0.0
    %v833 = vand.u32 %v575, 4294901760
    %v834 = vsub.f32 %v575, %v833
    %835 = vmatpush1.xpose.msra.mxu0 %v834
    %836 = vmatprep.subr.mxu0 0.0
    %v837 = vand.u32 %v578, 4294901760
    %v838 = vsub.f32 %v578, %v837
    %839 = vmatpush1.xpose.msra.mxu0 %v838
    %840 = vmatprep.subr.mxu0 0.0
    %v841 = vand.u32 %v581, 4294901760
    %v842 = vsub.f32 %v581, %v841
    %843 = vmatpush1.xpose.msra.mxu0 %v842
    %844 = vmatprep.subr.mxu0 0.0
    %v845 = vand.u32 %v584, 4294901760
    %v846 = vsub.f32 %v584, %v845
    %847 = vmatpush1.xpose.msra.mxu0 %v846
    %848 = vmatprep.subr.mxu0 0.0
    %v849 = vand.u32 %v587, 4294901760
    %v850 = vsub.f32 %v587, %v849
    %851 = vmatpush1.xpose.msra.mxu0 %v850
    %852 = vmatprep.subr.mxu0 0.0
    %v853 = vand.u32 %v590, 4294901760
    %v854 = vsub.f32 %v590, %v853
    %855 = vmatpush1.xpose.msra.mxu0 %v854
    %856 = vmatprep.subr.mxu0 0.0
    %v857 = vand.u32 %v593, 4294901760
    %v858 = vsub.f32 %v593, %v857
    %859 = vmatpush1.xpose.msra.mxu0 %v858
    %860 = vmatprep.subr.mxu0 0.0
    %v861 = vand.u32 %v596, 4294901760
    %v862 = vsub.f32 %v596, %v861
    %863 = vmatpush1.xpose.msra.mxu0 %v862
    %864 = vmatprep.subr.mxu0 0.0
    %865 = vmatpush1.xpose.msra.mxu0 0.0
    %866 = vmatprep.subr.mxu0 0.0
    %867 = vmatpush1.xpose.msra.mxu0 0.0
    %868 = vmatprep.subr.mxu0 0.0
    %869 = vmatpush1.xpose.msra.mxu0 0.0
    %870 = vmatprep.subr.mxu0 0.0
    %871 = vmatpush1.xpose.msra.mxu0 0.0
    %872 = vmatprep.subr.mxu0 0.0
    %873 = vmatpush1.xpose.msra.mxu0 0.0
    %874 = vmatprep.subr.mxu0 0.0
    %875 = vmatpush1.xpose.msra.mxu0 0.0
    %876 = vmatprep.subr.mxu0 0.0
    %877 = vmatpush1.xpose.msra.mxu0 0.0
    %878 = vmatprep.subr.mxu0 0.0
    %879 = vmatpush1.xpose.msra.mxu0 0.0
    %880 = vmatprep.subr.mxu0 0.0
    %881 = vmatpush1.xpose.msra.mxu0 0.0
    %882 = vmatprep.subr.mxu0 0.0
    %883 = vmatpush1.xpose.msra.mxu0 0.0
    %884 = vmatprep.subr.mxu0 0.0
    %885 = vmatpush1.xpose.msra.mxu0 0.0
    %886 = vmatprep.subr.mxu0 0.0
    %887 = vmatpush1.xpose.msra.mxu0 0.0
    %888 = vmatprep.subr.mxu0 0.0
    %889 = vmatpush1.xpose.msra.mxu0 0.0
    %890 = vmatprep.subr.mxu0 0.0
    %891 = vmatpush1.xpose.msra.mxu0 0.0
    %892 = vmatprep.subr.mxu0 0.0
    %893 = vmatpush1.xpose.msra.mxu0 0.0
    %894 = vmatprep.subr.mxu0 0.0
    %895 = vmatpush1.xpose.msra.mxu0 0.0
    %896 = vmatprep.subr.mxu0 0.0
    %897 = vmatpush1.xpose.msra.mxu0 0.0
    %898 = vmatprep.subr.mxu0 0.0
    %899 = vmatpush1.xpose.msra.mxu0 0.0
    %900 = vmatprep.subr.mxu0 0.0
    %901 = vmatpush1.xpose.msra.mxu0 0.0
    %902 = vmatprep.subr.mxu0 0.0
    %903 = vmatpush1.xpose.msra.mxu0 0.0
    %904 = vmatprep.mubr.f32.mxu0 0.0
    %v905 = vand.u32 %v560, 4294901760
    %v906 = vsub.f32 %v560, %v905
    %907 = vmatmul.mubr.f32.gmra.mrb[0].mxu0 %v906
    %v908 = vpop.f32.mrb[0].mxu0
    %v909 = vadd.f32 %v813, %v908
    %v910 = vpop.f32.mrb[0].mxu0
    %911 = vdwg.mxu0
    %912 = vmatprep.subr.mxu0 0.0
    %v913 = vand.u32 %v563, 4294901760
    %914 = vmatpush1.xpose.msra.mxu0 %v913
    %915 = vmatprep.subr.mxu0 0.0
    %v916 = vand.u32 %v566, 4294901760
    %917 = vmatpush1.xpose.msra.mxu0 %v916
    %918 = vmatprep.subr.mxu0 0.0
    %v919 = vand.u32 %v569, 4294901760
    %920 = vmatpush1.xpose.msra.mxu0 %v919
    %921 = vmatprep.subr.mxu0 0.0
    %v922 = vand.u32 %v572, 4294901760
    %923 = vmatpush1.xpose.msra.mxu0 %v922
    %924 = vmatprep.subr.mxu0 0.0
    %v925 = vand.u32 %v575, 4294901760
    %926 = vmatpush1.xpose.msra.mxu0 %v925
    %927 = vmatprep.subr.mxu0 0.0
    %v928 = vand.u32 %v578, 4294901760
    %929 = vmatpush1.xpose.msra.mxu0 %v928
    %930 = vmatprep.subr.mxu0 0.0
    %v931 = vand.u32 %v581, 4294901760
    %932 = vmatpush1.xpose.msra.mxu0 %v931
    %933 = vmatprep.subr.mxu0 0.0
    %v934 = vand.u32 %v584, 4294901760
    %935 = vmatpush1.xpose.msra.mxu0 %v934
    %936 = vmatprep.subr.mxu0 0.0
    %v937 = vand.u32 %v587, 4294901760
    %938 = vmatpush1.xpose.msra.mxu0 %v937
    %939 = vmatprep.subr.mxu0 0.0
    %v940 = vand.u32 %v590, 4294901760
    %941 = vmatpush1.xpose.msra.mxu0 %v940
    %942 = vmatprep.subr.mxu0 0.0
    %v943 = vand.u32 %v593, 4294901760
    %944 = vmatpush1.xpose.msra.mxu0 %v943
    %945 = vmatprep.subr.mxu0 0.0
    %v946 = vand.u32 %v596, 4294901760
    %947 = vmatpush1.xpose.msra.mxu0 %v946
    %948 = vmatprep.subr.mxu0 0.0
    %949 = vmatpush1.xpose.msra.mxu0 0.0
    %950 = vmatprep.subr.mxu0 0.0
    %951 = vmatpush1.xpose.msra.mxu0 0.0
    %952 = vmatprep.subr.mxu0 0.0
    %953 = vmatpush1.xpose.msra.mxu0 0.0
    %954 = vmatprep.subr.mxu0 0.0
    %955 = vmatpush1.xpose.msra.mxu0 0.0
    %956 = vmatprep.subr.mxu0 0.0
    %957 = vmatpush1.xpose.msra.mxu0 0.0
    %958 = vmatprep.subr.mxu0 0.0
    %959 = vmatpush1.xpose.msra.mxu0 0.0
    %960 = vmatprep.subr.mxu0 0.0
    %961 = vmatpush1.xpose.msra.mxu0 0.0
    %962 = vmatprep.subr.mxu0 0.0
    %963 = vmatpush1.xpose.msra.mxu0 0.0
    %964 = vmatprep.subr.mxu0 0.0
    %965 = vmatpush1.xpose.msra.mxu0 0.0
    %966 = vmatprep.subr.mxu0 0.0
    %967 = vmatpush1.xpose.msra.mxu0 0.0
    %968 = vmatprep.subr.mxu0 0.0
    %969 = vmatpush1.xpose.msra.mxu0 0.0
    %970 = vmatprep.subr.mxu0 0.0
    %971 = vmatpush1.xpose.msra.mxu0 0.0
    %972 = vmatprep.subr.mxu0 0.0
    %973 = vmatpush1.xpose.msra.mxu0 0.0
    %974 = vmatprep.subr.mxu0 0.0
    %975 = vmatpush1.xpose.msra.mxu0 0.0
    %976 = vmatprep.subr.mxu0 0.0
    %977 = vmatpush1.xpose.msra.mxu0 0.0
    %978 = vmatprep.subr.mxu0 0.0
    %979 = vmatpush1.xpose.msra.mxu0 0.0
    %980 = vmatprep.subr.mxu0 0.0
    %981 = vmatpush1.xpose.msra.mxu0 0.0
    %982 = vmatprep.subr.mxu0 0.0
    %983 = vmatpush1.xpose.msra.mxu0 0.0
    %984 = vmatprep.subr.mxu0 0.0
    %985 = vmatpush1.xpose.msra.mxu0 0.0
    %986 = vmatprep.subr.mxu0 0.0
    %987 = vmatpush1.xpose.msra.mxu0 0.0
    %988 = vmatprep.mubr.f32.mxu0 0.0
    %v989 = vand.u32 %v560, 4294901760
    %v990 = vsub.f32 %v560, %v989
    %v991 = vand.u32 %v990, 4294901760
    %992 = vmatmul.mubr.f32.gmra.mrb[0].mxu0 %v991
    %v993 = vpop.f32.mrb[0].mxu0
    %v994 = vadd.f32 %v909, %v993
    %v995 = vpop.f32.mrb[0].mxu0
    %996 = vdwg.mxu0
    %997 = vmatprep.subr.mxu0 0.0
    %v998 = vand.u32 %v563, 4294901760
    %v999 = vsub.f32 %v563, %v998
    %v1000 = vand.u32 %v999, 4294901760
    %1001 = vmatpush1.xpose.msra.mxu0 %v1000
    %1002 = vmatprep.subr.mxu0 0.0
    %v1003 = vand.u32 %v566, 4294901760
    %v1004 = vsub.f32 %v566, %v1003
    %v1005 = vand.u32 %v1004, 4294901760
    %1006 = vmatpush1.xpose.msra.mxu0 %v1005
    %1007 = vmatprep.subr.mxu0 0.0
    %v1008 = vand.u32 %v569, 4294901760
    %v1009 = vsub.f32 %v569, %v1008
    %v1010 = vand.u32 %v1009, 4294901760
    %1011 = vmatpush1.xpose.msra.mxu0 %v1010
    %1012 = vmatprep.subr.mxu0 0.0
    %v1013 = vand.u32 %v572, 4294901760
    %v1014 = vsub.f32 %v572, %v1013
    %v1015 = vand.u32 %v1014, 4294901760
    %1016 = vmatpush1.xpose.msra.mxu0 %v1015
    %1017 = vmatprep.subr.mxu0 0.0
    %v1018 = vand.u32 %v575, 4294901760
    %v1019 = vsub.f32 %v575, %v1018
    %v1020 = vand.u32 %v1019, 4294901760
    %1021 = vmatpush1.xpose.msra.mxu0 %v1020
    %1022 = vmatprep.subr.mxu0 0.0
    %v1023 = vand.u32 %v578, 4294901760
    %v1024 = vsub.f32 %v578, %v1023
    %v1025 = vand.u32 %v1024, 4294901760
    %1026 = vmatpush1.xpose.msra.mxu0 %v1025
    %1027 = vmatprep.subr.mxu0 0.0
    %v1028 = vand.u32 %v581, 4294901760
    %v1029 = vsub.f32 %v581, %v1028
    %v1030 = vand.u32 %v1029, 4294901760
    %1031 = vmatpush1.xpose.msra.mxu0 %v1030
    %1032 = vmatprep.subr.mxu0 0.0
    %v1033 = vand.u32 %v584, 4294901760
    %v1034 = vsub.f32 %v584, %v1033
    %v1035 = vand.u32 %v1034, 4294901760
    %1036 = vmatpush1.xpose.msra.mxu0 %v1035
    %1037 = vmatprep.subr.mxu0 0.0
    %v1038 = vand.u32 %v587, 4294901760
    %v1039 = vsub.f32 %v587, %v1038
    %v1040 = vand.u32 %v1039, 4294901760
    %1041 = vmatpush1.xpose.msra.mxu0 %v1040
    %1042 = vmatprep.subr.mxu0 0.0
    %v1043 = vand.u32 %v590, 4294901760
    %v1044 = vsub.f32 %v590, %v1043
    %v1045 = vand.u32 %v1044, 4294901760
    %1046 = vmatpush1.xpose.msra.mxu0 %v1045
    %1047 = vmatprep.subr.mxu0 0.0
    %v1048 = vand.u32 %v593, 4294901760
    %v1049 = vsub.f32 %v593, %v1048
    %v1050 = vand.u32 %v1049, 4294901760
    %1051 = vmatpush1.xpose.msra.mxu0 %v1050
    %1052 = vmatprep.subr.mxu0 0.0
    %v1053 = vand.u32 %v596, 4294901760
    %v1054 = vsub.f32 %v596, %v1053
    %v1055 = vand.u32 %v1054, 4294901760
    %1056 = vmatpush1.xpose.msra.mxu0 %v1055
    %1057 = vmatprep.subr.mxu0 0.0
    %1058 = vmatpush1.xpose.msra.mxu0 0.0
    %1059 = vmatprep.subr.mxu0 0.0
    %1060 = vmatpush1.xpose.msra.mxu0 0.0
    %1061 = vmatprep.subr.mxu0 0.0
    %1062 = vmatpush1.xpose.msra.mxu0 0.0
    %1063 = vmatprep.subr.mxu0 0.0
    %1064 = vmatpush1.xpose.msra.mxu0 0.0
    %1065 = vmatprep.subr.mxu0 0.0
    %1066 = vmatpush1.xpose.msra.mxu0 0.0
    %1067 = vmatprep.subr.mxu0 0.0
    %1068 = vmatpush1.xpose.msra.mxu0 0.0
    %1069 = vmatprep.subr.mxu0 0.0
    %1070 = vmatpush1.xpose.msra.mxu0 0.0
    %1071 = vmatprep.subr.mxu0 0.0
    %1072 = vmatpush1.xpose.msra.mxu0 0.0
    %1073 = vmatprep.subr.mxu0 0.0
    %1074 = vmatpush1.xpose.msra.mxu0 0.0
    %1075 = vmatprep.subr.mxu0 0.0
    %1076 = vmatpush1.xpose.msra.mxu0 0.0
    %1077 = vmatprep.subr.mxu0 0.0
    %1078 = vmatpush1.xpose.msra.mxu0 0.0
    %1079 = vmatprep.subr.mxu0 0.0
    %1080 = vmatpush1.xpose.msra.mxu0 0.0
    %1081 = vmatprep.subr.mxu0 0.0
    %1082 = vmatpush1.xpose.msra.mxu0 0.0
    %1083 = vmatprep.subr.mxu0 0.0
    %1084 = vmatpush1.xpose.msra.mxu0 0.0
    %1085 = vmatprep.subr.mxu0 0.0
    %1086 = vmatpush1.xpose.msra.mxu0 0.0
    %1087 = vmatprep.subr.mxu0 0.0
    %1088 = vmatpush1.xpose.msra.mxu0 0.0
    %1089 = vmatprep.subr.mxu0 0.0
    %1090 = vmatpush1.xpose.msra.mxu0 0.0
    %1091 = vmatprep.subr.mxu0 0.0
    %1092 = vmatpush1.xpose.msra.mxu0 0.0
    %1093 = vmatprep.subr.mxu0 0.0
    %1094 = vmatpush1.xpose.msra.mxu0 0.0
    %1095 = vmatprep.subr.mxu0 0.0
    %1096 = vmatpush1.xpose.msra.mxu0 0.0
    %1097 = vmatprep.mubr.f32.mxu0 0.0
    %v1098 = vand.u32 %v560, 4294901760
    %1099 = vmatmul.mubr.f32.gmra.mrb[0].mxu0 %v1098
    %v1100 = vpop.f32.mrb[0].mxu0
    %v1101 = vadd.f32 %v994, %v1100
    %v1102 = vpop.f32.mrb[0].mxu0
    %1103 = vdwg.mxu0
    %1104 = vmatprep.subr.mxu0 0.0
    %v1105 = vand.u32 %v563, 4294901760
    %1106 = vmatpush1.xpose.msra.mxu0 %v1105
    %1107 = vmatprep.subr.mxu0 0.0
    %v1108 = vand.u32 %v566, 4294901760
    %1109 = vmatpush1.xpose.msra.mxu0 %v1108
    %1110 = vmatprep.subr.mxu0 0.0
    %v1111 = vand.u32 %v569, 4294901760
    %1112 = vmatpush1.xpose.msra.mxu0 %v1111
    %1113 = vmatprep.subr.mxu0 0.0
    %v1114 = vand.u32 %v572, 4294901760
    %1115 = vmatpush1.xpose.msra.mxu0 %v1114
    %1116 = vmatprep.subr.mxu0 0.0
    %v1117 = vand.u32 %v575, 4294901760
    %1118 = vmatpush1.xpose.msra.mxu0 %v1117
    %1119 = vmatprep.subr.mxu0 0.0
    %v1120 = vand.u32 %v578, 4294901760
    %1121 = vmatpush1.xpose.msra.mxu0 %v1120
    %1122 = vmatprep.subr.mxu0 0.0
    %v1123 = vand.u32 %v581, 4294901760
    %1124 = vmatpush1.xpose.msra.mxu0 %v1123
    %1125 = vmatprep.subr.mxu0 0.0
    %v1126 = vand.u32 %v584, 4294901760
    %1127 = vmatpush1.xpose.msra.mxu0 %v1126
    %1128 = vmatprep.subr.mxu0 0.0
    %v1129 = vand.u32 %v587, 4294901760
    %1130 = vmatpush1.xpose.msra.mxu0 %v1129
    %1131 = vmatprep.subr.mxu0 0.0
    %v1132 = vand.u32 %v590, 4294901760
    %1133 = vmatpush1.xpose.msra.mxu0 %v1132
    %1134 = vmatprep.subr.mxu0 0.0
    %v1135 = vand.u32 %v593, 4294901760
    %1136 = vmatpush1.xpose.msra.mxu0 %v1135
    %1137 = vmatprep.subr.mxu0 0.0
    %v1138 = vand.u32 %v596, 4294901760
    %1139 = vmatpush1.xpose.msra.mxu0 %v1138
    %1140 = vmatprep.subr.mxu0 0.0
    %1141 = vmatpush1.xpose.msra.mxu0 0.0
    %1142 = vmatprep.subr.mxu0 0.0
    %1143 = vmatpush1.xpose.msra.mxu0 0.0
    %1144 = vmatprep.subr.mxu0 0.0
    %1145 = vmatpush1.xpose.msra.mxu0 0.0
    %1146 = vmatprep.subr.mxu0 0.0
    %1147 = vmatpush1.xpose.msra.mxu0 0.0
    %1148 = vmatprep.subr.mxu0 0.0
    %1149 = vmatpush1.xpose.msra.mxu0 0.0
    %1150 = vmatprep.subr.mxu0 0.0
    %1151 = vmatpush1.xpose.msra.mxu0 0.0
    %1152 = vmatprep.subr.mxu0 0.0
    %1153 = vmatpush1.xpose.msra.mxu0 0.0
    %1154 = vmatprep.subr.mxu0 0.0
    %1155 = vmatpush1.xpose.msra.mxu0 0.0
    %1156 = vmatprep.subr.mxu0 0.0
    %1157 = vmatpush1.xpose.msra.mxu0 0.0
    %1158 = vmatprep.subr.mxu0 0.0
    %1159 = vmatpush1.xpose.msra.mxu0 0.0
    %1160 = vmatprep.subr.mxu0 0.0
    %1161 = vmatpush1.xpose.msra.mxu0 0.0
    %1162 = vmatprep.subr.mxu0 0.0
    %1163 = vmatpush1.xpose.msra.mxu0 0.0
    %1164 = vmatprep.subr.mxu0 0.0
    %1165 = vmatpush1.xpose.msra.mxu0 0.0
    %1166 = vmatprep.subr.mxu0 0.0
    %1167 = vmatpush1.xpose.msra.mxu0 0.0
    %1168 = vmatprep.subr.mxu0 0.0
    %1169 = vmatpush1.xpose.msra.mxu0 0.0
    %1170 = vmatprep.subr.mxu0 0.0
    %1171 = vmatpush1.xpose.msra.mxu0 0.0
    %1172 = vmatprep.subr.mxu0 0.0
    %1173 = vmatpush1.xpose.msra.mxu0 0.0
    %1174 = vmatprep.subr.mxu0 0.0
    %1175 = vmatpush1.xpose.msra.mxu0 0.0
    %1176 = vmatprep.subr.mxu0 0.0
    %1177 = vmatpush1.xpose.msra.mxu0 0.0
    %1178 = vmatprep.subr.mxu0 0.0
    %1179 = vmatpush1.xpose.msra.mxu0 0.0
    %1180 = vmatprep.mubr.f32.mxu0 0.0
    %v1181 = vand.u32 %v560, 4294901760
    %1182 = vmatmul.mubr.f32.gmra.mrb[0].mxu0 %v1181
    %v1183 = vpop.f32.mrb[0].mxu0
    %v1184 = vadd.f32 %v1101, %v1183
    %v1185 = vpop.f32.mrb[0].mxu0
    %1186 = vdwg.mxu0
    %1188 = vrot.lane.b32.xlu0 %v1184, 96
    %v1189 = vpop.permute.xlu0 %1188
    %vm1190 = vcmask 64512
    %v1191 = vsel %vm1190, %v1184, 0
    %v1193 = vsel %vm1190, %v1189, 0
    %1195 = vmatprep.subr.mxu0 0.0
    %v1196 = vand.u32 %v1193, 4294901760
    %1197 = vmatpush1.xpose.msra.mxu0 %v1196
    %1198 = vmatprep.subr.mxu0 0.0
    %1199 = vmatpush1.xpose.msra.mxu0 0.0
    %1200 = vmatprep.subr.mxu0 0.0
    %1201 = vmatpush1.xpose.msra.mxu0 0.0
    %1202 = vmatprep.subr.mxu0 0.0
    %1203 = vmatpush1.xpose.msra.mxu0 0.0
    %1204 = vmatprep.subr.mxu0 0.0
    %1205 = vmatpush1.xpose.msra.mxu0 0.0
    %1206 = vmatprep.subr.mxu0 0.0
    %1207 = vmatpush1.xpose.msra.mxu0 0.0
    %1208 = vmatprep.subr.mxu0 0.0
    %1209 = vmatpush1.xpose.msra.mxu0 0.0
    %1210 = vmatprep.subr.mxu0 0.0
    %1211 = vmatpush1.xpose.msra.mxu0 0.0
    %1212 = vmatprep.subr.mxu0 0.0
    %1213 = vmatpush1.xpose.msra.mxu0 0.0
    %1214 = vmatprep.subr.mxu0 0.0
    %1215 = vmatpush1.xpose.msra.mxu0 0.0
    %1216 = vmatprep.subr.mxu0 0.0
    %1217 = vmatpush1.xpose.msra.mxu0 0.0
    %1218 = vmatprep.subr.mxu0 0.0
    %1219 = vmatpush1.xpose.msra.mxu0 0.0
    %1220 = vmatprep.subr.mxu0 0.0
    %1221 = vmatpush1.xpose.msra.mxu0 0.0
    %1222 = vmatprep.subr.mxu0 0.0
    %1223 = vmatpush1.xpose.msra.mxu0 0.0
    %1224 = vmatprep.subr.mxu0 0.0
    %1225 = vmatpush1.xpose.msra.mxu0 0.0
    %1226 = vmatprep.subr.mxu0 0.0
    %1227 = vmatpush1.xpose.msra.mxu0 0.0
    %1228 = vmatprep.subr.mxu0 0.0
    %1229 = vmatpush1.xpose.msra.mxu0 0.0
    %1230 = vmatprep.subr.mxu0 0.0
    %1231 = vmatpush1.xpose.msra.mxu0 0.0
    %1232 = vmatprep.subr.mxu0 0.0
    %1233 = vmatpush1.xpose.msra.mxu0 0.0
    %1234 = vmatprep.subr.mxu0 0.0
    %1235 = vmatpush1.xpose.msra.mxu0 0.0
    %1236 = vmatprep.subr.mxu0 0.0
    %1237 = vmatpush1.xpose.msra.mxu0 0.0
    %1238 = vmatprep.subr.mxu0 0.0
    %1239 = vmatpush1.xpose.msra.mxu0 0.0
    %1240 = vmatprep.subr.mxu0 0.0
    %1241 = vmatpush1.xpose.msra.mxu0 0.0
    %1242 = vmatprep.subr.mxu0 0.0
    %1243 = vmatpush1.xpose.msra.mxu0 0.0
    %1244 = vmatprep.subr.mxu0 0.0
    %1245 = vmatpush1.xpose.msra.mxu0 0.0
    %1246 = vmatprep.subr.mxu0 0.0
    %1247 = vmatpush1.xpose.msra.mxu0 0.0
    %1248 = vmatprep.subr.mxu0 0.0
    %1249 = vmatpush1.xpose.msra.mxu0 0.0
    %1250 = vmatprep.subr.mxu0 0.0
    %1251 = vmatpush1.xpose.msra.mxu0 0.0
    %1252 = vmatprep.subr.mxu0 0.0
    %1253 = vmatpush1.xpose.msra.mxu0 0.0
    %1254 = vmatprep.subr.mxu0 0.0
    %1255 = vmatpush1.xpose.msra.mxu0 0.0
    %1256 = vmatprep.subr.mxu0 0.0
    %1257 = vmatpush1.xpose.msra.mxu0 0.0
    %1258 = vmatprep.subr.mxu0 0.0
    %1259 = vmatpush1.xpose.msra.mxu0 0.0
    %1260 = vmatprep.mubr.f32.mxu0 0.0
    %v1261 = vand.u32 %v1191, 4294901760
    %v1262 = vsub.f32 %v1191, %v1261
    %v1263 = vand.u32 %v1262, 4294901760
    %v1264 = vsub.f32 %v1262, %v1263
    %v1265 = vand.u32 %v1264, 4294901760
    %1266 = vmatmul.mubr.f32.gmra.mrb[0].mxu0 %v1265
    %v1267 = vpop.f32.mrb[0].mxu0
    %v1268 = vadd.f32 0.0, %v1267
    %v1269 = vpop.f32.mrb[0].mxu0
    %1270 = vdwg.mxu0
    %1271 = vmatprep.subr.mxu0 0.0
    %v1272 = vand.u32 %v1193, 4294901760
    %v1273 = vsub.f32 %v1193, %v1272
    %v1274 = vand.u32 %v1273, 4294901760
    %v1275 = vsub.f32 %v1273, %v1274
    %v1276 = vand.u32 %v1275, 4294901760
    %1277 = vmatpush1.xpose.msra.mxu0 %v1276
    %1278 = vmatprep.subr.mxu0 0.0
    %1279 = vmatpush1.xpose.msra.mxu0 0.0
    %1280 = vmatprep.subr.mxu0 0.0
    %1281 = vmatpush1.xpose.msra.mxu0 0.0
    %1282 = vmatprep.subr.mxu0 0.0
    %1283 = vmatpush1.xpose.msra.mxu0 0.0
    %1284 = vmatprep.subr.mxu0 0.0
    %1285 = vmatpush1.xpose.msra.mxu0 0.0
    %1286 = vmatprep.subr.mxu0 0.0
    %1287 = vmatpush1.xpose.msra.mxu0 0.0
    %1288 = vmatprep.subr.mxu0 0.0
    %1289 = vmatpush1.xpose.msra.mxu0 0.0
    %1290 = vmatprep.subr.mxu0 0.0
    %1291 = vmatpush1.xpose.msra.mxu0 0.0
    %1292 = vmatprep.subr.mxu0 0.0
    %1293 = vmatpush1.xpose.msra.mxu0 0.0
    %1294 = vmatprep.subr.mxu0 0.0
    %1295 = vmatpush1.xpose.msra.mxu0 0.0
    %1296 = vmatprep.subr.mxu0 0.0
    %1297 = vmatpush1.xpose.msra.mxu0 0.0
    %1298 = vmatprep.subr.mxu0 0.0
    %1299 = vmatpush1.xpose.msra.mxu0 0.0
    %1300 = vmatprep.subr.mxu0 0.0
    %1301 = vmatpush1.xpose.msra.mxu0 0.0
    %1302 = vmatprep.subr.mxu0 0.0
    %1303 = vmatpush1.xpose.msra.mxu0 0.0
    %1304 = vmatprep.subr.mxu0 0.0
    %1305 = vmatpush1.xpose.msra.mxu0 0.0
    %1306 = vmatprep.subr.mxu0 0.0
    %1307 = vmatpush1.xpose.msra.mxu0 0.0
    %1308 = vmatprep.subr.mxu0 0.0
    %1309 = vmatpush1.xpose.msra.mxu0 0.0
    %1310 = vmatprep.subr.mxu0 0.0
    %1311 = vmatpush1.xpose.msra.mxu0 0.0
    %1312 = vmatprep.subr.mxu0 0.0
    %1313 = vmatpush1.xpose.msra.mxu0 0.0
    %1314 = vmatprep.subr.mxu0 0.0
    %1315 = vmatpush1.xpose.msra.mxu0 0.0
    %1316 = vmatprep.subr.mxu0 0.0
    %1317 = vmatpush1.xpose.msra.mxu0 0.0
    %1318 = vmatprep.subr.mxu0 0.0
    %1319 = vmatpush1.xpose.msra.mxu0 0.0
    %1320 = vmatprep.subr.mxu0 0.0
    %1321 = vmatpush1.xpose.msra.mxu0 0.0
    %1322 = vmatprep.subr.mxu0 0.0
    %1323 = vmatpush1.xpose.msra.mxu0 0.0
    %1324 = vmatprep.subr.mxu0 0.0
    %1325 = vmatpush1.xpose.msra.mxu0 0.0
    %1326 = vmatprep.subr.mxu0 0.0
    %1327 = vmatpush1.xpose.msra.mxu0 0.0
    %1328 = vmatprep.subr.mxu0 0.0
    %1329 = vmatpush1.xpose.msra.mxu0 0.0
    %1330 = vmatprep.subr.mxu0 0.0
    %1331 = vmatpush1.xpose.msra.mxu0 0.0
    %1332 = vmatprep.subr.mxu0 0.0
    %1333 = vmatpush1.xpose.msra.mxu0 0.0
    %1334 = vmatprep.subr.mxu0 0.0
    %1335 = vmatpush1.xpose.msra.mxu0 0.0
    %1336 = vmatprep.subr.mxu0 0.0
    %1337 = vmatpush1.xpose.msra.mxu0 0.0
    %1338 = vmatprep.subr.mxu0 0.0
    %1339 = vmatpush1.xpose.msra.mxu0 0.0
    %1340 = vmatprep.mubr.f32.mxu0 0.0
    %v1341 = vand.u32 %v1191, 4294901760
    %1342 = vmatmul.mubr.f32.gmra.mrb[0].mxu0 %v1341
    %v1343 = vpop.f32.mrb[0].mxu0
    %v1344 = vadd.f32 %v1268, %v1343
    %v1345 = vpop.f32.mrb[0].mxu0
    %1346 = vdwg.mxu0
    %1347 = vmatprep.subr.mxu0 0.0
    %v1348 = vand.u32 %v1193, 4294901760
    %v1349 = vsub.f32 %v1193, %v1348
    %1350 = vmatpush1.xpose.msra.mxu0 %v1349
    %1351 = vmatprep.subr.mxu0 0.0
    %1352 = vmatpush1.xpose.msra.mxu0 0.0
    %1353 = vmatprep.subr.mxu0 0.0
    %1354 = vmatpush1.xpose.msra.mxu0 0.0
    %1355 = vmatprep.subr.mxu0 0.0
    %1356 = vmatpush1.xpose.msra.mxu0 0.0
    %1357 = vmatprep.subr.mxu0 0.0
    %1358 = vmatpush1.xpose.msra.mxu0 0.0
    %1359 = vmatprep.subr.mxu0 0.0
    %1360 = vmatpush1.xpose.msra.mxu0 0.0
    %1361 = vmatprep.subr.mxu0 0.0
    %1362 = vmatpush1.xpose.msra.mxu0 0.0
    %1363 = vmatprep.subr.mxu0 0.0
    %1364 = vmatpush1.xpose.msra.mxu0 0.0
    %1365 = vmatprep.subr.mxu0 0.0
    %1366 = vmatpush1.xpose.msra.mxu0 0.0
    %1367 = vmatprep.subr.mxu0 0.0
    %1368 = vmatpush1.xpose.msra.mxu0 0.0
    %1369 = vmatprep.subr.mxu0 0.0
    %1370 = vmatpush1.xpose.msra.mxu0 0.0
    %1371 = vmatprep.subr.mxu0 0.0
    %1372 = vmatpush1.xpose.msra.mxu0 0.0
    %1373 = vmatprep.subr.mxu0 0.0
    %1374 = vmatpush1.xpose.msra.mxu0 0.0
    %1375 = vmatprep.subr.mxu0 0.0
    %1376 = vmatpush1.xpose.msra.mxu0 0.0
    %1377 = vmatprep.subr.mxu0 0.0
    %1378 = vmatpush1.xpose.msra.mxu0 0.0
    %1379 = vmatprep.subr.mxu0 0.0
    %1380 = vmatpush1.xpose.msra.mxu0 0.0
    %1381 = vmatprep.subr.mxu0 0.0
    %1382 = vmatpush1.xpose.msra.mxu0 0.0
    %1383 = vmatprep.subr.mxu0 0.0
    %1384 = vmatpush1.xpose.msra.mxu0 0.0
    %1385 = vmatprep.subr.mxu0 0.0
    %1386 = vmatpush1.xpose.msra.mxu0 0.0
    %1387 = vmatprep.subr.mxu0 0.0
    %1388 = vmatpush1.xpose.msra.mxu0 0.0
    %1389 = vmatprep.subr.mxu0 0.0
    %1390 = vmatpush1.xpose.msra.mxu0 0.0
    %1391 = vmatprep.subr.mxu0 0.0
    %1392 = vmatpush1.xpose.msra.mxu0 0.0
    %1393 = vmatprep.subr.mxu0 0.0
    %1394 = vmatpush1.xpose.msra.mxu0 0.0
    %1395 = vmatprep.subr.mxu0 0.0
    %1396 = vmatpush1.xpose.msra.mxu0 0.0
    %1397 = vmatprep.subr.mxu0 0.0
    %1398 = vmatpush1.xpose.msra.mxu0 0.0
    %1399 = vmatprep.subr.mxu0 0.0
    %1400 = vmatpush1.xpose.msra.mxu0 0.0
    %1401 = vmatprep.subr.mxu0 0.0
    %1402 = vmatpush1.xpose.msra.mxu0 0.0
    %1403 = vmatprep.subr.mxu0 0.0
    %1404 = vmatpush1.xpose.msra.mxu0 0.0
    %1405 = vmatprep.subr.mxu0 0.0
    %1406 = vmatpush1.xpose.msra.mxu0 0.0
    %1407 = vmatprep.subr.mxu0 0.0
    %1408 = vmatpush1.xpose.msra.mxu0 0.0
    %1409 = vmatprep.subr.mxu0 0.0
    %1410 = vmatpush1.xpose.msra.mxu0 0.0
    %1411 = vmatprep.subr.mxu0 0.0
    %1412 = vmatpush1.xpose.msra.mxu0 0.0
    %1413 = vmatprep.mubr.f32.mxu0 0.0
    %v1414 = vand.u32 %v1191, 4294901760
    %v1415 = vsub.f32 %v1191, %v1414
    %1416 = vmatmul.mubr.f32.gmra.mrb[0].mxu0 %v1415
    %v1417 = vpop.f32.mrb[0].mxu0
    %v1418 = vadd.f32 %v1344, %v1417
    %v1419 = vpop.f32.mrb[0].mxu0
    %1420 = vdwg.mxu0
    %1421 = vmatprep.subr.mxu0 0.0
    %v1422 = vand.u32 %v1193, 4294901760
    %1423 = vmatpush1.xpose.msra.mxu0 %v1422
    %1424 = vmatprep.subr.mxu0 0.0
    %1425 = vmatpush1.xpose.msra.mxu0 0.0
    %1426 = vmatprep.subr.mxu0 0.0
    %1427 = vmatpush1.xpose.msra.mxu0 0.0
    %1428 = vmatprep.subr.mxu0 0.0
    %1429 = vmatpush1.xpose.msra.mxu0 0.0
    %1430 = vmatprep.subr.mxu0 0.0
    %1431 = vmatpush1.xpose.msra.mxu0 0.0
    %1432 = vmatprep.subr.mxu0 0.0
    %1433 = vmatpush1.xpose.msra.mxu0 0.0
    %1434 = vmatprep.subr.mxu0 0.0
    %1435 = vmatpush1.xpose.msra.mxu0 0.0
    %1436 = vmatprep.subr.mxu0 0.0
    %1437 = vmatpush1.xpose.msra.mxu0 0.0
    %1438 = vmatprep.subr.mxu0 0.0
    %1439 = vmatpush1.xpose.msra.mxu0 0.0
    %1440 = vmatprep.subr.mxu0 0.0
    %1441 = vmatpush1.xpose.msra.mxu0 0.0
    %1442 = vmatprep.subr.mxu0 0.0
    %1443 = vmatpush1.xpose.msra.mxu0 0.0
    %1444 = vmatprep.subr.mxu0 0.0
    %1445 = vmatpush1.xpose.msra.mxu0 0.0
    %1446 = vmatprep.subr.mxu0 0.0
    %1447 = vmatpush1.xpose.msra.mxu0 0.0
    %1448 = vmatprep.subr.mxu0 0.0
    %1449 = vmatpush1.xpose.msra.mxu0 0.0
    %1450 = vmatprep.subr.mxu0 0.0
    %1451 = vmatpush1.xpose.msra.mxu0 0.0
    %1452 = vmatprep.subr.mxu0 0.0
    %1453 = vmatpush1.xpose.msra.mxu0 0.0
    %1454 = vmatprep.subr.mxu0 0.0
    %1455 = vmatpush1.xpose.msra.mxu0 0.0
    %1456 = vmatprep.subr.mxu0 0.0
    %1457 = vmatpush1.xpose.msra.mxu0 0.0
    %1458 = vmatprep.subr.mxu0 0.0
    %1459 = vmatpush1.xpose.msra.mxu0 0.0
    %1460 = vmatprep.subr.mxu0 0.0
    %1461 = vmatpush1.xpose.msra.mxu0 0.0
    %1462 = vmatprep.subr.mxu0 0.0
    %1463 = vmatpush1.xpose.msra.mxu0 0.0
    %1464 = vmatprep.subr.mxu0 0.0
    %1465 = vmatpush1.xpose.msra.mxu0 0.0
    %1466 = vmatprep.subr.mxu0 0.0
    %1467 = vmatpush1.xpose.msra.mxu0 0.0
    %1468 = vmatprep.subr.mxu0 0.0
    %1469 = vmatpush1.xpose.msra.mxu0 0.0
    %1470 = vmatprep.subr.mxu0 0.0
    %1471 = vmatpush1.xpose.msra.mxu0 0.0
    %1472 = vmatprep.subr.mxu0 0.0
    %1473 = vmatpush1.xpose.msra.mxu0 0.0
    %1474 = vmatprep.subr.mxu0 0.0
    %1475 = vmatpush1.xpose.msra.mxu0 0.0
    %1476 = vmatprep.subr.mxu0 0.0
    %1477 = vmatpush1.xpose.msra.mxu0 0.0
    %1478 = vmatprep.subr.mxu0 0.0
    %1479 = vmatpush1.xpose.msra.mxu0 0.0
    %1480 = vmatprep.subr.mxu0 0.0
    %1481 = vmatpush1.xpose.msra.mxu0 0.0
    %1482 = vmatprep.subr.mxu0 0.0
    %1483 = vmatpush1.xpose.msra.mxu0 0.0
    %1484 = vmatprep.subr.mxu0 0.0
    %1485 = vmatpush1.xpose.msra.mxu0 0.0
    %1486 = vmatprep.mubr.f32.mxu0 0.0
    %v1487 = vand.u32 %v1191, 4294901760
    %v1488 = vsub.f32 %v1191, %v1487
    %v1489 = vand.u32 %v1488, 4294901760
    %1490 = vmatmul.mubr.f32.gmra.mrb[0].mxu0 %v1489
    %v1491 = vpop.f32.mrb[0].mxu0
    %v1492 = vadd.f32 %v1418, %v1491
    %v1493 = vpop.f32.mrb[0].mxu0
    %1494 = vdwg.mxu0
    %1495 = vmatprep.subr.mxu0 0.0
    %v1496 = vand.u32 %v1193, 4294901760
    %v1497 = vsub.f32 %v1193, %v1496
    %v1498 = vand.u32 %v1497, 4294901760
    %1499 = vmatpush1.xpose.msra.mxu0 %v1498
    %1500 = vmatprep.subr.mxu0 0.0
    %1501 = vmatpush1.xpose.msra.mxu0 0.0
    %1502 = vmatprep.subr.mxu0 0.0
    %1503 = vmatpush1.xpose.msra.mxu0 0.0
    %1504 = vmatprep.subr.mxu0 0.0
    %1505 = vmatpush1.xpose.msra.mxu0 0.0
    %1506 = vmatprep.subr.mxu0 0.0
    %1507 = vmatpush1.xpose.msra.mxu0 0.0
    %1508 = vmatprep.subr.mxu0 0.0
    %1509 = vmatpush1.xpose.msra.mxu0 0.0
    %1510 = vmatprep.subr.mxu0 0.0
    %1511 = vmatpush1.xpose.msra.mxu0 0.0
    %1512 = vmatprep.subr.mxu0 0.0
    %1513 = vmatpush1.xpose.msra.mxu0 0.0
    %1514 = vmatprep.subr.mxu0 0.0
    %1515 = vmatpush1.xpose.msra.mxu0 0.0
    %1516 = vmatprep.subr.mxu0 0.0
    %1517 = vmatpush1.xpose.msra.mxu0 0.0
    %1518 = vmatprep.subr.mxu0 0.0
    %1519 = vmatpush1.xpose.msra.mxu0 0.0
    %1520 = vmatprep.subr.mxu0 0.0
    %1521 = vmatpush1.xpose.msra.mxu0 0.0
    %1522 = vmatprep.subr.mxu0 0.0
    %1523 = vmatpush1.xpose.msra.mxu0 0.0
    %1524 = vmatprep.subr.mxu0 0.0
    %1525 = vmatpush1.xpose.msra.mxu0 0.0
    %1526 = vmatprep.subr.mxu0 0.0
    %1527 = vmatpush1.xpose.msra.mxu0 0.0
    %1528 = vmatprep.subr.mxu0 0.0
    %1529 = vmatpush1.xpose.msra.mxu0 0.0
    %1530 = vmatprep.subr.mxu0 0.0
    %1531 = vmatpush1.xpose.msra.mxu0 0.0
    %1532 = vmatprep.subr.mxu0 0.0
    %1533 = vmatpush1.xpose.msra.mxu0 0.0
    %1534 = vmatprep.subr.mxu0 0.0
    %1535 = vmatpush1.xpose.msra.mxu0 0.0
    %1536 = vmatprep.subr.mxu0 0.0
    %1537 = vmatpush1.xpose.msra.mxu0 0.0
    %1538 = vmatprep.subr.mxu0 0.0
    %1539 = vmatpush1.xpose.msra.mxu0 0.0
    %1540 = vmatprep.subr.mxu0 0.0
    %1541 = vmatpush1.xpose.msra.mxu0 0.0
    %1542 = vmatprep.subr.mxu0 0.0
    %1543 = vmatpush1.xpose.msra.mxu0 0.0
    %1544 = vmatprep.subr.mxu0 0.0
    %1545 = vmatpush1.xpose.msra.mxu0 0.0
    %1546 = vmatprep.subr.mxu0 0.0
    %1547 = vmatpush1.xpose.msra.mxu0 0.0
    %1548 = vmatprep.subr.mxu0 0.0
    %1549 = vmatpush1.xpose.msra.mxu0 0.0
    %1550 = vmatprep.subr.mxu0 0.0
    %1551 = vmatpush1.xpose.msra.mxu0 0.0
    %1552 = vmatprep.subr.mxu0 0.0
    %1553 = vmatpush1.xpose.msra.mxu0 0.0
    %1554 = vmatprep.subr.mxu0 0.0
    %1555 = vmatpush1.xpose.msra.mxu0 0.0
    %1556 = vmatprep.subr.mxu0 0.0
    %1557 = vmatpush1.xpose.msra.mxu0 0.0
    %1558 = vmatprep.subr.mxu0 0.0
    %1559 = vmatpush1.xpose.msra.mxu0 0.0
    %1560 = vmatprep.subr.mxu0 0.0
    %1561 = vmatpush1.xpose.msra.mxu0 0.0
    %1562 = vmatprep.mubr.f32.mxu0 0.0
    %v1563 = vand.u32 %v1191, 4294901760
    %1564 = vmatmul.mubr.f32.gmra.mrb[0].mxu0 %v1563
    %v1565 = vpop.f32.mrb[0].mxu0
    %v1566 = vadd.f32 %v1492, %v1565
    %v1567 = vpop.f32.mrb[0].mxu0
    %1568 = vdwg.mxu0
    %1569 = vmatprep.subr.mxu0 0.0
    %v1570 = vand.u32 %v1193, 4294901760
    %1571 = vmatpush1.xpose.msra.mxu0 %v1570
    %1572 = vmatprep.subr.mxu0 0.0
    %1573 = vmatpush1.xpose.msra.mxu0 0.0
    %1574 = vmatprep.subr.mxu0 0.0
    %1575 = vmatpush1.xpose.msra.mxu0 0.0
    %1576 = vmatprep.subr.mxu0 0.0
    %1577 = vmatpush1.xpose.msra.mxu0 0.0
    %1578 = vmatprep.subr.mxu0 0.0
    %1579 = vmatpush1.xpose.msra.mxu0 0.0
    %1580 = vmatprep.subr.mxu0 0.0
    %1581 = vmatpush1.xpose.msra.mxu0 0.0
    %1582 = vmatprep.subr.mxu0 0.0
    %1583 = vmatpush1.xpose.msra.mxu0 0.0
    %1584 = vmatprep.subr.mxu0 0.0
    %1585 = vmatpush1.xpose.msra.mxu0 0.0
    %1586 = vmatprep.subr.mxu0 0.0
    %1587 = vmatpush1.xpose.msra.mxu0 0.0
    %1588 = vmatprep.subr.mxu0 0.0
    %1589 = vmatpush1.xpose.msra.mxu0 0.0
    %1590 = vmatprep.subr.mxu0 0.0
    %1591 = vmatpush1.xpose.msra.mxu0 0.0
    %1592 = vmatprep.subr.mxu0 0.0
    %1593 = vmatpush1.xpose.msra.mxu0 0.0
    %1594 = vmatprep.subr.mxu0 0.0
    %1595 = vmatpush1.xpose.msra.mxu0 0.0
    %1596 = vmatprep.subr.mxu0 0.0
    %1597 = vmatpush1.xpose.msra.mxu0 0.0
    %1598 = vmatprep.subr.mxu0 0.0
    %1599 = vmatpush1.xpose.msra.mxu0 0.0
    %1600 = vmatprep.subr.mxu0 0.0
    %1601 = vmatpush1.xpose.msra.mxu0 0.0
    %1602 = vmatprep.subr.mxu0 0.0
    %1603 = vmatpush1.xpose.msra.mxu0 0.0
    %1604 = vmatprep.subr.mxu0 0.0
    %1605 = vmatpush1.xpose.msra.mxu0 0.0
    %1606 = vmatprep.subr.mxu0 0.0
    %1607 = vmatpush1.xpose.msra.mxu0 0.0
    %1608 = vmatprep.subr.mxu0 0.0
    %1609 = vmatpush1.xpose.msra.mxu0 0.0
    %1610 = vmatprep.subr.mxu0 0.0
    %1611 = vmatpush1.xpose.msra.mxu0 0.0
    %1612 = vmatprep.subr.mxu0 0.0
    %1613 = vmatpush1.xpose.msra.mxu0 0.0
    %1614 = vmatprep.subr.mxu0 0.0
    %1615 = vmatpush1.xpose.msra.mxu0 0.0
    %1616 = vmatprep.subr.mxu0 0.0
    %1617 = vmatpush1.xpose.msra.mxu0 0.0
    %1618 = vmatprep.subr.mxu0 0.0
    %1619 = vmatpush1.xpose.msra.mxu0 0.0
    %1620 = vmatprep.subr.mxu0 0.0
    %1621 = vmatpush1.xpose.msra.mxu0 0.0
    %1622 = vmatprep.subr.mxu0 0.0
    %1623 = vmatpush1.xpose.msra.mxu0 0.0
    %1624 = vmatprep.subr.mxu0 0.0
    %1625 = vmatpush1.xpose.msra.mxu0 0.0
    %1626 = vmatprep.subr.mxu0 0.0
    %1627 = vmatpush1.xpose.msra.mxu0 0.0
    %1628 = vmatprep.subr.mxu0 0.0
    %1629 = vmatpush1.xpose.msra.mxu0 0.0
    %1630 = vmatprep.subr.mxu0 0.0
    %1631 = vmatpush1.xpose.msra.mxu0 0.0
    %1632 = vmatprep.subr.mxu0 0.0
    %1633 = vmatpush1.xpose.msra.mxu0 0.0
    %1634 = vmatprep.mubr.f32.mxu0 0.0
    %v1635 = vand.u32 %v1191, 4294901760
    %1636 = vmatmul.mubr.f32.gmra.mrb[0].mxu0 %v1635
    %v1637 = vpop.f32.mrb[0].mxu0
    %v1638 = vadd.f32 %v1566, %v1637
    %v1639 = vpop.f32.mrb[0].mxu0
    %1640 = vdwg.mxu0
    %v1641 = vmul.f32 %v1638, 0.35355338
    %v1642 = vsel %vm1190, %v1641, -inf
    %1643 = vmax.xlane.f32.xlu0 %v1642
    %v1644 = vpop.xlane.xlu0 %1643
    %v1645 = vsub.f32 %v1641, %v1644
    %v1646 = vmul.f32 %v1645, 1.442695
    %v1647 = vpow.pop %v1646
    %v1648 = vsel %vm1190, %v1647, 0.0
    %1649 = vadd.xlane.f32.xlu0 %v1648
    %v1650 = vpop.xlane.xlu0 %1649
    %v1651 = vrcp.pop %v1650
    %v1652 = vmul.f32 %v1647, %v1651
    %1653 = vrot.lane.b32.xlu0 %v1184, 64
    %v1654 = vpop.permute.xlu0 %1653
    %v1657 = vsel %vm1190, %v1652, 0
    %1659 = vmatprep.subr.mxu0 0.0
    %v1660 = vand.u32 %v1654, 4294901760
    %1661 = vmatpush1.msra.mxu0 %v1660
    %1662 = vmatprep.subr.mxu0 0.0
    %1663 = vmatpush1.msra.mxu0 0.0
    %1664 = vmatprep.subr.mxu0 0.0
    %1665 = vmatpush1.msra.mxu0 0.0
    %1666 = vmatprep.subr.mxu0 0.0
    %1667 = vmatpush1.msra.mxu0 0.0
    %1668 = vmatprep.subr.mxu0 0.0
    %1669 = vmatpush1.msra.mxu0 0.0
    %1670 = vmatprep.subr.mxu0 0.0
    %1671 = vmatpush1.msra.mxu0 0.0
    %1672 = vmatprep.subr.mxu0 0.0
    %1673 = vmatpush1.msra.mxu0 0.0
    %1674 = vmatprep.subr.mxu0 0.0
    %1675 = vmatpush1.msra.mxu0 0.0
    %1676 = vmatprep.subr.mxu0 0.0
    %1677 = vmatpush1.msra.mxu0 0.0
    %1678 = vmatprep.subr.mxu0 0.0
    %1679 = vmatpush1.msra.mxu0 0.0
    %1680 = vmatprep.subr.mxu0 0.0
    %1681 = vmatpush1.msra.mxu0 0.0
    %1682 = vmatprep.subr.mxu0 0.0
    %1683 = vmatpush1.msra.mxu0 0.0
    %1684 = vmatprep.subr.mxu0 0.0
    %1685 = vmatpush1.msra.mxu0 0.0
    %1686 = vmatprep.subr.mxu0 0.0
    %1687 = vmatpush1.msra.mxu0 0.0
    %1688 = vmatprep.subr.mxu0 0.0
    %1689 = vmatpush1.msra.mxu0 0.0
    %1690 = vmatprep.subr.mxu0 0.0
    %1691 = vmatpush1.msra.mxu0 0.0
    %1692 = vmatprep.subr.mxu0 0.0
    %1693 = vmatpush1.msra.mxu0 0.0
    %1694 = vmatprep.subr.mxu0 0.0
    %1695 = vmatpush1.msra.mxu0 0.0
    %1696 = vmatprep.subr.mxu0 0.0
    %1697 = vmatpush1.msra.mxu0 0.0
    %1698 = vmatprep.subr.mxu0 0.0
    %1699 = vmatpush1.msra.mxu0 0.0
    %1700 = vmatprep.subr.mxu0 0.0
    %1701 = vmatpush1.msra.mxu0 0.0
    %1702 = vmatprep.subr.mxu0 0.0
    %1703 = vmatpush1.msra.mxu0 0.0
    %1704 = vmatprep.subr.mxu0 0.0
    %1705 = vmatpush1.msra.mxu0 0.0
    %1706 = vmatprep.subr.mxu0 0.0
    %1707 = vmatpush1.msra.mxu0 0.0
    %1708 = vmatprep.subr.mxu0 0.0
    %1709 = vmatpush1.msra.mxu0 0.0
    %1710 = vmatprep.subr.mxu0 0.0
    %1711 = vmatpush1.msra.mxu0 0.0
    %1712 = vmatprep.subr.mxu0 0.0
    %1713 = vmatpush1.msra.mxu0 0.0
    %1714 = vmatprep.subr.mxu0 0.0
    %1715 = vmatpush1.msra.mxu0 0.0
    %1716 = vmatprep.subr.mxu0 0.0
    %1717 = vmatpush1.msra.mxu0 0.0
    %1718 = vmatprep.subr.mxu0 0.0
    %1719 = vmatpush1.msra.mxu0 0.0
    %1720 = vmatprep.subr.mxu0 0.0
    %1721 = vmatpush1.msra.mxu0 0.0
    %1722 = vmatprep.subr.mxu0 0.0
    %1723 = vmatpush1.msra.mxu0 0.0
    %1724 = vmatprep.mubr.f32.mxu0 0.0
    %v1725 = vand.u32 %v1657, 4294901760
    %v1726 = vsub.f32 %v1657, %v1725
    %v1727 = vand.u32 %v1726, 4294901760
    %v1728 = vsub.f32 %v1726, %v1727
    %v1729 = vand.u32 %v1728, 4294901760
    %1730 = vmatmul.mubr.f32.gmra.mrb[0].mxu0 %v1729
    %v1731 = vpop.f32.mrb[0].mxu0
    %v1732 = vadd.f32 0.0, %v1731
    %v1733 = vpop.f32.mrb[0].mxu0
    %1734 = vdwg.mxu0
    %1735 = vmatprep.subr.mxu0 0.0
    %v1736 = vand.u32 %v1654, 4294901760
    %v1737 = vsub.f32 %v1654, %v1736
    %v1738 = vand.u32 %v1737, 4294901760
    %v1739 = vsub.f32 %v1737, %v1738
    %v1740 = vand.u32 %v1739, 4294901760
    %1741 = vmatpush1.msra.mxu0 %v1740
    %1742 = vmatprep.subr.mxu0 0.0
    %1743 = vmatpush1.msra.mxu0 0.0
    %1744 = vmatprep.subr.mxu0 0.0
    %1745 = vmatpush1.msra.mxu0 0.0
    %1746 = vmatprep.subr.mxu0 0.0
    %1747 = vmatpush1.msra.mxu0 0.0
    %1748 = vmatprep.subr.mxu0 0.0
    %1749 = vmatpush1.msra.mxu0 0.0
    %1750 = vmatprep.subr.mxu0 0.0
    %1751 = vmatpush1.msra.mxu0 0.0
    %1752 = vmatprep.subr.mxu0 0.0
    %1753 = vmatpush1.msra.mxu0 0.0
    %1754 = vmatprep.subr.mxu0 0.0
    %1755 = vmatpush1.msra.mxu0 0.0
    %1756 = vmatprep.subr.mxu0 0.0
    %1757 = vmatpush1.msra.mxu0 0.0
    %1758 = vmatprep.subr.mxu0 0.0
    %1759 = vmatpush1.msra.mxu0 0.0
    %1760 = vmatprep.subr.mxu0 0.0
    %1761 = vmatpush1.msra.mxu0 0.0
    %1762 = vmatprep.subr.mxu0 0.0
    %1763 = vmatpush1.msra.mxu0 0.0
    %1764 = vmatprep.subr.mxu0 0.0
    %1765 = vmatpush1.msra.mxu0 0.0
    %1766 = vmatprep.subr.mxu0 0.0
    %1767 = vmatpush1.msra.mxu0 0.0
    %1768 = vmatprep.subr.mxu0 0.0
    %1769 = vmatpush1.msra.mxu0 0.0
    %1770 = vmatprep.subr.mxu0 0.0
    %1771 = vmatpush1.msra.mxu0 0.0
    %1772 = vmatprep.subr.mxu0 0.0
    %1773 = vmatpush1.msra.mxu0 0.0
    %1774 = vmatprep.subr.mxu0 0.0
    %1775 = vmatpush1.msra.mxu0 0.0
    %1776 = vmatprep.subr.mxu0 0.0
    %1777 = vmatpush1.msra.mxu0 0.0
    %1778 = vmatprep.subr.mxu0 0.0
    %1779 = vmatpush1.msra.mxu0 0.0
    %1780 = vmatprep.subr.mxu0 0.0
    %1781 = vmatpush1.msra.mxu0 0.0
    %1782 = vmatprep.subr.mxu0 0.0
    %1783 = vmatpush1.msra.mxu0 0.0
    %1784 = vmatprep.subr.mxu0 0.0
    %1785 = vmatpush1.msra.mxu0 0.0
    %1786 = vmatprep.subr.mxu0 0.0
    %1787 = vmatpush1.msra.mxu0 0.0
    %1788 = vmatprep.subr.mxu0 0.0
    %1789 = vmatpush1.msra.mxu0 0.0
    %1790 = vmatprep.subr.mxu0 0.0
    %1791 = vmatpush1.msra.mxu0 0.0
    %1792 = vmatprep.subr.mxu0 0.0
    %1793 = vmatpush1.msra.mxu0 0.0
    %1794 = vmatprep.subr.mxu0 0.0
    %1795 = vmatpush1.msra.mxu0 0.0
    %1796 = vmatprep.subr.mxu0 0.0
    %1797 = vmatpush1.msra.mxu0 0.0
    %1798 = vmatprep.subr.mxu0 0.0
    %1799 = vmatpush1.msra.mxu0 0.0
    %1800 = vmatprep.subr.mxu0 0.0
    %1801 = vmatpush1.msra.mxu0 0.0
    %1802 = vmatprep.subr.mxu0 0.0
    %1803 = vmatpush1.msra.mxu0 0.0
    %1804 = vmatprep.mubr.f32.mxu0 0.0
    %v1805 = vand.u32 %v1657, 4294901760
    %1806 = vmatmul.mubr.f32.gmra.mrb[0].mxu0 %v1805
    %v1807 = vpop.f32.mrb[0].mxu0
    %v1808 = vadd.f32 %v1732, %v1807
    %v1809 = vpop.f32.mrb[0].mxu0
    %1810 = vdwg.mxu0
    %1811 = vmatprep.subr.mxu0 0.0
    %v1812 = vand.u32 %v1654, 4294901760
    %v1813 = vsub.f32 %v1654, %v1812
    %1814 = vmatpush1.msra.mxu0 %v1813
    %1815 = vmatprep.subr.mxu0 0.0
    %1816 = vmatpush1.msra.mxu0 0.0
    %1817 = vmatprep.subr.mxu0 0.0
    %1818 = vmatpush1.msra.mxu0 0.0
    %1819 = vmatprep.subr.mxu0 0.0
    %1820 = vmatpush1.msra.mxu0 0.0
    %1821 = vmatprep.subr.mxu0 0.0
    %1822 = vmatpush1.msra.mxu0 0.0
    %1823 = vmatprep.subr.mxu0 0.0
    %1824 = vmatpush1.msra.mxu0 0.0
    %1825 = vmatprep.subr.mxu0 0.0
    %1826 = vmatpush1.msra.mxu0 0.0
    %1827 = vmatprep.subr.mxu0 0.0
    %1828 = vmatpush1.msra.mxu0 0.0
    %1829 = vmatprep.subr.mxu0 0.0
    %1830 = vmatpush1.msra.mxu0 0.0
    %1831 = vmatprep.subr.mxu0 0.0
    %1832 = vmatpush1.msra.mxu0 0.0
    %1833 = vmatprep.subr.mxu0 0.0
    %1834 = vmatpush1.msra.mxu0 0.0
    %1835 = vmatprep.subr.mxu0 0.0
    %1836 = vmatpush1.msra.mxu0 0.0
    %1837 = vmatprep.subr.mxu0 0.0
    %1838 = vmatpush1.msra.mxu0 0.0
    %1839 = vmatprep.subr.mxu0 0.0
    %1840 = vmatpush1.msra.mxu0 0.0
    %1841 = vmatprep.subr.mxu0 0.0
    %1842 = vmatpush1.msra.mxu0 0.0
    %1843 = vmatprep.subr.mxu0 0.0
    %1844 = vmatpush1.msra.mxu0 0.0
    %1845 = vmatprep.subr.mxu0 0.0
    %1846 = vmatpush1.msra.mxu0 0.0
    %1847 = vmatprep.subr.mxu0 0.0
    %1848 = vmatpush1.msra.mxu0 0.0
    %1849 = vmatprep.subr.mxu0 0.0
    %1850 = vmatpush1.msra.mxu0 0.0
    %1851 = vmatprep.subr.mxu0 0.0
    %1852 = vmatpush1.msra.mxu0 0.0
    %1853 = vmatprep.subr.mxu0 0.0
    %1854 = vmatpush1.msra.mxu0 0.0
    %1855 = vmatprep.subr.mxu0 0.0
    %1856 = vmatpush1.msra.mxu0 0.0
    %1857 = vmatprep.subr.mxu0 0.0
    %1858 = vmatpush1.msra.mxu0 0.0
    %1859 = vmatprep.subr.mxu0 0.0
    %1860 = vmatpush1.msra.mxu0 0.0
    %1861 = vmatprep.subr.mxu0 0.0
    %1862 = vmatpush1.msra.mxu0 0.0
    %1863 = vmatprep.subr.mxu0 0.0
    %1864 = vmatpush1.msra.mxu0 0.0
    %1865 = vmatprep.subr.mxu0 0.0
    %1866 = vmatpush1.msra.mxu0 0.0
    %1867 = vmatprep.subr.mxu0 0.0
    %1868 = vmatpush1.msra.mxu0 0.0
    %1869 = vmatprep.subr.mxu0 0.0
    %1870 = vmatpush1.msra.mxu0 0.0
    %1871 = vmatprep.subr.mxu0 0.0
    %1872 = vmatpush1.msra.mxu0 0.0
    %1873 = vmatprep.subr.mxu0 0.0
    %1874 = vmatpush1.msra.mxu0 0.0
    %1875 = vmatprep.subr.mxu0 0.0
    %1876 = vmatpush1.msra.mxu0 0.0
    %1877 = vmatprep.mubr.f32.mxu0 0.0
    %v1878 = vand.u32 %v1657, 4294901760
    %v1879 = vsub.f32 %v1657, %v1878
    %1880 = vmatmul.mubr.f32.gmra.mrb[0].mxu0 %v1879
    %v1881 = vpop.f32.mrb[0].mxu0
    %v1882 = vadd.f32 %v1808, %v1881
    %v1883 = vpop.f32.mrb[0].mxu0
    %1884 = vdwg.mxu0
    %1885 = vmatprep.subr.mxu0 0.0
    %v1886 = vand.u32 %v1654, 4294901760
    %1887 = vmatpush1.msra.mxu0 %v1886
    %1888 = vmatprep.subr.mxu0 0.0
    %1889 = vmatpush1.msra.mxu0 0.0
    %1890 = vmatprep.subr.mxu0 0.0
    %1891 = vmatpush1.msra.mxu0 0.0
    %1892 = vmatprep.subr.mxu0 0.0
    %1893 = vmatpush1.msra.mxu0 0.0
    %1894 = vmatprep.subr.mxu0 0.0
    %1895 = vmatpush1.msra.mxu0 0.0
    %1896 = vmatprep.subr.mxu0 0.0
    %1897 = vmatpush1.msra.mxu0 0.0
    %1898 = vmatprep.subr.mxu0 0.0
    %1899 = vmatpush1.msra.mxu0 0.0
    %1900 = vmatprep.subr.mxu0 0.0
    %1901 = vmatpush1.msra.mxu0 0.0
    %1902 = vmatprep.subr.mxu0 0.0
    %1903 = vmatpush1.msra.mxu0 0.0
    %1904 = vmatprep.subr.mxu0 0.0
    %1905 = vmatpush1.msra.mxu0 0.0
    %1906 = vmatprep.subr.mxu0 0.0
    %1907 = vmatpush1.msra.mxu0 0.0
    %1908 = vmatprep.subr.mxu0 0.0
    %1909 = vmatpush1.msra.mxu0 0.0
    %1910 = vmatprep.subr.mxu0 0.0
    %1911 = vmatpush1.msra.mxu0 0.0
    %1912 = vmatprep.subr.mxu0 0.0
    %1913 = vmatpush1.msra.mxu0 0.0
    %1914 = vmatprep.subr.mxu0 0.0
    %1915 = vmatpush1.msra.mxu0 0.0
    %1916 = vmatprep.subr.mxu0 0.0
    %1917 = vmatpush1.msra.mxu0 0.0
    %1918 = vmatprep.subr.mxu0 0.0
    %1919 = vmatpush1.msra.mxu0 0.0
    %1920 = vmatprep.subr.mxu0 0.0
    %1921 = vmatpush1.msra.mxu0 0.0
    %1922 = vmatprep.subr.mxu0 0.0
    %1923 = vmatpush1.msra.mxu0 0.0
    %1924 = vmatprep.subr.mxu0 0.0
    %1925 = vmatpush1.msra.mxu0 0.0
    %1926 = vmatprep.subr.mxu0 0.0
    %1927 = vmatpush1.msra.mxu0 0.0
    %1928 = vmatprep.subr.mxu0 0.0
    %1929 = vmatpush1.msra.mxu0 0.0
    %1930 = vmatprep.subr.mxu0 0.0
    %1931 = vmatpush1.msra.mxu0 0.0
    %1932 = vmatprep.subr.mxu0 0.0
    %1933 = vmatpush1.msra.mxu0 0.0
    %1934 = vmatprep.subr.mxu0 0.0
    %1935 = vmatpush1.msra.mxu0 0.0
    %1936 = vmatprep.subr.mxu0 0.0
    %1937 = vmatpush1.msra.mxu0 0.0
    %1938 = vmatprep.subr.mxu0 0.0
    %1939 = vmatpush1.msra.mxu0 0.0
    %1940 = vmatprep.subr.mxu0 0.0
    %1941 = vmatpush1.msra.mxu0 0.0
    %1942 = vmatprep.subr.mxu0 0.0
    %1943 = vmatpush1.msra.mxu0 0.0
    %1944 = vmatprep.subr.mxu0 0.0
    %1945 = vmatpush1.msra.mxu0 0.0
    %1946 = vmatprep.subr.mxu0 0.0
    %1947 = vmatpush1.msra.mxu0 0.0
    %1948 = vmatprep.subr.mxu0 0.0
    %1949 = vmatpush1.msra.mxu0 0.0
    %1950 = vmatprep.mubr.f32.mxu0 0.0
    %v1951 = vand.u32 %v1657, 4294901760
    %v1952 = vsub.f32 %v1657, %v1951
    %v1953 = vand.u32 %v1952, 4294901760
    %1954 = vmatmul.mubr.f32.gmra.mrb[0].mxu0 %v1953
    %v1955 = vpop.f32.mrb[0].mxu0
    %v1956 = vadd.f32 %v1882, %v1955
    %v1957 = vpop.f32.mrb[0].mxu0
    %1958 = vdwg.mxu0
    %1959 = vmatprep.subr.mxu0 0.0
    %v1960 = vand.u32 %v1654, 4294901760
    %v1961 = vsub.f32 %v1654, %v1960
    %v1962 = vand.u32 %v1961, 4294901760
    %1963 = vmatpush1.msra.mxu0 %v1962
    %1964 = vmatprep.subr.mxu0 0.0
    %1965 = vmatpush1.msra.mxu0 0.0
    %1966 = vmatprep.subr.mxu0 0.0
    %1967 = vmatpush1.msra.mxu0 0.0
    %1968 = vmatprep.subr.mxu0 0.0
    %1969 = vmatpush1.msra.mxu0 0.0
    %1970 = vmatprep.subr.mxu0 0.0
    %1971 = vmatpush1.msra.mxu0 0.0
    %1972 = vmatprep.subr.mxu0 0.0
    %1973 = vmatpush1.msra.mxu0 0.0
    %1974 = vmatprep.subr.mxu0 0.0
    %1975 = vmatpush1.msra.mxu0 0.0
    %1976 = vmatprep.subr.mxu0 0.0
    %1977 = vmatpush1.msra.mxu0 0.0
    %1978 = vmatprep.subr.mxu0 0.0
    %1979 = vmatpush1.msra.mxu0 0.0
    %1980 = vmatprep.subr.mxu0 0.0
    %1981 = vmatpush1.msra.mxu0 0.0
    %1982 = vmatprep.subr.mxu0 0.0
    %1983 = vmatpush1.msra.mxu0 0.0
    %1984 = vmatprep.subr.mxu0 0.0
    %1985 = vmatpush1.msra.mxu0 0.0
    %1986 = vmatprep.subr.mxu0 0.0
    %1987 = vmatpush1.msra.mxu0 0.0
    %1988 = vmatprep.subr.mxu0 0.0
    %1989 = vmatpush1.msra.mxu0 0.0
    %1990 = vmatprep.subr.mxu0 0.0
    %1991 = vmatpush1.msra.mxu0 0.0
    %1992 = vmatprep.subr.mxu0 0.0
    %1993 = vmatpush1.msra.mxu0 0.0
    %1994 = vmatprep.subr.mxu0 0.0
    %1995 = vmatpush1.msra.mxu0 0.0
    %1996 = vmatprep.subr.mxu0 0.0
    %1997 = vmatpush1.msra.mxu0 0.0
    %1998 = vmatprep.subr.mxu0 0.0
    %1999 = vmatpush1.msra.mxu0 0.0
    %2000 = vmatprep.subr.mxu0 0.0
    %2001 = vmatpush1.msra.mxu0 0.0
    %2002 = vmatprep.subr.mxu0 0.0
    %2003 = vmatpush1.msra.mxu0 0.0
    %2004 = vmatprep.subr.mxu0 0.0
    %2005 = vmatpush1.msra.mxu0 0.0
    %2006 = vmatprep.subr.mxu0 0.0
    %2007 = vmatpush1.msra.mxu0 0.0
    %2008 = vmatprep.subr.mxu0 0.0
    %2009 = vmatpush1.msra.mxu0 0.0
    %2010 = vmatprep.subr.mxu0 0.0
    %2011 = vmatpush1.msra.mxu0 0.0
    %2012 = vmatprep.subr.mxu0 0.0
    %2013 = vmatpush1.msra.mxu0 0.0
    %2014 = vmatprep.subr.mxu0 0.0
    %2015 = vmatpush1.msra.mxu0 0.0
    %2016 = vmatprep.subr.mxu0 0.0
    %2017 = vmatpush1.msra.mxu0 0.0
    %2018 = vmatprep.subr.mxu0 0.0
    %2019 = vmatpush1.msra.mxu0 0.0
    %2020 = vmatprep.subr.mxu0 0.0
    %2021 = vmatpush1.msra.mxu0 0.0
    %2022 = vmatprep.subr.mxu0 0.0
    %2023 = vmatpush1.msra.mxu0 0.0
    %2024 = vmatprep.subr.mxu0 0.0
    %2025 = vmatpush1.msra.mxu0 0.0
    %2026 = vmatprep.mubr.f32.mxu0 0.0
    %v2027 = vand.u32 %v1657, 4294901760
    %2028 = vmatmul.mubr.f32.gmra.mrb[0].mxu0 %v2027
    %v2029 = vpop.f32.mrb[0].mxu0
    %v2030 = vadd.f32 %v1956, %v2029
    %v2031 = vpop.f32.mrb[0].mxu0
    %2032 = vdwg.mxu0
    %2033 = vmatprep.subr.mxu0 0.0
    %v2034 = vand.u32 %v1654, 4294901760
    %2035 = vmatpush1.msra.mxu0 %v2034
    %2036 = vmatprep.subr.mxu0 0.0
    %2037 = vmatpush1.msra.mxu0 0.0
    %2038 = vmatprep.subr.mxu0 0.0
    %2039 = vmatpush1.msra.mxu0 0.0
    %2040 = vmatprep.subr.mxu0 0.0
    %2041 = vmatpush1.msra.mxu0 0.0
    %2042 = vmatprep.subr.mxu0 0.0
    %2043 = vmatpush1.msra.mxu0 0.0
    %2044 = vmatprep.subr.mxu0 0.0
    %2045 = vmatpush1.msra.mxu0 0.0
    %2046 = vmatprep.subr.mxu0 0.0
    %2047 = vmatpush1.msra.mxu0 0.0
    %2048 = vmatprep.subr.mxu0 0.0
    %2049 = vmatpush1.msra.mxu0 0.0
    %2050 = vmatprep.subr.mxu0 0.0
    %2051 = vmatpush1.msra.mxu0 0.0
    %2052 = vmatprep.subr.mxu0 0.0
    %2053 = vmatpush1.msra.mxu0 0.0
    %2054 = vmatprep.subr.mxu0 0.0
    %2055 = vmatpush1.msra.mxu0 0.0
    %2056 = vmatprep.subr.mxu0 0.0
    %2057 = vmatpush1.msra.mxu0 0.0
    %2058 = vmatprep.subr.mxu0 0.0
    %2059 = vmatpush1.msra.mxu0 0.0
    %2060 = vmatprep.subr.mxu0 0.0
    %2061 = vmatpush1.msra.mxu0 0.0
    %2062 = vmatprep.subr.mxu0 0.0
    %2063 = vmatpush1.msra.mxu0 0.0
    %2064 = vmatprep.subr.mxu0 0.0
    %2065 = vmatpush1.msra.mxu0 0.0
    %2066 = vmatprep.subr.mxu0 0.0
    %2067 = vmatpush1.msra.mxu0 0.0
    %2068 = vmatprep.subr.mxu0 0.0
    %2069 = vmatpush1.msra.mxu0 0.0
    %2070 = vmatprep.subr.mxu0 0.0
    %2071 = vmatpush1.msra.mxu0 0.0
    %2072 = vmatprep.subr.mxu0 0.0
    %2073 = vmatpush1.msra.mxu0 0.0
    %2074 = vmatprep.subr.mxu0 0.0
    %2075 = vmatpush1.msra.mxu0 0.0
    %2076 = vmatprep.subr.mxu0 0.0
    %2077 = vmatpush1.msra.mxu0 0.0
    %2078 = vmatprep.subr.mxu0 0.0
    %2079 = vmatpush1.msra.mxu0 0.0
    %2080 = vmatprep.subr.mxu0 0.0
    %2081 = vmatpush1.msra.mxu0 0.0
    %2082 = vmatprep.subr.mxu0 0.0
    %2083 = vmatpush1.msra.mxu0 0.0
    %2084 = vmatprep.subr.mxu0 0.0
    %2085 = vmatpush1.msra.mxu0 0.0
    %2086 = vmatprep.subr.mxu0 0.0
    %2087 = vmatpush1.msra.mxu0 0.0
    %2088 = vmatprep.subr.mxu0 0.0
    %2089 = vmatpush1.msra.mxu0 0.0
    %2090 = vmatprep.subr.mxu0 0.0
    %2091 = vmatpush1.msra.mxu0 0.0
    %2092 = vmatprep.subr.mxu0 0.0
    %2093 = vmatpush1.msra.mxu0 0.0
    %2094 = vmatprep.subr.mxu0 0.0
    %2095 = vmatpush1.msra.mxu0 0.0
    %2096 = vmatprep.subr.mxu0 0.0
    %2097 = vmatpush1.msra.mxu0 0.0
    %2098 = vmatprep.mubr.f32.mxu0 0.0
    %v2099 = vand.u32 %v1657, 4294901760
    %2100 = vmatmul.mubr.f32.gmra.mrb[0].mxu0 %v2099
    %v2101 = vpop.f32.mrb[0].mxu0
    %v2102 = vadd.f32 %v2030, %v2101
    %v2103 = vpop.f32.mrb[0].mxu0
    %2104 = vdwg.mxu0
    %2105 = vrot.lane.b32.xlu0 %v1184, 120
    %v2106 = vpop.permute.xlu0 %2105
    %2107 = vrot.lane.b32.xlu0 %v1184, 88
    %v2108 = vpop.permute.xlu0 %2107
    %v2109 = vsel %vm1190, %v2106, 0
    %v2111 = vsel %vm1190, %v2108, 0
    %2113 = vmatprep.subr.mxu0 0.0
    %v2114 = vand.u32 %v2111, 4294901760
    %2115 = vmatpush1.xpose.msra.mxu0 %v2114
    %2116 = vmatprep.subr.mxu0 0.0
    %2117 = vmatpush1.xpose.msra.mxu0 0.0
    %2118 = vmatprep.subr.mxu0 0.0
    %2119 = vmatpush1.xpose.msra.mxu0 0.0
    %2120 = vmatprep.subr.mxu0 0.0
    %2121 = vmatpush1.xpose.msra.mxu0 0.0
    %2122 = vmatprep.subr.mxu0 0.0
    %2123 = vmatpush1.xpose.msra.mxu0 0.0
    %2124 = vmatprep.subr.mxu0 0.0
    %2125 = vmatpush1.xpose.msra.mxu0 0.0
    %2126 = vmatprep.subr.mxu0 0.0
    %2127 = vmatpush1.xpose.msra.mxu0 0.0
    %2128 = vmatprep.subr.mxu0 0.0
    %2129 = vmatpush1.xpose.msra.mxu0 0.0
    %2130 = vmatprep.subr.mxu0 0.0
    %2131 = vmatpush1.xpose.msra.mxu0 0.0
    %2132 = vmatprep.subr.mxu0 0.0
    %2133 = vmatpush1.xpose.msra.mxu0 0.0
    %2134 = vmatprep.subr.mxu0 0.0
    %2135 = vmatpush1.xpose.msra.mxu0 0.0
    %2136 = vmatprep.subr.mxu0 0.0
    %2137 = vmatpush1.xpose.msra.mxu0 0.0
    %2138 = vmatprep.subr.mxu0 0.0
    %2139 = vmatpush1.xpose.msra.mxu0 0.0
    %2140 = vmatprep.subr.mxu0 0.0
    %2141 = vmatpush1.xpose.msra.mxu0 0.0
    %2142 = vmatprep.subr.mxu0 0.0
    %2143 = vmatpush1.xpose.msra.mxu0 0.0
    %2144 = vmatprep.subr.mxu0 0.0
    %2145 = vmatpush1.xpose.msra.mxu0 0.0
    %2146 = vmatprep.subr.mxu0 0.0
    %2147 = vmatpush1.xpose.msra.mxu0 0.0
    %2148 = vmatprep.subr.mxu0 0.0
    %2149 = vmatpush1.xpose.msra.mxu0 0.0
    %2150 = vmatprep.subr.mxu0 0.0
    %2151 = vmatpush1.xpose.msra.mxu0 0.0
    %2152 = vmatprep.subr.mxu0 0.0
    %2153 = vmatpush1.xpose.msra.mxu0 0.0
    %2154 = vmatprep.subr.mxu0 0.0
    %2155 = vmatpush1.xpose.msra.mxu0 0.0
    %2156 = vmatprep.subr.mxu0 0.0
    %2157 = vmatpush1.xpose.msra.mxu0 0.0
    %2158 = vmatprep.subr.mxu0 0.0
    %2159 = vmatpush1.xpose.msra.mxu0 0.0
    %2160 = vmatprep.subr.mxu0 0.0
    %2161 = vmatpush1.xpose.msra.mxu0 0.0
    %2162 = vmatprep.subr.mxu0 0.0
    %2163 = vmatpush1.xpose.msra.mxu0 0.0
    %2164 = vmatprep.subr.mxu0 0.0
    %2165 = vmatpush1.xpose.msra.mxu0 0.0
    %2166 = vmatprep.subr.mxu0 0.0
    %2167 = vmatpush1.xpose.msra.mxu0 0.0
    %2168 = vmatprep.subr.mxu0 0.0
    %2169 = vmatpush1.xpose.msra.mxu0 0.0
    %2170 = vmatprep.subr.mxu0 0.0
    %2171 = vmatpush1.xpose.msra.mxu0 0.0
    %2172 = vmatprep.subr.mxu0 0.0
    %2173 = vmatpush1.xpose.msra.mxu0 0.0
    %2174 = vmatprep.subr.mxu0 0.0
    %2175 = vmatpush1.xpose.msra.mxu0 0.0
    %2176 = vmatprep.subr.mxu0 0.0
    %2177 = vmatpush1.xpose.msra.mxu0 0.0
    %2178 = vmatprep.mubr.f32.mxu0 0.0
    %v2179 = vand.u32 %v2109, 4294901760
    %v2180 = vsub.f32 %v2109, %v2179
    %v2181 = vand.u32 %v2180, 4294901760
    %v2182 = vsub.f32 %v2180, %v2181
    %v2183 = vand.u32 %v2182, 4294901760
    %2184 = vmatmul.mubr.f32.gmra.mrb[0].mxu0 %v2183
    %v2185 = vpop.f32.mrb[0].mxu0
    %v2186 = vadd.f32 0.0, %v2185
    %v2187 = vpop.f32.mrb[0].mxu0
    %2188 = vdwg.mxu0
    %2189 = vmatprep.subr.mxu0 0.0
    %v2190 = vand.u32 %v2111, 4294901760
    %v2191 = vsub.f32 %v2111, %v2190
    %v2192 = vand.u32 %v2191, 4294901760
    %v2193 = vsub.f32 %v2191, %v2192
    %v2194 = vand.u32 %v2193, 4294901760
    %2195 = vmatpush1.xpose.msra.mxu0 %v2194
    %2196 = vmatprep.subr.mxu0 0.0
    %2197 = vmatpush1.xpose.msra.mxu0 0.0
    %2198 = vmatprep.subr.mxu0 0.0
    %2199 = vmatpush1.xpose.msra.mxu0 0.0
    %2200 = vmatprep.subr.mxu0 0.0
    %2201 = vmatpush1.xpose.msra.mxu0 0.0
    %2202 = vmatprep.subr.mxu0 0.0
    %2203 = vmatpush1.xpose.msra.mxu0 0.0
    %2204 = vmatprep.subr.mxu0 0.0
    %2205 = vmatpush1.xpose.msra.mxu0 0.0
    %2206 = vmatprep.subr.mxu0 0.0
    %2207 = vmatpush1.xpose.msra.mxu0 0.0
    %2208 = vmatprep.subr.mxu0 0.0
    %2209 = vmatpush1.xpose.msra.mxu0 0.0
    %2210 = vmatprep.subr.mxu0 0.0
    %2211 = vmatpush1.xpose.msra.mxu0 0.0
    %2212 = vmatprep.subr.mxu0 0.0
    %2213 = vmatpush1.xpose.msra.mxu0 0.0
    %2214 = vmatprep.subr.mxu0 0.0
    %2215 = vmatpush1.xpose.msra.mxu0 0.0
    %2216 = vmatprep.subr.mxu0 0.0
    %2217 = vmatpush1.xpose.msra.mxu0 0.0
    %2218 = vmatprep.subr.mxu0 0.0
    %2219 = vmatpush1.xpose.msra.mxu0 0.0
    %2220 = vmatprep.subr.mxu0 0.0
    %2221 = vmatpush1.xpose.msra.mxu0 0.0
    %2222 = vmatprep.subr.mxu0 0.0
    %2223 = vmatpush1.xpose.msra.mxu0 0.0
    %2224 = vmatprep.subr.mxu0 0.0
    %2225 = vmatpush1.xpose.msra.mxu0 0.0
    %2226 = vmatprep.subr.mxu0 0.0
    %2227 = vmatpush1.xpose.msra.mxu0 0.0
    %2228 = vmatprep.subr.mxu0 0.0
    %2229 = vmatpush1.xpose.msra.mxu0 0.0
    %2230 = vmatprep.subr.mxu0 0.0
    %2231 = vmatpush1.xpose.msra.mxu0 0.0
    %2232 = vmatprep.subr.mxu0 0.0
    %2233 = vmatpush1.xpose.msra.mxu0 0.0
    %2234 = vmatprep.subr.mxu0 0.0
    %2235 = vmatpush1.xpose.msra.mxu0 0.0
    %2236 = vmatprep.subr.mxu0 0.0
    %2237 = vmatpush1.xpose.msra.mxu0 0.0
    %2238 = vmatprep.subr.mxu0 0.0
    %2239 = vmatpush1.xpose.msra.mxu0 0.0
    %2240 = vmatprep.subr.mxu0 0.0
    %2241 = vmatpush1.xpose.msra.mxu0 0.0
    %2242 = vmatprep.subr.mxu0 0.0
    %2243 = vmatpush1.xpose.msra.mxu0 0.0
    %2244 = vmatprep.subr.mxu0 0.0
    %2245 = vmatpush1.xpose.msra.mxu0 0.0
    %2246 = vmatprep.subr.mxu0 0.0
    %2247 = vmatpush1.xpose.msra.mxu0 0.0
    %2248 = vmatprep.subr.mxu0 0.0
    %2249 = vmatpush1.xpose.msra.mxu0 0.0
    %2250 = vmatprep.subr.mxu0 0.0
    %2251 = vmatpush1.xpose.msra.mxu0 0.0
    %2252 = vmatprep.subr.mxu0 0.0
    %2253 = vmatpush1.xpose.msra.mxu0 0.0
    %2254 = vmatprep.subr.mxu0 0.0
    %2255 = vmatpush1.xpose.msra.mxu0 0.0
    %2256 = vmatprep.subr.mxu0 0.0
    %2257 = vmatpush1.xpose.msra.mxu0 0.0
    %2258 = vmatprep.mubr.f32.mxu0 0.0
    %v2259 = vand.u32 %v2109, 4294901760
    %2260 = vmatmul.mubr.f32.gmra.mrb[0].mxu0 %v2259
    %v2261 = vpop.f32.mrb[0].mxu0
    %v2262 = vadd.f32 %v2186, %v2261
    %v2263 = vpop.f32.mrb[0].mxu0
    %2264 = vdwg.mxu0
    %2265 = vmatprep.subr.mxu0 0.0
    %v2266 = vand.u32 %v2111, 4294901760
    %v2267 = vsub.f32 %v2111, %v2266
    %2268 = vmatpush1.xpose.msra.mxu0 %v2267
    %2269 = vmatprep.subr.mxu0 0.0
    %2270 = vmatpush1.xpose.msra.mxu0 0.0
    %2271 = vmatprep.subr.mxu0 0.0
    %2272 = vmatpush1.xpose.msra.mxu0 0.0
    %2273 = vmatprep.subr.mxu0 0.0
    %2274 = vmatpush1.xpose.msra.mxu0 0.0
    %2275 = vmatprep.subr.mxu0 0.0
    %2276 = vmatpush1.xpose.msra.mxu0 0.0
    %2277 = vmatprep.subr.mxu0 0.0
    %2278 = vmatpush1.xpose.msra.mxu0 0.0
    %2279 = vmatprep.subr.mxu0 0.0
    %2280 = vmatpush1.xpose.msra.mxu0 0.0
    %2281 = vmatprep.subr.mxu0 0.0
    %2282 = vmatpush1.xpose.msra.mxu0 0.0
    %2283 = vmatprep.subr.mxu0 0.0
    %2284 = vmatpush1.xpose.msra.mxu0 0.0
    %2285 = vmatprep.subr.mxu0 0.0
    %2286 = vmatpush1.xpose.msra.mxu0 0.0
    %2287 = vmatprep.subr.mxu0 0.0
    %2288 = vmatpush1.xpose.msra.mxu0 0.0
    %2289 = vmatprep.subr.mxu0 0.0
    %2290 = vmatpush1.xpose.msra.mxu0 0.0
    %2291 = vmatprep.subr.mxu0 0.0
    %2292 = vmatpush1.xpose.msra.mxu0 0.0
    %2293 = vmatprep.subr.mxu0 0.0
    %2294 = vmatpush1.xpose.msra.mxu0 0.0
    %2295 = vmatprep.subr.mxu0 0.0
    %2296 = vmatpush1.xpose.msra.mxu0 0.0
    %2297 = vmatprep.subr.mxu0 0.0
    %2298 = vmatpush1.xpose.msra.mxu0 0.0
    %2299 = vmatprep.subr.mxu0 0.0
    %2300 = vmatpush1.xpose.msra.mxu0 0.0
    %2301 = vmatprep.subr.mxu0 0.0
    %2302 = vmatpush1.xpose.msra.mxu0 0.0
    %2303 = vmatprep.subr.mxu0 0.0
    %2304 = vmatpush1.xpose.msra.mxu0 0.0
    %2305 = vmatprep.subr.mxu0 0.0
    %2306 = vmatpush1.xpose.msra.mxu0 0.0
    %2307 = vmatprep.subr.mxu0 0.0
    %2308 = vmatpush1.xpose.msra.mxu0 0.0
    %2309 = vmatprep.subr.mxu0 0.0
    %2310 = vmatpush1.xpose.msra.mxu0 0.0
    %2311 = vmatprep.subr.mxu0 0.0
    %2312 = vmatpush1.xpose.msra.mxu0 0.0
    %2313 = vmatprep.subr.mxu0 0.0
    %2314 = vmatpush1.xpose.msra.mxu0 0.0
    %2315 = vmatprep.subr.mxu0 0.0
    %2316 = vmatpush1.xpose.msra.mxu0 0.0
    %2317 = vmatprep.subr.mxu0 0.0
    %2318 = vmatpush1.xpose.msra.mxu0 0.0
    %2319 = vmatprep.subr.mxu0 0.0
    %2320 = vmatpush1.xpose.msra.mxu0 0.0
    %2321 = vmatprep.subr.mxu0 0.0
    %2322 = vmatpush1.xpose.msra.mxu0 0.0
    %2323 = vmatprep.subr.mxu0 0.0
    %2324 = vmatpush1.xpose.msra.mxu0 0.0
    %2325 = vmatprep.subr.mxu0 0.0
    %2326 = vmatpush1.xpose.msra.mxu0 0.0
    %2327 = vmatprep.subr.mxu0 0.0
    %2328 = vmatpush1.xpose.msra.mxu0 0.0
    %2329 = vmatprep.subr.mxu0 0.0
    %2330 = vmatpush1.xpose.msra.mxu0 0.0
    %2331 = vmatprep.mubr.f32.mxu0 0.0
    %v2332 = vand.u32 %v2109, 4294901760
    %v2333 = vsub.f32 %v2109, %v2332
    %2334 = vmatmul.mubr.f32.gmra.mrb[0].mxu0 %v2333
    %v2335 = vpop.f32.mrb[0].mxu0
    %v2336 = vadd.f32 %v2262, %v2335
    %v2337 = vpop.f32.mrb[0].mxu0
    %2338 = vdwg.mxu0
    %2339 = vmatprep.subr.mxu0 0.0
    %v2340 = vand.u32 %v2111, 4294901760
    %2341 = vmatpush1.xpose.msra.mxu0 %v2340
    %2342 = vmatprep.subr.mxu0 0.0
    %2343 = vmatpush1.xpose.msra.mxu0 0.0
    %2344 = vmatprep.subr.mxu0 0.0
    %2345 = vmatpush1.xpose.msra.mxu0 0.0
    %2346 = vmatprep.subr.mxu0 0.0
    %2347 = vmatpush1.xpose.msra.mxu0 0.0
    %2348 = vmatprep.subr.mxu0 0.0
    %2349 = vmatpush1.xpose.msra.mxu0 0.0
    %2350 = vmatprep.subr.mxu0 0.0
    %2351 = vmatpush1.xpose.msra.mxu0 0.0
    %2352 = vmatprep.subr.mxu0 0.0
    %2353 = vmatpush1.xpose.msra.mxu0 0.0
    %2354 = vmatprep.subr.mxu0 0.0
    %2355 = vmatpush1.xpose.msra.mxu0 0.0
    %2356 = vmatprep.subr.mxu0 0.0
    %2357 = vmatpush1.xpose.msra.mxu0 0.0
    %2358 = vmatprep.subr.mxu0 0.0
    %2359 = vmatpush1.xpose.msra.mxu0 0.0
    %2360 = vmatprep.subr.mxu0 0.0
    %2361 = vmatpush1.xpose.msra.mxu0 0.0
    %2362 = vmatprep.subr.mxu0 0.0
    %2363 = vmatpush1.xpose.msra.mxu0 0.0
    %2364 = vmatprep.subr.mxu0 0.0
    %2365 = vmatpush1.xpose.msra.mxu0 0.0
    %2366 = vmatprep.subr.mxu0 0.0
    %2367 = vmatpush1.xpose.msra.mxu0 0.0
    %2368 = vmatprep.subr.mxu0 0.0
    %2369 = vmatpush1.xpose.msra.mxu0 0.0
    %2370 = vmatprep.subr.mxu0 0.0
    %2371 = vmatpush1.xpose.msra.mxu0 0.0
    %2372 = vmatprep.subr.mxu0 0.0
    %2373 = vmatpush1.xpose.msra.mxu0 0.0
    %2374 = vmatprep.subr.mxu0 0.0
    %2375 = vmatpush1.xpose.msra.mxu0 0.0
    %2376 = vmatprep.subr.mxu0 0.0
    %2377 = vmatpush1.xpose.msra.mxu0 0.0
    %2378 = vmatprep.subr.mxu0 0.0
    %2379 = vmatpush1.xpose.msra.mxu0 0.0
    %2380 = vmatprep.subr.mxu0 0.0
    %2381 = vmatpush1.xpose.msra.mxu0 0.0
    %2382 = vmatprep.subr.mxu0 0.0
    %2383 = vmatpush1.xpose.msra.mxu0 0.0
    %2384 = vmatprep.subr.mxu0 0.0
    %2385 = vmatpush1.xpose.msra.mxu0 0.0
    %2386 = vmatprep.subr.mxu0 0.0
    %2387 = vmatpush1.xpose.msra.mxu0 0.0
    %2388 = vmatprep.subr.mxu0 0.0
    %2389 = vmatpush1.xpose.msra.mxu0 0.0
    %2390 = vmatprep.subr.mxu0 0.0
    %2391 = vmatpush1.xpose.msra.mxu0 0.0
    %2392 = vmatprep.subr.mxu0 0.0
    %2393 = vmatpush1.xpose.msra.mxu0 0.0
    %2394 = vmatprep.subr.mxu0 0.0
    %2395 = vmatpush1.xpose.msra.mxu0 0.0
    %2396 = vmatprep.subr.mxu0 0.0
    %2397 = vmatpush1.xpose.msra.mxu0 0.0
    %2398 = vmatprep.subr.mxu0 0.0
    %2399 = vmatpush1.xpose.msra.mxu0 0.0
    %2400 = vmatprep.subr.mxu0 0.0
    %2401 = vmatpush1.xpose.msra.mxu0 0.0
    %2402 = vmatprep.subr.mxu0 0.0
    %2403 = vmatpush1.xpose.msra.mxu0 0.0
    %2404 = vmatprep.mubr.f32.mxu0 0.0
    %v2405 = vand.u32 %v2109, 4294901760
    %v2406 = vsub.f32 %v2109, %v2405
    %v2407 = vand.u32 %v2406, 4294901760
    %2408 = vmatmul.mubr.f32.gmra.mrb[0].mxu0 %v2407
    %v2409 = vpop.f32.mrb[0].mxu0
    %v2410 = vadd.f32 %v2336, %v2409
    %v2411 = vpop.f32.mrb[0].mxu0
    %2412 = vdwg.mxu0
    %2413 = vmatprep.subr.mxu0 0.0
    %v2414 = vand.u32 %v2111, 4294901760
    %v2415 = vsub.f32 %v2111, %v2414
    %v2416 = vand.u32 %v2415, 4294901760
    %2417 = vmatpush1.xpose.msra.mxu0 %v2416
    %2418 = vmatprep.subr.mxu0 0.0
    %2419 = vmatpush1.xpose.msra.mxu0 0.0
    %2420 = vmatprep.subr.mxu0 0.0
    %2421 = vmatpush1.xpose.msra.mxu0 0.0
    %2422 = vmatprep.subr.mxu0 0.0
    %2423 = vmatpush1.xpose.msra.mxu0 0.0
    %2424 = vmatprep.subr.mxu0 0.0
    %2425 = vmatpush1.xpose.msra.mxu0 0.0
    %2426 = vmatprep.subr.mxu0 0.0
    %2427 = vmatpush1.xpose.msra.mxu0 0.0
    %2428 = vmatprep.subr.mxu0 0.0
    %2429 = vmatpush1.xpose.msra.mxu0 0.0
    %2430 = vmatprep.subr.mxu0 0.0
    %2431 = vmatpush1.xpose.msra.mxu0 0.0
    %2432 = vmatprep.subr.mxu0 0.0
    %2433 = vmatpush1.xpose.msra.mxu0 0.0
    %2434 = vmatprep.subr.mxu0 0.0
    %2435 = vmatpush1.xpose.msra.mxu0 0.0
    %2436 = vmatprep.subr.mxu0 0.0
    %2437 = vmatpush1.xpose.msra.mxu0 0.0
    %2438 = vmatprep.subr.mxu0 0.0
    %2439 = vmatpush1.xpose.msra.mxu0 0.0
    %2440 = vmatprep.subr.mxu0 0.0
    %2441 = vmatpush1.xpose.msra.mxu0 0.0
    %2442 = vmatprep.subr.mxu0 0.0
    %2443 = vmatpush1.xpose.msra.mxu0 0.0
    %2444 = vmatprep.subr.mxu0 0.0
    %2445 = vmatpush1.xpose.msra.mxu0 0.0
    %2446 = vmatprep.subr.mxu0 0.0
    %2447 = vmatpush1.xpose.msra.mxu0 0.0
    %2448 = vmatprep.subr.mxu0 0.0
    %2449 = vmatpush1.xpose.msra.mxu0 0.0
    %2450 = vmatprep.subr.mxu0 0.0
    %2451 = vmatpush1.xpose.msra.mxu0 0.0
    %2452 = vmatprep.subr.mxu0 0.0
    %2453 = vmatpush1.xpose.msra.mxu0 0.0
    %2454 = vmatprep.subr.mxu0 0.0
    %2455 = vmatpush1.xpose.msra.mxu0 0.0
    %2456 = vmatprep.subr.mxu0 0.0
    %2457 = vmatpush1.xpose.msra.mxu0 0.0
    %2458 = vmatprep.subr.mxu0 0.0
    %2459 = vmatpush1.xpose.msra.mxu0 0.0
    %2460 = vmatprep.subr.mxu0 0.0
    %2461 = vmatpush1.xpose.msra.mxu0 0.0
    %2462 = vmatprep.subr.mxu0 0.0
    %2463 = vmatpush1.xpose.msra.mxu0 0.0
    %2464 = vmatprep.subr.mxu0 0.0
    %2465 = vmatpush1.xpose.msra.mxu0 0.0
    %2466 = vmatprep.subr.mxu0 0.0
    %2467 = vmatpush1.xpose.msra.mxu0 0.0
    %2468 = vmatprep.subr.mxu0 0.0
    %2469 = vmatpush1.xpose.msra.mxu0 0.0
    %2470 = vmatprep.subr.mxu0 0.0
    %2471 = vmatpush1.xpose.msra.mxu0 0.0
    %2472 = vmatprep.subr.mxu0 0.0
    %2473 = vmatpush1.xpose.msra.mxu0 0.0
    %2474 = vmatprep.subr.mxu0 0.0
    %2475 = vmatpush1.xpose.msra.mxu0 0.0
    %2476 = vmatprep.subr.mxu0 0.0
    %2477 = vmatpush1.xpose.msra.mxu0 0.0
    %2478 = vmatprep.subr.mxu0 0.0
    %2479 = vmatpush1.xpose.msra.mxu0 0.0
    %2480 = vmatprep.mubr.f32.mxu0 0.0
    %v2481 = vand.u32 %v2109, 4294901760
    %2482 = vmatmul.mubr.f32.gmra.mrb[0].mxu0 %v2481
    %v2483 = vpop.f32.mrb[0].mxu0
    %v2484 = vadd.f32 %v2410, %v2483
    %v2485 = vpop.f32.mrb[0].mxu0
    %2486 = vdwg.mxu0
    %2487 = vmatprep.subr.mxu0 0.0
    %v2488 = vand.u32 %v2111, 4294901760
    %2489 = vmatpush1.xpose.msra.mxu0 %v2488
    %2490 = vmatprep.subr.mxu0 0.0
    %2491 = vmatpush1.xpose.msra.mxu0 0.0
    %2492 = vmatprep.subr.mxu0 0.0
    %2493 = vmatpush1.xpose.msra.mxu0 0.0
    %2494 = vmatprep.subr.mxu0 0.0
    %2495 = vmatpush1.xpose.msra.mxu0 0.0
    %2496 = vmatprep.subr.mxu0 0.0
    %2497 = vmatpush1.xpose.msra.mxu0 0.0
    %2498 = vmatprep.subr.mxu0 0.0
    %2499 = vmatpush1.xpose.msra.mxu0 0.0
    %2500 = vmatprep.subr.mxu0 0.0
    %2501 = vmatpush1.xpose.msra.mxu0 0.0
    %2502 = vmatprep.subr.mxu0 0.0
    %2503 = vmatpush1.xpose.msra.mxu0 0.0
    %2504 = vmatprep.subr.mxu0 0.0
    %2505 = vmatpush1.xpose.msra.mxu0 0.0
    %2506 = vmatprep.subr.mxu0 0.0
    %2507 = vmatpush1.xpose.msra.mxu0 0.0
    %2508 = vmatprep.subr.mxu0 0.0
    %2509 = vmatpush1.xpose.msra.mxu0 0.0
    %2510 = vmatprep.subr.mxu0 0.0
    %2511 = vmatpush1.xpose.msra.mxu0 0.0
    %2512 = vmatprep.subr.mxu0 0.0
    %2513 = vmatpush1.xpose.msra.mxu0 0.0
    %2514 = vmatprep.subr.mxu0 0.0
    %2515 = vmatpush1.xpose.msra.mxu0 0.0
    %2516 = vmatprep.subr.mxu0 0.0
    %2517 = vmatpush1.xpose.msra.mxu0 0.0
    %2518 = vmatprep.subr.mxu0 0.0
    %2519 = vmatpush1.xpose.msra.mxu0 0.0
    %2520 = vmatprep.subr.mxu0 0.0
    %2521 = vmatpush1.xpose.msra.mxu0 0.0
    %2522 = vmatprep.subr.mxu0 0.0
    %2523 = vmatpush1.xpose.msra.mxu0 0.0
    %2524 = vmatprep.subr.mxu0 0.0
    %2525 = vmatpush1.xpose.msra.mxu0 0.0
    %2526 = vmatprep.subr.mxu0 0.0
    %2527 = vmatpush1.xpose.msra.mxu0 0.0
    %2528 = vmatprep.subr.mxu0 0.0
    %2529 = vmatpush1.xpose.msra.mxu0 0.0
    %2530 = vmatprep.subr.mxu0 0.0
    %2531 = vmatpush1.xpose.msra.mxu0 0.0
    %2532 = vmatprep.subr.mxu0 0.0
    %2533 = vmatpush1.xpose.msra.mxu0 0.0
    %2534 = vmatprep.subr.mxu0 0.0
    %2535 = vmatpush1.xpose.msra.mxu0 0.0
    %2536 = vmatprep.subr.mxu0 0.0
    %2537 = vmatpush1.xpose.msra.mxu0 0.0
    %2538 = vmatprep.subr.mxu0 0.0
    %2539 = vmatpush1.xpose.msra.mxu0 0.0
    %2540 = vmatprep.subr.mxu0 0.0
    %2541 = vmatpush1.xpose.msra.mxu0 0.0
    %2542 = vmatprep.subr.mxu0 0.0
    %2543 = vmatpush1.xpose.msra.mxu0 0.0
    %2544 = vmatprep.subr.mxu0 0.0
    %2545 = vmatpush1.xpose.msra.mxu0 0.0
    %2546 = vmatprep.subr.mxu0 0.0
    %2547 = vmatpush1.xpose.msra.mxu0 0.0
    %2548 = vmatprep.subr.mxu0 0.0
    %2549 = vmatpush1.xpose.msra.mxu0 0.0
    %2550 = vmatprep.subr.mxu0 0.0
    %2551 = vmatpush1.xpose.msra.mxu0 0.0
    %2552 = vmatprep.mubr.f32.mxu0 0.0
    %v2553 = vand.u32 %v2109, 4294901760
    %2554 = vmatmul.mubr.f32.gmra.mrb[0].mxu0 %v2553
    %v2555 = vpop.f32.mrb[0].mxu0
    %v2556 = vadd.f32 %v2484, %v2555
    %v2557 = vpop.f32.mrb[0].mxu0
    %2558 = vdwg.mxu0
    %v2559 = vmul.f32 %v2556, 0.35355338
    %v2560 = vsel %vm1190, %v2559, -inf
    %2561 = vmax.xlane.f32.xlu0 %v2560
    %v2562 = vpop.xlane.xlu0 %2561
    %v2563 = vsub.f32 %v2559, %v2562
    %v2564 = vmul.f32 %v2563, 1.442695
    %v2565 = vpow.pop %v2564
    %v2566 = vsel %vm1190, %v2565, 0.0
    %2567 = vadd.xlane.f32.xlu0 %v2566
    %v2568 = vpop.xlane.xlu0 %2567
    %v2569 = vrcp.pop %v2568
    %v2570 = vmul.f32 %v2565, %v2569
    %2571 = vrot.lane.b32.xlu0 %v1184, 56
    %v2572 = vpop.permute.xlu0 %2571
    %v2575 = vsel %vm1190, %v2570, 0
    %2577 = vmatprep.subr.mxu0 0.0
    %v2578 = vand.u32 %v2572, 4294901760
    %2579 = vmatpush1.msra.mxu0 %v2578
    %2580 = vmatprep.subr.mxu0 0.0
    %2581 = vmatpush1.msra.mxu0 0.0
    %2582 = vmatprep.subr.mxu0 0.0
    %2583 = vmatpush1.msra.mxu0 0.0
    %2584 = vmatprep.subr.mxu0 0.0
    %2585 = vmatpush1.msra.mxu0 0.0
    %2586 = vmatprep.subr.mxu0 0.0
    %2587 = vmatpush1.msra.mxu0 0.0
    %2588 = vmatprep.subr.mxu0 0.0
    %2589 = vmatpush1.msra.mxu0 0.0
    %2590 = vmatprep.subr.mxu0 0.0
    %2591 = vmatpush1.msra.mxu0 0.0
    %2592 = vmatprep.subr.mxu0 0.0
    %2593 = vmatpush1.msra.mxu0 0.0
    %2594 = vmatprep.subr.mxu0 0.0
    %2595 = vmatpush1.msra.mxu0 0.0
    %2596 = vmatprep.subr.mxu0 0.0
    %2597 = vmatpush1.msra.mxu0 0.0
    %2598 = vmatprep.subr.mxu0 0.0
    %2599 = vmatpush1.msra.mxu0 0.0
    %2600 = vmatprep.subr.mxu0 0.0
    %2601 = vmatpush1.msra.mxu0 0.0
    %2602 = vmatprep.subr.mxu0 0.0
    %2603 = vmatpush1.msra.mxu0 0.0
    %2604 = vmatprep.subr.mxu0 0.0
    %2605 = vmatpush1.msra.mxu0 0.0
    %2606 = vmatprep.subr.mxu0 0.0
    %2607 = vmatpush1.msra.mxu0 0.0
    %2608 = vmatprep.subr.mxu0 0.0
    %2609 = vmatpush1.msra.mxu0 0.0
    %2610 = vmatprep.subr.mxu0 0.0
    %2611 = vmatpush1.msra.mxu0 0.0
    %2612 = vmatprep.subr.mxu0 0.0
    %2613 = vmatpush1.msra.mxu0 0.0
    %2614 = vmatprep.subr.mxu0 0.0
    %2615 = vmatpush1.msra.mxu0 0.0
    %2616 = vmatprep.subr.mxu0 0.0
    %2617 = vmatpush1.msra.mxu0 0.0
    %2618 = vmatprep.subr.mxu0 0.0
    %2619 = vmatpush1.msra.mxu0 0.0
    %2620 = vmatprep.subr.mxu0 0.0
    %2621 = vmatpush1.msra.mxu0 0.0
    %2622 = vmatprep.subr.mxu0 0.0
    %2623 = vmatpush1.msra.mxu0 0.0
    %2624 = vmatprep.subr.mxu0 0.0
    %2625 = vmatpush1.msra.mxu0 0.0
    %2626 = vmatprep.subr.mxu0 0.0
    %2627 = vmatpush1.msra.mxu0 0.0
    %2628 = vmatprep.subr.mxu0 0.0
    %2629 = vmatpush1.msra.mxu0 0.0
    %2630 = vmatprep.subr.mxu0 0.0
    %2631 = vmatpush1.msra.mxu0 0.0
    %2632 = vmatprep.subr.mxu0 0.0
    %2633 = vmatpush1.msra.mxu0 0.0
    %2634 = vmatprep.subr.mxu0 0.0
    %2635 = vmatpush1.msra.mxu0 0.0
    %2636 = vmatprep.subr.mxu0 0.0
    %2637 = vmatpush1.msra.mxu0 0.0
    %2638 = vmatprep.subr.mxu0 0.0
    %2639 = vmatpush1.msra.mxu0 0.0
    %2640 = vmatprep.subr.mxu0 0.0
    %2641 = vmatpush1.msra.mxu0 0.0
    %2642 = vmatprep.mubr.f32.mxu0 0.0
    %v2643 = vand.u32 %v2575, 4294901760
    %v2644 = vsub.f32 %v2575, %v2643
    %v2645 = vand.u32 %v2644, 4294901760
    %v2646 = vsub.f32 %v2644, %v2645
    %v2647 = vand.u32 %v2646, 4294901760
    %2648 = vmatmul.mubr.f32.gmra.mrb[0].mxu0 %v2647
    %v2649 = vpop.f32.mrb[0].mxu0
    %v2650 = vadd.f32 0.0, %v2649
    %v2651 = vpop.f32.mrb[0].mxu0
    %2652 = vdwg.mxu0
    %2653 = vmatprep.subr.mxu0 0.0
    %v2654 = vand.u32 %v2572, 4294901760
    %v2655 = vsub.f32 %v2572, %v2654
    %v2656 = vand.u32 %v2655, 4294901760
    %v2657 = vsub.f32 %v2655, %v2656
    %v2658 = vand.u32 %v2657, 4294901760
    %2659 = vmatpush1.msra.mxu0 %v2658
    %2660 = vmatprep.subr.mxu0 0.0
    %2661 = vmatpush1.msra.mxu0 0.0
    %2662 = vmatprep.subr.mxu0 0.0
    %2663 = vmatpush1.msra.mxu0 0.0
    %2664 = vmatprep.subr.mxu0 0.0
    %2665 = vmatpush1.msra.mxu0 0.0
    %2666 = vmatprep.subr.mxu0 0.0
    %2667 = vmatpush1.msra.mxu0 0.0
    %2668 = vmatprep.subr.mxu0 0.0
    %2669 = vmatpush1.msra.mxu0 0.0
    %2670 = vmatprep.subr.mxu0 0.0
    %2671 = vmatpush1.msra.mxu0 0.0
    %2672 = vmatprep.subr.mxu0 0.0
    %2673 = vmatpush1.msra.mxu0 0.0
    %2674 = vmatprep.subr.mxu0 0.0
    %2675 = vmatpush1.msra.mxu0 0.0
    %2676 = vmatprep.subr.mxu0 0.0
    %2677 = vmatpush1.msra.mxu0 0.0
    %2678 = vmatprep.subr.mxu0 0.0
    %2679 = vmatpush1.msra.mxu0 0.0
    %2680 = vmatprep.subr.mxu0 0.0
    %2681 = vmatpush1.msra.mxu0 0.0
    %2682 = vmatprep.subr.mxu0 0.0
    %2683 = vmatpush1.msra.mxu0 0.0
    %2684 = vmatprep.subr.mxu0 0.0
    %2685 = vmatpush1.msra.mxu0 0.0
    %2686 = vmatprep.subr.mxu0 0.0
    %2687 = vmatpush1.msra.mxu0 0.0
    %2688 = vmatprep.subr.mxu0 0.0
    %2689 = vmatpush1.msra.mxu0 0.0
    %2690 = vmatprep.subr.mxu0 0.0
    %2691 = vmatpush1.msra.mxu0 0.0
    %2692 = vmatprep.subr.mxu0 0.0
    %2693 = vmatpush1.msra.mxu0 0.0
    %2694 = vmatprep.subr.mxu0 0.0
    %2695 = vmatpush1.msra.mxu0 0.0
    %2696 = vmatprep.subr.mxu0 0.0
    %2697 = vmatpush1.msra.mxu0 0.0
    %2698 = vmatprep.subr.mxu0 0.0
    %2699 = vmatpush1.msra.mxu0 0.0
    %2700 = vmatprep.subr.mxu0 0.0
    %2701 = vmatpush1.msra.mxu0 0.0
    %2702 = vmatprep.subr.mxu0 0.0
    %2703 = vmatpush1.msra.mxu0 0.0
    %2704 = vmatprep.subr.mxu0 0.0
    %2705 = vmatpush1.msra.mxu0 0.0
    %2706 = vmatprep.subr.mxu0 0.0
    %2707 = vmatpush1.msra.mxu0 0.0
    %2708 = vmatprep.subr.mxu0 0.0
    %2709 = vmatpush1.msra.mxu0 0.0
    %2710 = vmatprep.subr.mxu0 0.0
    %2711 = vmatpush1.msra.mxu0 0.0
    %2712 = vmatprep.subr.mxu0 0.0
    %2713 = vmatpush1.msra.mxu0 0.0
    %2714 = vmatprep.subr.mxu0 0.0
    %2715 = vmatpush1.msra.mxu0 0.0
    %2716 = vmatprep.subr.mxu0 0.0
    %2717 = vmatpush1.msra.mxu0 0.0
    %2718 = vmatprep.subr.mxu0 0.0
    %2719 = vmatpush1.msra.mxu0 0.0
    %2720 = vmatprep.subr.mxu0 0.0
    %2721 = vmatpush1.msra.mxu0 0.0
    %2722 = vmatprep.mubr.f32.mxu0 0.0
    %v2723 = vand.u32 %v2575, 4294901760
    %2724 = vmatmul.mubr.f32.gmra.mrb[0].mxu0 %v2723
    %v2725 = vpop.f32.mrb[0].mxu0
    %v2726 = vadd.f32 %v2650, %v2725
    %v2727 = vpop.f32.mrb[0].mxu0
    %2728 = vdwg.mxu0
    %2729 = vmatprep.subr.mxu0 0.0
    %v2730 = vand.u32 %v2572, 4294901760
    %v2731 = vsub.f32 %v2572, %v2730
    %2732 = vmatpush1.msra.mxu0 %v2731
    %2733 = vmatprep.subr.mxu0 0.0
    %2734 = vmatpush1.msra.mxu0 0.0
    %2735 = vmatprep.subr.mxu0 0.0
    %2736 = vmatpush1.msra.mxu0 0.0
    %2737 = vmatprep.subr.mxu0 0.0
    %2738 = vmatpush1.msra.mxu0 0.0
    %2739 = vmatprep.subr.mxu0 0.0
    %2740 = vmatpush1.msra.mxu0 0.0
    %2741 = vmatprep.subr.mxu0 0.0
    %2742 = vmatpush1.msra.mxu0 0.0
    %2743 = vmatprep.subr.mxu0 0.0
    %2744 = vmatpush1.msra.mxu0 0.0
    %2745 = vmatprep.subr.mxu0 0.0
    %2746 = vmatpush1.msra.mxu0 0.0
    %2747 = vmatprep.subr.mxu0 0.0
    %2748 = vmatpush1.msra.mxu0 0.0
    %2749 = vmatprep.subr.mxu0 0.0
    %2750 = vmatpush1.msra.mxu0 0.0
    %2751 = vmatprep.subr.mxu0 0.0
    %2752 = vmatpush1.msra.mxu0 0.0
    %2753 = vmatprep.subr.mxu0 0.0
    %2754 = vmatpush1.msra.mxu0 0.0
    %2755 = vmatprep.subr.mxu0 0.0
    %2756 = vmatpush1.msra.mxu0 0.0
    %2757 = vmatprep.subr.mxu0 0.0
    %2758 = vmatpush1.msra.mxu0 0.0
    %2759 = vmatprep.subr.mxu0 0.0
    %2760 = vmatpush1.msra.mxu0 0.0
    %2761 = vmatprep.subr.mxu0 0.0
    %2762 = vmatpush1.msra.mxu0 0.0
    %2763 = vmatprep.subr.mxu0 0.0
    %2764 = vmatpush1.msra.mxu0 0.0
    %2765 = vmatprep.subr.mxu0 0.0
    %2766 = vmatpush1.msra.mxu0 0.0
    %2767 = vmatprep.subr.mxu0 0.0
    %2768 = vmatpush1.msra.mxu0 0.0
    %2769 = vmatprep.subr.mxu0 0.0
    %2770 = vmatpush1.msra.mxu0 0.0
    %2771 = vmatprep.subr.mxu0 0.0
    %2772 = vmatpush1.msra.mxu0 0.0
    %2773 = vmatprep.subr.mxu0 0.0
    %2774 = vmatpush1.msra.mxu0 0.0
    %2775 = vmatprep.subr.mxu0 0.0
    %2776 = vmatpush1.msra.mxu0 0.0
    %2777 = vmatprep.subr.mxu0 0.0
    %2778 = vmatpush1.msra.mxu0 0.0
    %2779 = vmatprep.subr.mxu0 0.0
    %2780 = vmatpush1.msra.mxu0 0.0
    %2781 = vmatprep.subr.mxu0 0.0
    %2782 = vmatpush1.msra.mxu0 0.0
    %2783 = vmatprep.subr.mxu0 0.0
    %2784 = vmatpush1.msra.mxu0 0.0
    %2785 = vmatprep.subr.mxu0 0.0
    %2786 = vmatpush1.msra.mxu0 0.0
    %2787 = vmatprep.subr.mxu0 0.0
    %2788 = vmatpush1.msra.mxu0 0.0
    %2789 = vmatprep.subr.mxu0 0.0
    %2790 = vmatpush1.msra.mxu0 0.0
    %2791 = vmatprep.subr.mxu0 0.0
    %2792 = vmatpush1.msra.mxu0 0.0
    %2793 = vmatprep.subr.mxu0 0.0
    %2794 = vmatpush1.msra.mxu0 0.0
    %2795 = vmatprep.mubr.f32.mxu0 0.0
    %v2796 = vand.u32 %v2575, 4294901760
    %v2797 = vsub.f32 %v2575, %v2796
    %2798 = vmatmul.mubr.f32.gmra.mrb[0].mxu0 %v2797
    %v2799 = vpop.f32.mrb[0].mxu0
    %v2800 = vadd.f32 %v2726, %v2799
    %v2801 = vpop.f32.mrb[0].mxu0
    %2802 = vdwg.mxu0
    %2803 = vmatprep.subr.mxu0 0.0
    %v2804 = vand.u32 %v2572, 4294901760
    %2805 = vmatpush1.msra.mxu0 %v2804
    %2806 = vmatprep.subr.mxu0 0.0
    %2807 = vmatpush1.msra.mxu0 0.0
    %2808 = vmatprep.subr.mxu0 0.0
    %2809 = vmatpush1.msra.mxu0 0.0
    %2810 = vmatprep.subr.mxu0 0.0
    %2811 = vmatpush1.msra.mxu0 0.0
    %2812 = vmatprep.subr.mxu0 0.0
    %2813 = vmatpush1.msra.mxu0 0.0
    %2814 = vmatprep.subr.mxu0 0.0
    %2815 = vmatpush1.msra.mxu0 0.0
    %2816 = vmatprep.subr.mxu0 0.0
    %2817 = vmatpush1.msra.mxu0 0.0
    %2818 = vmatprep.subr.mxu0 0.0
    %2819 = vmatpush1.msra.mxu0 0.0
    %2820 = vmatprep.subr.mxu0 0.0
    %2821 = vmatpush1.msra.mxu0 0.0
    %2822 = vmatprep.subr.mxu0 0.0
    %2823 = vmatpush1.msra.mxu0 0.0
    %2824 = vmatprep.subr.mxu0 0.0
    %2825 = vmatpush1.msra.mxu0 0.0
    %2826 = vmatprep.subr.mxu0 0.0
    %2827 = vmatpush1.msra.mxu0 0.0
    %2828 = vmatprep.subr.mxu0 0.0
    %2829 = vmatpush1.msra.mxu0 0.0
    %2830 = vmatprep.subr.mxu0 0.0
    %2831 = vmatpush1.msra.mxu0 0.0
    %2832 = vmatprep.subr.mxu0 0.0
    %2833 = vmatpush1.msra.mxu0 0.0
    %2834 = vmatprep.subr.mxu0 0.0
    %2835 = vmatpush1.msra.mxu0 0.0
    %2836 = vmatprep.subr.mxu0 0.0
    %2837 = vmatpush1.msra.mxu0 0.0
    %2838 = vmatprep.subr.mxu0 0.0
    %2839 = vmatpush1.msra.mxu0 0.0
    %2840 = vmatprep.subr.mxu0 0.0
    %2841 = vmatpush1.msra.mxu0 0.0
    %2842 = vmatprep.subr.mxu0 0.0
    %2843 = vmatpush1.msra.mxu0 0.0
    %2844 = vmatprep.subr.mxu0 0.0
    %2845 = vmatpush1.msra.mxu0 0.0
    %2846 = vmatprep.subr.mxu0 0.0
    %2847 = vmatpush1.msra.mxu0 0.0
    %2848 = vmatprep.subr.mxu0 0.0
    %2849 = vmatpush1.msra.mxu0 0.0
    %2850 = vmatprep.subr.mxu0 0.0
    %2851 = vmatpush1.msra.mxu0 0.0
    %2852 = vmatprep.subr.mxu0 0.0
    %2853 = vmatpush1.msra.mxu0 0.0
    %2854 = vmatprep.subr.mxu0 0.0
    %2855 = vmatpush1.msra.mxu0 0.0
    %2856 = vmatprep.subr.mxu0 0.0
    %2857 = vmatpush1.msra.mxu0 0.0
    %2858 = vmatprep.subr.mxu0 0.0
    %2859 = vmatpush1.msra.mxu0 0.0
    %2860 = vmatprep.subr.mxu0 0.0
    %2861 = vmatpush1.msra.mxu0 0.0
    %2862 = vmatprep.subr.mxu0 0.0
    %2863 = vmatpush1.msra.mxu0 0.0
    %2864 = vmatprep.subr.mxu0 0.0
    %2865 = vmatpush1.msra.mxu0 0.0
    %2866 = vmatprep.subr.mxu0 0.0
    %2867 = vmatpush1.msra.mxu0 0.0
    %2868 = vmatprep.mubr.f32.mxu0 0.0
    %v2869 = vand.u32 %v2575, 4294901760
    %v2870 = vsub.f32 %v2575, %v2869
    %v2871 = vand.u32 %v2870, 4294901760
    %2872 = vmatmul.mubr.f32.gmra.mrb[0].mxu0 %v2871
    %v2873 = vpop.f32.mrb[0].mxu0
    %v2874 = vadd.f32 %v2800, %v2873
    %v2875 = vpop.f32.mrb[0].mxu0
    %2876 = vdwg.mxu0
    %2877 = vmatprep.subr.mxu0 0.0
    %v2878 = vand.u32 %v2572, 4294901760
    %v2879 = vsub.f32 %v2572, %v2878
    %v2880 = vand.u32 %v2879, 4294901760
    %2881 = vmatpush1.msra.mxu0 %v2880
    %2882 = vmatprep.subr.mxu0 0.0
    %2883 = vmatpush1.msra.mxu0 0.0
    %2884 = vmatprep.subr.mxu0 0.0
    %2885 = vmatpush1.msra.mxu0 0.0
    %2886 = vmatprep.subr.mxu0 0.0
    %2887 = vmatpush1.msra.mxu0 0.0
    %2888 = vmatprep.subr.mxu0 0.0
    %2889 = vmatpush1.msra.mxu0 0.0
    %2890 = vmatprep.subr.mxu0 0.0
    %2891 = vmatpush1.msra.mxu0 0.0
    %2892 = vmatprep.subr.mxu0 0.0
    %2893 = vmatpush1.msra.mxu0 0.0
    %2894 = vmatprep.subr.mxu0 0.0
    %2895 = vmatpush1.msra.mxu0 0.0
    %2896 = vmatprep.subr.mxu0 0.0
    %2897 = vmatpush1.msra.mxu0 0.0
    %2898 = vmatprep.subr.mxu0 0.0
    %2899 = vmatpush1.msra.mxu0 0.0
    %2900 = vmatprep.subr.mxu0 0.0
    %2901 = vmatpush1.msra.mxu0 0.0
    %2902 = vmatprep.subr.mxu0 0.0
    %2903 = vmatpush1.msra.mxu0 0.0
    %2904 = vmatprep.subr.mxu0 0.0
    %2905 = vmatpush1.msra.mxu0 0.0
    %2906 = vmatprep.subr.mxu0 0.0
    %2907 = vmatpush1.msra.mxu0 0.0
    %2908 = vmatprep.subr.mxu0 0.0
    %2909 = vmatpush1.msra.mxu0 0.0
    %2910 = vmatprep.subr.mxu0 0.0
    %2911 = vmatpush1.msra.mxu0 0.0
    %2912 = vmatprep.subr.mxu0 0.0
    %2913 = vmatpush1.msra.mxu0 0.0
    %2914 = vmatprep.subr.mxu0 0.0
    %2915 = vmatpush1.msra.mxu0 0.0
    %2916 = vmatprep.subr.mxu0 0.0
    %2917 = vmatpush1.msra.mxu0 0.0
    %2918 = vmatprep.subr.mxu0 0.0
    %2919 = vmatpush1.msra.mxu0 0.0
    %2920 = vmatprep.subr.mxu0 0.0
    %2921 = vmatpush1.msra.mxu0 0.0
    %2922 = vmatprep.subr.mxu0 0.0
    %2923 = vmatpush1.msra.mxu0 0.0
    %2924 = vmatprep.subr.mxu0 0.0
    %2925 = vmatpush1.msra.mxu0 0.0
    %2926 = vmatprep.subr.mxu0 0.0
    %2927 = vmatpush1.msra.mxu0 0.0
    %2928 = vmatprep.subr.mxu0 0.0
    %2929 = vmatpush1.msra.mxu0 0.0
    %2930 = vmatprep.subr.mxu0 0.0
    %2931 = vmatpush1.msra.mxu0 0.0
    %2932 = vmatprep.subr.mxu0 0.0
    %2933 = vmatpush1.msra.mxu0 0.0
    %2934 = vmatprep.subr.mxu0 0.0
    %2935 = vmatpush1.msra.mxu0 0.0
    %2936 = vmatprep.subr.mxu0 0.0
    %2937 = vmatpush1.msra.mxu0 0.0
    %2938 = vmatprep.subr.mxu0 0.0
    %2939 = vmatpush1.msra.mxu0 0.0
    %2940 = vmatprep.subr.mxu0 0.0
    %2941 = vmatpush1.msra.mxu0 0.0
    %2942 = vmatprep.subr.mxu0 0.0
    %2943 = vmatpush1.msra.mxu0 0.0
    %2944 = vmatprep.mubr.f32.mxu0 0.0
    %v2945 = vand.u32 %v2575, 4294901760
    %2946 = vmatmul.mubr.f32.gmra.mrb[0].mxu0 %v2945
    %v2947 = vpop.f32.mrb[0].mxu0
    %v2948 = vadd.f32 %v2874, %v2947
    %v2949 = vpop.f32.mrb[0].mxu0
    %2950 = vdwg.mxu0
    %2951 = vmatprep.subr.mxu0 0.0
    %v2952 = vand.u32 %v2572, 4294901760
    %2953 = vmatpush1.msra.mxu0 %v2952
    %2954 = vmatprep.subr.mxu0 0.0
    %2955 = vmatpush1.msra.mxu0 0.0
    %2956 = vmatprep.subr.mxu0 0.0
    %2957 = vmatpush1.msra.mxu0 0.0
    %2958 = vmatprep.subr.mxu0 0.0
    %2959 = vmatpush1.msra.mxu0 0.0
    %2960 = vmatprep.subr.mxu0 0.0
    %2961 = vmatpush1.msra.mxu0 0.0
    %2962 = vmatprep.subr.mxu0 0.0
    %2963 = vmatpush1.msra.mxu0 0.0
    %2964 = vmatprep.subr.mxu0 0.0
    %2965 = vmatpush1.msra.mxu0 0.0
    %2966 = vmatprep.subr.mxu0 0.0
    %2967 = vmatpush1.msra.mxu0 0.0
    %2968 = vmatprep.subr.mxu0 0.0
    %2969 = vmatpush1.msra.mxu0 0.0
    %2970 = vmatprep.subr.mxu0 0.0
    %2971 = vmatpush1.msra.mxu0 0.0
    %2972 = vmatprep.subr.mxu0 0.0
    %2973 = vmatpush1.msra.mxu0 0.0
    %2974 = vmatprep.subr.mxu0 0.0
    %2975 = vmatpush1.msra.mxu0 0.0
    %2976 = vmatprep.subr.mxu0 0.0
    %2977 = vmatpush1.msra.mxu0 0.0
    %2978 = vmatprep.subr.mxu0 0.0
    %2979 = vmatpush1.msra.mxu0 0.0
    %2980 = vmatprep.subr.mxu0 0.0
    %2981 = vmatpush1.msra.mxu0 0.0
    %2982 = vmatprep.subr.mxu0 0.0
    %2983 = vmatpush1.msra.mxu0 0.0
    %2984 = vmatprep.subr.mxu0 0.0
    %2985 = vmatpush1.msra.mxu0 0.0
    %2986 = vmatprep.subr.mxu0 0.0
    %2987 = vmatpush1.msra.mxu0 0.0
    %2988 = vmatprep.subr.mxu0 0.0
    %2989 = vmatpush1.msra.mxu0 0.0
    %2990 = vmatprep.subr.mxu0 0.0
    %2991 = vmatpush1.msra.mxu0 0.0
    %2992 = vmatprep.subr.mxu0 0.0
    %2993 = vmatpush1.msra.mxu0 0.0
    %2994 = vmatprep.subr.mxu0 0.0
    %2995 = vmatpush1.msra.mxu0 0.0
    %2996 = vmatprep.subr.mxu0 0.0
    %2997 = vmatpush1.msra.mxu0 0.0
    %2998 = vmatprep.subr.mxu0 0.0
    %2999 = vmatpush1.msra.mxu0 0.0
    %3000 = vmatprep.subr.mxu0 0.0
    %3001 = vmatpush1.msra.mxu0 0.0
    %3002 = vmatprep.subr.mxu0 0.0
    %3003 = vmatpush1.msra.mxu0 0.0
    %3004 = vmatprep.subr.mxu0 0.0
    %3005 = vmatpush1.msra.mxu0 0.0
    %3006 = vmatprep.subr.mxu0 0.0
    %3007 = vmatpush1.msra.mxu0 0.0
    %3008 = vmatprep.subr.mxu0 0.0
    %3009 = vmatpush1.msra.mxu0 0.0
    %3010 = vmatprep.subr.mxu0 0.0
    %3011 = vmatpush1.msra.mxu0 0.0
    %3012 = vmatprep.subr.mxu0 0.0
    %3013 = vmatpush1.msra.mxu0 0.0
    %3014 = vmatprep.subr.mxu0 0.0
    %3015 = vmatpush1.msra.mxu0 0.0
    %3016 = vmatprep.mubr.f32.mxu0 0.0
    %v3017 = vand.u32 %v2575, 4294901760
    %3018 = vmatmul.mubr.f32.gmra.mrb[0].mxu0 %v3017
    %v3019 = vpop.f32.mrb[0].mxu0
    %v3020 = vadd.f32 %v2948, %v3019
    %v3021 = vpop.f32.mrb[0].mxu0
    %3022 = vdwg.mxu0
    %3023 = vrot.lane.b32.xlu0 %v1184, 112
    %v3024 = vpop.permute.xlu0 %3023
    %3025 = vrot.lane.b32.xlu0 %v1184, 80
    %v3026 = vpop.permute.xlu0 %3025
    %v3027 = vsel %vm1190, %v3024, 0
    %v3029 = vsel %vm1190, %v3026, 0
    %3031 = vmatprep.subr.mxu0 0.0
    %v3032 = vand.u32 %v3029, 4294901760
    %3033 = vmatpush1.xpose.msra.mxu0 %v3032
    %3034 = vmatprep.subr.mxu0 0.0
    %3035 = vmatpush1.xpose.msra.mxu0 0.0
    %3036 = vmatprep.subr.mxu0 0.0
    %3037 = vmatpush1.xpose.msra.mxu0 0.0
    %3038 = vmatprep.subr.mxu0 0.0
    %3039 = vmatpush1.xpose.msra.mxu0 0.0
    %3040 = vmatprep.subr.mxu0 0.0
    %3041 = vmatpush1.xpose.msra.mxu0 0.0
    %3042 = vmatprep.subr.mxu0 0.0
    %3043 = vmatpush1.xpose.msra.mxu0 0.0
    %3044 = vmatprep.subr.mxu0 0.0
    %3045 = vmatpush1.xpose.msra.mxu0 0.0
    %3046 = vmatprep.subr.mxu0 0.0
    %3047 = vmatpush1.xpose.msra.mxu0 0.0
    %3048 = vmatprep.subr.mxu0 0.0
    %3049 = vmatpush1.xpose.msra.mxu0 0.0
    %3050 = vmatprep.subr.mxu0 0.0
    %3051 = vmatpush1.xpose.msra.mxu0 0.0
    %3052 = vmatprep.subr.mxu0 0.0
    %3053 = vmatpush1.xpose.msra.mxu0 0.0
    %3054 = vmatprep.subr.mxu0 0.0
    %3055 = vmatpush1.xpose.msra.mxu0 0.0
    %3056 = vmatprep.subr.mxu0 0.0
    %3057 = vmatpush1.xpose.msra.mxu0 0.0
    %3058 = vmatprep.subr.mxu0 0.0
    %3059 = vmatpush1.xpose.msra.mxu0 0.0
    %3060 = vmatprep.subr.mxu0 0.0
    %3061 = vmatpush1.xpose.msra.mxu0 0.0
    %3062 = vmatprep.subr.mxu0 0.0
    %3063 = vmatpush1.xpose.msra.mxu0 0.0
    %3064 = vmatprep.subr.mxu0 0.0
    %3065 = vmatpush1.xpose.msra.mxu0 0.0
    %3066 = vmatprep.subr.mxu0 0.0
    %3067 = vmatpush1.xpose.msra.mxu0 0.0
    %3068 = vmatprep.subr.mxu0 0.0
    %3069 = vmatpush1.xpose.msra.mxu0 0.0
    %3070 = vmatprep.subr.mxu0 0.0
    %3071 = vmatpush1.xpose.msra.mxu0 0.0
    %3072 = vmatprep.subr.mxu0 0.0
    %3073 = vmatpush1.xpose.msra.mxu0 0.0
    %3074 = vmatprep.subr.mxu0 0.0
    %3075 = vmatpush1.xpose.msra.mxu0 0.0
    %3076 = vmatprep.subr.mxu0 0.0
    %3077 = vmatpush1.xpose.msra.mxu0 0.0
    %3078 = vmatprep.subr.mxu0 0.0
    %3079 = vmatpush1.xpose.msra.mxu0 0.0
    %3080 = vmatprep.subr.mxu0 0.0
    %3081 = vmatpush1.xpose.msra.mxu0 0.0
    %3082 = vmatprep.subr.mxu0 0.0
    %3083 = vmatpush1.xpose.msra.mxu0 0.0
    %3084 = vmatprep.subr.mxu0 0.0
    %3085 = vmatpush1.xpose.msra.mxu0 0.0
    %3086 = vmatprep.subr.mxu0 0.0
    %3087 = vmatpush1.xpose.msra.mxu0 0.0
    %3088 = vmatprep.subr.mxu0 0.0
    %3089 = vmatpush1.xpose.msra.mxu0 0.0
    %3090 = vmatprep.subr.mxu0 0.0
    %3091 = vmatpush1.xpose.msra.mxu0 0.0
    %3092 = vmatprep.subr.mxu0 0.0
    %3093 = vmatpush1.xpose.msra.mxu0 0.0
    %3094 = vmatprep.subr.mxu0 0.0
    %3095 = vmatpush1.xpose.msra.mxu0 0.0
    %3096 = vmatprep.mubr.f32.mxu0 0.0
    %v3097 = vand.u32 %v3027, 4294901760
    %v3098 = vsub.f32 %v3027, %v3097
    %v3099 = vand.u32 %v3098, 4294901760
    %v3100 = vsub.f32 %v3098, %v3099
    %v3101 = vand.u32 %v3100, 4294901760
    %3102 = vmatmul.mubr.f32.gmra.mrb[0].mxu0 %v3101
    %v3103 = vpop.f32.mrb[0].mxu0
    %v3104 = vadd.f32 0.0, %v3103
    %v3105 = vpop.f32.mrb[0].mxu0
    %3106 = vdwg.mxu0
    %3107 = vmatprep.subr.mxu0 0.0
    %v3108 = vand.u32 %v3029, 4294901760
    %v3109 = vsub.f32 %v3029, %v3108
    %v3110 = vand.u32 %v3109, 4294901760
    %v3111 = vsub.f32 %v3109, %v3110
    %v3112 = vand.u32 %v3111, 4294901760
    %3113 = vmatpush1.xpose.msra.mxu0 %v3112
    %3114 = vmatprep.subr.mxu0 0.0
    %3115 = vmatpush1.xpose.msra.mxu0 0.0
    %3116 = vmatprep.subr.mxu0 0.0
    %3117 = vmatpush1.xpose.msra.mxu0 0.0
    %3118 = vmatprep.subr.mxu0 0.0
    %3119 = vmatpush1.xpose.msra.mxu0 0.0
    %3120 = vmatprep.subr.mxu0 0.0
    %3121 = vmatpush1.xpose.msra.mxu0 0.0
    %3122 = vmatprep.subr.mxu0 0.0
    %3123 = vmatpush1.xpose.msra.mxu0 0.0
    %3124 = vmatprep.subr.mxu0 0.0
    %3125 = vmatpush1.xpose.msra.mxu0 0.0
    %3126 = vmatprep.subr.mxu0 0.0
    %3127 = vmatpush1.xpose.msra.mxu0 0.0
    %3128 = vmatprep.subr.mxu0 0.0
    %3129 = vmatpush1.xpose.msra.mxu0 0.0
    %3130 = vmatprep.subr.mxu0 0.0
    %3131 = vmatpush1.xpose.msra.mxu0 0.0
    %3132 = vmatprep.subr.mxu0 0.0
    %3133 = vmatpush1.xpose.msra.mxu0 0.0
    %3134 = vmatprep.subr.mxu0 0.0
    %3135 = vmatpush1.xpose.msra.mxu0 0.0
    %3136 = vmatprep.subr.mxu0 0.0
    %3137 = vmatpush1.xpose.msra.mxu0 0.0
    %3138 = vmatprep.subr.mxu0 0.0
    %3139 = vmatpush1.xpose.msra.mxu0 0.0
    %3140 = vmatprep.subr.mxu0 0.0
    %3141 = vmatpush1.xpose.msra.mxu0 0.0
    %3142 = vmatprep.subr.mxu0 0.0
    %3143 = vmatpush1.xpose.msra.mxu0 0.0
    %3144 = vmatprep.subr.mxu0 0.0
    %3145 = vmatpush1.xpose.msra.mxu0 0.0
    %3146 = vmatprep.subr.mxu0 0.0
    %3147 = vmatpush1.xpose.msra.mxu0 0.0
    %3148 = vmatprep.subr.mxu0 0.0
    %3149 = vmatpush1.xpose.msra.mxu0 0.0
    %3150 = vmatprep.subr.mxu0 0.0
    %3151 = vmatpush1.xpose.msra.mxu0 0.0
    %3152 = vmatprep.subr.mxu0 0.0
    %3153 = vmatpush1.xpose.msra.mxu0 0.0
    %3154 = vmatprep.subr.mxu0 0.0
    %3155 = vmatpush1.xpose.msra.mxu0 0.0
    %3156 = vmatprep.subr.mxu0 0.0
    %3157 = vmatpush1.xpose.msra.mxu0 0.0
    %3158 = vmatprep.subr.mxu0 0.0
    %3159 = vmatpush1.xpose.msra.mxu0 0.0
    %3160 = vmatprep.subr.mxu0 0.0
    %3161 = vmatpush1.xpose.msra.mxu0 0.0
    %3162 = vmatprep.subr.mxu0 0.0
    %3163 = vmatpush1.xpose.msra.mxu0 0.0
    %3164 = vmatprep.subr.mxu0 0.0
    %3165 = vmatpush1.xpose.msra.mxu0 0.0
    %3166 = vmatprep.subr.mxu0 0.0
    %3167 = vmatpush1.xpose.msra.mxu0 0.0
    %3168 = vmatprep.subr.mxu0 0.0
    %3169 = vmatpush1.xpose.msra.mxu0 0.0
    %3170 = vmatprep.subr.mxu0 0.0
    %3171 = vmatpush1.xpose.msra.mxu0 0.0
    %3172 = vmatprep.subr.mxu0 0.0
    %3173 = vmatpush1.xpose.msra.mxu0 0.0
    %3174 = vmatprep.subr.mxu0 0.0
    %3175 = vmatpush1.xpose.msra.mxu0 0.0
    %3176 = vmatprep.mubr.f32.mxu0 0.0
    %v3177 = vand.u32 %v3027, 4294901760
    %3178 = vmatmul.mubr.f32.gmra.mrb[0].mxu0 %v3177
    %v3179 = vpop.f32.mrb[0].mxu0
    %v3180 = vadd.f32 %v3104, %v3179
    %v3181 = vpop.f32.mrb[0].mxu0
    %3182 = vdwg.mxu0
    %3183 = vmatprep.subr.mxu0 0.0
    %v3184 = vand.u32 %v3029, 4294901760
    %v3185 = vsub.f32 %v3029, %v3184
    %3186 = vmatpush1.xpose.msra.mxu0 %v3185
    %3187 = vmatprep.subr.mxu0 0.0
    %3188 = vmatpush1.xpose.msra.mxu0 0.0
    %3189 = vmatprep.subr.mxu0 0.0
    %3190 = vmatpush1.xpose.msra.mxu0 0.0
    %3191 = vmatprep.subr.mxu0 0.0
    %3192 = vmatpush1.xpose.msra.mxu0 0.0
    %3193 = vmatprep.subr.mxu0 0.0
    %3194 = vmatpush1.xpose.msra.mxu0 0.0
    %3195 = vmatprep.subr.mxu0 0.0
    %3196 = vmatpush1.xpose.msra.mxu0 0.0
    %3197 = vmatprep.subr.mxu0 0.0
    %3198 = vmatpush1.xpose.msra.mxu0 0.0
    %3199 = vmatprep.subr.mxu0 0.0
    %3200 = vmatpush1.xpose.msra.mxu0 0.0
    %3201 = vmatprep.subr.mxu0 0.0
    %3202 = vmatpush1.xpose.msra.mxu0 0.0
    %3203 = vmatprep.subr.mxu0 0.0
    %3204 = vmatpush1.xpose.msra.mxu0 0.0
    %3205 = vmatprep.subr.mxu0 0.0
    %3206 = vmatpush1.xpose.msra.mxu0 0.0
    %3207 = vmatprep.subr.mxu0 0.0
    %3208 = vmatpush1.xpose.msra.mxu0 0.0
    %3209 = vmatprep.subr.mxu0 0.0
    %3210 = vmatpush1.xpose.msra.mxu0 0.0
    %3211 = vmatprep.subr.mxu0 0.0
    %3212 = vmatpush1.xpose.msra.mxu0 0.0
    %3213 = vmatprep.subr.mxu0 0.0
    %3214 = vmatpush1.xpose.msra.mxu0 0.0
    %3215 = vmatprep.subr.mxu0 0.0
    %3216 = vmatpush1.xpose.msra.mxu0 0.0
    %3217 = vmatprep.subr.mxu0 0.0
    %3218 = vmatpush1.xpose.msra.mxu0 0.0
    %3219 = vmatprep.subr.mxu0 0.0
    %3220 = vmatpush1.xpose.msra.mxu0 0.0
    %3221 = vmatprep.subr.mxu0 0.0
    %3222 = vmatpush1.xpose.msra.mxu0 0.0
    %3223 = vmatprep.subr.mxu0 0.0
    %3224 = vmatpush1.xpose.msra.mxu0 0.0
    %3225 = vmatprep.subr.mxu0 0.0
    %3226 = vmatpush1.xpose.msra.mxu0 0.0
    %3227 = vmatprep.subr.mxu0 0.0
    %3228 = vmatpush1.xpose.msra.mxu0 0.0
    %3229 = vmatprep.subr.mxu0 0.0
    %3230 = vmatpush1.xpose.msra.mxu0 0.0
    %3231 = vmatprep.subr.mxu0 0.0
    %3232 = vmatpush1.xpose.msra.mxu0 0.0
    %3233 = vmatprep.subr.mxu0 0.0
    %3234 = vmatpush1.xpose.msra.mxu0 0.0
    %3235 = vmatprep.subr.mxu0 0.0
    %3236 = vmatpush1.xpose.msra.mxu0 0.0
    %3237 = vmatprep.subr.mxu0 0.0
    %3238 = vmatpush1.xpose.msra.mxu0 0.0
    %3239 = vmatprep.subr.mxu0 0.0
    %3240 = vmatpush1.xpose.msra.mxu0 0.0
    %3241 = vmatprep.subr.mxu0 0.0
    %3242 = vmatpush1.xpose.msra.mxu0 0.0
    %3243 = vmatprep.subr.mxu0 0.0
    %3244 = vmatpush1.xpose.msra.mxu0 0.0
    %3245 = vmatprep.subr.mxu0 0.0
    %3246 = vmatpush1.xpose.msra.mxu0 0.0
    %3247 = vmatprep.subr.mxu0 0.0
    %3248 = vmatpush1.xpose.msra.mxu0 0.0
    %3249 = vmatprep.mubr.f32.mxu0 0.0
    %v3250 = vand.u32 %v3027, 4294901760
    %v3251 = vsub.f32 %v3027, %v3250
    %3252 = vmatmul.mubr.f32.gmra.mrb[0].mxu0 %v3251
    %v3253 = vpop.f32.mrb[0].mxu0
    %v3254 = vadd.f32 %v3180, %v3253
    %v3255 = vpop.f32.mrb[0].mxu0
    %3256 = vdwg.mxu0
    %3257 = vmatprep.subr.mxu0 0.0
    %v3258 = vand.u32 %v3029, 4294901760
    %3259 = vmatpush1.xpose.msra.mxu0 %v3258
    %3260 = vmatprep.subr.mxu0 0.0
    %3261 = vmatpush1.xpose.msra.mxu0 0.0
    %3262 = vmatprep.subr.mxu0 0.0
    %3263 = vmatpush1.xpose.msra.mxu0 0.0
    %3264 = vmatprep.subr.mxu0 0.0
    %3265 = vmatpush1.xpose.msra.mxu0 0.0
    %3266 = vmatprep.subr.mxu0 0.0
    %3267 = vmatpush1.xpose.msra.mxu0 0.0
    %3268 = vmatprep.subr.mxu0 0.0
    %3269 = vmatpush1.xpose.msra.mxu0 0.0
    %3270 = vmatprep.subr.mxu0 0.0
    %3271 = vmatpush1.xpose.msra.mxu0 0.0
    %3272 = vmatprep.subr.mxu0 0.0
    %3273 = vmatpush1.xpose.msra.mxu0 0.0
    %3274 = vmatprep.subr.mxu0 0.0
    %3275 = vmatpush1.xpose.msra.mxu0 0.0
    %3276 = vmatprep.subr.mxu0 0.0
    %3277 = vmatpush1.xpose.msra.mxu0 0.0
    %3278 = vmatprep.subr.mxu0 0.0
    %3279 = vmatpush1.xpose.msra.mxu0 0.0
    %3280 = vmatprep.subr.mxu0 0.0
    %3281 = vmatpush1.xpose.msra.mxu0 0.0
    %3282 = vmatprep.subr.mxu0 0.0
    %3283 = vmatpush1.xpose.msra.mxu0 0.0
    %3284 = vmatprep.subr.mxu0 0.0
    %3285 = vmatpush1.xpose.msra.mxu0 0.0
    %3286 = vmatprep.subr.mxu0 0.0
    %3287 = vmatpush1.xpose.msra.mxu0 0.0
    %3288 = vmatprep.subr.mxu0 0.0
    %3289 = vmatpush1.xpose.msra.mxu0 0.0
    %3290 = vmatprep.subr.mxu0 0.0
    %3291 = vmatpush1.xpose.msra.mxu0 0.0
    %3292 = vmatprep.subr.mxu0 0.0
    %3293 = vmatpush1.xpose.msra.mxu0 0.0
    %3294 = vmatprep.subr.mxu0 0.0
    %3295 = vmatpush1.xpose.msra.mxu0 0.0
    %3296 = vmatprep.subr.mxu0 0.0
    %3297 = vmatpush1.xpose.msra.mxu0 0.0
    %3298 = vmatprep.subr.mxu0 0.0
    %3299 = vmatpush1.xpose.msra.mxu0 0.0
    %3300 = vmatprep.subr.mxu0 0.0
    %3301 = vmatpush1.xpose.msra.mxu0 0.0
    %3302 = vmatprep.subr.mxu0 0.0
    %3303 = vmatpush1.xpose.msra.mxu0 0.0
    %3304 = vmatprep.subr.mxu0 0.0
    %3305 = vmatpush1.xpose.msra.mxu0 0.0
    %3306 = vmatprep.subr.mxu0 0.0
    %3307 = vmatpush1.xpose.msra.mxu0 0.0
    %3308 = vmatprep.subr.mxu0 0.0
    %3309 = vmatpush1.xpose.msra.mxu0 0.0
    %3310 = vmatprep.subr.mxu0 0.0
    %3311 = vmatpush1.xpose.msra.mxu0 0.0
    %3312 = vmatprep.subr.mxu0 0.0
    %3313 = vmatpush1.xpose.msra.mxu0 0.0
    %3314 = vmatprep.subr.mxu0 0.0
    %3315 = vmatpush1.xpose.msra.mxu0 0.0
    %3316 = vmatprep.subr.mxu0 0.0
    %3317 = vmatpush1.xpose.msra.mxu0 0.0
    %3318 = vmatprep.subr.mxu0 0.0
    %3319 = vmatpush1.xpose.msra.mxu0 0.0
    %3320 = vmatprep.subr.mxu0 0.0
    %3321 = vmatpush1.xpose.msra.mxu0 0.0
    %3322 = vmatprep.mubr.f32.mxu0 0.0
    %v3323 = vand.u32 %v3027, 4294901760
    %v3324 = vsub.f32 %v3027, %v3323
    %v3325 = vand.u32 %v3324, 4294901760
    %3326 = vmatmul.mubr.f32.gmra.mrb[0].mxu0 %v3325
    %v3327 = vpop.f32.mrb[0].mxu0
    %v3328 = vadd.f32 %v3254, %v3327
    %v3329 = vpop.f32.mrb[0].mxu0
    %3330 = vdwg.mxu0
    %3331 = vmatprep.subr.mxu0 0.0
    %v3332 = vand.u32 %v3029, 4294901760
    %v3333 = vsub.f32 %v3029, %v3332
    %v3334 = vand.u32 %v3333, 4294901760
    %3335 = vmatpush1.xpose.msra.mxu0 %v3334
    %3336 = vmatprep.subr.mxu0 0.0
    %3337 = vmatpush1.xpose.msra.mxu0 0.0
    %3338 = vmatprep.subr.mxu0 0.0
    %3339 = vmatpush1.xpose.msra.mxu0 0.0
    %3340 = vmatprep.subr.mxu0 0.0
    %3341 = vmatpush1.xpose.msra.mxu0 0.0
    %3342 = vmatprep.subr.mxu0 0.0
    %3343 = vmatpush1.xpose.msra.mxu0 0.0
    %3344 = vmatprep.subr.mxu0 0.0
    %3345 = vmatpush1.xpose.msra.mxu0 0.0
    %3346 = vmatprep.subr.mxu0 0.0
    %3347 = vmatpush1.xpose.msra.mxu0 0.0
    %3348 = vmatprep.subr.mxu0 0.0
    %3349 = vmatpush1.xpose.msra.mxu0 0.0
    %3350 = vmatprep.subr.mxu0 0.0
    %3351 = vmatpush1.xpose.msra.mxu0 0.0
    %3352 = vmatprep.subr.mxu0 0.0
    %3353 = vmatpush1.xpose.msra.mxu0 0.0
    %3354 = vmatprep.subr.mxu0 0.0
    %3355 = vmatpush1.xpose.msra.mxu0 0.0
    %3356 = vmatprep.subr.mxu0 0.0
    %3357 = vmatpush1.xpose.msra.mxu0 0.0
    %3358 = vmatprep.subr.mxu0 0.0
    %3359 = vmatpush1.xpose.msra.mxu0 0.0
    %3360 = vmatprep.subr.mxu0 0.0
    %3361 = vmatpush1.xpose.msra.mxu0 0.0
    %3362 = vmatprep.subr.mxu0 0.0
    %3363 = vmatpush1.xpose.msra.mxu0 0.0
    %3364 = vmatprep.subr.mxu0 0.0
    %3365 = vmatpush1.xpose.msra.mxu0 0.0
    %3366 = vmatprep.subr.mxu0 0.0
    %3367 = vmatpush1.xpose.msra.mxu0 0.0
    %3368 = vmatprep.subr.mxu0 0.0
    %3369 = vmatpush1.xpose.msra.mxu0 0.0
    %3370 = vmatprep.subr.mxu0 0.0
    %3371 = vmatpush1.xpose.msra.mxu0 0.0
    %3372 = vmatprep.subr.mxu0 0.0
    %3373 = vmatpush1.xpose.msra.mxu0 0.0
    %3374 = vmatprep.subr.mxu0 0.0
    %3375 = vmatpush1.xpose.msra.mxu0 0.0
    %3376 = vmatprep.subr.mxu0 0.0
    %3377 = vmatpush1.xpose.msra.mxu0 0.0
    %3378 = vmatprep.subr.mxu0 0.0
    %3379 = vmatpush1.xpose.msra.mxu0 0.0
    %3380 = vmatprep.subr.mxu0 0.0
    %3381 = vmatpush1.xpose.msra.mxu0 0.0
    %3382 = vmatprep.subr.mxu0 0.0
    %3383 = vmatpush1.xpose.msra.mxu0 0.0
    %3384 = vmatprep.subr.mxu0 0.0
    %3385 = vmatpush1.xpose.msra.mxu0 0.0
    %3386 = vmatprep.subr.mxu0 0.0
    %3387 = vmatpush1.xpose.msra.mxu0 0.0
    %3388 = vmatprep.subr.mxu0 0.0
    %3389 = vmatpush1.xpose.msra.mxu0 0.0
    %3390 = vmatprep.subr.mxu0 0.0
    %3391 = vmatpush1.xpose.msra.mxu0 0.0
    %3392 = vmatprep.subr.mxu0 0.0
    %3393 = vmatpush1.xpose.msra.mxu0 0.0
    %3394 = vmatprep.subr.mxu0 0.0
    %3395 = vmatpush1.xpose.msra.mxu0 0.0
    %3396 = vmatprep.subr.mxu0 0.0
    %3397 = vmatpush1.xpose.msra.mxu0 0.0
    %3398 = vmatprep.mubr.f32.mxu0 0.0
    %v3399 = vand.u32 %v3027, 4294901760
    %3400 = vmatmul.mubr.f32.gmra.mrb[0].mxu0 %v3399
    %v3401 = vpop.f32.mrb[0].mxu0
    %v3402 = vadd.f32 %v3328, %v3401
    %v3403 = vpop.f32.mrb[0].mxu0
    %3404 = vdwg.mxu0
    %3405 = vmatprep.subr.mxu0 0.0
    %v3406 = vand.u32 %v3029, 4294901760
    %3407 = vmatpush1.xpose.msra.mxu0 %v3406
    %3408 = vmatprep.subr.mxu0 0.0
    %3409 = vmatpush1.xpose.msra.mxu0 0.0
    %3410 = vmatprep.subr.mxu0 0.0
    %3411 = vmatpush1.xpose.msra.mxu0 0.0
    %3412 = vmatprep.subr.mxu0 0.0
    %3413 = vmatpush1.xpose.msra.mxu0 0.0
    %3414 = vmatprep.subr.mxu0 0.0
    %3415 = vmatpush1.xpose.msra.mxu0 0.0
    %3416 = vmatprep.subr.mxu0 0.0
    %3417 = vmatpush1.xpose.msra.mxu0 0.0
    %3418 = vmatprep.subr.mxu0 0.0
    %3419 = vmatpush1.xpose.msra.mxu0 0.0
    %3420 = vmatprep.subr.mxu0 0.0
    %3421 = vmatpush1.xpose.msra.mxu0 0.0
    %3422 = vmatprep.subr.mxu0 0.0
    %3423 = vmatpush1.xpose.msra.mxu0 0.0
    %3424 = vmatprep.subr.mxu0 0.0
    %3425 = vmatpush1.xpose.msra.mxu0 0.0
    %3426 = vmatprep.subr.mxu0 0.0
    %3427 = vmatpush1.xpose.msra.mxu0 0.0
    %3428 = vmatprep.subr.mxu0 0.0
    %3429 = vmatpush1.xpose.msra.mxu0 0.0
    %3430 = vmatprep.subr.mxu0 0.0
    %3431 = vmatpush1.xpose.msra.mxu0 0.0
    %3432 = vmatprep.subr.mxu0 0.0
    %3433 = vmatpush1.xpose.msra.mxu0 0.0
    %3434 = vmatprep.subr.mxu0 0.0
    %3435 = vmatpush1.xpose.msra.mxu0 0.0
    %3436 = vmatprep.subr.mxu0 0.0
    %3437 = vmatpush1.xpose.msra.mxu0 0.0
    %3438 = vmatprep.subr.mxu0 0.0
    %3439 = vmatpush1.xpose.msra.mxu0 0.0
    %3440 = vmatprep.subr.mxu0 0.0
    %3441 = vmatpush1.xpose.msra.mxu0 0.0
    %3442 = vmatprep.subr.mxu0 0.0
    %3443 = vmatpush1.xpose.msra.mxu0 0.0
    %3444 = vmatprep.subr.mxu0 0.0
    %3445 = vmatpush1.xpose.msra.mxu0 0.0
    %3446 = vmatprep.subr.mxu0 0.0
    %3447 = vmatpush1.xpose.msra.mxu0 0.0
    %3448 = vmatprep.subr.mxu0 0.0
    %3449 = vmatpush1.xpose.msra.mxu0 0.0
    %3450 = vmatprep.subr.mxu0 0.0
    %3451 = vmatpush1.xpose.msra.mxu0 0.0
    %3452 = vmatprep.subr.mxu0 0.0
    %3453 = vmatpush1.xpose.msra.mxu0 0.0
    %3454 = vmatprep.subr.mxu0 0.0
    %3455 = vmatpush1.xpose.msra.mxu0 0.0
    %3456 = vmatprep.subr.mxu0 0.0
    %3457 = vmatpush1.xpose.msra.mxu0 0.0
    %3458 = vmatprep.subr.mxu0 0.0
    %3459 = vmatpush1.xpose.msra.mxu0 0.0
    %3460 = vmatprep.subr.mxu0 0.0
    %3461 = vmatpush1.xpose.msra.mxu0 0.0
    %3462 = vmatprep.subr.mxu0 0.0
    %3463 = vmatpush1.xpose.msra.mxu0 0.0
    %3464 = vmatprep.subr.mxu0 0.0
    %3465 = vmatpush1.xpose.msra.mxu0 0.0
    %3466 = vmatprep.subr.mxu0 0.0
    %3467 = vmatpush1.xpose.msra.mxu0 0.0
    %3468 = vmatprep.subr.mxu0 0.0
    %3469 = vmatpush1.xpose.msra.mxu0 0.0
    %3470 = vmatprep.mubr.f32.mxu0 0.0
    %v3471 = vand.u32 %v3027, 4294901760
    %3472 = vmatmul.mubr.f32.gmra.mrb[0].mxu0 %v3471
    %v3473 = vpop.f32.mrb[0].mxu0
    %v3474 = vadd.f32 %v3402, %v3473
    %v3475 = vpop.f32.mrb[0].mxu0
    %3476 = vdwg.mxu0
    %v3477 = vmul.f32 %v3474, 0.35355338
    %v3478 = vsel %vm1190, %v3477, -inf
    %3479 = vmax.xlane.f32.xlu0 %v3478
    %v3480 = vpop.xlane.xlu0 %3479
    %v3481 = vsub.f32 %v3477, %v3480
    %v3482 = vmul.f32 %v3481, 1.442695
    %v3483 = vpow.pop %v3482
    %v3484 = vsel %vm1190, %v3483, 0.0
    %3485 = vadd.xlane.f32.xlu0 %v3484
    %v3486 = vpop.xlane.xlu0 %3485
    %v3487 = vrcp.pop %v3486
    %v3488 = vmul.f32 %v3483, %v3487
    %3489 = vrot.lane.b32.xlu0 %v1184, 48
    %v3490 = vpop.permute.xlu0 %3489
    %v3493 = vsel %vm1190, %v3488, 0
    %3495 = vmatprep.subr.mxu0 0.0
    %v3496 = vand.u32 %v3490, 4294901760
    %3497 = vmatpush1.msra.mxu0 %v3496
    %3498 = vmatprep.subr.mxu0 0.0
    %3499 = vmatpush1.msra.mxu0 0.0
    %3500 = vmatprep.subr.mxu0 0.0
    %3501 = vmatpush1.msra.mxu0 0.0
    %3502 = vmatprep.subr.mxu0 0.0
    %3503 = vmatpush1.msra.mxu0 0.0
    %3504 = vmatprep.subr.mxu0 0.0
    %3505 = vmatpush1.msra.mxu0 0.0
    %3506 = vmatprep.subr.mxu0 0.0
    %3507 = vmatpush1.msra.mxu0 0.0
    %3508 = vmatprep.subr.mxu0 0.0
    %3509 = vmatpush1.msra.mxu0 0.0
    %3510 = vmatprep.subr.mxu0 0.0
    %3511 = vmatpush1.msra.mxu0 0.0
    %3512 = vmatprep.subr.mxu0 0.0
    %3513 = vmatpush1.msra.mxu0 0.0
    %3514 = vmatprep.subr.mxu0 0.0
    %3515 = vmatpush1.msra.mxu0 0.0
    %3516 = vmatprep.subr.mxu0 0.0
    %3517 = vmatpush1.msra.mxu0 0.0
    %3518 = vmatprep.subr.mxu0 0.0
    %3519 = vmatpush1.msra.mxu0 0.0
    %3520 = vmatprep.subr.mxu0 0.0
    %3521 = vmatpush1.msra.mxu0 0.0
    %3522 = vmatprep.subr.mxu0 0.0
    %3523 = vmatpush1.msra.mxu0 0.0
    %3524 = vmatprep.subr.mxu0 0.0
    %3525 = vmatpush1.msra.mxu0 0.0
    %3526 = vmatprep.subr.mxu0 0.0
    %3527 = vmatpush1.msra.mxu0 0.0
    %3528 = vmatprep.subr.mxu0 0.0
    %3529 = vmatpush1.msra.mxu0 0.0
    %3530 = vmatprep.subr.mxu0 0.0
    %3531 = vmatpush1.msra.mxu0 0.0
    %3532 = vmatprep.subr.mxu0 0.0
    %3533 = vmatpush1.msra.mxu0 0.0
    %3534 = vmatprep.subr.mxu0 0.0
    %3535 = vmatpush1.msra.mxu0 0.0
    %3536 = vmatprep.subr.mxu0 0.0
    %3537 = vmatpush1.msra.mxu0 0.0
    %3538 = vmatprep.subr.mxu0 0.0
    %3539 = vmatpush1.msra.mxu0 0.0
    %3540 = vmatprep.subr.mxu0 0.0
    %3541 = vmatpush1.msra.mxu0 0.0
    %3542 = vmatprep.subr.mxu0 0.0
    %3543 = vmatpush1.msra.mxu0 0.0
    %3544 = vmatprep.subr.mxu0 0.0
    %3545 = vmatpush1.msra.mxu0 0.0
    %3546 = vmatprep.subr.mxu0 0.0
    %3547 = vmatpush1.msra.mxu0 0.0
    %3548 = vmatprep.subr.mxu0 0.0
    %3549 = vmatpush1.msra.mxu0 0.0
    %3550 = vmatprep.subr.mxu0 0.0
    %3551 = vmatpush1.msra.mxu0 0.0
    %3552 = vmatprep.subr.mxu0 0.0
    %3553 = vmatpush1.msra.mxu0 0.0
    %3554 = vmatprep.subr.mxu0 0.0
    %3555 = vmatpush1.msra.mxu0 0.0
    %3556 = vmatprep.subr.mxu0 0.0
    %3557 = vmatpush1.msra.mxu0 0.0
    %3558 = vmatprep.subr.mxu0 0.0
    %3559 = vmatpush1.msra.mxu0 0.0
    %3560 = vmatprep.mubr.f32.mxu0 0.0
    %v3561 = vand.u32 %v3493, 4294901760
    %v3562 = vsub.f32 %v3493, %v3561
    %v3563 = vand.u32 %v3562, 4294901760
    %v3564 = vsub.f32 %v3562, %v3563
    %v3565 = vand.u32 %v3564, 4294901760
    %3566 = vmatmul.mubr.f32.gmra.mrb[0].mxu0 %v3565
    %v3567 = vpop.f32.mrb[0].mxu0
    %v3568 = vadd.f32 0.0, %v3567
    %v3569 = vpop.f32.mrb[0].mxu0
    %3570 = vdwg.mxu0
    %3571 = vmatprep.subr.mxu0 0.0
    %v3572 = vand.u32 %v3490, 4294901760
    %v3573 = vsub.f32 %v3490, %v3572
    %v3574 = vand.u32 %v3573, 4294901760
    %v3575 = vsub.f32 %v3573, %v3574
    %v3576 = vand.u32 %v3575, 4294901760
    %3577 = vmatpush1.msra.mxu0 %v3576
    %3578 = vmatprep.subr.mxu0 0.0
    %3579 = vmatpush1.msra.mxu0 0.0
    %3580 = vmatprep.subr.mxu0 0.0
    %3581 = vmatpush1.msra.mxu0 0.0
    %3582 = vmatprep.subr.mxu0 0.0
    %3583 = vmatpush1.msra.mxu0 0.0
    %3584 = vmatprep.subr.mxu0 0.0
    %3585 = vmatpush1.msra.mxu0 0.0
    %3586 = vmatprep.subr.mxu0 0.0
    %3587 = vmatpush1.msra.mxu0 0.0
    %3588 = vmatprep.subr.mxu0 0.0
    %3589 = vmatpush1.msra.mxu0 0.0
    %3590 = vmatprep.subr.mxu0 0.0
    %3591 = vmatpush1.msra.mxu0 0.0
    %3592 = vmatprep.subr.mxu0 0.0
    %3593 = vmatpush1.msra.mxu0 0.0
    %3594 = vmatprep.subr.mxu0 0.0
    %3595 = vmatpush1.msra.mxu0 0.0
    %3596 = vmatprep.subr.mxu0 0.0
    %3597 = vmatpush1.msra.mxu0 0.0
    %3598 = vmatprep.subr.mxu0 0.0
    %3599 = vmatpush1.msra.mxu0 0.0
    %3600 = vmatprep.subr.mxu0 0.0
    %3601 = vmatpush1.msra.mxu0 0.0
    %3602 = vmatprep.subr.mxu0 0.0
    %3603 = vmatpush1.msra.mxu0 0.0
    %3604 = vmatprep.subr.mxu0 0.0
    %3605 = vmatpush1.msra.mxu0 0.0
    %3606 = vmatprep.subr.mxu0 0.0
    %3607 = vmatpush1.msra.mxu0 0.0
    %3608 = vmatprep.subr.mxu0 0.0
    %3609 = vmatpush1.msra.mxu0 0.0
    %3610 = vmatprep.subr.mxu0 0.0
    %3611 = vmatpush1.msra.mxu0 0.0
    %3612 = vmatprep.subr.mxu0 0.0
    %3613 = vmatpush1.msra.mxu0 0.0
    %3614 = vmatprep.subr.mxu0 0.0
    %3615 = vmatpush1.msra.mxu0 0.0
    %3616 = vmatprep.subr.mxu0 0.0
    %3617 = vmatpush1.msra.mxu0 0.0
    %3618 = vmatprep.subr.mxu0 0.0
    %3619 = vmatpush1.msra.mxu0 0.0
    %3620 = vmatprep.subr.mxu0 0.0
    %3621 = vmatpush1.msra.mxu0 0.0
    %3622 = vmatprep.subr.mxu0 0.0
    %3623 = vmatpush1.msra.mxu0 0.0
    %3624 = vmatprep.subr.mxu0 0.0
    %3625 = vmatpush1.msra.mxu0 0.0
    %3626 = vmatprep.subr.mxu0 0.0
    %3627 = vmatpush1.msra.mxu0 0.0
    %3628 = vmatprep.subr.mxu0 0.0
    %3629 = vmatpush1.msra.mxu0 0.0
    %3630 = vmatprep.subr.mxu0 0.0
    %3631 = vmatpush1.msra.mxu0 0.0
    %3632 = vmatprep.subr.mxu0 0.0
    %3633 = vmatpush1.msra.mxu0 0.0
    %3634 = vmatprep.subr.mxu0 0.0
    %3635 = vmatpush1.msra.mxu0 0.0
    %3636 = vmatprep.subr.mxu0 0.0
    %3637 = vmatpush1.msra.mxu0 0.0
    %3638 = vmatprep.subr.mxu0 0.0
    %3639 = vmatpush1.msra.mxu0 0.0
    %3640 = vmatprep.mubr.f32.mxu0 0.0
    %v3641 = vand.u32 %v3493, 4294901760
    %3642 = vmatmul.mubr.f32.gmra.mrb[0].mxu0 %v3641
    %v3643 = vpop.f32.mrb[0].mxu0
    %v3644 = vadd.f32 %v3568, %v3643
    %v3645 = vpop.f32.mrb[0].mxu0
    %3646 = vdwg.mxu0
    %3647 = vmatprep.subr.mxu0 0.0
    %v3648 = vand.u32 %v3490, 4294901760
    %v3649 = vsub.f32 %v3490, %v3648
    %3650 = vmatpush1.msra.mxu0 %v3649
    %3651 = vmatprep.subr.mxu0 0.0
    %3652 = vmatpush1.msra.mxu0 0.0
    %3653 = vmatprep.subr.mxu0 0.0
    %3654 = vmatpush1.msra.mxu0 0.0
    %3655 = vmatprep.subr.mxu0 0.0
    %3656 = vmatpush1.msra.mxu0 0.0
    %3657 = vmatprep.subr.mxu0 0.0
    %3658 = vmatpush1.msra.mxu0 0.0
    %3659 = vmatprep.subr.mxu0 0.0
    %3660 = vmatpush1.msra.mxu0 0.0
    %3661 = vmatprep.subr.mxu0 0.0
    %3662 = vmatpush1.msra.mxu0 0.0
    %3663 = vmatprep.subr.mxu0 0.0
    %3664 = vmatpush1.msra.mxu0 0.0
    %3665 = vmatprep.subr.mxu0 0.0
    %3666 = vmatpush1.msra.mxu0 0.0
    %3667 = vmatprep.subr.mxu0 0.0
    %3668 = vmatpush1.msra.mxu0 0.0
    %3669 = vmatprep.subr.mxu0 0.0
    %3670 = vmatpush1.msra.mxu0 0.0
    %3671 = vmatprep.subr.mxu0 0.0
    %3672 = vmatpush1.msra.mxu0 0.0
    %3673 = vmatprep.subr.mxu0 0.0
    %3674 = vmatpush1.msra.mxu0 0.0
    %3675 = vmatprep.subr.mxu0 0.0
    %3676 = vmatpush1.msra.mxu0 0.0
    %3677 = vmatprep.subr.mxu0 0.0
    %3678 = vmatpush1.msra.mxu0 0.0
    %3679 = vmatprep.subr.mxu0 0.0
    %3680 = vmatpush1.msra.mxu0 0.0
    %3681 = vmatprep.subr.mxu0 0.0
    %3682 = vmatpush1.msra.mxu0 0.0
    %3683 = vmatprep.subr.mxu0 0.0
    %3684 = vmatpush1.msra.mxu0 0.0
    %3685 = vmatprep.subr.mxu0 0.0
    %3686 = vmatpush1.msra.mxu0 0.0
    %3687 = vmatprep.subr.mxu0 0.0
    %3688 = vmatpush1.msra.mxu0 0.0
    %3689 = vmatprep.subr.mxu0 0.0
    %3690 = vmatpush1.msra.mxu0 0.0
    %3691 = vmatprep.subr.mxu0 0.0
    %3692 = vmatpush1.msra.mxu0 0.0
    %3693 = vmatprep.subr.mxu0 0.0
    %3694 = vmatpush1.msra.mxu0 0.0
    %3695 = vmatprep.subr.mxu0 0.0
    %3696 = vmatpush1.msra.mxu0 0.0
    %3697 = vmatprep.subr.mxu0 0.0
    %3698 = vmatpush1.msra.mxu0 0.0
    %3699 = vmatprep.subr.mxu0 0.0
    %3700 = vmatpush1.msra.mxu0 0.0
    %3701 = vmatprep.subr.mxu0 0.0
    %3702 = vmatpush1.msra.mxu0 0.0
    %3703 = vmatprep.subr.mxu0 0.0
    %3704 = vmatpush1.msra.mxu0 0.0
    %3705 = vmatprep.subr.mxu0 0.0
    %3706 = vmatpush1.msra.mxu0 0.0
    %3707 = vmatprep.subr.mxu0 0.0
    %3708 = vmatpush1.msra.mxu0 0.0
    %3709 = vmatprep.subr.mxu0 0.0
    %3710 = vmatpush1.msra.mxu0 0.0
    %3711 = vmatprep.subr.mxu0 0.0
    %3712 = vmatpush1.msra.mxu0 0.0
    %3713 = vmatprep.mubr.f32.mxu0 0.0
    %v3714 = vand.u32 %v3493, 4294901760
    %v3715 = vsub.f32 %v3493, %v3714
    %3716 = vmatmul.mubr.f32.gmra.mrb[0].mxu0 %v3715
    %v3717 = vpop.f32.mrb[0].mxu0
    %v3718 = vadd.f32 %v3644, %v3717
    %v3719 = vpop.f32.mrb[0].mxu0
    %3720 = vdwg.mxu0
    %3721 = vmatprep.subr.mxu0 0.0
    %v3722 = vand.u32 %v3490, 4294901760
    %3723 = vmatpush1.msra.mxu0 %v3722
    %3724 = vmatprep.subr.mxu0 0.0
    %3725 = vmatpush1.msra.mxu0 0.0
    %3726 = vmatprep.subr.mxu0 0.0
    %3727 = vmatpush1.msra.mxu0 0.0
    %3728 = vmatprep.subr.mxu0 0.0
    %3729 = vmatpush1.msra.mxu0 0.0
    %3730 = vmatprep.subr.mxu0 0.0
    %3731 = vmatpush1.msra.mxu0 0.0
    %3732 = vmatprep.subr.mxu0 0.0
    %3733 = vmatpush1.msra.mxu0 0.0
    %3734 = vmatprep.subr.mxu0 0.0
    %3735 = vmatpush1.msra.mxu0 0.0
    %3736 = vmatprep.subr.mxu0 0.0
    %3737 = vmatpush1.msra.mxu0 0.0
    %3738 = vmatprep.subr.mxu0 0.0
    %3739 = vmatpush1.msra.mxu0 0.0
    %3740 = vmatprep.subr.mxu0 0.0
    %3741 = vmatpush1.msra.mxu0 0.0
    %3742 = vmatprep.subr.mxu0 0.0
    %3743 = vmatpush1.msra.mxu0 0.0
    %3744 = vmatprep.subr.mxu0 0.0
    %3745 = vmatpush1.msra.mxu0 0.0
    %3746 = vmatprep.subr.mxu0 0.0
    %3747 = vmatpush1.msra.mxu0 0.0
    %3748 = vmatprep.subr.mxu0 0.0
    %3749 = vmatpush1.msra.mxu0 0.0
    %3750 = vmatprep.subr.mxu0 0.0
    %3751 = vmatpush1.msra.mxu0 0.0
    %3752 = vmatprep.subr.mxu0 0.0
    %3753 = vmatpush1.msra.mxu0 0.0
    %3754 = vmatprep.subr.mxu0 0.0
    %3755 = vmatpush1.msra.mxu0 0.0
    %3756 = vmatprep.subr.mxu0 0.0
    %3757 = vmatpush1.msra.mxu0 0.0
    %3758 = vmatprep.subr.mxu0 0.0
    %3759 = vmatpush1.msra.mxu0 0.0
    %3760 = vmatprep.subr.mxu0 0.0
    %3761 = vmatpush1.msra.mxu0 0.0
    %3762 = vmatprep.subr.mxu0 0.0
    %3763 = vmatpush1.msra.mxu0 0.0
    %3764 = vmatprep.subr.mxu0 0.0
    %3765 = vmatpush1.msra.mxu0 0.0
    %3766 = vmatprep.subr.mxu0 0.0
    %3767 = vmatpush1.msra.mxu0 0.0
    %3768 = vmatprep.subr.mxu0 0.0
    %3769 = vmatpush1.msra.mxu0 0.0
    %3770 = vmatprep.subr.mxu0 0.0
    %3771 = vmatpush1.msra.mxu0 0.0
    %3772 = vmatprep.subr.mxu0 0.0
    %3773 = vmatpush1.msra.mxu0 0.0
    %3774 = vmatprep.subr.mxu0 0.0
    %3775 = vmatpush1.msra.mxu0 0.0
    %3776 = vmatprep.subr.mxu0 0.0
    %3777 = vmatpush1.msra.mxu0 0.0
    %3778 = vmatprep.subr.mxu0 0.0
    %3779 = vmatpush1.msra.mxu0 0.0
    %3780 = vmatprep.subr.mxu0 0.0
    %3781 = vmatpush1.msra.mxu0 0.0
    %3782 = vmatprep.subr.mxu0 0.0
    %3783 = vmatpush1.msra.mxu0 0.0
    %3784 = vmatprep.subr.mxu0 0.0
    %3785 = vmatpush1.msra.mxu0 0.0
    %3786 = vmatprep.mubr.f32.mxu0 0.0
    %v3787 = vand.u32 %v3493, 4294901760
    %v3788 = vsub.f32 %v3493, %v3787
    %v3789 = vand.u32 %v3788, 4294901760
    %3790 = vmatmul.mubr.f32.gmra.mrb[0].mxu0 %v3789
    %v3791 = vpop.f32.mrb[0].mxu0
    %v3792 = vadd.f32 %v3718, %v3791
    %v3793 = vpop.f32.mrb[0].mxu0
    %3794 = vdwg.mxu0
    %3795 = vmatprep.subr.mxu0 0.0
    %v3796 = vand.u32 %v3490, 4294901760
    %v3797 = vsub.f32 %v3490, %v3796
    %v3798 = vand.u32 %v3797, 4294901760
    %3799 = vmatpush1.msra.mxu0 %v3798
    %3800 = vmatprep.subr.mxu0 0.0
    %3801 = vmatpush1.msra.mxu0 0.0
    %3802 = vmatprep.subr.mxu0 0.0
    %3803 = vmatpush1.msra.mxu0 0.0
    %3804 = vmatprep.subr.mxu0 0.0
    %3805 = vmatpush1.msra.mxu0 0.0
    %3806 = vmatprep.subr.mxu0 0.0
    %3807 = vmatpush1.msra.mxu0 0.0
    %3808 = vmatprep.subr.mxu0 0.0
    %3809 = vmatpush1.msra.mxu0 0.0
    %3810 = vmatprep.subr.mxu0 0.0
    %3811 = vmatpush1.msra.mxu0 0.0
    %3812 = vmatprep.subr.mxu0 0.0
    %3813 = vmatpush1.msra.mxu0 0.0
    %3814 = vmatprep.subr.mxu0 0.0
    %3815 = vmatpush1.msra.mxu0 0.0
    %3816 = vmatprep.subr.mxu0 0.0
    %3817 = vmatpush1.msra.mxu0 0.0
    %3818 = vmatprep.subr.mxu0 0.0
    %3819 = vmatpush1.msra.mxu0 0.0
    %3820 = vmatprep.subr.mxu0 0.0
    %3821 = vmatpush1.msra.mxu0 0.0
    %3822 = vmatprep.subr.mxu0 0.0
    %3823 = vmatpush1.msra.mxu0 0.0
    %3824 = vmatprep.subr.mxu0 0.0
    %3825 = vmatpush1.msra.mxu0 0.0
    %3826 = vmatprep.subr.mxu0 0.0
    %3827 = vmatpush1.msra.mxu0 0.0
    %3828 = vmatprep.subr.mxu0 0.0
    %3829 = vmatpush1.msra.mxu0 0.0
    %3830 = vmatprep.subr.mxu0 0.0
    %3831 = vmatpush1.msra.mxu0 0.0
    %3832 = vmatprep.subr.mxu0 0.0
    %3833 = vmatpush1.msra.mxu0 0.0
    %3834 = vmatprep.subr.mxu0 0.0
    %3835 = vmatpush1.msra.mxu0 0.0
    %3836 = vmatprep.subr.mxu0 0.0
    %3837 = vmatpush1.msra.mxu0 0.0
    %3838 = vmatprep.subr.mxu0 0.0
    %3839 = vmatpush1.msra.mxu0 0.0
    %3840 = vmatprep.subr.mxu0 0.0
    %3841 = vmatpush1.msra.mxu0 0.0
    %3842 = vmatprep.subr.mxu0 0.0
    %3843 = vmatpush1.msra.mxu0 0.0
    %3844 = vmatprep.subr.mxu0 0.0
    %3845 = vmatpush1.msra.mxu0 0.0
    %3846 = vmatprep.subr.mxu0 0.0
    %3847 = vmatpush1.msra.mxu0 0.0
    %3848 = vmatprep.subr.mxu0 0.0
    %3849 = vmatpush1.msra.mxu0 0.0
    %3850 = vmatprep.subr.mxu0 0.0
    %3851 = vmatpush1.msra.mxu0 0.0
    %3852 = vmatprep.subr.mxu0 0.0
    %3853 = vmatpush1.msra.mxu0 0.0
    %3854 = vmatprep.subr.mxu0 0.0
    %3855 = vmatpush1.msra.mxu0 0.0
    %3856 = vmatprep.subr.mxu0 0.0
    %3857 = vmatpush1.msra.mxu0 0.0
    %3858 = vmatprep.subr.mxu0 0.0
    %3859 = vmatpush1.msra.mxu0 0.0
    %3860 = vmatprep.subr.mxu0 0.0
    %3861 = vmatpush1.msra.mxu0 0.0
    %3862 = vmatprep.mubr.f32.mxu0 0.0
    %v3863 = vand.u32 %v3493, 4294901760
    %3864 = vmatmul.mubr.f32.gmra.mrb[0].mxu0 %v3863
    %v3865 = vpop.f32.mrb[0].mxu0
    %v3866 = vadd.f32 %v3792, %v3865
    %v3867 = vpop.f32.mrb[0].mxu0
    %3868 = vdwg.mxu0
    %3869 = vmatprep.subr.mxu0 0.0
    %v3870 = vand.u32 %v3490, 4294901760
    %3871 = vmatpush1.msra.mxu0 %v3870
    %3872 = vmatprep.subr.mxu0 0.0
    %3873 = vmatpush1.msra.mxu0 0.0
    %3874 = vmatprep.subr.mxu0 0.0
    %3875 = vmatpush1.msra.mxu0 0.0
    %3876 = vmatprep.subr.mxu0 0.0
    %3877 = vmatpush1.msra.mxu0 0.0
    %3878 = vmatprep.subr.mxu0 0.0
    %3879 = vmatpush1.msra.mxu0 0.0
    %3880 = vmatprep.subr.mxu0 0.0
    %3881 = vmatpush1.msra.mxu0 0.0
    %3882 = vmatprep.subr.mxu0 0.0
    %3883 = vmatpush1.msra.mxu0 0.0
    %3884 = vmatprep.subr.mxu0 0.0
    %3885 = vmatpush1.msra.mxu0 0.0
    %3886 = vmatprep.subr.mxu0 0.0
    %3887 = vmatpush1.msra.mxu0 0.0
    %3888 = vmatprep.subr.mxu0 0.0
    %3889 = vmatpush1.msra.mxu0 0.0
    %3890 = vmatprep.subr.mxu0 0.0
    %3891 = vmatpush1.msra.mxu0 0.0
    %3892 = vmatprep.subr.mxu0 0.0
    %3893 = vmatpush1.msra.mxu0 0.0
    %3894 = vmatprep.subr.mxu0 0.0
    %3895 = vmatpush1.msra.mxu0 0.0
    %3896 = vmatprep.subr.mxu0 0.0
    %3897 = vmatpush1.msra.mxu0 0.0
    %3898 = vmatprep.subr.mxu0 0.0
    %3899 = vmatpush1.msra.mxu0 0.0
    %3900 = vmatprep.subr.mxu0 0.0
    %3901 = vmatpush1.msra.mxu0 0.0
    %3902 = vmatprep.subr.mxu0 0.0
    %3903 = vmatpush1.msra.mxu0 0.0
    %3904 = vmatprep.subr.mxu0 0.0
    %3905 = vmatpush1.msra.mxu0 0.0
    %3906 = vmatprep.subr.mxu0 0.0
    %3907 = vmatpush1.msra.mxu0 0.0
    %3908 = vmatprep.subr.mxu0 0.0
    %3909 = vmatpush1.msra.mxu0 0.0
    %3910 = vmatprep.subr.mxu0 0.0
    %3911 = vmatpush1.msra.mxu0 0.0
    %3912 = vmatprep.subr.mxu0 0.0
    %3913 = vmatpush1.msra.mxu0 0.0
    %3914 = vmatprep.subr.mxu0 0.0
    %3915 = vmatpush1.msra.mxu0 0.0
    %3916 = vmatprep.subr.mxu0 0.0
    %3917 = vmatpush1.msra.mxu0 0.0
    %3918 = vmatprep.subr.mxu0 0.0
    %3919 = vmatpush1.msra.mxu0 0.0
    %3920 = vmatprep.subr.mxu0 0.0
    %3921 = vmatpush1.msra.mxu0 0.0
    %3922 = vmatprep.subr.mxu0 0.0
    %3923 = vmatpush1.msra.mxu0 0.0
    %3924 = vmatprep.subr.mxu0 0.0
    %3925 = vmatpush1.msra.mxu0 0.0
    %3926 = vmatprep.subr.mxu0 0.0
    %3927 = vmatpush1.msra.mxu0 0.0
    %3928 = vmatprep.subr.mxu0 0.0
    %3929 = vmatpush1.msra.mxu0 0.0
    %3930 = vmatprep.subr.mxu0 0.0
    %3931 = vmatpush1.msra.mxu0 0.0
    %3932 = vmatprep.subr.mxu0 0.0
    %3933 = vmatpush1.msra.mxu0 0.0
    %3934 = vmatprep.mubr.f32.mxu0 0.0
    %v3935 = vand.u32 %v3493, 4294901760
    %3936 = vmatmul.mubr.f32.gmra.mrb[0].mxu0 %v3935
    %v3937 = vpop.f32.mrb[0].mxu0
    %v3938 = vadd.f32 %v3866, %v3937
    %v3939 = vpop.f32.mrb[0].mxu0
    %3940 = vdwg.mxu0
    %3941 = vrot.lane.b32.xlu0 %v1184, 104
    %v3942 = vpop.permute.xlu0 %3941
    %3943 = vrot.lane.b32.xlu0 %v1184, 72
    %v3944 = vpop.permute.xlu0 %3943
    %v3945 = vsel %vm1190, %v3942, 0
    %v3947 = vsel %vm1190, %v3944, 0
    %3949 = vmatprep.subr.mxu0 0.0
    %v3950 = vand.u32 %v3947, 4294901760
    %3951 = vmatpush1.xpose.msra.mxu0 %v3950
    %3952 = vmatprep.subr.mxu0 0.0
    %3953 = vmatpush1.xpose.msra.mxu0 0.0
    %3954 = vmatprep.subr.mxu0 0.0
    %3955 = vmatpush1.xpose.msra.mxu0 0.0
    %3956 = vmatprep.subr.mxu0 0.0
    %3957 = vmatpush1.xpose.msra.mxu0 0.0
    %3958 = vmatprep.subr.mxu0 0.0
    %3959 = vmatpush1.xpose.msra.mxu0 0.0
    %3960 = vmatprep.subr.mxu0 0.0
    %3961 = vmatpush1.xpose.msra.mxu0 0.0
    %3962 = vmatprep.subr.mxu0 0.0
    %3963 = vmatpush1.xpose.msra.mxu0 0.0
    %3964 = vmatprep.subr.mxu0 0.0
    %3965 = vmatpush1.xpose.msra.mxu0 0.0
    %3966 = vmatprep.subr.mxu0 0.0
    %3967 = vmatpush1.xpose.msra.mxu0 0.0
    %3968 = vmatprep.subr.mxu0 0.0
    %3969 = vmatpush1.xpose.msra.mxu0 0.0
    %3970 = vmatprep.subr.mxu0 0.0
    %3971 = vmatpush1.xpose.msra.mxu0 0.0
    %3972 = vmatprep.subr.mxu0 0.0
    %3973 = vmatpush1.xpose.msra.mxu0 0.0
    %3974 = vmatprep.subr.mxu0 0.0
    %3975 = vmatpush1.xpose.msra.mxu0 0.0
    %3976 = vmatprep.subr.mxu0 0.0
    %3977 = vmatpush1.xpose.msra.mxu0 0.0
    %3978 = vmatprep.subr.mxu0 0.0
    %3979 = vmatpush1.xpose.msra.mxu0 0.0
    %3980 = vmatprep.subr.mxu0 0.0
    %3981 = vmatpush1.xpose.msra.mxu0 0.0
    %3982 = vmatprep.subr.mxu0 0.0
    %3983 = vmatpush1.xpose.msra.mxu0 0.0
    %3984 = vmatprep.subr.mxu0 0.0
    %3985 = vmatpush1.xpose.msra.mxu0 0.0
    %3986 = vmatprep.subr.mxu0 0.0
    %3987 = vmatpush1.xpose.msra.mxu0 0.0
    %3988 = vmatprep.subr.mxu0 0.0
    %3989 = vmatpush1.xpose.msra.mxu0 0.0
    %3990 = vmatprep.subr.mxu0 0.0
    %3991 = vmatpush1.xpose.msra.mxu0 0.0
    %3992 = vmatprep.subr.mxu0 0.0
    %3993 = vmatpush1.xpose.msra.mxu0 0.0
    %3994 = vmatprep.subr.mxu0 0.0
    %3995 = vmatpush1.xpose.msra.mxu0 0.0
    %3996 = vmatprep.subr.mxu0 0.0
    %3997 = vmatpush1.xpose.msra.mxu0 0.0
    %3998 = vmatprep.subr.mxu0 0.0
    %3999 = vmatpush1.xpose.msra.mxu0 0.0
    %4000 = vmatprep.subr.mxu0 0.0
    %4001 = vmatpush1.xpose.msra.mxu0 0.0
    %4002 = vmatprep.subr.mxu0 0.0
    %4003 = vmatpush1.xpose.msra.mxu0 0.0
    %4004 = vmatprep.subr.mxu0 0.0
    %4005 = vmatpush1.xpose.msra.mxu0 0.0
    %4006 = vmatprep.subr.mxu0 0.0
    %4007 = vmatpush1.xpose.msra.mxu0 0.0
    %4008 = vmatprep.subr.mxu0 0.0
    %4009 = vmatpush1.xpose.msra.mxu0 0.0
    %4010 = vmatprep.subr.mxu0 0.0
    %4011 = vmatpush1.xpose.msra.mxu0 0.0
    %4012 = vmatprep.subr.mxu0 0.0
    %4013 = vmatpush1.xpose.msra.mxu0 0.0
    %4014 = vmatprep.mubr.f32.mxu0 0.0
    %v4015 = vand.u32 %v3945, 4294901760
    %v4016 = vsub.f32 %v3945, %v4015
    %v4017 = vand.u32 %v4016, 4294901760
    %v4018 = vsub.f32 %v4016, %v4017
    %v4019 = vand.u32 %v4018, 4294901760
    %4020 = vmatmul.mubr.f32.gmra.mrb[0].mxu0 %v4019
    %v4021 = vpop.f32.mrb[0].mxu0
    %v4022 = vadd.f32 0.0, %v4021
    %v4023 = vpop.f32.mrb[0].mxu0
    %4024 = vdwg.mxu0
    %4025 = vmatprep.subr.mxu0 0.0
    %v4026 = vand.u32 %v3947, 4294901760
    %v4027 = vsub.f32 %v3947, %v4026
    %v4028 = vand.u32 %v4027, 4294901760
    %v4029 = vsub.f32 %v4027, %v4028
    %v4030 = vand.u32 %v4029, 4294901760
    %4031 = vmatpush1.xpose.msra.mxu0 %v4030
    %4032 = vmatprep.subr.mxu0 0.0
    %4033 = vmatpush1.xpose.msra.mxu0 0.0
    %4034 = vmatprep.subr.mxu0 0.0
    %4035 = vmatpush1.xpose.msra.mxu0 0.0
    %4036 = vmatprep.subr.mxu0 0.0
    %4037 = vmatpush1.xpose.msra.mxu0 0.0
    %4038 = vmatprep.subr.mxu0 0.0
    %4039 = vmatpush1.xpose.msra.mxu0 0.0
    %4040 = vmatprep.subr.mxu0 0.0
    %4041 = vmatpush1.xpose.msra.mxu0 0.0
    %4042 = vmatprep.subr.mxu0 0.0
    %4043 = vmatpush1.xpose.msra.mxu0 0.0
    %4044 = vmatprep.subr.mxu0 0.0
    %4045 = vmatpush1.xpose.msra.mxu0 0.0
    %4046 = vmatprep.subr.mxu0 0.0
    %4047 = vmatpush1.xpose.msra.mxu0 0.0
    %4048 = vmatprep.subr.mxu0 0.0
    %4049 = vmatpush1.xpose.msra.mxu0 0.0
    %4050 = vmatprep.subr.mxu0 0.0
    %4051 = vmatpush1.xpose.msra.mxu0 0.0
    %4052 = vmatprep.subr.mxu0 0.0
    %4053 = vmatpush1.xpose.msra.mxu0 0.0
    %4054 = vmatprep.subr.mxu0 0.0
    %4055 = vmatpush1.xpose.msra.mxu0 0.0
    %4056 = vmatprep.subr.mxu0 0.0
    %4057 = vmatpush1.xpose.msra.mxu0 0.0
    %4058 = vmatprep.subr.mxu0 0.0
    %4059 = vmatpush1.xpose.msra.mxu0 0.0
    %4060 = vmatprep.subr.mxu0 0.0
    %4061 = vmatpush1.xpose.msra.mxu0 0.0
    %4062 = vmatprep.subr.mxu0 0.0
    %4063 = vmatpush1.xpose.msra.mxu0 0.0
    %4064 = vmatprep.subr.mxu0 0.0
    %4065 = vmatpush1.xpose.msra.mxu0 0.0
    %4066 = vmatprep.subr.mxu0 0.0
    %4067 = vmatpush1.xpose.msra.mxu0 0.0
    %4068 = vmatprep.subr.mxu0 0.0
    %4069 = vmatpush1.xpose.msra.mxu0 0.0
    %4070 = vmatprep.subr.mxu0 0.0
    %4071 = vmatpush1.xpose.msra.mxu0 0.0
    %4072 = vmatprep.subr.mxu0 0.0
    %4073 = vmatpush1.xpose.msra.mxu0 0.0
    %4074 = vmatprep.subr.mxu0 0.0
    %4075 = vmatpush1.xpose.msra.mxu0 0.0
    %4076 = vmatprep.subr.mxu0 0.0
    %4077 = vmatpush1.xpose.msra.mxu0 0.0
    %4078 = vmatprep.subr.mxu0 0.0
    %4079 = vmatpush1.xpose.msra.mxu0 0.0
    %4080 = vmatprep.subr.mxu0 0.0
    %4081 = vmatpush1.xpose.msra.mxu0 0.0
    %4082 = vmatprep.subr.mxu0 0.0
    %4083 = vmatpush1.xpose.msra.mxu0 0.0
    %4084 = vmatprep.subr.mxu0 0.0
    %4085 = vmatpush1.xpose.msra.mxu0 0.0
    %4086 = vmatprep.subr.mxu0 0.0
    %4087 = vmatpush1.xpose.msra.mxu0 0.0
    %4088 = vmatprep.subr.mxu0 0.0
    %4089 = vmatpush1.xpose.msra.mxu0 0.0
    %4090 = vmatprep.subr.mxu0 0.0
    %4091 = vmatpush1.xpose.msra.mxu0 0.0
    %4092 = vmatprep.subr.mxu0 0.0
    %4093 = vmatpush1.xpose.msra.mxu0 0.0
    %4094 = vmatprep.mubr.f32.mxu0 0.0
    %v4095 = vand.u32 %v3945, 4294901760
    %4096 = vmatmul.mubr.f32.gmra.mrb[0].mxu0 %v4095
    %v4097 = vpop.f32.mrb[0].mxu0
    %v4098 = vadd.f32 %v4022, %v4097
    %v4099 = vpop.f32.mrb[0].mxu0
    %4100 = vdwg.mxu0
    %4101 = vmatprep.subr.mxu0 0.0
    %v4102 = vand.u32 %v3947, 4294901760
    %v4103 = vsub.f32 %v3947, %v4102
    %4104 = vmatpush1.xpose.msra.mxu0 %v4103
    %4105 = vmatprep.subr.mxu0 0.0
    %4106 = vmatpush1.xpose.msra.mxu0 0.0
    %4107 = vmatprep.subr.mxu0 0.0
    %4108 = vmatpush1.xpose.msra.mxu0 0.0
    %4109 = vmatprep.subr.mxu0 0.0
    %4110 = vmatpush1.xpose.msra.mxu0 0.0
    %4111 = vmatprep.subr.mxu0 0.0
    %4112 = vmatpush1.xpose.msra.mxu0 0.0
    %4113 = vmatprep.subr.mxu0 0.0
    %4114 = vmatpush1.xpose.msra.mxu0 0.0
    %4115 = vmatprep.subr.mxu0 0.0
    %4116 = vmatpush1.xpose.msra.mxu0 0.0
    %4117 = vmatprep.subr.mxu0 0.0
    %4118 = vmatpush1.xpose.msra.mxu0 0.0
    %4119 = vmatprep.subr.mxu0 0.0
    %4120 = vmatpush1.xpose.msra.mxu0 0.0
    %4121 = vmatprep.subr.mxu0 0.0
    %4122 = vmatpush1.xpose.msra.mxu0 0.0
    %4123 = vmatprep.subr.mxu0 0.0
    %4124 = vmatpush1.xpose.msra.mxu0 0.0
    %4125 = vmatprep.subr.mxu0 0.0
    %4126 = vmatpush1.xpose.msra.mxu0 0.0
    %4127 = vmatprep.subr.mxu0 0.0
    %4128 = vmatpush1.xpose.msra.mxu0 0.0
    %4129 = vmatprep.subr.mxu0 0.0
    %4130 = vmatpush1.xpose.msra.mxu0 0.0
    %4131 = vmatprep.subr.mxu0 0.0
    %4132 = vmatpush1.xpose.msra.mxu0 0.0
    %4133 = vmatprep.subr.mxu0 0.0
    %4134 = vmatpush1.xpose.msra.mxu0 0.0
    %4135 = vmatprep.subr.mxu0 0.0
    %4136 = vmatpush1.xpose.msra.mxu0 0.0
    %4137 = vmatprep.subr.mxu0 0.0
    %4138 = vmatpush1.xpose.msra.mxu0 0.0
    %4139 = vmatprep.subr.mxu0 0.0
    %4140 = vmatpush1.xpose.msra.mxu0 0.0
    %4141 = vmatprep.subr.mxu0 0.0
    %4142 = vmatpush1.xpose.msra.mxu0 0.0
    %4143 = vmatprep.subr.mxu0 0.0
    %4144 = vmatpush1.xpose.msra.mxu0 0.0
    %4145 = vmatprep.subr.mxu0 0.0
    %4146 = vmatpush1.xpose.msra.mxu0 0.0
    %4147 = vmatprep.subr.mxu0 0.0
    %4148 = vmatpush1.xpose.msra.mxu0 0.0
    %4149 = vmatprep.subr.mxu0 0.0
    %4150 = vmatpush1.xpose.msra.mxu0 0.0
    %4151 = vmatprep.subr.mxu0 0.0
    %4152 = vmatpush1.xpose.msra.mxu0 0.0
    %4153 = vmatprep.subr.mxu0 0.0
    %4154 = vmatpush1.xpose.msra.mxu0 0.0
    %4155 = vmatprep.subr.mxu0 0.0
    %4156 = vmatpush1.xpose.msra.mxu0 0.0
    %4157 = vmatprep.subr.mxu0 0.0
    %4158 = vmatpush1.xpose.msra.mxu0 0.0
    %4159 = vmatprep.subr.mxu0 0.0
    %4160 = vmatpush1.xpose.msra.mxu0 0.0
    %4161 = vmatprep.subr.mxu0 0.0
    %4162 = vmatpush1.xpose.msra.mxu0 0.0
    %4163 = vmatprep.subr.mxu0 0.0
    %4164 = vmatpush1.xpose.msra.mxu0 0.0
    %4165 = vmatprep.subr.mxu0 0.0
    %4166 = vmatpush1.xpose.msra.mxu0 0.0
    %4167 = vmatprep.mubr.f32.mxu0 0.0
    %v4168 = vand.u32 %v3945, 4294901760
    %v4169 = vsub.f32 %v3945, %v4168
    %4170 = vmatmul.mubr.f32.gmra.mrb[0].mxu0 %v4169
    %v4171 = vpop.f32.mrb[0].mxu0
    %v4172 = vadd.f32 %v4098, %v4171
    %v4173 = vpop.f32.mrb[0].mxu0
    %4174 = vdwg.mxu0
    %4175 = vmatprep.subr.mxu0 0.0
    %v4176 = vand.u32 %v3947, 4294901760
    %4177 = vmatpush1.xpose.msra.mxu0 %v4176
    %4178 = vmatprep.subr.mxu0 0.0
    %4179 = vmatpush1.xpose.msra.mxu0 0.0
    %4180 = vmatprep.subr.mxu0 0.0
    %4181 = vmatpush1.xpose.msra.mxu0 0.0
    %4182 = vmatprep.subr.mxu0 0.0
    %4183 = vmatpush1.xpose.msra.mxu0 0.0
    %4184 = vmatprep.subr.mxu0 0.0
    %4185 = vmatpush1.xpose.msra.mxu0 0.0
    %4186 = vmatprep.subr.mxu0 0.0
    %4187 = vmatpush1.xpose.msra.mxu0 0.0
    %4188 = vmatprep.subr.mxu0 0.0
    %4189 = vmatpush1.xpose.msra.mxu0 0.0
    %4190 = vmatprep.subr.mxu0 0.0
    %4191 = vmatpush1.xpose.msra.mxu0 0.0
    %4192 = vmatprep.subr.mxu0 0.0
    %4193 = vmatpush1.xpose.msra.mxu0 0.0
    %4194 = vmatprep.subr.mxu0 0.0
    %4195 = vmatpush1.xpose.msra.mxu0 0.0
    %4196 = vmatprep.subr.mxu0 0.0
    %4197 = vmatpush1.xpose.msra.mxu0 0.0
    %4198 = vmatprep.subr.mxu0 0.0
    %4199 = vmatpush1.xpose.msra.mxu0 0.0
    %4200 = vmatprep.subr.mxu0 0.0
    %4201 = vmatpush1.xpose.msra.mxu0 0.0
    %4202 = vmatprep.subr.mxu0 0.0
    %4203 = vmatpush1.xpose.msra.mxu0 0.0
    %4204 = vmatprep.subr.mxu0 0.0
    %4205 = vmatpush1.xpose.msra.mxu0 0.0
    %4206 = vmatprep.subr.mxu0 0.0
    %4207 = vmatpush1.xpose.msra.mxu0 0.0
    %4208 = vmatprep.subr.mxu0 0.0
    %4209 = vmatpush1.xpose.msra.mxu0 0.0
    %4210 = vmatprep.subr.mxu0 0.0
    %4211 = vmatpush1.xpose.msra.mxu0 0.0
    %4212 = vmatprep.subr.mxu0 0.0
    %4213 = vmatpush1.xpose.msra.mxu0 0.0
    %4214 = vmatprep.subr.mxu0 0.0
    %4215 = vmatpush1.xpose.msra.mxu0 0.0
    %4216 = vmatprep.subr.mxu0 0.0
    %4217 = vmatpush1.xpose.msra.mxu0 0.0
    %4218 = vmatprep.subr.mxu0 0.0
    %4219 = vmatpush1.xpose.msra.mxu0 0.0
    %4220 = vmatprep.subr.mxu0 0.0
    %4221 = vmatpush1.xpose.msra.mxu0 0.0
    %4222 = vmatprep.subr.mxu0 0.0
    %4223 = vmatpush1.xpose.msra.mxu0 0.0
    %4224 = vmatprep.subr.mxu0 0.0
    %4225 = vmatpush1.xpose.msra.mxu0 0.0
    %4226 = vmatprep.subr.mxu0 0.0
    %4227 = vmatpush1.xpose.msra.mxu0 0.0
    %4228 = vmatprep.subr.mxu0 0.0
    %4229 = vmatpush1.xpose.msra.mxu0 0.0
    %4230 = vmatprep.subr.mxu0 0.0
    %4231 = vmatpush1.xpose.msra.mxu0 0.0
    %4232 = vmatprep.subr.mxu0 0.0
    %4233 = vmatpush1.xpose.msra.mxu0 0.0
    %4234 = vmatprep.subr.mxu0 0.0
    %4235 = vmatpush1.xpose.msra.mxu0 0.0
    %4236 = vmatprep.subr.mxu0 0.0
    %4237 = vmatpush1.xpose.msra.mxu0 0.0
    %4238 = vmatprep.subr.mxu0 0.0
    %4239 = vmatpush1.xpose.msra.mxu0 0.0
    %4240 = vmatprep.mubr.f32.mxu0 0.0
    %v4241 = vand.u32 %v3945, 4294901760
    %v4242 = vsub.f32 %v3945, %v4241
    %v4243 = vand.u32 %v4242, 4294901760
    %4244 = vmatmul.mubr.f32.gmra.mrb[0].mxu0 %v4243
    %v4245 = vpop.f32.mrb[0].mxu0
    %v4246 = vadd.f32 %v4172, %v4245
    %v4247 = vpop.f32.mrb[0].mxu0
    %4248 = vdwg.mxu0
    %4249 = vmatprep.subr.mxu0 0.0
    %v4250 = vand.u32 %v3947, 4294901760
    %v4251 = vsub.f32 %v3947, %v4250
    %v4252 = vand.u32 %v4251, 4294901760
    %4253 = vmatpush1.xpose.msra.mxu0 %v4252
    %4254 = vmatprep.subr.mxu0 0.0
    %4255 = vmatpush1.xpose.msra.mxu0 0.0
    %4256 = vmatprep.subr.mxu0 0.0
    %4257 = vmatpush1.xpose.msra.mxu0 0.0
    %4258 = vmatprep.subr.mxu0 0.0
    %4259 = vmatpush1.xpose.msra.mxu0 0.0
    %4260 = vmatprep.subr.mxu0 0.0
    %4261 = vmatpush1.xpose.msra.mxu0 0.0
    %4262 = vmatprep.subr.mxu0 0.0
    %4263 = vmatpush1.xpose.msra.mxu0 0.0
    %4264 = vmatprep.subr.mxu0 0.0
    %4265 = vmatpush1.xpose.msra.mxu0 0.0
    %4266 = vmatprep.subr.mxu0 0.0
    %4267 = vmatpush1.xpose.msra.mxu0 0.0
    %4268 = vmatprep.subr.mxu0 0.0
    %4269 = vmatpush1.xpose.msra.mxu0 0.0
    %4270 = vmatprep.subr.mxu0 0.0
    %4271 = vmatpush1.xpose.msra.mxu0 0.0
    %4272 = vmatprep.subr.mxu0 0.0
    %4273 = vmatpush1.xpose.msra.mxu0 0.0
    %4274 = vmatprep.subr.mxu0 0.0
    %4275 = vmatpush1.xpose.msra.mxu0 0.0
    %4276 = vmatprep.subr.mxu0 0.0
    %4277 = vmatpush1.xpose.msra.mxu0 0.0
    %4278 = vmatprep.subr.mxu0 0.0
    %4279 = vmatpush1.xpose.msra.mxu0 0.0
    %4280 = vmatprep.subr.mxu0 0.0
    %4281 = vmatpush1.xpose.msra.mxu0 0.0
    %4282 = vmatprep.subr.mxu0 0.0
    %4283 = vmatpush1.xpose.msra.mxu0 0.0
    %4284 = vmatprep.subr.mxu0 0.0
    %4285 = vmatpush1.xpose.msra.mxu0 0.0
    %4286 = vmatprep.subr.mxu0 0.0
    %4287 = vmatpush1.xpose.msra.mxu0 0.0
    %4288 = vmatprep.subr.mxu0 0.0
    %4289 = vmatpush1.xpose.msra.mxu0 0.0
    %4290 = vmatprep.subr.mxu0 0.0
    %4291 = vmatpush1.xpose.msra.mxu0 0.0
    %4292 = vmatprep.subr.mxu0 0.0
    %4293 = vmatpush1.xpose.msra.mxu0 0.0
    %4294 = vmatprep.subr.mxu0 0.0
    %4295 = vmatpush1.xpose.msra.mxu0 0.0
    %4296 = vmatprep.subr.mxu0 0.0
    %4297 = vmatpush1.xpose.msra.mxu0 0.0
    %4298 = vmatprep.subr.mxu0 0.0
    %4299 = vmatpush1.xpose.msra.mxu0 0.0
    %4300 = vmatprep.subr.mxu0 0.0
    %4301 = vmatpush1.xpose.msra.mxu0 0.0
    %4302 = vmatprep.subr.mxu0 0.0
    %4303 = vmatpush1.xpose.msra.mxu0 0.0
    %4304 = vmatprep.subr.mxu0 0.0
    %4305 = vmatpush1.xpose.msra.mxu0 0.0
    %4306 = vmatprep.subr.mxu0 0.0
    %4307 = vmatpush1.xpose.msra.mxu0 0.0
    %4308 = vmatprep.subr.mxu0 0.0
    %4309 = vmatpush1.xpose.msra.mxu0 0.0
    %4310 = vmatprep.subr.mxu0 0.0
    %4311 = vmatpush1.xpose.msra.mxu0 0.0
    %4312 = vmatprep.subr.mxu0 0.0
    %4313 = vmatpush1.xpose.msra.mxu0 0.0
    %4314 = vmatprep.subr.mxu0 0.0
    %4315 = vmatpush1.xpose.msra.mxu0 0.0
    %4316 = vmatprep.mubr.f32.mxu0 0.0
    %v4317 = vand.u32 %v3945, 4294901760
    %4318 = vmatmul.mubr.f32.gmra.mrb[0].mxu0 %v4317
    %v4319 = vpop.f32.mrb[0].mxu0
    %v4320 = vadd.f32 %v4246, %v4319
    %v4321 = vpop.f32.mrb[0].mxu0
    %4322 = vdwg.mxu0
    %4323 = vmatprep.subr.mxu0 0.0
    %v4324 = vand.u32 %v3947, 4294901760
    %4325 = vmatpush1.xpose.msra.mxu0 %v4324
    %4326 = vmatprep.subr.mxu0 0.0
    %4327 = vmatpush1.xpose.msra.mxu0 0.0
    %4328 = vmatprep.subr.mxu0 0.0
    %4329 = vmatpush1.xpose.msra.mxu0 0.0
    %4330 = vmatprep.subr.mxu0 0.0
    %4331 = vmatpush1.xpose.msra.mxu0 0.0
    %4332 = vmatprep.subr.mxu0 0.0
    %4333 = vmatpush1.xpose.msra.mxu0 0.0
    %4334 = vmatprep.subr.mxu0 0.0
    %4335 = vmatpush1.xpose.msra.mxu0 0.0
    %4336 = vmatprep.subr.mxu0 0.0
    %4337 = vmatpush1.xpose.msra.mxu0 0.0
    %4338 = vmatprep.subr.mxu0 0.0
    %4339 = vmatpush1.xpose.msra.mxu0 0.0
    %4340 = vmatprep.subr.mxu0 0.0
    %4341 = vmatpush1.xpose.msra.mxu0 0.0
    %4342 = vmatprep.subr.mxu0 0.0
    %4343 = vmatpush1.xpose.msra.mxu0 0.0
    %4344 = vmatprep.subr.mxu0 0.0
    %4345 = vmatpush1.xpose.msra.mxu0 0.0
    %4346 = vmatprep.subr.mxu0 0.0
    %4347 = vmatpush1.xpose.msra.mxu0 0.0
    %4348 = vmatprep.subr.mxu0 0.0
    %4349 = vmatpush1.xpose.msra.mxu0 0.0
    %4350 = vmatprep.subr.mxu0 0.0
    %4351 = vmatpush1.xpose.msra.mxu0 0.0
    %4352 = vmatprep.subr.mxu0 0.0
    %4353 = vmatpush1.xpose.msra.mxu0 0.0
    %4354 = vmatprep.subr.mxu0 0.0
    %4355 = vmatpush1.xpose.msra.mxu0 0.0
    %4356 = vmatprep.subr.mxu0 0.0
    %4357 = vmatpush1.xpose.msra.mxu0 0.0
    %4358 = vmatprep.subr.mxu0 0.0
    %4359 = vmatpush1.xpose.msra.mxu0 0.0
    %4360 = vmatprep.subr.mxu0 0.0
    %4361 = vmatpush1.xpose.msra.mxu0 0.0
    %4362 = vmatprep.subr.mxu0 0.0
    %4363 = vmatpush1.xpose.msra.mxu0 0.0
    %4364 = vmatprep.subr.mxu0 0.0
    %4365 = vmatpush1.xpose.msra.mxu0 0.0
    %4366 = vmatprep.subr.mxu0 0.0
    %4367 = vmatpush1.xpose.msra.mxu0 0.0
    %4368 = vmatprep.subr.mxu0 0.0
    %4369 = vmatpush1.xpose.msra.mxu0 0.0
    %4370 = vmatprep.subr.mxu0 0.0
    %4371 = vmatpush1.xpose.msra.mxu0 0.0
    %4372 = vmatprep.subr.mxu0 0.0
    %4373 = vmatpush1.xpose.msra.mxu0 0.0
    %4374 = vmatprep.subr.mxu0 0.0
    %4375 = vmatpush1.xpose.msra.mxu0 0.0
    %4376 = vmatprep.subr.mxu0 0.0
    %4377 = vmatpush1.xpose.msra.mxu0 0.0
    %4378 = vmatprep.subr.mxu0 0.0
    %4379 = vmatpush1.xpose.msra.mxu0 0.0
    %4380 = vmatprep.subr.mxu0 0.0
    %4381 = vmatpush1.xpose.msra.mxu0 0.0
    %4382 = vmatprep.subr.mxu0 0.0
    %4383 = vmatpush1.xpose.msra.mxu0 0.0
    %4384 = vmatprep.subr.mxu0 0.0
    %4385 = vmatpush1.xpose.msra.mxu0 0.0
    %4386 = vmatprep.subr.mxu0 0.0
    %4387 = vmatpush1.xpose.msra.mxu0 0.0
    %4388 = vmatprep.mubr.f32.mxu0 0.0
    %v4389 = vand.u32 %v3945, 4294901760
    %4390 = vmatmul.mubr.f32.gmra.mrb[0].mxu0 %v4389
    %v4391 = vpop.f32.mrb[0].mxu0
    %v4392 = vadd.f32 %v4320, %v4391
    %v4393 = vpop.f32.mrb[0].mxu0
    %4394 = vdwg.mxu0
    %v4395 = vmul.f32 %v4392, 0.35355338
    %v4396 = vsel %vm1190, %v4395, -inf
    %4397 = vmax.xlane.f32.xlu0 %v4396
    %v4398 = vpop.xlane.xlu0 %4397
    %v4399 = vsub.f32 %v4395, %v4398
    %v4400 = vmul.f32 %v4399, 1.442695
    %v4401 = vpow.pop %v4400
    %v4402 = vsel %vm1190, %v4401, 0.0
    %4403 = vadd.xlane.f32.xlu0 %v4402
    %v4404 = vpop.xlane.xlu0 %4403
    %v4405 = vrcp.pop %v4404
    %v4406 = vmul.f32 %v4401, %v4405
    %4407 = vrot.lane.b32.xlu0 %v1184, 40
    %v4408 = vpop.permute.xlu0 %4407
    %v4411 = vsel %vm1190, %v4406, 0
    %4413 = vmatprep.subr.mxu0 0.0
    %v4414 = vand.u32 %v4408, 4294901760
    %4415 = vmatpush1.msra.mxu0 %v4414
    %4416 = vmatprep.subr.mxu0 0.0
    %4417 = vmatpush1.msra.mxu0 0.0
    %4418 = vmatprep.subr.mxu0 0.0
    %4419 = vmatpush1.msra.mxu0 0.0
    %4420 = vmatprep.subr.mxu0 0.0
    %4421 = vmatpush1.msra.mxu0 0.0
    %4422 = vmatprep.subr.mxu0 0.0
    %4423 = vmatpush1.msra.mxu0 0.0
    %4424 = vmatprep.subr.mxu0 0.0
    %4425 = vmatpush1.msra.mxu0 0.0
    %4426 = vmatprep.subr.mxu0 0.0
    %4427 = vmatpush1.msra.mxu0 0.0
    %4428 = vmatprep.subr.mxu0 0.0
    %4429 = vmatpush1.msra.mxu0 0.0
    %4430 = vmatprep.subr.mxu0 0.0
    %4431 = vmatpush1.msra.mxu0 0.0
    %4432 = vmatprep.subr.mxu0 0.0
    %4433 = vmatpush1.msra.mxu0 0.0
    %4434 = vmatprep.subr.mxu0 0.0
    %4435 = vmatpush1.msra.mxu0 0.0
    %4436 = vmatprep.subr.mxu0 0.0
    %4437 = vmatpush1.msra.mxu0 0.0
    %4438 = vmatprep.subr.mxu0 0.0
    %4439 = vmatpush1.msra.mxu0 0.0
    %4440 = vmatprep.subr.mxu0 0.0
    %4441 = vmatpush1.msra.mxu0 0.0
    %4442 = vmatprep.subr.mxu0 0.0
    %4443 = vmatpush1.msra.mxu0 0.0
    %4444 = vmatprep.subr.mxu0 0.0
    %4445 = vmatpush1.msra.mxu0 0.0
    %4446 = vmatprep.subr.mxu0 0.0
    %4447 = vmatpush1.msra.mxu0 0.0
    %4448 = vmatprep.subr.mxu0 0.0
    %4449 = vmatpush1.msra.mxu0 0.0
    %4450 = vmatprep.subr.mxu0 0.0
    %4451 = vmatpush1.msra.mxu0 0.0
    %4452 = vmatprep.subr.mxu0 0.0
    %4453 = vmatpush1.msra.mxu0 0.0
    %4454 = vmatprep.subr.mxu0 0.0
    %4455 = vmatpush1.msra.mxu0 0.0
    %4456 = vmatprep.subr.mxu0 0.0
    %4457 = vmatpush1.msra.mxu0 0.0
    %4458 = vmatprep.subr.mxu0 0.0
    %4459 = vmatpush1.msra.mxu0 0.0
    %4460 = vmatprep.subr.mxu0 0.0
    %4461 = vmatpush1.msra.mxu0 0.0
    %4462 = vmatprep.subr.mxu0 0.0
    %4463 = vmatpush1.msra.mxu0 0.0
    %4464 = vmatprep.subr.mxu0 0.0
    %4465 = vmatpush1.msra.mxu0 0.0
    %4466 = vmatprep.subr.mxu0 0.0
    %4467 = vmatpush1.msra.mxu0 0.0
    %4468 = vmatprep.subr.mxu0 0.0
    %4469 = vmatpush1.msra.mxu0 0.0
    %4470 = vmatprep.subr.mxu0 0.0
    %4471 = vmatpush1.msra.mxu0 0.0
    %4472 = vmatprep.subr.mxu0 0.0
    %4473 = vmatpush1.msra.mxu0 0.0
    %4474 = vmatprep.subr.mxu0 0.0
    %4475 = vmatpush1.msra.mxu0 0.0
    %4476 = vmatprep.subr.mxu0 0.0
    %4477 = vmatpush1.msra.mxu0 0.0
    %4478 = vmatprep.mubr.f32.mxu0 0.0
    %v4479 = vand.u32 %v4411, 4294901760
    %v4480 = vsub.f32 %v4411, %v4479
    %v4481 = vand.u32 %v4480, 4294901760
    %v4482 = vsub.f32 %v4480, %v4481
    %v4483 = vand.u32 %v4482, 4294901760
    %4484 = vmatmul.mubr.f32.gmra.mrb[0].mxu0 %v4483
    %v4485 = vpop.f32.mrb[0].mxu0
    %v4486 = vadd.f32 0.0, %v4485
    %v4487 = vpop.f32.mrb[0].mxu0
    %4488 = vdwg.mxu0
    %4489 = vmatprep.subr.mxu0 0.0
    %v4490 = vand.u32 %v4408, 4294901760
    %v4491 = vsub.f32 %v4408, %v4490
    %v4492 = vand.u32 %v4491, 4294901760
    %v4493 = vsub.f32 %v4491, %v4492
    %v4494 = vand.u32 %v4493, 4294901760
    %4495 = vmatpush1.msra.mxu0 %v4494
    %4496 = vmatprep.subr.mxu0 0.0
    %4497 = vmatpush1.msra.mxu0 0.0
    %4498 = vmatprep.subr.mxu0 0.0
    %4499 = vmatpush1.msra.mxu0 0.0
    %4500 = vmatprep.subr.mxu0 0.0
    %4501 = vmatpush1.msra.mxu0 0.0
    %4502 = vmatprep.subr.mxu0 0.0
    %4503 = vmatpush1.msra.mxu0 0.0
    %4504 = vmatprep.subr.mxu0 0.0
    %4505 = vmatpush1.msra.mxu0 0.0
    %4506 = vmatprep.subr.mxu0 0.0
    %4507 = vmatpush1.msra.mxu0 0.0
    %4508 = vmatprep.subr.mxu0 0.0
    %4509 = vmatpush1.msra.mxu0 0.0
    %4510 = vmatprep.subr.mxu0 0.0
    %4511 = vmatpush1.msra.mxu0 0.0
    %4512 = vmatprep.subr.mxu0 0.0
    %4513 = vmatpush1.msra.mxu0 0.0
    %4514 = vmatprep.subr.mxu0 0.0
    %4515 = vmatpush1.msra.mxu0 0.0
    %4516 = vmatprep.subr.mxu0 0.0
    %4517 = vmatpush1.msra.mxu0 0.0
    %4518 = vmatprep.subr.mxu0 0.0
    %4519 = vmatpush1.msra.mxu0 0.0
    %4520 = vmatprep.subr.mxu0 0.0
    %4521 = vmatpush1.msra.mxu0 0.0
    %4522 = vmatprep.subr.mxu0 0.0
    %4523 = vmatpush1.msra.mxu0 0.0
    %4524 = vmatprep.subr.mxu0 0.0
    %4525 = vmatpush1.msra.mxu0 0.0
    %4526 = vmatprep.subr.mxu0 0.0
    %4527 = vmatpush1.msra.mxu0 0.0
    %4528 = vmatprep.subr.mxu0 0.0
    %4529 = vmatpush1.msra.mxu0 0.0
    %4530 = vmatprep.subr.mxu0 0.0
    %4531 = vmatpush1.msra.mxu0 0.0
    %4532 = vmatprep.subr.mxu0 0.0
    %4533 = vmatpush1.msra.mxu0 0.0
    %4534 = vmatprep.subr.mxu0 0.0
    %4535 = vmatpush1.msra.mxu0 0.0
    %4536 = vmatprep.subr.mxu0 0.0
    %4537 = vmatpush1.msra.mxu0 0.0
    %4538 = vmatprep.subr.mxu0 0.0
    %4539 = vmatpush1.msra.mxu0 0.0
    %4540 = vmatprep.subr.mxu0 0.0
    %4541 = vmatpush1.msra.mxu0 0.0
    %4542 = vmatprep.subr.mxu0 0.0
    %4543 = vmatpush1.msra.mxu0 0.0
    %4544 = vmatprep.subr.mxu0 0.0
    %4545 = vmatpush1.msra.mxu0 0.0
    %4546 = vmatprep.subr.mxu0 0.0
    %4547 = vmatpush1.msra.mxu0 0.0
    %4548 = vmatprep.subr.mxu0 0.0
    %4549 = vmatpush1.msra.mxu0 0.0
    %4550 = vmatprep.subr.mxu0 0.0
    %4551 = vmatpush1.msra.mxu0 0.0
    %4552 = vmatprep.subr.mxu0 0.0
    %4553 = vmatpush1.msra.mxu0 0.0
    %4554 = vmatprep.subr.mxu0 0.0
    %4555 = vmatpush1.msra.mxu0 0.0
    %4556 = vmatprep.subr.mxu0 0.0
    %4557 = vmatpush1.msra.mxu0 0.0
    %4558 = vmatprep.mubr.f32.mxu0 0.0
    %v4559 = vand.u32 %v4411, 4294901760
    %4560 = vmatmul.mubr.f32.gmra.mrb[0].mxu0 %v4559
    %v4561 = vpop.f32.mrb[0].mxu0
    %v4562 = vadd.f32 %v4486, %v4561
    %v4563 = vpop.f32.mrb[0].mxu0
    %4564 = vdwg.mxu0
    %4565 = vmatprep.subr.mxu0 0.0
    %v4566 = vand.u32 %v4408, 4294901760
    %v4567 = vsub.f32 %v4408, %v4566
    %4568 = vmatpush1.msra.mxu0 %v4567
    %4569 = vmatprep.subr.mxu0 0.0
    %4570 = vmatpush1.msra.mxu0 0.0
    %4571 = vmatprep.subr.mxu0 0.0
    %4572 = vmatpush1.msra.mxu0 0.0
    %4573 = vmatprep.subr.mxu0 0.0
    %4574 = vmatpush1.msra.mxu0 0.0
    %4575 = vmatprep.subr.mxu0 0.0
    %4576 = vmatpush1.msra.mxu0 0.0
    %4577 = vmatprep.subr.mxu0 0.0
    %4578 = vmatpush1.msra.mxu0 0.0
    %4579 = vmatprep.subr.mxu0 0.0
    %4580 = vmatpush1.msra.mxu0 0.0
    %4581 = vmatprep.subr.mxu0 0.0
    %4582 = vmatpush1.msra.mxu0 0.0
    %4583 = vmatprep.subr.mxu0 0.0
    %4584 = vmatpush1.msra.mxu0 0.0
    %4585 = vmatprep.subr.mxu0 0.0
    %4586 = vmatpush1.msra.mxu0 0.0
    %4587 = vmatprep.subr.mxu0 0.0
    %4588 = vmatpush1.msra.mxu0 0.0
    %4589 = vmatprep.subr.mxu0 0.0
    %4590 = vmatpush1.msra.mxu0 0.0
    %4591 = vmatprep.subr.mxu0 0.0
    %4592 = vmatpush1.msra.mxu0 0.0
    %4593 = vmatprep.subr.mxu0 0.0
    %4594 = vmatpush1.msra.mxu0 0.0
    %4595 = vmatprep.subr.mxu0 0.0
    %4596 = vmatpush1.msra.mxu0 0.0
    %4597 = vmatprep.subr.mxu0 0.0
    %4598 = vmatpush1.msra.mxu0 0.0
    %4599 = vmatprep.subr.mxu0 0.0
    %4600 = vmatpush1.msra.mxu0 0.0
    %4601 = vmatprep.subr.mxu0 0.0
    %4602 = vmatpush1.msra.mxu0 0.0
    %4603 = vmatprep.subr.mxu0 0.0
    %4604 = vmatpush1.msra.mxu0 0.0
    %4605 = vmatprep.subr.mxu0 0.0
    %4606 = vmatpush1.msra.mxu0 0.0
    %4607 = vmatprep.subr.mxu0 0.0
    %4608 = vmatpush1.msra.mxu0 0.0
    %4609 = vmatprep.subr.mxu0 0.0
    %4610 = vmatpush1.msra.mxu0 0.0
    %4611 = vmatprep.subr.mxu0 0.0
    %4612 = vmatpush1.msra.mxu0 0.0
    %4613 = vmatprep.subr.mxu0 0.0
    %4614 = vmatpush1.msra.mxu0 0.0
    %4615 = vmatprep.subr.mxu0 0.0
    %4616 = vmatpush1.msra.mxu0 0.0
    %4617 = vmatprep.subr.mxu0 0.0
    %4618 = vmatpush1.msra.mxu0 0.0
    %4619 = vmatprep.subr.mxu0 0.0
    %4620 = vmatpush1.msra.mxu0 0.0
    %4621 = vmatprep.subr.mxu0 0.0
    %4622 = vmatpush1.msra.mxu0 0.0
    %4623 = vmatprep.subr.mxu0 0.0
    %4624 = vmatpush1.msra.mxu0 0.0
    %4625 = vmatprep.subr.mxu0 0.0
    %4626 = vmatpush1.msra.mxu0 0.0
    %4627 = vmatprep.subr.mxu0 0.0
    %4628 = vmatpush1.msra.mxu0 0.0
    %4629 = vmatprep.subr.mxu0 0.0
    %4630 = vmatpush1.msra.mxu0 0.0
    %4631 = vmatprep.mubr.f32.mxu0 0.0
    %v4632 = vand.u32 %v4411, 4294901760
    %v4633 = vsub.f32 %v4411, %v4632
    %4634 = vmatmul.mubr.f32.gmra.mrb[0].mxu0 %v4633
    %v4635 = vpop.f32.mrb[0].mxu0
    %v4636 = vadd.f32 %v4562, %v4635
    %v4637 = vpop.f32.mrb[0].mxu0
    %4638 = vdwg.mxu0
    %4639 = vmatprep.subr.mxu0 0.0
    %v4640 = vand.u32 %v4408, 4294901760
    %4641 = vmatpush1.msra.mxu0 %v4640
    %4642 = vmatprep.subr.mxu0 0.0
    %4643 = vmatpush1.msra.mxu0 0.0
    %4644 = vmatprep.subr.mxu0 0.0
    %4645 = vmatpush1.msra.mxu0 0.0
    %4646 = vmatprep.subr.mxu0 0.0
    %4647 = vmatpush1.msra.mxu0 0.0
    %4648 = vmatprep.subr.mxu0 0.0
    %4649 = vmatpush1.msra.mxu0 0.0
    %4650 = vmatprep.subr.mxu0 0.0
    %4651 = vmatpush1.msra.mxu0 0.0
    %4652 = vmatprep.subr.mxu0 0.0
    %4653 = vmatpush1.msra.mxu0 0.0
    %4654 = vmatprep.subr.mxu0 0.0
    %4655 = vmatpush1.msra.mxu0 0.0
    %4656 = vmatprep.subr.mxu0 0.0
    %4657 = vmatpush1.msra.mxu0 0.0
    %4658 = vmatprep.subr.mxu0 0.0
    %4659 = vmatpush1.msra.mxu0 0.0
    %4660 = vmatprep.subr.mxu0 0.0
    %4661 = vmatpush1.msra.mxu0 0.0
    %4662 = vmatprep.subr.mxu0 0.0
    %4663 = vmatpush1.msra.mxu0 0.0
    %4664 = vmatprep.subr.mxu0 0.0
    %4665 = vmatpush1.msra.mxu0 0.0
    %4666 = vmatprep.subr.mxu0 0.0
    %4667 = vmatpush1.msra.mxu0 0.0
    %4668 = vmatprep.subr.mxu0 0.0
    %4669 = vmatpush1.msra.mxu0 0.0
    %4670 = vmatprep.subr.mxu0 0.0
    %4671 = vmatpush1.msra.mxu0 0.0
    %4672 = vmatprep.subr.mxu0 0.0
    %4673 = vmatpush1.msra.mxu0 0.0
    %4674 = vmatprep.subr.mxu0 0.0
    %4675 = vmatpush1.msra.mxu0 0.0
    %4676 = vmatprep.subr.mxu0 0.0
    %4677 = vmatpush1.msra.mxu0 0.0
    %4678 = vmatprep.subr.mxu0 0.0
    %4679 = vmatpush1.msra.mxu0 0.0
    %4680 = vmatprep.subr.mxu0 0.0
    %4681 = vmatpush1.msra.mxu0 0.0
    %4682 = vmatprep.subr.mxu0 0.0
    %4683 = vmatpush1.msra.mxu0 0.0
    %4684 = vmatprep.subr.mxu0 0.0
    %4685 = vmatpush1.msra.mxu0 0.0
    %4686 = vmatprep.subr.mxu0 0.0
    %4687 = vmatpush1.msra.mxu0 0.0
    %4688 = vmatprep.subr.mxu0 0.0
    %4689 = vmatpush1.msra.mxu0 0.0
    %4690 = vmatprep.subr.mxu0 0.0
    %4691 = vmatpush1.msra.mxu0 0.0
    %4692 = vmatprep.subr.mxu0 0.0
    %4693 = vmatpush1.msra.mxu0 0.0
    %4694 = vmatprep.subr.mxu0 0.0
    %4695 = vmatpush1.msra.mxu0 0.0
    %4696 = vmatprep.subr.mxu0 0.0
    %4697 = vmatpush1.msra.mxu0 0.0
    %4698 = vmatprep.subr.mxu0 0.0
    %4699 = vmatpush1.msra.mxu0 0.0
    %4700 = vmatprep.subr.mxu0 0.0
    %4701 = vmatpush1.msra.mxu0 0.0
    %4702 = vmatprep.subr.mxu0 0.0
    %4703 = vmatpush1.msra.mxu0 0.0
    %4704 = vmatprep.mubr.f32.mxu0 0.0
    %v4705 = vand.u32 %v4411, 4294901760
    %v4706 = vsub.f32 %v4411, %v4705
    %v4707 = vand.u32 %v4706, 4294901760
    %4708 = vmatmul.mubr.f32.gmra.mrb[0].mxu0 %v4707
    %v4709 = vpop.f32.mrb[0].mxu0
    %v4710 = vadd.f32 %v4636, %v4709
    %v4711 = vpop.f32.mrb[0].mxu0
    %4712 = vdwg.mxu0
    %4713 = vmatprep.subr.mxu0 0.0
    %v4714 = vand.u32 %v4408, 4294901760
    %v4715 = vsub.f32 %v4408, %v4714
    %v4716 = vand.u32 %v4715, 4294901760
    %4717 = vmatpush1.msra.mxu0 %v4716
    %4718 = vmatprep.subr.mxu0 0.0
    %4719 = vmatpush1.msra.mxu0 0.0
    %4720 = vmatprep.subr.mxu0 0.0
    %4721 = vmatpush1.msra.mxu0 0.0
    %4722 = vmatprep.subr.mxu0 0.0
    %4723 = vmatpush1.msra.mxu0 0.0
    %4724 = vmatprep.subr.mxu0 0.0
    %4725 = vmatpush1.msra.mxu0 0.0
    %4726 = vmatprep.subr.mxu0 0.0
    %4727 = vmatpush1.msra.mxu0 0.0
    %4728 = vmatprep.subr.mxu0 0.0
    %4729 = vmatpush1.msra.mxu0 0.0
    %4730 = vmatprep.subr.mxu0 0.0
    %4731 = vmatpush1.msra.mxu0 0.0
    %4732 = vmatprep.subr.mxu0 0.0
    %4733 = vmatpush1.msra.mxu0 0.0
    %4734 = vmatprep.subr.mxu0 0.0
    %4735 = vmatpush1.msra.mxu0 0.0
    %4736 = vmatprep.subr.mxu0 0.0
    %4737 = vmatpush1.msra.mxu0 0.0
    %4738 = vmatprep.subr.mxu0 0.0
    %4739 = vmatpush1.msra.mxu0 0.0
    %4740 = vmatprep.subr.mxu0 0.0
    %4741 = vmatpush1.msra.mxu0 0.0
    %4742 = vmatprep.subr.mxu0 0.0
    %4743 = vmatpush1.msra.mxu0 0.0
    %4744 = vmatprep.subr.mxu0 0.0
    %4745 = vmatpush1.msra.mxu0 0.0
    %4746 = vmatprep.subr.mxu0 0.0
    %4747 = vmatpush1.msra.mxu0 0.0
    %4748 = vmatprep.subr.mxu0 0.0
    %4749 = vmatpush1.msra.mxu0 0.0
    %4750 = vmatprep.subr.mxu0 0.0
    %4751 = vmatpush1.msra.mxu0 0.0
    %4752 = vmatprep.subr.mxu0 0.0
    %4753 = vmatpush1.msra.mxu0 0.0
    %4754 = vmatprep.subr.mxu0 0.0
    %4755 = vmatpush1.msra.mxu0 0.0
    %4756 = vmatprep.subr.mxu0 0.0
    %4757 = vmatpush1.msra.mxu0 0.0
    %4758 = vmatprep.subr.mxu0 0.0
    %4759 = vmatpush1.msra.mxu0 0.0
    %4760 = vmatprep.subr.mxu0 0.0
    %4761 = vmatpush1.msra.mxu0 0.0
    %4762 = vmatprep.subr.mxu0 0.0
    %4763 = vmatpush1.msra.mxu0 0.0
    %4764 = vmatprep.subr.mxu0 0.0
    %4765 = vmatpush1.msra.mxu0 0.0
    %4766 = vmatprep.subr.mxu0 0.0
    %4767 = vmatpush1.msra.mxu0 0.0
    %4768 = vmatprep.subr.mxu0 0.0
    %4769 = vmatpush1.msra.mxu0 0.0
    %4770 = vmatprep.subr.mxu0 0.0
    %4771 = vmatpush1.msra.mxu0 0.0
    %4772 = vmatprep.subr.mxu0 0.0
    %4773 = vmatpush1.msra.mxu0 0.0
    %4774 = vmatprep.subr.mxu0 0.0
    %4775 = vmatpush1.msra.mxu0 0.0
    %4776 = vmatprep.subr.mxu0 0.0
    %4777 = vmatpush1.msra.mxu0 0.0
    %4778 = vmatprep.subr.mxu0 0.0
    %4779 = vmatpush1.msra.mxu0 0.0
    %4780 = vmatprep.mubr.f32.mxu0 0.0
    %v4781 = vand.u32 %v4411, 4294901760
    %4782 = vmatmul.mubr.f32.gmra.mrb[0].mxu0 %v4781
    %v4783 = vpop.f32.mrb[0].mxu0
    %v4784 = vadd.f32 %v4710, %v4783
    %v4785 = vpop.f32.mrb[0].mxu0
    %4786 = vdwg.mxu0
    %4787 = vmatprep.subr.mxu0 0.0
    %v4788 = vand.u32 %v4408, 4294901760
    %4789 = vmatpush1.msra.mxu0 %v4788
    %4790 = vmatprep.subr.mxu0 0.0
    %4791 = vmatpush1.msra.mxu0 0.0
    %4792 = vmatprep.subr.mxu0 0.0
    %4793 = vmatpush1.msra.mxu0 0.0
    %4794 = vmatprep.subr.mxu0 0.0
    %4795 = vmatpush1.msra.mxu0 0.0
    %4796 = vmatprep.subr.mxu0 0.0
    %4797 = vmatpush1.msra.mxu0 0.0
    %4798 = vmatprep.subr.mxu0 0.0
    %4799 = vmatpush1.msra.mxu0 0.0
    %4800 = vmatprep.subr.mxu0 0.0
    %4801 = vmatpush1.msra.mxu0 0.0
    %4802 = vmatprep.subr.mxu0 0.0
    %4803 = vmatpush1.msra.mxu0 0.0
    %4804 = vmatprep.subr.mxu0 0.0
    %4805 = vmatpush1.msra.mxu0 0.0
    %4806 = vmatprep.subr.mxu0 0.0
    %4807 = vmatpush1.msra.mxu0 0.0
    %4808 = vmatprep.subr.mxu0 0.0
    %4809 = vmatpush1.msra.mxu0 0.0
    %4810 = vmatprep.subr.mxu0 0.0
    %4811 = vmatpush1.msra.mxu0 0.0
    %4812 = vmatprep.subr.mxu0 0.0
    %4813 = vmatpush1.msra.mxu0 0.0
    %4814 = vmatprep.subr.mxu0 0.0
    %4815 = vmatpush1.msra.mxu0 0.0
    %4816 = vmatprep.subr.mxu0 0.0
    %4817 = vmatpush1.msra.mxu0 0.0
    %4818 = vmatprep.subr.mxu0 0.0
    %4819 = vmatpush1.msra.mxu0 0.0
    %4820 = vmatprep.subr.mxu0 0.0
    %4821 = vmatpush1.msra.mxu0 0.0
    %4822 = vmatprep.subr.mxu0 0.0
    %4823 = vmatpush1.msra.mxu0 0.0
    %4824 = vmatprep.subr.mxu0 0.0
    %4825 = vmatpush1.msra.mxu0 0.0
    %4826 = vmatprep.subr.mxu0 0.0
    %4827 = vmatpush1.msra.mxu0 0.0
    %4828 = vmatprep.subr.mxu0 0.0
    %4829 = vmatpush1.msra.mxu0 0.0
    %4830 = vmatprep.subr.mxu0 0.0
    %4831 = vmatpush1.msra.mxu0 0.0
    %4832 = vmatprep.subr.mxu0 0.0
    %4833 = vmatpush1.msra.mxu0 0.0
    %4834 = vmatprep.subr.mxu0 0.0
    %4835 = vmatpush1.msra.mxu0 0.0
    %4836 = vmatprep.subr.mxu0 0.0
    %4837 = vmatpush1.msra.mxu0 0.0
    %4838 = vmatprep.subr.mxu0 0.0
    %4839 = vmatpush1.msra.mxu0 0.0
    %4840 = vmatprep.subr.mxu0 0.0
    %4841 = vmatpush1.msra.mxu0 0.0
    %4842 = vmatprep.subr.mxu0 0.0
    %4843 = vmatpush1.msra.mxu0 0.0
    %4844 = vmatprep.subr.mxu0 0.0
    %4845 = vmatpush1.msra.mxu0 0.0
    %4846 = vmatprep.subr.mxu0 0.0
    %4847 = vmatpush1.msra.mxu0 0.0
    %4848 = vmatprep.subr.mxu0 0.0
    %4849 = vmatpush1.msra.mxu0 0.0
    %4850 = vmatprep.subr.mxu0 0.0
    %4851 = vmatpush1.msra.mxu0 0.0
    %4852 = vmatprep.mubr.f32.mxu0 0.0
    %v4853 = vand.u32 %v4411, 4294901760
    %4854 = vmatmul.mubr.f32.gmra.mrb[0].mxu0 %v4853
    %v4855 = vpop.f32.mrb[0].mxu0
    %v4856 = vadd.f32 %v4784, %v4855
    %v4857 = vpop.f32.mrb[0].mxu0
    %4858 = vdwg.mxu0
    %4860 = vrot.lane.b32.xlu0 %v3020, 8
    %v4861 = vpop.permute.xlu0 %4860
    %4864 = vrot.lane.b32.xlu0 %v3938, 16
    %v4865 = vpop.permute.xlu0 %4864
    %4868 = vrot.lane.b32.xlu0 %v4856, 24
    %v4869 = vpop.permute.xlu0 %4868
    %v4871 = vsel %vm1190, %v2102, %v4861
    %vm4872 = vcmask 130048
    %v4873 = vsel %vm4872, %v4871, %v4865
    %vm4874 = vcmask 195584
    %v4875 = vsel %vm4874, %v4873, %v4869
    %v4876 = vld [vmem:[%s5] sm:$0xff]
    %v4877 = vld [vmem:[%s5 + $0x8] sm:$0xff]
    %v4878 = vld [vmem:[%s5 + $0x10] sm:$0xff]
    %v4879 = vld [vmem:[%s5 + $0x18] sm:$0xff]
    %v4880 = vld [vmem:[%s6] sm:$0x1]
    %v4882 = vlaneseq
    %v4883 = vshrl.u32 %v4882, 7
    %v4884 = vsub.s32 0, %v4883
    %v4885 = vrot.slane %v4880, %v4884
    %v4888 = vsel %vm39, %v4875, 0
    %v4891 = vsel %vm39, %v4876, 0
    %v4894 = vsel %vm39, %v4877, 0
    %v4897 = vsel %vm39, %v4878, 0
    %v4900 = vsel %vm39, %v4879, 0
    %4902 = vmatprep.subr.mxu0 0.0
    %v4903 = vand.u32 %v4891, 4294901760
    %4904 = vmatpush1.xpose.msra.mxu0 %v4903
    %4905 = vmatprep.subr.mxu0 0.0
    %v4906 = vand.u32 %v4894, 4294901760
    %4907 = vmatpush1.xpose.msra.mxu0 %v4906
    %4908 = vmatprep.subr.mxu0 0.0
    %v4909 = vand.u32 %v4897, 4294901760
    %4910 = vmatpush1.xpose.msra.mxu0 %v4909
    %4911 = vmatprep.subr.mxu0 0.0
    %v4912 = vand.u32 %v4900, 4294901760
    %4913 = vmatpush1.xpose.msra.mxu0 %v4912
    %4914 = vmatprep.subr.mxu0 0.0
    %4915 = vmatpush1.xpose.msra.mxu0 0.0
    %4916 = vmatprep.subr.mxu0 0.0
    %4917 = vmatpush1.xpose.msra.mxu0 0.0
    %4918 = vmatprep.subr.mxu0 0.0
    %4919 = vmatpush1.xpose.msra.mxu0 0.0
    %4920 = vmatprep.subr.mxu0 0.0
    %4921 = vmatpush1.xpose.msra.mxu0 0.0
    %4922 = vmatprep.subr.mxu0 0.0
    %4923 = vmatpush1.xpose.msra.mxu0 0.0
    %4924 = vmatprep.subr.mxu0 0.0
    %4925 = vmatpush1.xpose.msra.mxu0 0.0
    %4926 = vmatprep.subr.mxu0 0.0
    %4927 = vmatpush1.xpose.msra.mxu0 0.0
    %4928 = vmatprep.subr.mxu0 0.0
    %4929 = vmatpush1.xpose.msra.mxu0 0.0
    %4930 = vmatprep.subr.mxu0 0.0
    %4931 = vmatpush1.xpose.msra.mxu0 0.0
    %4932 = vmatprep.subr.mxu0 0.0
    %4933 = vmatpush1.xpose.msra.mxu0 0.0
    %4934 = vmatprep.subr.mxu0 0.0
    %4935 = vmatpush1.xpose.msra.mxu0 0.0
    %4936 = vmatprep.subr.mxu0 0.0
    %4937 = vmatpush1.xpose.msra.mxu0 0.0
    %4938 = vmatprep.subr.mxu0 0.0
    %4939 = vmatpush1.xpose.msra.mxu0 0.0
    %4940 = vmatprep.subr.mxu0 0.0
    %4941 = vmatpush1.xpose.msra.mxu0 0.0
    %4942 = vmatprep.subr.mxu0 0.0
    %4943 = vmatpush1.xpose.msra.mxu0 0.0
    %4944 = vmatprep.subr.mxu0 0.0
    %4945 = vmatpush1.xpose.msra.mxu0 0.0
    %4946 = vmatprep.subr.mxu0 0.0
    %4947 = vmatpush1.xpose.msra.mxu0 0.0
    %4948 = vmatprep.subr.mxu0 0.0
    %4949 = vmatpush1.xpose.msra.mxu0 0.0
    %4950 = vmatprep.subr.mxu0 0.0
    %4951 = vmatpush1.xpose.msra.mxu0 0.0
    %4952 = vmatprep.subr.mxu0 0.0
    %4953 = vmatpush1.xpose.msra.mxu0 0.0
    %4954 = vmatprep.subr.mxu0 0.0
    %4955 = vmatpush1.xpose.msra.mxu0 0.0
    %4956 = vmatprep.subr.mxu0 0.0
    %4957 = vmatpush1.xpose.msra.mxu0 0.0
    %4958 = vmatprep.subr.mxu0 0.0
    %4959 = vmatpush1.xpose.msra.mxu0 0.0
    %4960 = vmatprep.subr.mxu0 0.0
    %4961 = vmatpush1.xpose.msra.mxu0 0.0
    %4962 = vmatprep.subr.mxu0 0.0
    %4963 = vmatpush1.xpose.msra.mxu0 0.0
    %4964 = vmatprep.subr.mxu0 0.0
    %4965 = vmatpush1.xpose.msra.mxu0 0.0
    %4966 = vmatprep.subr.mxu0 0.0
    %4967 = vmatpush1.xpose.msra.mxu0 0.0
    %4968 = vmatprep.subr.mxu0 0.0
    %4969 = vmatpush1.xpose.msra.mxu0 0.0
    %4970 = vmatprep.mubr.f32.mxu0 0.0
    %v4971 = vand.u32 %v4888, 4294901760
    %v4972 = vsub.f32 %v4888, %v4971
    %v4973 = vand.u32 %v4972, 4294901760
    %v4974 = vsub.f32 %v4972, %v4973
    %v4975 = vand.u32 %v4974, 4294901760
    %4976 = vmatmul.mubr.f32.gmra.mrb[0].mxu0 %v4975
    %v4977 = vpop.f32.mrb[0].mxu0
    %v4978 = vadd.f32 %v4885, %v4977
    %v4979 = vpop.f32.mrb[0].mxu0
    %4980 = vdwg.mxu0
    %4981 = vmatprep.subr.mxu0 0.0
    %v4982 = vand.u32 %v4891, 4294901760
    %v4983 = vsub.f32 %v4891, %v4982
    %v4984 = vand.u32 %v4983, 4294901760
    %v4985 = vsub.f32 %v4983, %v4984
    %v4986 = vand.u32 %v4985, 4294901760
    %4987 = vmatpush1.xpose.msra.mxu0 %v4986
    %4988 = vmatprep.subr.mxu0 0.0
    %v4989 = vand.u32 %v4894, 4294901760
    %v4990 = vsub.f32 %v4894, %v4989
    %v4991 = vand.u32 %v4990, 4294901760
    %v4992 = vsub.f32 %v4990, %v4991
    %v4993 = vand.u32 %v4992, 4294901760
    %4994 = vmatpush1.xpose.msra.mxu0 %v4993
    %4995 = vmatprep.subr.mxu0 0.0
    %v4996 = vand.u32 %v4897, 4294901760
    %v4997 = vsub.f32 %v4897, %v4996
    %v4998 = vand.u32 %v4997, 4294901760
    %v4999 = vsub.f32 %v4997, %v4998
    %v5000 = vand.u32 %v4999, 4294901760
    %5001 = vmatpush1.xpose.msra.mxu0 %v5000
    %5002 = vmatprep.subr.mxu0 0.0
    %v5003 = vand.u32 %v4900, 4294901760
    %v5004 = vsub.f32 %v4900, %v5003
    %v5005 = vand.u32 %v5004, 4294901760
    %v5006 = vsub.f32 %v5004, %v5005
    %v5007 = vand.u32 %v5006, 4294901760
    %5008 = vmatpush1.xpose.msra.mxu0 %v5007
    %5009 = vmatprep.subr.mxu0 0.0
    %5010 = vmatpush1.xpose.msra.mxu0 0.0
    %5011 = vmatprep.subr.mxu0 0.0
    %5012 = vmatpush1.xpose.msra.mxu0 0.0
    %5013 = vmatprep.subr.mxu0 0.0
    %5014 = vmatpush1.xpose.msra.mxu0 0.0
    %5015 = vmatprep.subr.mxu0 0.0
    %5016 = vmatpush1.xpose.msra.mxu0 0.0
    %5017 = vmatprep.subr.mxu0 0.0
    %5018 = vmatpush1.xpose.msra.mxu0 0.0
    %5019 = vmatprep.subr.mxu0 0.0
    %5020 = vmatpush1.xpose.msra.mxu0 0.0
    %5021 = vmatprep.subr.mxu0 0.0
    %5022 = vmatpush1.xpose.msra.mxu0 0.0
    %5023 = vmatprep.subr.mxu0 0.0
    %5024 = vmatpush1.xpose.msra.mxu0 0.0
    %5025 = vmatprep.subr.mxu0 0.0
    %5026 = vmatpush1.xpose.msra.mxu0 0.0
    %5027 = vmatprep.subr.mxu0 0.0
    %5028 = vmatpush1.xpose.msra.mxu0 0.0
    %5029 = vmatprep.subr.mxu0 0.0
    %5030 = vmatpush1.xpose.msra.mxu0 0.0
    %5031 = vmatprep.subr.mxu0 0.0
    %5032 = vmatpush1.xpose.msra.mxu0 0.0
    %5033 = vmatprep.subr.mxu0 0.0
    %5034 = vmatpush1.xpose.msra.mxu0 0.0
    %5035 = vmatprep.subr.mxu0 0.0
    %5036 = vmatpush1.xpose.msra.mxu0 0.0
    %5037 = vmatprep.subr.mxu0 0.0
    %5038 = vmatpush1.xpose.msra.mxu0 0.0
    %5039 = vmatprep.subr.mxu0 0.0
    %5040 = vmatpush1.xpose.msra.mxu0 0.0
    %5041 = vmatprep.subr.mxu0 0.0
    %5042 = vmatpush1.xpose.msra.mxu0 0.0
    %5043 = vmatprep.subr.mxu0 0.0
    %5044 = vmatpush1.xpose.msra.mxu0 0.0
    %5045 = vmatprep.subr.mxu0 0.0
    %5046 = vmatpush1.xpose.msra.mxu0 0.0
    %5047 = vmatprep.subr.mxu0 0.0
    %5048 = vmatpush1.xpose.msra.mxu0 0.0
    %5049 = vmatprep.subr.mxu0 0.0
    %5050 = vmatpush1.xpose.msra.mxu0 0.0
    %5051 = vmatprep.subr.mxu0 0.0
    %5052 = vmatpush1.xpose.msra.mxu0 0.0
    %5053 = vmatprep.subr.mxu0 0.0
    %5054 = vmatpush1.xpose.msra.mxu0 0.0
    %5055 = vmatprep.subr.mxu0 0.0
    %5056 = vmatpush1.xpose.msra.mxu0 0.0
    %5057 = vmatprep.subr.mxu0 0.0
    %5058 = vmatpush1.xpose.msra.mxu0 0.0
    %5059 = vmatprep.subr.mxu0 0.0
    %5060 = vmatpush1.xpose.msra.mxu0 0.0
    %5061 = vmatprep.subr.mxu0 0.0
    %5062 = vmatpush1.xpose.msra.mxu0 0.0
    %5063 = vmatprep.subr.mxu0 0.0
    %5064 = vmatpush1.xpose.msra.mxu0 0.0
    %5065 = vmatprep.mubr.f32.mxu0 0.0
    %v5066 = vand.u32 %v4888, 4294901760
    %5067 = vmatmul.mubr.f32.gmra.mrb[0].mxu0 %v5066
    %v5068 = vpop.f32.mrb[0].mxu0
    %v5069 = vadd.f32 %v4978, %v5068
    %v5070 = vpop.f32.mrb[0].mxu0
    %5071 = vdwg.mxu0
    %5072 = vmatprep.subr.mxu0 0.0
    %v5073 = vand.u32 %v4891, 4294901760
    %v5074 = vsub.f32 %v4891, %v5073
    %5075 = vmatpush1.xpose.msra.mxu0 %v5074
    %5076 = vmatprep.subr.mxu0 0.0
    %v5077 = vand.u32 %v4894, 4294901760
    %v5078 = vsub.f32 %v4894, %v5077
    %5079 = vmatpush1.xpose.msra.mxu0 %v5078
    %5080 = vmatprep.subr.mxu0 0.0
    %v5081 = vand.u32 %v4897, 4294901760
    %v5082 = vsub.f32 %v4897, %v5081
    %5083 = vmatpush1.xpose.msra.mxu0 %v5082
    %5084 = vmatprep.subr.mxu0 0.0
    %v5085 = vand.u32 %v4900, 4294901760
    %v5086 = vsub.f32 %v4900, %v5085
    %5087 = vmatpush1.xpose.msra.mxu0 %v5086
    %5088 = vmatprep.subr.mxu0 0.0
    %5089 = vmatpush1.xpose.msra.mxu0 0.0
    %5090 = vmatprep.subr.mxu0 0.0
    %5091 = vmatpush1.xpose.msra.mxu0 0.0
    %5092 = vmatprep.subr.mxu0 0.0
    %5093 = vmatpush1.xpose.msra.mxu0 0.0
    %5094 = vmatprep.subr.mxu0 0.0
    %5095 = vmatpush1.xpose.msra.mxu0 0.0
    %5096 = vmatprep.subr.mxu0 0.0
    %5097 = vmatpush1.xpose.msra.mxu0 0.0
    %5098 = vmatprep.subr.mxu0 0.0
    %5099 = vmatpush1.xpose.msra.mxu0 0.0
    %5100 = vmatprep.subr.mxu0 0.0
    %5101 = vmatpush1.xpose.msra.mxu0 0.0
    %5102 = vmatprep.subr.mxu0 0.0
    %5103 = vmatpush1.xpose.msra.mxu0 0.0
    %5104 = vmatprep.subr.mxu0 0.0
    %5105 = vmatpush1.xpose.msra.mxu0 0.0
    %5106 = vmatprep.subr.mxu0 0.0
    %5107 = vmatpush1.xpose.msra.mxu0 0.0
    %5108 = vmatprep.subr.mxu0 0.0
    %5109 = vmatpush1.xpose.msra.mxu0 0.0
    %5110 = vmatprep.subr.mxu0 0.0
    %5111 = vmatpush1.xpose.msra.mxu0 0.0
    %5112 = vmatprep.subr.mxu0 0.0
    %5113 = vmatpush1.xpose.msra.mxu0 0.0
    %5114 = vmatprep.subr.mxu0 0.0
    %5115 = vmatpush1.xpose.msra.mxu0 0.0
    %5116 = vmatprep.subr.mxu0 0.0
    %5117 = vmatpush1.xpose.msra.mxu0 0.0
    %5118 = vmatprep.subr.mxu0 0.0
    %5119 = vmatpush1.xpose.msra.mxu0 0.0
    %5120 = vmatprep.subr.mxu0 0.0
    %5121 = vmatpush1.xpose.msra.mxu0 0.0
    %5122 = vmatprep.subr.mxu0 0.0
    %5123 = vmatpush1.xpose.msra.mxu0 0.0
    %5124 = vmatprep.subr.mxu0 0.0
    %5125 = vmatpush1.xpose.msra.mxu0 0.0
    %5126 = vmatprep.subr.mxu0 0.0
    %5127 = vmatpush1.xpose.msra.mxu0 0.0
    %5128 = vmatprep.subr.mxu0 0.0
    %5129 = vmatpush1.xpose.msra.mxu0 0.0
    %5130 = vmatprep.subr.mxu0 0.0
    %5131 = vmatpush1.xpose.msra.mxu0 0.0
    %5132 = vmatprep.subr.mxu0 0.0
    %5133 = vmatpush1.xpose.msra.mxu0 0.0
    %5134 = vmatprep.subr.mxu0 0.0
    %5135 = vmatpush1.xpose.msra.mxu0 0.0
    %5136 = vmatprep.subr.mxu0 0.0
    %5137 = vmatpush1.xpose.msra.mxu0 0.0
    %5138 = vmatprep.subr.mxu0 0.0
    %5139 = vmatpush1.xpose.msra.mxu0 0.0
    %5140 = vmatprep.subr.mxu0 0.0
    %5141 = vmatpush1.xpose.msra.mxu0 0.0
    %5142 = vmatprep.subr.mxu0 0.0
    %5143 = vmatpush1.xpose.msra.mxu0 0.0
    %5144 = vmatprep.mubr.f32.mxu0 0.0
    %v5145 = vand.u32 %v4888, 4294901760
    %v5146 = vsub.f32 %v4888, %v5145
    %5147 = vmatmul.mubr.f32.gmra.mrb[0].mxu0 %v5146
    %v5148 = vpop.f32.mrb[0].mxu0
    %v5149 = vadd.f32 %v5069, %v5148
    %v5150 = vpop.f32.mrb[0].mxu0
    %5151 = vdwg.mxu0
    %5152 = vmatprep.subr.mxu0 0.0
    %v5153 = vand.u32 %v4891, 4294901760
    %5154 = vmatpush1.xpose.msra.mxu0 %v5153
    %5155 = vmatprep.subr.mxu0 0.0
    %v5156 = vand.u32 %v4894, 4294901760
    %5157 = vmatpush1.xpose.msra.mxu0 %v5156
    %5158 = vmatprep.subr.mxu0 0.0
    %v5159 = vand.u32 %v4897, 4294901760
    %5160 = vmatpush1.xpose.msra.mxu0 %v5159
    %5161 = vmatprep.subr.mxu0 0.0
    %v5162 = vand.u32 %v4900, 4294901760
    %5163 = vmatpush1.xpose.msra.mxu0 %v5162
    %5164 = vmatprep.subr.mxu0 0.0
    %5165 = vmatpush1.xpose.msra.mxu0 0.0
    %5166 = vmatprep.subr.mxu0 0.0
    %5167 = vmatpush1.xpose.msra.mxu0 0.0
    %5168 = vmatprep.subr.mxu0 0.0
    %5169 = vmatpush1.xpose.msra.mxu0 0.0
    %5170 = vmatprep.subr.mxu0 0.0
    %5171 = vmatpush1.xpose.msra.mxu0 0.0
    %5172 = vmatprep.subr.mxu0 0.0
    %5173 = vmatpush1.xpose.msra.mxu0 0.0
    %5174 = vmatprep.subr.mxu0 0.0
    %5175 = vmatpush1.xpose.msra.mxu0 0.0
    %5176 = vmatprep.subr.mxu0 0.0
    %5177 = vmatpush1.xpose.msra.mxu0 0.0
    %5178 = vmatprep.subr.mxu0 0.0
    %5179 = vmatpush1.xpose.msra.mxu0 0.0
    %5180 = vmatprep.subr.mxu0 0.0
    %5181 = vmatpush1.xpose.msra.mxu0 0.0
    %5182 = vmatprep.subr.mxu0 0.0
    %5183 = vmatpush1.xpose.msra.mxu0 0.0
    %5184 = vmatprep.subr.mxu0 0.0
    %5185 = vmatpush1.xpose.msra.mxu0 0.0
    %5186 = vmatprep.subr.mxu0 0.0
    %5187 = vmatpush1.xpose.msra.mxu0 0.0
    %5188 = vmatprep.subr.mxu0 0.0
    %5189 = vmatpush1.xpose.msra.mxu0 0.0
    %5190 = vmatprep.subr.mxu0 0.0
    %5191 = vmatpush1.xpose.msra.mxu0 0.0
    %5192 = vmatprep.subr.mxu0 0.0
    %5193 = vmatpush1.xpose.msra.mxu0 0.0
    %5194 = vmatprep.subr.mxu0 0.0
    %5195 = vmatpush1.xpose.msra.mxu0 0.0
    %5196 = vmatprep.subr.mxu0 0.0
    %5197 = vmatpush1.xpose.msra.mxu0 0.0
    %5198 = vmatprep.subr.mxu0 0.0
    %5199 = vmatpush1.xpose.msra.mxu0 0.0
    %5200 = vmatprep.subr.mxu0 0.0
    %5201 = vmatpush1.xpose.msra.mxu0 0.0
    %5202 = vmatprep.subr.mxu0 0.0
    %5203 = vmatpush1.xpose.msra.mxu0 0.0
    %5204 = vmatprep.subr.mxu0 0.0
    %5205 = vmatpush1.xpose.msra.mxu0 0.0
    %5206 = vmatprep.subr.mxu0 0.0
    %5207 = vmatpush1.xpose.msra.mxu0 0.0
    %5208 = vmatprep.subr.mxu0 0.0
    %5209 = vmatpush1.xpose.msra.mxu0 0.0
    %5210 = vmatprep.subr.mxu0 0.0
    %5211 = vmatpush1.xpose.msra.mxu0 0.0
    %5212 = vmatprep.subr.mxu0 0.0
    %5213 = vmatpush1.xpose.msra.mxu0 0.0
    %5214 = vmatprep.subr.mxu0 0.0
    %5215 = vmatpush1.xpose.msra.mxu0 0.0
    %5216 = vmatprep.subr.mxu0 0.0
    %5217 = vmatpush1.xpose.msra.mxu0 0.0
    %5218 = vmatprep.subr.mxu0 0.0
    %5219 = vmatpush1.xpose.msra.mxu0 0.0
    %5220 = vmatprep.mubr.f32.mxu0 0.0
    %v5221 = vand.u32 %v4888, 4294901760
    %v5222 = vsub.f32 %v4888, %v5221
    %v5223 = vand.u32 %v5222, 4294901760
    %5224 = vmatmul.mubr.f32.gmra.mrb[0].mxu0 %v5223
    %v5225 = vpop.f32.mrb[0].mxu0
    %v5226 = vadd.f32 %v5149, %v5225
    %v5227 = vpop.f32.mrb[0].mxu0
    %5228 = vdwg.mxu0
    %5229 = vmatprep.subr.mxu0 0.0
    %v5230 = vand.u32 %v4891, 4294901760
    %v5231 = vsub.f32 %v4891, %v5230
    %v5232 = vand.u32 %v5231, 4294901760
    %5233 = vmatpush1.xpose.msra.mxu0 %v5232
    %5234 = vmatprep.subr.mxu0 0.0
    %v5235 = vand.u32 %v4894, 4294901760
    %v5236 = vsub.f32 %v4894, %v5235
    %v5237 = vand.u32 %v5236, 4294901760
    %5238 = vmatpush1.xpose.msra.mxu0 %v5237
    %5239 = vmatprep.subr.mxu0 0.0
    %v5240 = vand.u32 %v4897, 4294901760
    %v5241 = vsub.f32 %v4897, %v5240
    %v5242 = vand.u32 %v5241, 4294901760
    %5243 = vmatpush1.xpose.msra.mxu0 %v5242
    %5244 = vmatprep.subr.mxu0 0.0
    %v5245 = vand.u32 %v4900, 4294901760
    %v5246 = vsub.f32 %v4900, %v5245
    %v5247 = vand.u32 %v5246, 4294901760
    %5248 = vmatpush1.xpose.msra.mxu0 %v5247
    %5249 = vmatprep.subr.mxu0 0.0
    %5250 = vmatpush1.xpose.msra.mxu0 0.0
    %5251 = vmatprep.subr.mxu0 0.0
    %5252 = vmatpush1.xpose.msra.mxu0 0.0
    %5253 = vmatprep.subr.mxu0 0.0
    %5254 = vmatpush1.xpose.msra.mxu0 0.0
    %5255 = vmatprep.subr.mxu0 0.0
    %5256 = vmatpush1.xpose.msra.mxu0 0.0
    %5257 = vmatprep.subr.mxu0 0.0
    %5258 = vmatpush1.xpose.msra.mxu0 0.0
    %5259 = vmatprep.subr.mxu0 0.0
    %5260 = vmatpush1.xpose.msra.mxu0 0.0
    %5261 = vmatprep.subr.mxu0 0.0
    %5262 = vmatpush1.xpose.msra.mxu0 0.0
    %5263 = vmatprep.subr.mxu0 0.0
    %5264 = vmatpush1.xpose.msra.mxu0 0.0
    %5265 = vmatprep.subr.mxu0 0.0
    %5266 = vmatpush1.xpose.msra.mxu0 0.0
    %5267 = vmatprep.subr.mxu0 0.0
    %5268 = vmatpush1.xpose.msra.mxu0 0.0
    %5269 = vmatprep.subr.mxu0 0.0
    %5270 = vmatpush1.xpose.msra.mxu0 0.0
    %5271 = vmatprep.subr.mxu0 0.0
    %5272 = vmatpush1.xpose.msra.mxu0 0.0
    %5273 = vmatprep.subr.mxu0 0.0
    %5274 = vmatpush1.xpose.msra.mxu0 0.0
    %5275 = vmatprep.subr.mxu0 0.0
    %5276 = vmatpush1.xpose.msra.mxu0 0.0
    %5277 = vmatprep.subr.mxu0 0.0
    %5278 = vmatpush1.xpose.msra.mxu0 0.0
    %5279 = vmatprep.subr.mxu0 0.0
    %5280 = vmatpush1.xpose.msra.mxu0 0.0
    %5281 = vmatprep.subr.mxu0 0.0
    %5282 = vmatpush1.xpose.msra.mxu0 0.0
    %5283 = vmatprep.subr.mxu0 0.0
    %5284 = vmatpush1.xpose.msra.mxu0 0.0
    %5285 = vmatprep.subr.mxu0 0.0
    %5286 = vmatpush1.xpose.msra.mxu0 0.0
    %5287 = vmatprep.subr.mxu0 0.0
    %5288 = vmatpush1.xpose.msra.mxu0 0.0
    %5289 = vmatprep.subr.mxu0 0.0
    %5290 = vmatpush1.xpose.msra.mxu0 0.0
    %5291 = vmatprep.subr.mxu0 0.0
    %5292 = vmatpush1.xpose.msra.mxu0 0.0
    %5293 = vmatprep.subr.mxu0 0.0
    %5294 = vmatpush1.xpose.msra.mxu0 0.0
    %5295 = vmatprep.subr.mxu0 0.0
    %5296 = vmatpush1.xpose.msra.mxu0 0.0
    %5297 = vmatprep.subr.mxu0 0.0
    %5298 = vmatpush1.xpose.msra.mxu0 0.0
    %5299 = vmatprep.subr.mxu0 0.0
    %5300 = vmatpush1.xpose.msra.mxu0 0.0
    %5301 = vmatprep.subr.mxu0 0.0
    %5302 = vmatpush1.xpose.msra.mxu0 0.0
    %5303 = vmatprep.subr.mxu0 0.0
    %5304 = vmatpush1.xpose.msra.mxu0 0.0
    %5305 = vmatprep.mubr.f32.mxu0 0.0
    %v5306 = vand.u32 %v4888, 4294901760
    %5307 = vmatmul.mubr.f32.gmra.mrb[0].mxu0 %v5306
    %v5308 = vpop.f32.mrb[0].mxu0
    %v5309 = vadd.f32 %v5226, %v5308
    %v5310 = vpop.f32.mrb[0].mxu0
    %5311 = vdwg.mxu0
    %5312 = vmatprep.subr.mxu0 0.0
    %v5313 = vand.u32 %v4891, 4294901760
    %5314 = vmatpush1.xpose.msra.mxu0 %v5313
    %5315 = vmatprep.subr.mxu0 0.0
    %v5316 = vand.u32 %v4894, 4294901760
    %5317 = vmatpush1.xpose.msra.mxu0 %v5316
    %5318 = vmatprep.subr.mxu0 0.0
    %v5319 = vand.u32 %v4897, 4294901760
    %5320 = vmatpush1.xpose.msra.mxu0 %v5319
    %5321 = vmatprep.subr.mxu0 0.0
    %v5322 = vand.u32 %v4900, 4294901760
    %5323 = vmatpush1.xpose.msra.mxu0 %v5322
    %5324 = vmatprep.subr.mxu0 0.0
    %5325 = vmatpush1.xpose.msra.mxu0 0.0
    %5326 = vmatprep.subr.mxu0 0.0
    %5327 = vmatpush1.xpose.msra.mxu0 0.0
    %5328 = vmatprep.subr.mxu0 0.0
    %5329 = vmatpush1.xpose.msra.mxu0 0.0
    %5330 = vmatprep.subr.mxu0 0.0
    %5331 = vmatpush1.xpose.msra.mxu0 0.0
    %5332 = vmatprep.subr.mxu0 0.0
    %5333 = vmatpush1.xpose.msra.mxu0 0.0
    %5334 = vmatprep.subr.mxu0 0.0
    %5335 = vmatpush1.xpose.msra.mxu0 0.0
    %5336 = vmatprep.subr.mxu0 0.0
    %5337 = vmatpush1.xpose.msra.mxu0 0.0
    %5338 = vmatprep.subr.mxu0 0.0
    %5339 = vmatpush1.xpose.msra.mxu0 0.0
    %5340 = vmatprep.subr.mxu0 0.0
    %5341 = vmatpush1.xpose.msra.mxu0 0.0
    %5342 = vmatprep.subr.mxu0 0.0
    %5343 = vmatpush1.xpose.msra.mxu0 0.0
    %5344 = vmatprep.subr.mxu0 0.0
    %5345 = vmatpush1.xpose.msra.mxu0 0.0
    %5346 = vmatprep.subr.mxu0 0.0
    %5347 = vmatpush1.xpose.msra.mxu0 0.0
    %5348 = vmatprep.subr.mxu0 0.0
    %5349 = vmatpush1.xpose.msra.mxu0 0.0
    %5350 = vmatprep.subr.mxu0 0.0
    %5351 = vmatpush1.xpose.msra.mxu0 0.0
    %5352 = vmatprep.subr.mxu0 0.0
    %5353 = vmatpush1.xpose.msra.mxu0 0.0
    %5354 = vmatprep.subr.mxu0 0.0
    %5355 = vmatpush1.xpose.msra.mxu0 0.0
    %5356 = vmatprep.subr.mxu0 0.0
    %5357 = vmatpush1.xpose.msra.mxu0 0.0
    %5358 = vmatprep.subr.mxu0 0.0
    %5359 = vmatpush1.xpose.msra.mxu0 0.0
    %5360 = vmatprep.subr.mxu0 0.0
    %5361 = vmatpush1.xpose.msra.mxu0 0.0
    %5362 = vmatprep.subr.mxu0 0.0
    %5363 = vmatpush1.xpose.msra.mxu0 0.0
    %5364 = vmatprep.subr.mxu0 0.0
    %5365 = vmatpush1.xpose.msra.mxu0 0.0
    %5366 = vmatprep.subr.mxu0 0.0
    %5367 = vmatpush1.xpose.msra.mxu0 0.0
    %5368 = vmatprep.subr.mxu0 0.0
    %5369 = vmatpush1.xpose.msra.mxu0 0.0
    %5370 = vmatprep.subr.mxu0 0.0
    %5371 = vmatpush1.xpose.msra.mxu0 0.0
    %5372 = vmatprep.subr.mxu0 0.0
    %5373 = vmatpush1.xpose.msra.mxu0 0.0
    %5374 = vmatprep.subr.mxu0 0.0
    %5375 = vmatpush1.xpose.msra.mxu0 0.0
    %5376 = vmatprep.subr.mxu0 0.0
    %5377 = vmatpush1.xpose.msra.mxu0 0.0
    %5378 = vmatprep.subr.mxu0 0.0
    %5379 = vmatpush1.xpose.msra.mxu0 0.0
    %5380 = vmatprep.mubr.f32.mxu0 0.0
    %v5381 = vand.u32 %v4888, 4294901760
    %5382 = vmatmul.mubr.f32.gmra.mrb[0].mxu0 %v5381
    %v5383 = vpop.f32.mrb[0].mxu0
    %v5384 = vadd.f32 %v5309, %v5383
    %v5385 = vpop.f32.mrb[0].mxu0
    %5386 = vdwg.mxu0
    %s5387 = scalar_lea.vmem %s3, 96
    %v5388 = vld [vmem:[%s5387] sm:$0xff]
    %v5389 = vld [vmem:[%s5387 + $0x8] sm:$0xff]
    %v5390 = vld [vmem:[%s5387 + $0x10] sm:$0xff]
    %v5391 = vld [vmem:[%s5387 + $0x18] sm:$0xff]
    %v5392 = vld [vmem:[%s5387 + $0x20] sm:$0xff]
    %v5393 = vld [vmem:[%s5387 + $0x28] sm:$0xff]
    %v5394 = vld [vmem:[%s5387 + $0x30] sm:$0xff]
    %v5395 = vld [vmem:[%s5387 + $0x38] sm:$0xff]
    %v5396 = vld [vmem:[%s5387 + $0x40] sm:$0xff]
    %v5397 = vld [vmem:[%s5387 + $0x48] sm:$0xff]
    %v5398 = vld [vmem:[%s5387 + $0x50] sm:$0xff]
    %v5399 = vld [vmem:[%s5387 + $0x58] sm:$0xff]
    %s5400 = scalar_lea.vmem %s4, 1
    %v5401 = vld [vmem:[%s5400] sm:$0x1]
    %v5403 = vlaneseq
    %v5404 = vshrl.u32 %v5403, 7
    %v5405 = vsub.s32 0, %v5404
    %v5406 = vrot.slane %v5401, %v5405
    %v5409 = vsel %vm39, %v5384, 0
    %v5412 = vsel %vm39, %v5388, 0
    %v5415 = vsel %vm39, %v5389, 0
    %v5418 = vsel %vm39, %v5390, 0
    %v5421 = vsel %vm39, %v5391, 0
    %v5424 = vsel %vm39, %v5392, 0
    %v5427 = vsel %vm39, %v5393, 0
    %v5430 = vsel %vm39, %v5394, 0
    %v5433 = vsel %vm39, %v5395, 0
    %v5436 = vsel %vm39, %v5396, 0
    %v5439 = vsel %vm39, %v5397, 0
    %v5442 = vsel %vm39, %v5398, 0
    %v5445 = vsel %vm39, %v5399, 0
    %5447 = vmatprep.subr.mxu0 0.0
    %v5448 = vand.u32 %v5412, 4294901760
    %5449 = vmatpush1.xpose.msra.mxu0 %v5448
    %5450 = vmatprep.subr.mxu0 0.0
    %v5451 = vand.u32 %v5415, 4294901760
    %5452 = vmatpush1.xpose.msra.mxu0 %v5451
    %5453 = vmatprep.subr.mxu0 0.0
    %v5454 = vand.u32 %v5418, 4294901760
    %5455 = vmatpush1.xpose.msra.mxu0 %v5454
    %5456 = vmatprep.subr.mxu0 0.0
    %v5457 = vand.u32 %v5421, 4294901760
    %5458 = vmatpush1.xpose.msra.mxu0 %v5457
    %5459 = vmatprep.subr.mxu0 0.0
    %v5460 = vand.u32 %v5424, 4294901760
    %5461 = vmatpush1.xpose.msra.mxu0 %v5460
    %5462 = vmatprep.subr.mxu0 0.0
    %v5463 = vand.u32 %v5427, 4294901760
    %5464 = vmatpush1.xpose.msra.mxu0 %v5463
    %5465 = vmatprep.subr.mxu0 0.0
    %v5466 = vand.u32 %v5430, 4294901760
    %5467 = vmatpush1.xpose.msra.mxu0 %v5466
    %5468 = vmatprep.subr.mxu0 0.0
    %v5469 = vand.u32 %v5433, 4294901760
    %5470 = vmatpush1.xpose.msra.mxu0 %v5469
    %5471 = vmatprep.subr.mxu0 0.0
    %v5472 = vand.u32 %v5436, 4294901760
    %5473 = vmatpush1.xpose.msra.mxu0 %v5472
    %5474 = vmatprep.subr.mxu0 0.0
    %v5475 = vand.u32 %v5439, 4294901760
    %5476 = vmatpush1.xpose.msra.mxu0 %v5475
    %5477 = vmatprep.subr.mxu0 0.0
    %v5478 = vand.u32 %v5442, 4294901760
    %5479 = vmatpush1.xpose.msra.mxu0 %v5478
    %5480 = vmatprep.subr.mxu0 0.0
    %v5481 = vand.u32 %v5445, 4294901760
    %5482 = vmatpush1.xpose.msra.mxu0 %v5481
    %5483 = vmatprep.subr.mxu0 0.0
    %5484 = vmatpush1.xpose.msra.mxu0 0.0
    %5485 = vmatprep.subr.mxu0 0.0
    %5486 = vmatpush1.xpose.msra.mxu0 0.0
    %5487 = vmatprep.subr.mxu0 0.0
    %5488 = vmatpush1.xpose.msra.mxu0 0.0
    %5489 = vmatprep.subr.mxu0 0.0
    %5490 = vmatpush1.xpose.msra.mxu0 0.0
    %5491 = vmatprep.subr.mxu0 0.0
    %5492 = vmatpush1.xpose.msra.mxu0 0.0
    %5493 = vmatprep.subr.mxu0 0.0
    %5494 = vmatpush1.xpose.msra.mxu0 0.0
    %5495 = vmatprep.subr.mxu0 0.0
    %5496 = vmatpush1.xpose.msra.mxu0 0.0
    %5497 = vmatprep.subr.mxu0 0.0
    %5498 = vmatpush1.xpose.msra.mxu0 0.0
    %5499 = vmatprep.subr.mxu0 0.0
    %5500 = vmatpush1.xpose.msra.mxu0 0.0
    %5501 = vmatprep.subr.mxu0 0.0
    %5502 = vmatpush1.xpose.msra.mxu0 0.0
    %5503 = vmatprep.subr.mxu0 0.0
    %5504 = vmatpush1.xpose.msra.mxu0 0.0
    %5505 = vmatprep.subr.mxu0 0.0
    %5506 = vmatpush1.xpose.msra.mxu0 0.0
    %5507 = vmatprep.subr.mxu0 0.0
    %5508 = vmatpush1.xpose.msra.mxu0 0.0
    %5509 = vmatprep.subr.mxu0 0.0
    %5510 = vmatpush1.xpose.msra.mxu0 0.0
    %5511 = vmatprep.subr.mxu0 0.0
    %5512 = vmatpush1.xpose.msra.mxu0 0.0
    %5513 = vmatprep.subr.mxu0 0.0
    %5514 = vmatpush1.xpose.msra.mxu0 0.0
    %5515 = vmatprep.subr.mxu0 0.0
    %5516 = vmatpush1.xpose.msra.mxu0 0.0
    %5517 = vmatprep.subr.mxu0 0.0
    %5518 = vmatpush1.xpose.msra.mxu0 0.0
    %5519 = vmatprep.subr.mxu0 0.0
    %5520 = vmatpush1.xpose.msra.mxu0 0.0
    %5521 = vmatprep.subr.mxu0 0.0
    %5522 = vmatpush1.xpose.msra.mxu0 0.0
    %5523 = vmatprep.mubr.f32.mxu0 0.0
    %v5524 = vand.u32 %v5409, 4294901760
    %v5525 = vsub.f32 %v5409, %v5524
    %v5526 = vand.u32 %v5525, 4294901760
    %v5527 = vsub.f32 %v5525, %v5526
    %v5528 = vand.u32 %v5527, 4294901760
    %5529 = vmatmul.mubr.f32.gmra.mrb[0].mxu0 %v5528
    %v5530 = vpop.f32.mrb[0].mxu0
    %v5531 = vadd.f32 %v5406, %v5530
    %v5532 = vpop.f32.mrb[0].mxu0
    %5533 = vdwg.mxu0
    %5534 = vmatprep.subr.mxu0 0.0
    %v5535 = vand.u32 %v5412, 4294901760
    %v5536 = vsub.f32 %v5412, %v5535
    %v5537 = vand.u32 %v5536, 4294901760
    %v5538 = vsub.f32 %v5536, %v5537
    %v5539 = vand.u32 %v5538, 4294901760
    %5540 = vmatpush1.xpose.msra.mxu0 %v5539
    %5541 = vmatprep.subr.mxu0 0.0
    %v5542 = vand.u32 %v5415, 4294901760
    %v5543 = vsub.f32 %v5415, %v5542
    %v5544 = vand.u32 %v5543, 4294901760
    %v5545 = vsub.f32 %v5543, %v5544
    %v5546 = vand.u32 %v5545, 4294901760
    %5547 = vmatpush1.xpose.msra.mxu0 %v5546
    %5548 = vmatprep.subr.mxu0 0.0
    %v5549 = vand.u32 %v5418, 4294901760
    %v5550 = vsub.f32 %v5418, %v5549
    %v5551 = vand.u32 %v5550, 4294901760
    %v5552 = vsub.f32 %v5550, %v5551
    %v5553 = vand.u32 %v5552, 4294901760
    %5554 = vmatpush1.xpose.msra.mxu0 %v5553
    %5555 = vmatprep.subr.mxu0 0.0
    %v5556 = vand.u32 %v5421, 4294901760
    %v5557 = vsub.f32 %v5421, %v5556
    %v5558 = vand.u32 %v5557, 4294901760
    %v5559 = vsub.f32 %v5557, %v5558
    %v5560 = vand.u32 %v5559, 4294901760
    %5561 = vmatpush1.xpose.msra.mxu0 %v5560
    %5562 = vmatprep.subr.mxu0 0.0
    %v5563 = vand.u32 %v5424, 4294901760
    %v5564 = vsub.f32 %v5424, %v5563
    %v5565 = vand.u32 %v5564, 4294901760
    %v5566 = vsub.f32 %v5564, %v5565
    %v5567 = vand.u32 %v5566, 4294901760
    %5568 = vmatpush1.xpose.msra.mxu0 %v5567
    %5569 = vmatprep.subr.mxu0 0.0
    %v5570 = vand.u32 %v5427, 4294901760
    %v5571 = vsub.f32 %v5427, %v5570
    %v5572 = vand.u32 %v5571, 4294901760
    %v5573 = vsub.f32 %v5571, %v5572
    %v5574 = vand.u32 %v5573, 4294901760
    %5575 = vmatpush1.xpose.msra.mxu0 %v5574
    %5576 = vmatprep.subr.mxu0 0.0
    %v5577 = vand.u32 %v5430, 4294901760
    %v5578 = vsub.f32 %v5430, %v5577
    %v5579 = vand.u32 %v5578, 4294901760
    %v5580 = vsub.f32 %v5578, %v5579
    %v5581 = vand.u32 %v5580, 4294901760
    %5582 = vmatpush1.xpose.msra.mxu0 %v5581
    %5583 = vmatprep.subr.mxu0 0.0
    %v5584 = vand.u32 %v5433, 4294901760
    %v5585 = vsub.f32 %v5433, %v5584
    %v5586 = vand.u32 %v5585, 4294901760
    %v5587 = vsub.f32 %v5585, %v5586
    %v5588 = vand.u32 %v5587, 4294901760
    %5589 = vmatpush1.xpose.msra.mxu0 %v5588
    %5590 = vmatprep.subr.mxu0 0.0
    %v5591 = vand.u32 %v5436, 4294901760
    %v5592 = vsub.f32 %v5436, %v5591
    %v5593 = vand.u32 %v5592, 4294901760
    %v5594 = vsub.f32 %v5592, %v5593
    %v5595 = vand.u32 %v5594, 4294901760
    %5596 = vmatpush1.xpose.msra.mxu0 %v5595
    %5597 = vmatprep.subr.mxu0 0.0
    %v5598 = vand.u32 %v5439, 4294901760
    %v5599 = vsub.f32 %v5439, %v5598
    %v5600 = vand.u32 %v5599, 4294901760
    %v5601 = vsub.f32 %v5599, %v5600
    %v5602 = vand.u32 %v5601, 4294901760
    %5603 = vmatpush1.xpose.msra.mxu0 %v5602
    %5604 = vmatprep.subr.mxu0 0.0
    %v5605 = vand.u32 %v5442, 4294901760
    %v5606 = vsub.f32 %v5442, %v5605
    %v5607 = vand.u32 %v5606, 4294901760
    %v5608 = vsub.f32 %v5606, %v5607
    %v5609 = vand.u32 %v5608, 4294901760
    %5610 = vmatpush1.xpose.msra.mxu0 %v5609
    %5611 = vmatprep.subr.mxu0 0.0
    %v5612 = vand.u32 %v5445, 4294901760
    %v5613 = vsub.f32 %v5445, %v5612
    %v5614 = vand.u32 %v5613, 4294901760
    %v5615 = vsub.f32 %v5613, %v5614
    %v5616 = vand.u32 %v5615, 4294901760
    %5617 = vmatpush1.xpose.msra.mxu0 %v5616
    %5618 = vmatprep.subr.mxu0 0.0
    %5619 = vmatpush1.xpose.msra.mxu0 0.0
    %5620 = vmatprep.subr.mxu0 0.0
    %5621 = vmatpush1.xpose.msra.mxu0 0.0
    %5622 = vmatprep.subr.mxu0 0.0
    %5623 = vmatpush1.xpose.msra.mxu0 0.0
    %5624 = vmatprep.subr.mxu0 0.0
    %5625 = vmatpush1.xpose.msra.mxu0 0.0
    %5626 = vmatprep.subr.mxu0 0.0
    %5627 = vmatpush1.xpose.msra.mxu0 0.0
    %5628 = vmatprep.subr.mxu0 0.0
    %5629 = vmatpush1.xpose.msra.mxu0 0.0
    %5630 = vmatprep.subr.mxu0 0.0
    %5631 = vmatpush1.xpose.msra.mxu0 0.0
    %5632 = vmatprep.subr.mxu0 0.0
    %5633 = vmatpush1.xpose.msra.mxu0 0.0
    %5634 = vmatprep.subr.mxu0 0.0
    %5635 = vmatpush1.xpose.msra.mxu0 0.0
    %5636 = vmatprep.subr.mxu0 0.0
    %5637 = vmatpush1.xpose.msra.mxu0 0.0
    %5638 = vmatprep.subr.mxu0 0.0
    %5639 = vmatpush1.xpose.msra.mxu0 0.0
    %5640 = vmatprep.subr.mxu0 0.0
    %5641 = vmatpush1.xpose.msra.mxu0 0.0
    %5642 = vmatprep.subr.mxu0 0.0
    %5643 = vmatpush1.xpose.msra.mxu0 0.0
    %5644 = vmatprep.subr.mxu0 0.0
    %5645 = vmatpush1.xpose.msra.mxu0 0.0
    %5646 = vmatprep.subr.mxu0 0.0
    %5647 = vmatpush1.xpose.msra.mxu0 0.0
    %5648 = vmatprep.subr.mxu0 0.0
    %5649 = vmatpush1.xpose.msra.mxu0 0.0
    %5650 = vmatprep.subr.mxu0 0.0
    %5651 = vmatpush1.xpose.msra.mxu0 0.0
    %5652 = vmatprep.subr.mxu0 0.0
    %5653 = vmatpush1.xpose.msra.mxu0 0.0
    %5654 = vmatprep.subr.mxu0 0.0
    %5655 = vmatpush1.xpose.msra.mxu0 0.0
    %5656 = vmatprep.subr.mxu0 0.0
    %5657 = vmatpush1.xpose.msra.mxu0 0.0
    %5658 = vmatprep.mubr.f32.mxu0 0.0
    %v5659 = vand.u32 %v5409, 4294901760
    %5660 = vmatmul.mubr.f32.gmra.mrb[0].mxu0 %v5659
    %v5661 = vpop.f32.mrb[0].mxu0
    %v5662 = vadd.f32 %v5531, %v5661
    %v5663 = vpop.f32.mrb[0].mxu0
    %5664 = vdwg.mxu0
    %5665 = vmatprep.subr.mxu0 0.0
    %v5666 = vand.u32 %v5412, 4294901760
    %v5667 = vsub.f32 %v5412, %v5666
    %5668 = vmatpush1.xpose.msra.mxu0 %v5667
    %5669 = vmatprep.subr.mxu0 0.0
    %v5670 = vand.u32 %v5415, 4294901760
    %v5671 = vsub.f32 %v5415, %v5670
    %5672 = vmatpush1.xpose.msra.mxu0 %v5671
    %5673 = vmatprep.subr.mxu0 0.0
    %v5674 = vand.u32 %v5418, 4294901760
    %v5675 = vsub.f32 %v5418, %v5674
    %5676 = vmatpush1.xpose.msra.mxu0 %v5675
    %5677 = vmatprep.subr.mxu0 0.0
    %v5678 = vand.u32 %v5421, 4294901760
    %v5679 = vsub.f32 %v5421, %v5678
    %5680 = vmatpush1.xpose.msra.mxu0 %v5679
    %5681 = vmatprep.subr.mxu0 0.0
    %v5682 = vand.u32 %v5424, 4294901760
    %v5683 = vsub.f32 %v5424, %v5682
    %5684 = vmatpush1.xpose.msra.mxu0 %v5683
    %5685 = vmatprep.subr.mxu0 0.0
    %v5686 = vand.u32 %v5427, 4294901760
    %v5687 = vsub.f32 %v5427, %v5686
    %5688 = vmatpush1.xpose.msra.mxu0 %v5687
    %5689 = vmatprep.subr.mxu0 0.0
    %v5690 = vand.u32 %v5430, 4294901760
    %v5691 = vsub.f32 %v5430, %v5690
    %5692 = vmatpush1.xpose.msra.mxu0 %v5691
    %5693 = vmatprep.subr.mxu0 0.0
    %v5694 = vand.u32 %v5433, 4294901760
    %v5695 = vsub.f32 %v5433, %v5694
    %5696 = vmatpush1.xpose.msra.mxu0 %v5695
    %5697 = vmatprep.subr.mxu0 0.0
    %v5698 = vand.u32 %v5436, 4294901760
    %v5699 = vsub.f32 %v5436, %v5698
    %5700 = vmatpush1.xpose.msra.mxu0 %v5699
    %5701 = vmatprep.subr.mxu0 0.0
    %v5702 = vand.u32 %v5439, 4294901760
    %v5703 = vsub.f32 %v5439, %v5702
    %5704 = vmatpush1.xpose.msra.mxu0 %v5703
    %5705 = vmatprep.subr.mxu0 0.0
    %v5706 = vand.u32 %v5442, 4294901760
    %v5707 = vsub.f32 %v5442, %v5706
    %5708 = vmatpush1.xpose.msra.mxu0 %v5707
    %5709 = vmatprep.subr.mxu0 0.0
    %v5710 = vand.u32 %v5445, 4294901760
    %v5711 = vsub.f32 %v5445, %v5710
    %5712 = vmatpush1.xpose.msra.mxu0 %v5711
    %5713 = vmatprep.subr.mxu0 0.0
    %5714 = vmatpush1.xpose.msra.mxu0 0.0
    %5715 = vmatprep.subr.mxu0 0.0
    %5716 = vmatpush1.xpose.msra.mxu0 0.0
    %5717 = vmatprep.subr.mxu0 0.0
    %5718 = vmatpush1.xpose.msra.mxu0 0.0
    %5719 = vmatprep.subr.mxu0 0.0
    %5720 = vmatpush1.xpose.msra.mxu0 0.0
    %5721 = vmatprep.subr.mxu0 0.0
    %5722 = vmatpush1.xpose.msra.mxu0 0.0
    %5723 = vmatprep.subr.mxu0 0.0
    %5724 = vmatpush1.xpose.msra.mxu0 0.0
    %5725 = vmatprep.subr.mxu0 0.0
    %5726 = vmatpush1.xpose.msra.mxu0 0.0
    %5727 = vmatprep.subr.mxu0 0.0
    %5728 = vmatpush1.xpose.msra.mxu0 0.0
    %5729 = vmatprep.subr.mxu0 0.0
    %5730 = vmatpush1.xpose.msra.mxu0 0.0
    %5731 = vmatprep.subr.mxu0 0.0
    %5732 = vmatpush1.xpose.msra.mxu0 0.0
    %5733 = vmatprep.subr.mxu0 0.0
    %5734 = vmatpush1.xpose.msra.mxu0 0.0
    %5735 = vmatprep.subr.mxu0 0.0
    %5736 = vmatpush1.xpose.msra.mxu0 0.0
    %5737 = vmatprep.subr.mxu0 0.0
    %5738 = vmatpush1.xpose.msra.mxu0 0.0
    %5739 = vmatprep.subr.mxu0 0.0
    %5740 = vmatpush1.xpose.msra.mxu0 0.0
    %5741 = vmatprep.subr.mxu0 0.0
    %5742 = vmatpush1.xpose.msra.mxu0 0.0
    %5743 = vmatprep.subr.mxu0 0.0
    %5744 = vmatpush1.xpose.msra.mxu0 0.0
    %5745 = vmatprep.subr.mxu0 0.0
    %5746 = vmatpush1.xpose.msra.mxu0 0.0
    %5747 = vmatprep.subr.mxu0 0.0
    %5748 = vmatpush1.xpose.msra.mxu0 0.0
    %5749 = vmatprep.subr.mxu0 0.0
    %5750 = vmatpush1.xpose.msra.mxu0 0.0
    %5751 = vmatprep.subr.mxu0 0.0
    %5752 = vmatpush1.xpose.msra.mxu0 0.0
    %5753 = vmatprep.mubr.f32.mxu0 0.0
    %v5754 = vand.u32 %v5409, 4294901760
    %v5755 = vsub.f32 %v5409, %v5754
    %5756 = vmatmul.mubr.f32.gmra.mrb[0].mxu0 %v5755
    %v5757 = vpop.f32.mrb[0].mxu0
    %v5758 = vadd.f32 %v5662, %v5757
    %v5759 = vpop.f32.mrb[0].mxu0
    %5760 = vdwg.mxu0
    %5761 = vmatprep.subr.mxu0 0.0
    %v5762 = vand.u32 %v5412, 4294901760
    %5763 = vmatpush1.xpose.msra.mxu0 %v5762
    %5764 = vmatprep.subr.mxu0 0.0
    %v5765 = vand.u32 %v5415, 4294901760
    %5766 = vmatpush1.xpose.msra.mxu0 %v5765
    %5767 = vmatprep.subr.mxu0 0.0
    %v5768 = vand.u32 %v5418, 4294901760
    %5769 = vmatpush1.xpose.msra.mxu0 %v5768
    %5770 = vmatprep.subr.mxu0 0.0
    %v5771 = vand.u32 %v5421, 4294901760
    %5772 = vmatpush1.xpose.msra.mxu0 %v5771
    %5773 = vmatprep.subr.mxu0 0.0
    %v5774 = vand.u32 %v5424, 4294901760
    %5775 = vmatpush1.xpose.msra.mxu0 %v5774
    %5776 = vmatprep.subr.mxu0 0.0
    %v5777 = vand.u32 %v5427, 4294901760
    %5778 = vmatpush1.xpose.msra.mxu0 %v5777
    %5779 = vmatprep.subr.mxu0 0.0
    %v5780 = vand.u32 %v5430, 4294901760
    %5781 = vmatpush1.xpose.msra.mxu0 %v5780
    %5782 = vmatprep.subr.mxu0 0.0
    %v5783 = vand.u32 %v5433, 4294901760
    %5784 = vmatpush1.xpose.msra.mxu0 %v5783
    %5785 = vmatprep.subr.mxu0 0.0
    %v5786 = vand.u32 %v5436, 4294901760
    %5787 = vmatpush1.xpose.msra.mxu0 %v5786
    %5788 = vmatprep.subr.mxu0 0.0
    %v5789 = vand.u32 %v5439, 4294901760
    %5790 = vmatpush1.xpose.msra.mxu0 %v5789
    %5791 = vmatprep.subr.mxu0 0.0
    %v5792 = vand.u32 %v5442, 4294901760
    %5793 = vmatpush1.xpose.msra.mxu0 %v5792
    %5794 = vmatprep.subr.mxu0 0.0
    %v5795 = vand.u32 %v5445, 4294901760
    %5796 = vmatpush1.xpose.msra.mxu0 %v5795
    %5797 = vmatprep.subr.mxu0 0.0
    %5798 = vmatpush1.xpose.msra.mxu0 0.0
    %5799 = vmatprep.subr.mxu0 0.0
    %5800 = vmatpush1.xpose.msra.mxu0 0.0
    %5801 = vmatprep.subr.mxu0 0.0
    %5802 = vmatpush1.xpose.msra.mxu0 0.0
    %5803 = vmatprep.subr.mxu0 0.0
    %5804 = vmatpush1.xpose.msra.mxu0 0.0
    %5805 = vmatprep.subr.mxu0 0.0
    %5806 = vmatpush1.xpose.msra.mxu0 0.0
    %5807 = vmatprep.subr.mxu0 0.0
    %5808 = vmatpush1.xpose.msra.mxu0 0.0
    %5809 = vmatprep.subr.mxu0 0.0
    %5810 = vmatpush1.xpose.msra.mxu0 0.0
    %5811 = vmatprep.subr.mxu0 0.0
    %5812 = vmatpush1.xpose.msra.mxu0 0.0
    %5813 = vmatprep.subr.mxu0 0.0
    %5814 = vmatpush1.xpose.msra.mxu0 0.0
    %5815 = vmatprep.subr.mxu0 0.0
    %5816 = vmatpush1.xpose.msra.mxu0 0.0
    %5817 = vmatprep.subr.mxu0 0.0
    %5818 = vmatpush1.xpose.msra.mxu0 0.0
    %5819 = vmatprep.subr.mxu0 0.0
    %5820 = vmatpush1.xpose.msra.mxu0 0.0
    %5821 = vmatprep.subr.mxu0 0.0
    %5822 = vmatpush1.xpose.msra.mxu0 0.0
    %5823 = vmatprep.subr.mxu0 0.0
    %5824 = vmatpush1.xpose.msra.mxu0 0.0
    %5825 = vmatprep.subr.mxu0 0.0
    %5826 = vmatpush1.xpose.msra.mxu0 0.0
    %5827 = vmatprep.subr.mxu0 0.0
    %5828 = vmatpush1.xpose.msra.mxu0 0.0
    %5829 = vmatprep.subr.mxu0 0.0
    %5830 = vmatpush1.xpose.msra.mxu0 0.0
    %5831 = vmatprep.subr.mxu0 0.0
    %5832 = vmatpush1.xpose.msra.mxu0 0.0
    %5833 = vmatprep.subr.mxu0 0.0
    %5834 = vmatpush1.xpose.msra.mxu0 0.0
    %5835 = vmatprep.subr.mxu0 0.0
    %5836 = vmatpush1.xpose.msra.mxu0 0.0
    %5837 = vmatprep.mubr.f32.mxu0 0.0
    %v5838 = vand.u32 %v5409, 4294901760
    %v5839 = vsub.f32 %v5409, %v5838
    %v5840 = vand.u32 %v5839, 4294901760
    %5841 = vmatmul.mubr.f32.gmra.mrb[0].mxu0 %v5840
    %v5842 = vpop.f32.mrb[0].mxu0
    %v5843 = vadd.f32 %v5758, %v5842
    %v5844 = vpop.f32.mrb[0].mxu0
    %5845 = vdwg.mxu0
    %5846 = vmatprep.subr.mxu0 0.0
    %v5847 = vand.u32 %v5412, 4294901760
    %v5848 = vsub.f32 %v5412, %v5847
    %v5849 = vand.u32 %v5848, 4294901760
    %5850 = vmatpush1.xpose.msra.mxu0 %v5849
    %5851 = vmatprep.subr.mxu0 0.0
    %v5852 = vand.u32 %v5415, 4294901760
    %v5853 = vsub.f32 %v5415, %v5852
    %v5854 = vand.u32 %v5853, 4294901760
    %5855 = vmatpush1.xpose.msra.mxu0 %v5854
    %5856 = vmatprep.subr.mxu0 0.0
    %v5857 = vand.u32 %v5418, 4294901760
    %v5858 = vsub.f32 %v5418, %v5857
    %v5859 = vand.u32 %v5858, 4294901760
    %5860 = vmatpush1.xpose.msra.mxu0 %v5859
    %5861 = vmatprep.subr.mxu0 0.0
    %v5862 = vand.u32 %v5421, 4294901760
    %v5863 = vsub.f32 %v5421, %v5862
    %v5864 = vand.u32 %v5863, 4294901760
    %5865 = vmatpush1.xpose.msra.mxu0 %v5864
    %5866 = vmatprep.subr.mxu0 0.0
    %v5867 = vand.u32 %v5424, 4294901760
    %v5868 = vsub.f32 %v5424, %v5867
    %v5869 = vand.u32 %v5868, 4294901760
    %5870 = vmatpush1.xpose.msra.mxu0 %v5869
    %5871 = vmatprep.subr.mxu0 0.0
    %v5872 = vand.u32 %v5427, 4294901760
    %v5873 = vsub.f32 %v5427, %v5872
    %v5874 = vand.u32 %v5873, 4294901760
    %5875 = vmatpush1.xpose.msra.mxu0 %v5874
    %5876 = vmatprep.subr.mxu0 0.0
    %v5877 = vand.u32 %v5430, 4294901760
    %v5878 = vsub.f32 %v5430, %v5877
    %v5879 = vand.u32 %v5878, 4294901760
    %5880 = vmatpush1.xpose.msra.mxu0 %v5879
    %5881 = vmatprep.subr.mxu0 0.0
    %v5882 = vand.u32 %v5433, 4294901760
    %v5883 = vsub.f32 %v5433, %v5882
    %v5884 = vand.u32 %v5883, 4294901760
    %5885 = vmatpush1.xpose.msra.mxu0 %v5884
    %5886 = vmatprep.subr.mxu0 0.0
    %v5887 = vand.u32 %v5436, 4294901760
    %v5888 = vsub.f32 %v5436, %v5887
    %v5889 = vand.u32 %v5888, 4294901760
    %5890 = vmatpush1.xpose.msra.mxu0 %v5889
    %5891 = vmatprep.subr.mxu0 0.0
    %v5892 = vand.u32 %v5439, 4294901760
    %v5893 = vsub.f32 %v5439, %v5892
    %v5894 = vand.u32 %v5893, 4294901760
    %5895 = vmatpush1.xpose.msra.mxu0 %v5894
    %5896 = vmatprep.subr.mxu0 0.0
    %v5897 = vand.u32 %v5442, 4294901760
    %v5898 = vsub.f32 %v5442, %v5897
    %v5899 = vand.u32 %v5898, 4294901760
    %5900 = vmatpush1.xpose.msra.mxu0 %v5899
    %5901 = vmatprep.subr.mxu0 0.0
    %v5902 = vand.u32 %v5445, 4294901760
    %v5903 = vsub.f32 %v5445, %v5902
    %v5904 = vand.u32 %v5903, 4294901760
    %5905 = vmatpush1.xpose.msra.mxu0 %v5904
    %5906 = vmatprep.subr.mxu0 0.0
    %5907 = vmatpush1.xpose.msra.mxu0 0.0
    %5908 = vmatprep.subr.mxu0 0.0
    %5909 = vmatpush1.xpose.msra.mxu0 0.0
    %5910 = vmatprep.subr.mxu0 0.0
    %5911 = vmatpush1.xpose.msra.mxu0 0.0
    %5912 = vmatprep.subr.mxu0 0.0
    %5913 = vmatpush1.xpose.msra.mxu0 0.0
    %5914 = vmatprep.subr.mxu0 0.0
    %5915 = vmatpush1.xpose.msra.mxu0 0.0
    %5916 = vmatprep.subr.mxu0 0.0
    %5917 = vmatpush1.xpose.msra.mxu0 0.0
    %5918 = vmatprep.subr.mxu0 0.0
    %5919 = vmatpush1.xpose.msra.mxu0 0.0
    %5920 = vmatprep.subr.mxu0 0.0
    %5921 = vmatpush1.xpose.msra.mxu0 0.0
    %5922 = vmatprep.subr.mxu0 0.0
    %5923 = vmatpush1.xpose.msra.mxu0 0.0
    %5924 = vmatprep.subr.mxu0 0.0
    %5925 = vmatpush1.xpose.msra.mxu0 0.0
    %5926 = vmatprep.subr.mxu0 0.0
    %5927 = vmatpush1.xpose.msra.mxu0 0.0
    %5928 = vmatprep.subr.mxu0 0.0
    %5929 = vmatpush1.xpose.msra.mxu0 0.0
    %5930 = vmatprep.subr.mxu0 0.0
    %5931 = vmatpush1.xpose.msra.mxu0 0.0
    %5932 = vmatprep.subr.mxu0 0.0
    %5933 = vmatpush1.xpose.msra.mxu0 0.0
    %5934 = vmatprep.subr.mxu0 0.0
    %5935 = vmatpush1.xpose.msra.mxu0 0.0
    %5936 = vmatprep.subr.mxu0 0.0
    %5937 = vmatpush1.xpose.msra.mxu0 0.0
    %5938 = vmatprep.subr.mxu0 0.0
    %5939 = vmatpush1.xpose.msra.mxu0 0.0
    %5940 = vmatprep.subr.mxu0 0.0
    %5941 = vmatpush1.xpose.msra.mxu0 0.0
    %5942 = vmatprep.subr.mxu0 0.0
    %5943 = vmatpush1.xpose.msra.mxu0 0.0
    %5944 = vmatprep.subr.mxu0 0.0
    %5945 = vmatpush1.xpose.msra.mxu0 0.0
    %5946 = vmatprep.mubr.f32.mxu0 0.0
    %v5947 = vand.u32 %v5409, 4294901760
    %5948 = vmatmul.mubr.f32.gmra.mrb[0].mxu0 %v5947
    %v5949 = vpop.f32.mrb[0].mxu0
    %v5950 = vadd.f32 %v5843, %v5949
    %v5951 = vpop.f32.mrb[0].mxu0
    %5952 = vdwg.mxu0
    %5953 = vmatprep.subr.mxu0 0.0
    %v5954 = vand.u32 %v5412, 4294901760
    %5955 = vmatpush1.xpose.msra.mxu0 %v5954
    %5956 = vmatprep.subr.mxu0 0.0
    %v5957 = vand.u32 %v5415, 4294901760
    %5958 = vmatpush1.xpose.msra.mxu0 %v5957
    %5959 = vmatprep.subr.mxu0 0.0
    %v5960 = vand.u32 %v5418, 4294901760
    %5961 = vmatpush1.xpose.msra.mxu0 %v5960
    %5962 = vmatprep.subr.mxu0 0.0
    %v5963 = vand.u32 %v5421, 4294901760
    %5964 = vmatpush1.xpose.msra.mxu0 %v5963
    %5965 = vmatprep.subr.mxu0 0.0
    %v5966 = vand.u32 %v5424, 4294901760
    %5967 = vmatpush1.xpose.msra.mxu0 %v5966
    %5968 = vmatprep.subr.mxu0 0.0
    %v5969 = vand.u32 %v5427, 4294901760
    %5970 = vmatpush1.xpose.msra.mxu0 %v5969
    %5971 = vmatprep.subr.mxu0 0.0
    %v5972 = vand.u32 %v5430, 4294901760
    %5973 = vmatpush1.xpose.msra.mxu0 %v5972
    %5974 = vmatprep.subr.mxu0 0.0
    %v5975 = vand.u32 %v5433, 4294901760
    %5976 = vmatpush1.xpose.msra.mxu0 %v5975
    %5977 = vmatprep.subr.mxu0 0.0
    %v5978 = vand.u32 %v5436, 4294901760
    %5979 = vmatpush1.xpose.msra.mxu0 %v5978
    %5980 = vmatprep.subr.mxu0 0.0
    %v5981 = vand.u32 %v5439, 4294901760
    %5982 = vmatpush1.xpose.msra.mxu0 %v5981
    %5983 = vmatprep.subr.mxu0 0.0
    %v5984 = vand.u32 %v5442, 4294901760
    %5985 = vmatpush1.xpose.msra.mxu0 %v5984
    %5986 = vmatprep.subr.mxu0 0.0
    %v5987 = vand.u32 %v5445, 4294901760
    %5988 = vmatpush1.xpose.msra.mxu0 %v5987
    %5989 = vmatprep.subr.mxu0 0.0
    %5990 = vmatpush1.xpose.msra.mxu0 0.0
    %5991 = vmatprep.subr.mxu0 0.0
    %5992 = vmatpush1.xpose.msra.mxu0 0.0
    %5993 = vmatprep.subr.mxu0 0.0
    %5994 = vmatpush1.xpose.msra.mxu0 0.0
    %5995 = vmatprep.subr.mxu0 0.0
    %5996 = vmatpush1.xpose.msra.mxu0 0.0
    %5997 = vmatprep.subr.mxu0 0.0
    %5998 = vmatpush1.xpose.msra.mxu0 0.0
    %5999 = vmatprep.subr.mxu0 0.0
    %6000 = vmatpush1.xpose.msra.mxu0 0.0
    %6001 = vmatprep.subr.mxu0 0.0
    %6002 = vmatpush1.xpose.msra.mxu0 0.0
    %6003 = vmatprep.subr.mxu0 0.0
    %6004 = vmatpush1.xpose.msra.mxu0 0.0
    %6005 = vmatprep.subr.mxu0 0.0
    %6006 = vmatpush1.xpose.msra.mxu0 0.0
    %6007 = vmatprep.subr.mxu0 0.0
    %6008 = vmatpush1.xpose.msra.mxu0 0.0
    %6009 = vmatprep.subr.mxu0 0.0
    %6010 = vmatpush1.xpose.msra.mxu0 0.0
    %6011 = vmatprep.subr.mxu0 0.0
    %6012 = vmatpush1.xpose.msra.mxu0 0.0
    %6013 = vmatprep.subr.mxu0 0.0
    %6014 = vmatpush1.xpose.msra.mxu0 0.0
    %6015 = vmatprep.subr.mxu0 0.0
    %6016 = vmatpush1.xpose.msra.mxu0 0.0
    %6017 = vmatprep.subr.mxu0 0.0
    %6018 = vmatpush1.xpose.msra.mxu0 0.0
    %6019 = vmatprep.subr.mxu0 0.0
    %6020 = vmatpush1.xpose.msra.mxu0 0.0
    %6021 = vmatprep.subr.mxu0 0.0
    %6022 = vmatpush1.xpose.msra.mxu0 0.0
    %6023 = vmatprep.subr.mxu0 0.0
    %6024 = vmatpush1.xpose.msra.mxu0 0.0
    %6025 = vmatprep.subr.mxu0 0.0
    %6026 = vmatpush1.xpose.msra.mxu0 0.0
    %6027 = vmatprep.subr.mxu0 0.0
    %6028 = vmatpush1.xpose.msra.mxu0 0.0
    %6029 = vmatprep.mubr.f32.mxu0 0.0
    %v6030 = vand.u32 %v5409, 4294901760
    %6031 = vmatmul.mubr.f32.gmra.mrb[0].mxu0 %v6030
    %v6032 = vpop.f32.mrb[0].mxu0
    %v6033 = vadd.f32 %v5950, %v6032
    %v6034 = vpop.f32.mrb[0].mxu0
    %6035 = vdwg.mxu0
    %6037 = vrot.lane.b32.xlu0 %v6033, 96
    %v6038 = vpop.permute.xlu0 %6037
    %v6039 = vsel %vm1190, %v6033, 0
    %v6041 = vsel %vm1190, %v6038, 0
    %6043 = vmatprep.subr.mxu0 0.0
    %v6044 = vand.u32 %v6041, 4294901760
    %6045 = vmatpush1.xpose.msra.mxu0 %v6044
    %6046 = vmatprep.subr.mxu0 0.0
    %6047 = vmatpush1.xpose.msra.mxu0 0.0
    %6048 = vmatprep.subr.mxu0 0.0
    %6049 = vmatpush1.xpose.msra.mxu0 0.0
    %6050 = vmatprep.subr.mxu0 0.0
    %6051 = vmatpush1.xpose.msra.mxu0 0.0
    %6052 = vmatprep.subr.mxu0 0.0
    %6053 = vmatpush1.xpose.msra.mxu0 0.0
    %6054 = vmatprep.subr.mxu0 0.0
    %6055 = vmatpush1.xpose.msra.mxu0 0.0
    %6056 = vmatprep.subr.mxu0 0.0
    %6057 = vmatpush1.xpose.msra.mxu0 0.0
    %6058 = vmatprep.subr.mxu0 0.0
    %6059 = vmatpush1.xpose.msra.mxu0 0.0
    %6060 = vmatprep.subr.mxu0 0.0
    %6061 = vmatpush1.xpose.msra.mxu0 0.0
    %6062 = vmatprep.subr.mxu0 0.0
    %6063 = vmatpush1.xpose.msra.mxu0 0.0
    %6064 = vmatprep.subr.mxu0 0.0
    %6065 = vmatpush1.xpose.msra.mxu0 0.0
    %6066 = vmatprep.subr.mxu0 0.0
    %6067 = vmatpush1.xpose.msra.mxu0 0.0
    %6068 = vmatprep.subr.mxu0 0.0
    %6069 = vmatpush1.xpose.msra.mxu0 0.0
    %6070 = vmatprep.subr.mxu0 0.0
    %6071 = vmatpush1.xpose.msra.mxu0 0.0
    %6072 = vmatprep.subr.mxu0 0.0
    %6073 = vmatpush1.xpose.msra.mxu0 0.0
    %6074 = vmatprep.subr.mxu0 0.0
    %6075 = vmatpush1.xpose.msra.mxu0 0.0
    %6076 = vmatprep.subr.mxu0 0.0
    %6077 = vmatpush1.xpose.msra.mxu0 0.0
    %6078 = vmatprep.subr.mxu0 0.0
    %6079 = vmatpush1.xpose.msra.mxu0 0.0
    %6080 = vmatprep.subr.mxu0 0.0
    %6081 = vmatpush1.xpose.msra.mxu0 0.0
    %6082 = vmatprep.subr.mxu0 0.0
    %6083 = vmatpush1.xpose.msra.mxu0 0.0
    %6084 = vmatprep.subr.mxu0 0.0
    %6085 = vmatpush1.xpose.msra.mxu0 0.0
    %6086 = vmatprep.subr.mxu0 0.0
    %6087 = vmatpush1.xpose.msra.mxu0 0.0
    %6088 = vmatprep.subr.mxu0 0.0
    %6089 = vmatpush1.xpose.msra.mxu0 0.0
    %6090 = vmatprep.subr.mxu0 0.0
    %6091 = vmatpush1.xpose.msra.mxu0 0.0
    %6092 = vmatprep.subr.mxu0 0.0
    %6093 = vmatpush1.xpose.msra.mxu0 0.0
    %6094 = vmatprep.subr.mxu0 0.0
    %6095 = vmatpush1.xpose.msra.mxu0 0.0
    %6096 = vmatprep.subr.mxu0 0.0
    %6097 = vmatpush1.xpose.msra.mxu0 0.0
    %6098 = vmatprep.subr.mxu0 0.0
    %6099 = vmatpush1.xpose.msra.mxu0 0.0
    %6100 = vmatprep.subr.mxu0 0.0
    %6101 = vmatpush1.xpose.msra.mxu0 0.0
    %6102 = vmatprep.subr.mxu0 0.0
    %6103 = vmatpush1.xpose.msra.mxu0 0.0
    %6104 = vmatprep.subr.mxu0 0.0
    %6105 = vmatpush1.xpose.msra.mxu0 0.0
    %6106 = vmatprep.subr.mxu0 0.0
    %6107 = vmatpush1.xpose.msra.mxu0 0.0
    %6108 = vmatprep.mubr.f32.mxu0 0.0
    %v6109 = vand.u32 %v6039, 4294901760
    %v6110 = vsub.f32 %v6039, %v6109
    %v6111 = vand.u32 %v6110, 4294901760
    %v6112 = vsub.f32 %v6110, %v6111
    %v6113 = vand.u32 %v6112, 4294901760
    %6114 = vmatmul.mubr.f32.gmra.mrb[0].mxu0 %v6113
    %v6115 = vpop.f32.mrb[0].mxu0
    %v6116 = vadd.f32 0.0, %v6115
    %v6117 = vpop.f32.mrb[0].mxu0
    %6118 = vdwg.mxu0
    %6119 = vmatprep.subr.mxu0 0.0
    %v6120 = vand.u32 %v6041, 4294901760
    %v6121 = vsub.f32 %v6041, %v6120
    %v6122 = vand.u32 %v6121, 4294901760
    %v6123 = vsub.f32 %v6121, %v6122
    %v6124 = vand.u32 %v6123, 4294901760
    %6125 = vmatpush1.xpose.msra.mxu0 %v6124
    %6126 = vmatprep.subr.mxu0 0.0
    %6127 = vmatpush1.xpose.msra.mxu0 0.0
    %6128 = vmatprep.subr.mxu0 0.0
    %6129 = vmatpush1.xpose.msra.mxu0 0.0
    %6130 = vmatprep.subr.mxu0 0.0
    %6131 = vmatpush1.xpose.msra.mxu0 0.0
    %6132 = vmatprep.subr.mxu0 0.0
    %6133 = vmatpush1.xpose.msra.mxu0 0.0
    %6134 = vmatprep.subr.mxu0 0.0
    %6135 = vmatpush1.xpose.msra.mxu0 0.0
    %6136 = vmatprep.subr.mxu0 0.0
    %6137 = vmatpush1.xpose.msra.mxu0 0.0
    %6138 = vmatprep.subr.mxu0 0.0
    %6139 = vmatpush1.xpose.msra.mxu0 0.0
    %6140 = vmatprep.subr.mxu0 0.0
    %6141 = vmatpush1.xpose.msra.mxu0 0.0
    %6142 = vmatprep.subr.mxu0 0.0
    %6143 = vmatpush1.xpose.msra.mxu0 0.0
    %6144 = vmatprep.subr.mxu0 0.0
    %6145 = vmatpush1.xpose.msra.mxu0 0.0
    %6146 = vmatprep.subr.mxu0 0.0
    %6147 = vmatpush1.xpose.msra.mxu0 0.0
    %6148 = vmatprep.subr.mxu0 0.0
    %6149 = vmatpush1.xpose.msra.mxu0 0.0
    %6150 = vmatprep.subr.mxu0 0.0
    %6151 = vmatpush1.xpose.msra.mxu0 0.0
    %6152 = vmatprep.subr.mxu0 0.0
    %6153 = vmatpush1.xpose.msra.mxu0 0.0
    %6154 = vmatprep.subr.mxu0 0.0
    %6155 = vmatpush1.xpose.msra.mxu0 0.0
    %6156 = vmatprep.subr.mxu0 0.0
    %6157 = vmatpush1.xpose.msra.mxu0 0.0
    %6158 = vmatprep.subr.mxu0 0.0
    %6159 = vmatpush1.xpose.msra.mxu0 0.0
    %6160 = vmatprep.subr.mxu0 0.0
    %6161 = vmatpush1.xpose.msra.mxu0 0.0
    %6162 = vmatprep.subr.mxu0 0.0
    %6163 = vmatpush1.xpose.msra.mxu0 0.0
    %6164 = vmatprep.subr.mxu0 0.0
    %6165 = vmatpush1.xpose.msra.mxu0 0.0
    %6166 = vmatprep.subr.mxu0 0.0
    %6167 = vmatpush1.xpose.msra.mxu0 0.0
    %6168 = vmatprep.subr.mxu0 0.0
    %6169 = vmatpush1.xpose.msra.mxu0 0.0
    %6170 = vmatprep.subr.mxu0 0.0
    %6171 = vmatpush1.xpose.msra.mxu0 0.0
    %6172 = vmatprep.subr.mxu0 0.0
    %6173 = vmatpush1.xpose.msra.mxu0 0.0
    %6174 = vmatprep.subr.mxu0 0.0
    %6175 = vmatpush1.xpose.msra.mxu0 0.0
    %6176 = vmatprep.subr.mxu0 0.0
    %6177 = vmatpush1.xpose.msra.mxu0 0.0
    %6178 = vmatprep.subr.mxu0 0.0
    %6179 = vmatpush1.xpose.msra.mxu0 0.0
    %6180 = vmatprep.subr.mxu0 0.0
    %6181 = vmatpush1.xpose.msra.mxu0 0.0
    %6182 = vmatprep.subr.mxu0 0.0
    %6183 = vmatpush1.xpose.msra.mxu0 0.0
    %6184 = vmatprep.subr.mxu0 0.0
    %6185 = vmatpush1.xpose.msra.mxu0 0.0
    %6186 = vmatprep.subr.mxu0 0.0
    %6187 = vmatpush1.xpose.msra.mxu0 0.0
    %6188 = vmatprep.mubr.f32.mxu0 0.0
    %v6189 = vand.u32 %v6039, 4294901760
    %6190 = vmatmul.mubr.f32.gmra.mrb[0].mxu0 %v6189
    %v6191 = vpop.f32.mrb[0].mxu0
    %v6192 = vadd.f32 %v6116, %v6191
    %v6193 = vpop.f32.mrb[0].mxu0
    %6194 = vdwg.mxu0
    %6195 = vmatprep.subr.mxu0 0.0
    %v6196 = vand.u32 %v6041, 4294901760
    %v6197 = vsub.f32 %v6041, %v6196
    %6198 = vmatpush1.xpose.msra.mxu0 %v6197
    %6199 = vmatprep.subr.mxu0 0.0
    %6200 = vmatpush1.xpose.msra.mxu0 0.0
    %6201 = vmatprep.subr.mxu0 0.0
    %6202 = vmatpush1.xpose.msra.mxu0 0.0
    %6203 = vmatprep.subr.mxu0 0.0
    %6204 = vmatpush1.xpose.msra.mxu0 0.0
    %6205 = vmatprep.subr.mxu0 0.0
    %6206 = vmatpush1.xpose.msra.mxu0 0.0
    %6207 = vmatprep.subr.mxu0 0.0
    %6208 = vmatpush1.xpose.msra.mxu0 0.0
    %6209 = vmatprep.subr.mxu0 0.0
    %6210 = vmatpush1.xpose.msra.mxu0 0.0
    %6211 = vmatprep.subr.mxu0 0.0
    %6212 = vmatpush1.xpose.msra.mxu0 0.0
    %6213 = vmatprep.subr.mxu0 0.0
    %6214 = vmatpush1.xpose.msra.mxu0 0.0
    %6215 = vmatprep.subr.mxu0 0.0
    %6216 = vmatpush1.xpose.msra.mxu0 0.0
    %6217 = vmatprep.subr.mxu0 0.0
    %6218 = vmatpush1.xpose.msra.mxu0 0.0
    %6219 = vmatprep.subr.mxu0 0.0
    %6220 = vmatpush1.xpose.msra.mxu0 0.0
    %6221 = vmatprep.subr.mxu0 0.0
    %6222 = vmatpush1.xpose.msra.mxu0 0.0
    %6223 = vmatprep.subr.mxu0 0.0
    %6224 = vmatpush1.xpose.msra.mxu0 0.0
    %6225 = vmatprep.subr.mxu0 0.0
    %6226 = vmatpush1.xpose.msra.mxu0 0.0
    %6227 = vmatprep.subr.mxu0 0.0
    %6228 = vmatpush1.xpose.msra.mxu0 0.0
    %6229 = vmatprep.subr.mxu0 0.0
    %6230 = vmatpush1.xpose.msra.mxu0 0.0
    %6231 = vmatprep.subr.mxu0 0.0
    %6232 = vmatpush1.xpose.msra.mxu0 0.0
    %6233 = vmatprep.subr.mxu0 0.0
    %6234 = vmatpush1.xpose.msra.mxu0 0.0
    %6235 = vmatprep.subr.mxu0 0.0
    %6236 = vmatpush1.xpose.msra.mxu0 0.0
    %6237 = vmatprep.subr.mxu0 0.0
    %6238 = vmatpush1.xpose.msra.mxu0 0.0
    %6239 = vmatprep.subr.mxu0 0.0
    %6240 = vmatpush1.xpose.msra.mxu0 0.0
    %6241 = vmatprep.subr.mxu0 0.0
    %6242 = vmatpush1.xpose.msra.mxu0 0.0
    %6243 = vmatprep.subr.mxu0 0.0
    %6244 = vmatpush1.xpose.msra.mxu0 0.0
    %6245 = vmatprep.subr.mxu0 0.0
    %6246 = vmatpush1.xpose.msra.mxu0 0.0
    %6247 = vmatprep.subr.mxu0 0.0
    %6248 = vmatpush1.xpose.msra.mxu0 0.0
    %6249 = vmatprep.subr.mxu0 0.0
    %6250 = vmatpush1.xpose.msra.mxu0 0.0
    %6251 = vmatprep.subr.mxu0 0.0
    %6252 = vmatpush1.xpose.msra.mxu0 0.0
    %6253 = vmatprep.subr.mxu0 0.0
    %6254 = vmatpush1.xpose.msra.mxu0 0.0
    %6255 = vmatprep.subr.mxu0 0.0
    %6256 = vmatpush1.xpose.msra.mxu0 0.0
    %6257 = vmatprep.subr.mxu0 0.0
    %6258 = vmatpush1.xpose.msra.mxu0 0.0
    %6259 = vmatprep.subr.mxu0 0.0
    %6260 = vmatpush1.xpose.msra.mxu0 0.0
    %6261 = vmatprep.mubr.f32.mxu0 0.0
    %v6262 = vand.u32 %v6039, 4294901760
    %v6263 = vsub.f32 %v6039, %v6262
    %6264 = vmatmul.mubr.f32.gmra.mrb[0].mxu0 %v6263
    %v6265 = vpop.f32.mrb[0].mxu0
    %v6266 = vadd.f32 %v6192, %v6265
    %v6267 = vpop.f32.mrb[0].mxu0
    %6268 = vdwg.mxu0
    %6269 = vmatprep.subr.mxu0 0.0
    %v6270 = vand.u32 %v6041, 4294901760
    %6271 = vmatpush1.xpose.msra.mxu0 %v6270
    %6272 = vmatprep.subr.mxu0 0.0
    %6273 = vmatpush1.xpose.msra.mxu0 0.0
    %6274 = vmatprep.subr.mxu0 0.0
    %6275 = vmatpush1.xpose.msra.mxu0 0.0
    %6276 = vmatprep.subr.mxu0 0.0
    %6277 = vmatpush1.xpose.msra.mxu0 0.0
    %6278 = vmatprep.subr.mxu0 0.0
    %6279 = vmatpush1.xpose.msra.mxu0 0.0
    %6280 = vmatprep.subr.mxu0 0.0
    %6281 = vmatpush1.xpose.msra.mxu0 0.0
    %6282 = vmatprep.subr.mxu0 0.0
    %6283 = vmatpush1.xpose.msra.mxu0 0.0
    %6284 = vmatprep.subr.mxu0 0.0
    %6285 = vmatpush1.xpose.msra.mxu0 0.0
    %6286 = vmatprep.subr.mxu0 0.0
    %6287 = vmatpush1.xpose.msra.mxu0 0.0
    %6288 = vmatprep.subr.mxu0 0.0
    %6289 = vmatpush1.xpose.msra.mxu0 0.0
    %6290 = vmatprep.subr.mxu0 0.0
    %6291 = vmatpush1.xpose.msra.mxu0 0.0
    %6292 = vmatprep.subr.mxu0 0.0
    %6293 = vmatpush1.xpose.msra.mxu0 0.0
    %6294 = vmatprep.subr.mxu0 0.0
    %6295 = vmatpush1.xpose.msra.mxu0 0.0
    %6296 = vmatprep.subr.mxu0 0.0
    %6297 = vmatpush1.xpose.msra.mxu0 0.0
    %6298 = vmatprep.subr.mxu0 0.0
    %6299 = vmatpush1.xpose.msra.mxu0 0.0
    %6300 = vmatprep.subr.mxu0 0.0
    %6301 = vmatpush1.xpose.msra.mxu0 0.0
    %6302 = vmatprep.subr.mxu0 0.0
    %6303 = vmatpush1.xpose.msra.mxu0 0.0
    %6304 = vmatprep.subr.mxu0 0.0
    %6305 = vmatpush1.xpose.msra.mxu0 0.0
    %6306 = vmatprep.subr.mxu0 0.0
    %6307 = vmatpush1.xpose.msra.mxu0 0.0
    %6308 = vmatprep.subr.mxu0 0.0
    %6309 = vmatpush1.xpose.msra.mxu0 0.0
    %6310 = vmatprep.subr.mxu0 0.0
    %6311 = vmatpush1.xpose.msra.mxu0 0.0
    %6312 = vmatprep.subr.mxu0 0.0
    %6313 = vmatpush1.xpose.msra.mxu0 0.0
    %6314 = vmatprep.subr.mxu0 0.0
    %6315 = vmatpush1.xpose.msra.mxu0 0.0
    %6316 = vmatprep.subr.mxu0 0.0
    %6317 = vmatpush1.xpose.msra.mxu0 0.0
    %6318 = vmatprep.subr.mxu0 0.0
    %6319 = vmatpush1.xpose.msra.mxu0 0.0
    %6320 = vmatprep.subr.mxu0 0.0
    %6321 = vmatpush1.xpose.msra.mxu0 0.0
    %6322 = vmatprep.subr.mxu0 0.0
    %6323 = vmatpush1.xpose.msra.mxu0 0.0
    %6324 = vmatprep.subr.mxu0 0.0
    %6325 = vmatpush1.xpose.msra.mxu0 0.0
    %6326 = vmatprep.subr.mxu0 0.0
    %6327 = vmatpush1.xpose.msra.mxu0 0.0
    %6328 = vmatprep.subr.mxu0 0.0
    %6329 = vmatpush1.xpose.msra.mxu0 0.0
    %6330 = vmatprep.subr.mxu0 0.0
    %6331 = vmatpush1.xpose.msra.mxu0 0.0
    %6332 = vmatprep.subr.mxu0 0.0
    %6333 = vmatpush1.xpose.msra.mxu0 0.0
    %6334 = vmatprep.mubr.f32.mxu0 0.0
    %v6335 = vand.u32 %v6039, 4294901760
    %v6336 = vsub.f32 %v6039, %v6335
    %v6337 = vand.u32 %v6336, 4294901760
    %6338 = vmatmul.mubr.f32.gmra.mrb[0].mxu0 %v6337
    %v6339 = vpop.f32.mrb[0].mxu0
    %v6340 = vadd.f32 %v6266, %v6339
    %v6341 = vpop.f32.mrb[0].mxu0
    %6342 = vdwg.mxu0
    %6343 = vmatprep.subr.mxu0 0.0
    %v6344 = vand.u32 %v6041, 4294901760
    %v6345 = vsub.f32 %v6041, %v6344
    %v6346 = vand.u32 %v6345, 4294901760
    %6347 = vmatpush1.xpose.msra.mxu0 %v6346
    %6348 = vmatprep.subr.mxu0 0.0
    %6349 = vmatpush1.xpose.msra.mxu0 0.0
    %6350 = vmatprep.subr.mxu0 0.0
    %6351 = vmatpush1.xpose.msra.mxu0 0.0
    %6352 = vmatprep.subr.mxu0 0.0
    %6353 = vmatpush1.xpose.msra.mxu0 0.0
    %6354 = vmatprep.subr.mxu0 0.0
    %6355 = vmatpush1.xpose.msra.mxu0 0.0
    %6356 = vmatprep.subr.mxu0 0.0
    %6357 = vmatpush1.xpose.msra.mxu0 0.0
    %6358 = vmatprep.subr.mxu0 0.0
    %6359 = vmatpush1.xpose.msra.mxu0 0.0
    %6360 = vmatprep.subr.mxu0 0.0
    %6361 = vmatpush1.xpose.msra.mxu0 0.0
    %6362 = vmatprep.subr.mxu0 0.0
    %6363 = vmatpush1.xpose.msra.mxu0 0.0
    %6364 = vmatprep.subr.mxu0 0.0
    %6365 = vmatpush1.xpose.msra.mxu0 0.0
    %6366 = vmatprep.subr.mxu0 0.0
    %6367 = vmatpush1.xpose.msra.mxu0 0.0
    %6368 = vmatprep.subr.mxu0 0.0
    %6369 = vmatpush1.xpose.msra.mxu0 0.0
    %6370 = vmatprep.subr.mxu0 0.0
    %6371 = vmatpush1.xpose.msra.mxu0 0.0
    %6372 = vmatprep.subr.mxu0 0.0
    %6373 = vmatpush1.xpose.msra.mxu0 0.0
    %6374 = vmatprep.subr.mxu0 0.0
    %6375 = vmatpush1.xpose.msra.mxu0 0.0
    %6376 = vmatprep.subr.mxu0 0.0
    %6377 = vmatpush1.xpose.msra.mxu0 0.0
    %6378 = vmatprep.subr.mxu0 0.0
    %6379 = vmatpush1.xpose.msra.mxu0 0.0
    %6380 = vmatprep.subr.mxu0 0.0
    %6381 = vmatpush1.xpose.msra.mxu0 0.0
    %6382 = vmatprep.subr.mxu0 0.0
    %6383 = vmatpush1.xpose.msra.mxu0 0.0
    %6384 = vmatprep.subr.mxu0 0.0
    %6385 = vmatpush1.xpose.msra.mxu0 0.0
    %6386 = vmatprep.subr.mxu0 0.0
    %6387 = vmatpush1.xpose.msra.mxu0 0.0
    %6388 = vmatprep.subr.mxu0 0.0
    %6389 = vmatpush1.xpose.msra.mxu0 0.0
    %6390 = vmatprep.subr.mxu0 0.0
    %6391 = vmatpush1.xpose.msra.mxu0 0.0
    %6392 = vmatprep.subr.mxu0 0.0
    %6393 = vmatpush1.xpose.msra.mxu0 0.0
    %6394 = vmatprep.subr.mxu0 0.0
    %6395 = vmatpush1.xpose.msra.mxu0 0.0
    %6396 = vmatprep.subr.mxu0 0.0
    %6397 = vmatpush1.xpose.msra.mxu0 0.0
    %6398 = vmatprep.subr.mxu0 0.0
    %6399 = vmatpush1.xpose.msra.mxu0 0.0
    %6400 = vmatprep.subr.mxu0 0.0
    %6401 = vmatpush1.xpose.msra.mxu0 0.0
    %6402 = vmatprep.subr.mxu0 0.0
    %6403 = vmatpush1.xpose.msra.mxu0 0.0
    %6404 = vmatprep.subr.mxu0 0.0
    %6405 = vmatpush1.xpose.msra.mxu0 0.0
    %6406 = vmatprep.subr.mxu0 0.0
    %6407 = vmatpush1.xpose.msra.mxu0 0.0
    %6408 = vmatprep.subr.mxu0 0.0
    %6409 = vmatpush1.xpose.msra.mxu0 0.0
    %6410 = vmatprep.mubr.f32.mxu0 0.0
    %v6411 = vand.u32 %v6039, 4294901760
    %6412 = vmatmul.mubr.f32.gmra.mrb[0].mxu0 %v6411
    %v6413 = vpop.f32.mrb[0].mxu0
    %v6414 = vadd.f32 %v6340, %v6413
    %v6415 = vpop.f32.mrb[0].mxu0
    %6416 = vdwg.mxu0
    %6417 = vmatprep.subr.mxu0 0.0
    %v6418 = vand.u32 %v6041, 4294901760
    %6419 = vmatpush1.xpose.msra.mxu0 %v6418
    %6420 = vmatprep.subr.mxu0 0.0
    %6421 = vmatpush1.xpose.msra.mxu0 0.0
    %6422 = vmatprep.subr.mxu0 0.0
    %6423 = vmatpush1.xpose.msra.mxu0 0.0
    %6424 = vmatprep.subr.mxu0 0.0
    %6425 = vmatpush1.xpose.msra.mxu0 0.0
    %6426 = vmatprep.subr.mxu0 0.0
    %6427 = vmatpush1.xpose.msra.mxu0 0.0
    %6428 = vmatprep.subr.mxu0 0.0
    %6429 = vmatpush1.xpose.msra.mxu0 0.0
    %6430 = vmatprep.subr.mxu0 0.0
    %6431 = vmatpush1.xpose.msra.mxu0 0.0
    %6432 = vmatprep.subr.mxu0 0.0
    %6433 = vmatpush1.xpose.msra.mxu0 0.0
    %6434 = vmatprep.subr.mxu0 0.0
    %6435 = vmatpush1.xpose.msra.mxu0 0.0
    %6436 = vmatprep.subr.mxu0 0.0
    %6437 = vmatpush1.xpose.msra.mxu0 0.0
    %6438 = vmatprep.subr.mxu0 0.0
    %6439 = vmatpush1.xpose.msra.mxu0 0.0
    %6440 = vmatprep.subr.mxu0 0.0
    %6441 = vmatpush1.xpose.msra.mxu0 0.0
    %6442 = vmatprep.subr.mxu0 0.0
    %6443 = vmatpush1.xpose.msra.mxu0 0.0
    %6444 = vmatprep.subr.mxu0 0.0
    %6445 = vmatpush1.xpose.msra.mxu0 0.0
    %6446 = vmatprep.subr.mxu0 0.0
    %6447 = vmatpush1.xpose.msra.mxu0 0.0
    %6448 = vmatprep.subr.mxu0 0.0
    %6449 = vmatpush1.xpose.msra.mxu0 0.0
    %6450 = vmatprep.subr.mxu0 0.0
    %6451 = vmatpush1.xpose.msra.mxu0 0.0
    %6452 = vmatprep.subr.mxu0 0.0
    %6453 = vmatpush1.xpose.msra.mxu0 0.0
    %6454 = vmatprep.subr.mxu0 0.0
    %6455 = vmatpush1.xpose.msra.mxu0 0.0
    %6456 = vmatprep.subr.mxu0 0.0
    %6457 = vmatpush1.xpose.msra.mxu0 0.0
    %6458 = vmatprep.subr.mxu0 0.0
    %6459 = vmatpush1.xpose.msra.mxu0 0.0
    %6460 = vmatprep.subr.mxu0 0.0
    %6461 = vmatpush1.xpose.msra.mxu0 0.0
    %6462 = vmatprep.subr.mxu0 0.0
    %6463 = vmatpush1.xpose.msra.mxu0 0.0
    %6464 = vmatprep.subr.mxu0 0.0
    %6465 = vmatpush1.xpose.msra.mxu0 0.0
    %6466 = vmatprep.subr.mxu0 0.0
    %6467 = vmatpush1.xpose.msra.mxu0 0.0
    %6468 = vmatprep.subr.mxu0 0.0
    %6469 = vmatpush1.xpose.msra.mxu0 0.0
    %6470 = vmatprep.subr.mxu0 0.0
    %6471 = vmatpush1.xpose.msra.mxu0 0.0
    %6472 = vmatprep.subr.mxu0 0.0
    %6473 = vmatpush1.xpose.msra.mxu0 0.0
    %6474 = vmatprep.subr.mxu0 0.0
    %6475 = vmatpush1.xpose.msra.mxu0 0.0
    %6476 = vmatprep.subr.mxu0 0.0
    %6477 = vmatpush1.xpose.msra.mxu0 0.0
    %6478 = vmatprep.subr.mxu0 0.0
    %6479 = vmatpush1.xpose.msra.mxu0 0.0
    %6480 = vmatprep.subr.mxu0 0.0
    %6481 = vmatpush1.xpose.msra.mxu0 0.0
    %6482 = vmatprep.mubr.f32.mxu0 0.0
    %v6483 = vand.u32 %v6039, 4294901760
    %6484 = vmatmul.mubr.f32.gmra.mrb[0].mxu0 %v6483
    %v6485 = vpop.f32.mrb[0].mxu0
    %v6486 = vadd.f32 %v6414, %v6485
    %v6487 = vpop.f32.mrb[0].mxu0
    %6488 = vdwg.mxu0
    %v6489 = vmul.f32 %v6486, 0.35355338
    %v6490 = vsel %vm1190, %v6489, -inf
    %6491 = vmax.xlane.f32.xlu0 %v6490
    %v6492 = vpop.xlane.xlu0 %6491
    %v6493 = vsub.f32 %v6489, %v6492
    %v6494 = vmul.f32 %v6493, 1.442695
    %v6495 = vpow.pop %v6494
    %v6496 = vsel %vm1190, %v6495, 0.0
    %6497 = vadd.xlane.f32.xlu0 %v6496
    %v6498 = vpop.xlane.xlu0 %6497
    %v6499 = vrcp.pop %v6498
    %v6500 = vmul.f32 %v6495, %v6499
    %6501 = vrot.lane.b32.xlu0 %v6033, 64
    %v6502 = vpop.permute.xlu0 %6501
    %v6505 = vsel %vm1190, %v6500, 0
    %6507 = vmatprep.subr.mxu0 0.0
    %v6508 = vand.u32 %v6502, 4294901760
    %6509 = vmatpush1.msra.mxu0 %v6508
    %6510 = vmatprep.subr.mxu0 0.0
    %6511 = vmatpush1.msra.mxu0 0.0
    %6512 = vmatprep.subr.mxu0 0.0
    %6513 = vmatpush1.msra.mxu0 0.0
    %6514 = vmatprep.subr.mxu0 0.0
    %6515 = vmatpush1.msra.mxu0 0.0
    %6516 = vmatprep.subr.mxu0 0.0
    %6517 = vmatpush1.msra.mxu0 0.0
    %6518 = vmatprep.subr.mxu0 0.0
    %6519 = vmatpush1.msra.mxu0 0.0
    %6520 = vmatprep.subr.mxu0 0.0
    %6521 = vmatpush1.msra.mxu0 0.0
    %6522 = vmatprep.subr.mxu0 0.0
    %6523 = vmatpush1.msra.mxu0 0.0
    %6524 = vmatprep.subr.mxu0 0.0
    %6525 = vmatpush1.msra.mxu0 0.0
    %6526 = vmatprep.subr.mxu0 0.0
    %6527 = vmatpush1.msra.mxu0 0.0
    %6528 = vmatprep.subr.mxu0 0.0
    %6529 = vmatpush1.msra.mxu0 0.0
    %6530 = vmatprep.subr.mxu0 0.0
    %6531 = vmatpush1.msra.mxu0 0.0
    %6532 = vmatprep.subr.mxu0 0.0
    %6533 = vmatpush1.msra.mxu0 0.0
    %6534 = vmatprep.subr.mxu0 0.0
    %6535 = vmatpush1.msra.mxu0 0.0
    %6536 = vmatprep.subr.mxu0 0.0
    %6537 = vmatpush1.msra.mxu0 0.0
    %6538 = vmatprep.subr.mxu0 0.0
    %6539 = vmatpush1.msra.mxu0 0.0
    %6540 = vmatprep.subr.mxu0 0.0
    %6541 = vmatpush1.msra.mxu0 0.0
    %6542 = vmatprep.subr.mxu0 0.0
    %6543 = vmatpush1.msra.mxu0 0.0
    %6544 = vmatprep.subr.mxu0 0.0
    %6545 = vmatpush1.msra.mxu0 0.0
    %6546 = vmatprep.subr.mxu0 0.0
    %6547 = vmatpush1.msra.mxu0 0.0
    %6548 = vmatprep.subr.mxu0 0.0
    %6549 = vmatpush1.msra.mxu0 0.0
    %6550 = vmatprep.subr.mxu0 0.0
    %6551 = vmatpush1.msra.mxu0 0.0
    %6552 = vmatprep.subr.mxu0 0.0
    %6553 = vmatpush1.msra.mxu0 0.0
    %6554 = vmatprep.subr.mxu0 0.0
    %6555 = vmatpush1.msra.mxu0 0.0
    %6556 = vmatprep.subr.mxu0 0.0
    %6557 = vmatpush1.msra.mxu0 0.0
    %6558 = vmatprep.subr.mxu0 0.0
    %6559 = vmatpush1.msra.mxu0 0.0
    %6560 = vmatprep.subr.mxu0 0.0
    %6561 = vmatpush1.msra.mxu0 0.0
    %6562 = vmatprep.subr.mxu0 0.0
    %6563 = vmatpush1.msra.mxu0 0.0
    %6564 = vmatprep.subr.mxu0 0.0
    %6565 = vmatpush1.msra.mxu0 0.0
    %6566 = vmatprep.subr.mxu0 0.0
    %6567 = vmatpush1.msra.mxu0 0.0
    %6568 = vmatprep.subr.mxu0 0.0
    %6569 = vmatpush1.msra.mxu0 0.0
    %6570 = vmatprep.subr.mxu0 0.0
    %6571 = vmatpush1.msra.mxu0 0.0
    %6572 = vmatprep.mubr.f32.mxu0 0.0
    %v6573 = vand.u32 %v6505, 4294901760
    %v6574 = vsub.f32 %v6505, %v6573
    %v6575 = vand.u32 %v6574, 4294901760
    %v6576 = vsub.f32 %v6574, %v6575
    %v6577 = vand.u32 %v6576, 4294901760
    %6578 = vmatmul.mubr.f32.gmra.mrb[0].mxu0 %v6577
    %v6579 = vpop.f32.mrb[0].mxu0
    %v6580 = vadd.f32 0.0, %v6579
    %v6581 = vpop.f32.mrb[0].mxu0
    %6582 = vdwg.mxu0
    %6583 = vmatprep.subr.mxu0 0.0
    %v6584 = vand.u32 %v6502, 4294901760
    %v6585 = vsub.f32 %v6502, %v6584
    %v6586 = vand.u32 %v6585, 4294901760
    %v6587 = vsub.f32 %v6585, %v6586
    %v6588 = vand.u32 %v6587, 4294901760
    %6589 = vmatpush1.msra.mxu0 %v6588
    %6590 = vmatprep.subr.mxu0 0.0
    %6591 = vmatpush1.msra.mxu0 0.0
    %6592 = vmatprep.subr.mxu0 0.0
    %6593 = vmatpush1.msra.mxu0 0.0
    %6594 = vmatprep.subr.mxu0 0.0
    %6595 = vmatpush1.msra.mxu0 0.0
    %6596 = vmatprep.subr.mxu0 0.0
    %6597 = vmatpush1.msra.mxu0 0.0
    %6598 = vmatprep.subr.mxu0 0.0
    %6599 = vmatpush1.msra.mxu0 0.0
    %6600 = vmatprep.subr.mxu0 0.0
    %6601 = vmatpush1.msra.mxu0 0.0
    %6602 = vmatprep.subr.mxu0 0.0
    %6603 = vmatpush1.msra.mxu0 0.0
    %6604 = vmatprep.subr.mxu0 0.0
    %6605 = vmatpush1.msra.mxu0 0.0
    %6606 = vmatprep.subr.mxu0 0.0
    %6607 = vmatpush1.msra.mxu0 0.0
    %6608 = vmatprep.subr.mxu0 0.0
    %6609 = vmatpush1.msra.mxu0 0.0
    %6610 = vmatprep.subr.mxu0 0.0
    %6611 = vmatpush1.msra.mxu0 0.0
    %6612 = vmatprep.subr.mxu0 0.0
    %6613 = vmatpush1.msra.mxu0 0.0
    %6614 = vmatprep.subr.mxu0 0.0
    %6615 = vmatpush1.msra.mxu0 0.0
    %6616 = vmatprep.subr.mxu0 0.0
    %6617 = vmatpush1.msra.mxu0 0.0
    %6618 = vmatprep.subr.mxu0 0.0
    %6619 = vmatpush1.msra.mxu0 0.0
    %6620 = vmatprep.subr.mxu0 0.0
    %6621 = vmatpush1.msra.mxu0 0.0
    %6622 = vmatprep.subr.mxu0 0.0
    %6623 = vmatpush1.msra.mxu0 0.0
    %6624 = vmatprep.subr.mxu0 0.0
    %6625 = vmatpush1.msra.mxu0 0.0
    %6626 = vmatprep.subr.mxu0 0.0
    %6627 = vmatpush1.msra.mxu0 0.0
    %6628 = vmatprep.subr.mxu0 0.0
    %6629 = vmatpush1.msra.mxu0 0.0
    %6630 = vmatprep.subr.mxu0 0.0
    %6631 = vmatpush1.msra.mxu0 0.0
    %6632 = vmatprep.subr.mxu0 0.0
    %6633 = vmatpush1.msra.mxu0 0.0
    %6634 = vmatprep.subr.mxu0 0.0
    %6635 = vmatpush1.msra.mxu0 0.0
    %6636 = vmatprep.subr.mxu0 0.0
    %6637 = vmatpush1.msra.mxu0 0.0
    %6638 = vmatprep.subr.mxu0 0.0
    %6639 = vmatpush1.msra.mxu0 0.0
    %6640 = vmatprep.subr.mxu0 0.0
    %6641 = vmatpush1.msra.mxu0 0.0
    %6642 = vmatprep.subr.mxu0 0.0
    %6643 = vmatpush1.msra.mxu0 0.0
    %6644 = vmatprep.subr.mxu0 0.0
    %6645 = vmatpush1.msra.mxu0 0.0
    %6646 = vmatprep.subr.mxu0 0.0
    %6647 = vmatpush1.msra.mxu0 0.0
    %6648 = vmatprep.subr.mxu0 0.0
    %6649 = vmatpush1.msra.mxu0 0.0
    %6650 = vmatprep.subr.mxu0 0.0
    %6651 = vmatpush1.msra.mxu0 0.0
    %6652 = vmatprep.mubr.f32.mxu0 0.0
    %v6653 = vand.u32 %v6505, 4294901760
    %6654 = vmatmul.mubr.f32.gmra.mrb[0].mxu0 %v6653
    %v6655 = vpop.f32.mrb[0].mxu0
    %v6656 = vadd.f32 %v6580, %v6655
    %v6657 = vpop.f32.mrb[0].mxu0
    %6658 = vdwg.mxu0
    %6659 = vmatprep.subr.mxu0 0.0
    %v6660 = vand.u32 %v6502, 4294901760
    %v6661 = vsub.f32 %v6502, %v6660
    %6662 = vmatpush1.msra.mxu0 %v6661
    %6663 = vmatprep.subr.mxu0 0.0
    %6664 = vmatpush1.msra.mxu0 0.0
    %6665 = vmatprep.subr.mxu0 0.0
    %6666 = vmatpush1.msra.mxu0 0.0
    %6667 = vmatprep.subr.mxu0 0.0
    %6668 = vmatpush1.msra.mxu0 0.0
    %6669 = vmatprep.subr.mxu0 0.0
    %6670 = vmatpush1.msra.mxu0 0.0
    %6671 = vmatprep.subr.mxu0 0.0
    %6672 = vmatpush1.msra.mxu0 0.0
    %6673 = vmatprep.subr.mxu0 0.0
    %6674 = vmatpush1.msra.mxu0 0.0
    %6675 = vmatprep.subr.mxu0 0.0
    %6676 = vmatpush1.msra.mxu0 0.0
    %6677 = vmatprep.subr.mxu0 0.0
    %6678 = vmatpush1.msra.mxu0 0.0
    %6679 = vmatprep.subr.mxu0 0.0
    %6680 = vmatpush1.msra.mxu0 0.0
    %6681 = vmatprep.subr.mxu0 0.0
    %6682 = vmatpush1.msra.mxu0 0.0
    %6683 = vmatprep.subr.mxu0 0.0
    %6684 = vmatpush1.msra.mxu0 0.0
    %6685 = vmatprep.subr.mxu0 0.0
    %6686 = vmatpush1.msra.mxu0 0.0
    %6687 = vmatprep.subr.mxu0 0.0
    %6688 = vmatpush1.msra.mxu0 0.0
    %6689 = vmatprep.subr.mxu0 0.0
    %6690 = vmatpush1.msra.mxu0 0.0
    %6691 = vmatprep.subr.mxu0 0.0
    %6692 = vmatpush1.msra.mxu0 0.0
    %6693 = vmatprep.subr.mxu0 0.0
    %6694 = vmatpush1.msra.mxu0 0.0
    %6695 = vmatprep.subr.mxu0 0.0
    %6696 = vmatpush1.msra.mxu0 0.0
    %6697 = vmatprep.subr.mxu0 0.0
    %6698 = vmatpush1.msra.mxu0 0.0
    %6699 = vmatprep.subr.mxu0 0.0
    %6700 = vmatpush1.msra.mxu0 0.0
    %6701 = vmatprep.subr.mxu0 0.0
    %6702 = vmatpush1.msra.mxu0 0.0
    %6703 = vmatprep.subr.mxu0 0.0
    %6704 = vmatpush1.msra.mxu0 0.0
    %6705 = vmatprep.subr.mxu0 0.0
    %6706 = vmatpush1.msra.mxu0 0.0
    %6707 = vmatprep.subr.mxu0 0.0
    %6708 = vmatpush1.msra.mxu0 0.0
    %6709 = vmatprep.subr.mxu0 0.0
    %6710 = vmatpush1.msra.mxu0 0.0
    %6711 = vmatprep.subr.mxu0 0.0
    %6712 = vmatpush1.msra.mxu0 0.0
    %6713 = vmatprep.subr.mxu0 0.0
    %6714 = vmatpush1.msra.mxu0 0.0
    %6715 = vmatprep.subr.mxu0 0.0
    %6716 = vmatpush1.msra.mxu0 0.0
    %6717 = vmatprep.subr.mxu0 0.0
    %6718 = vmatpush1.msra.mxu0 0.0
    %6719 = vmatprep.subr.mxu0 0.0
    %6720 = vmatpush1.msra.mxu0 0.0
    %6721 = vmatprep.subr.mxu0 0.0
    %6722 = vmatpush1.msra.mxu0 0.0
    %6723 = vmatprep.subr.mxu0 0.0
    %6724 = vmatpush1.msra.mxu0 0.0
    %6725 = vmatprep.mubr.f32.mxu0 0.0
    %v6726 = vand.u32 %v6505, 4294901760
    %v6727 = vsub.f32 %v6505, %v6726
    %6728 = vmatmul.mubr.f32.gmra.mrb[0].mxu0 %v6727
    %v6729 = vpop.f32.mrb[0].mxu0
    %v6730 = vadd.f32 %v6656, %v6729
    %v6731 = vpop.f32.mrb[0].mxu0
    %6732 = vdwg.mxu0
    %6733 = vmatprep.subr.mxu0 0.0
    %v6734 = vand.u32 %v6502, 4294901760
    %6735 = vmatpush1.msra.mxu0 %v6734
    %6736 = vmatprep.subr.mxu0 0.0
    %6737 = vmatpush1.msra.mxu0 0.0
    %6738 = vmatprep.subr.mxu0 0.0
    %6739 = vmatpush1.msra.mxu0 0.0
    %6740 = vmatprep.subr.mxu0 0.0
    %6741 = vmatpush1.msra.mxu0 0.0
    %6742 = vmatprep.subr.mxu0 0.0
    %6743 = vmatpush1.msra.mxu0 0.0
    %6744 = vmatprep.subr.mxu0 0.0
    %6745 = vmatpush1.msra.mxu0 0.0
    %6746 = vmatprep.subr.mxu0 0.0
    %6747 = vmatpush1.msra.mxu0 0.0
    %6748 = vmatprep.subr.mxu0 0.0
    %6749 = vmatpush1.msra.mxu0 0.0
    %6750 = vmatprep.subr.mxu0 0.0
    %6751 = vmatpush1.msra.mxu0 0.0
    %6752 = vmatprep.subr.mxu0 0.0
    %6753 = vmatpush1.msra.mxu0 0.0
    %6754 = vmatprep.subr.mxu0 0.0
    %6755 = vmatpush1.msra.mxu0 0.0
    %6756 = vmatprep.subr.mxu0 0.0
    %6757 = vmatpush1.msra.mxu0 0.0
    %6758 = vmatprep.subr.mxu0 0.0
    %6759 = vmatpush1.msra.mxu0 0.0
    %6760 = vmatprep.subr.mxu0 0.0
    %6761 = vmatpush1.msra.mxu0 0.0
    %6762 = vmatprep.subr.mxu0 0.0
    %6763 = vmatpush1.msra.mxu0 0.0
    %6764 = vmatprep.subr.mxu0 0.0
    %6765 = vmatpush1.msra.mxu0 0.0
    %6766 = vmatprep.subr.mxu0 0.0
    %6767 = vmatpush1.msra.mxu0 0.0
    %6768 = vmatprep.subr.mxu0 0.0
    %6769 = vmatpush1.msra.mxu0 0.0
    %6770 = vmatprep.subr.mxu0 0.0
    %6771 = vmatpush1.msra.mxu0 0.0
    %6772 = vmatprep.subr.mxu0 0.0
    %6773 = vmatpush1.msra.mxu0 0.0
    %6774 = vmatprep.subr.mxu0 0.0
    %6775 = vmatpush1.msra.mxu0 0.0
    %6776 = vmatprep.subr.mxu0 0.0
    %6777 = vmatpush1.msra.mxu0 0.0
    %6778 = vmatprep.subr.mxu0 0.0
    %6779 = vmatpush1.msra.mxu0 0.0
    %6780 = vmatprep.subr.mxu0 0.0
    %6781 = vmatpush1.msra.mxu0 0.0
    %6782 = vmatprep.subr.mxu0 0.0
    %6783 = vmatpush1.msra.mxu0 0.0
    %6784 = vmatprep.subr.mxu0 0.0
    %6785 = vmatpush1.msra.mxu0 0.0
    %6786 = vmatprep.subr.mxu0 0.0
    %6787 = vmatpush1.msra.mxu0 0.0
    %6788 = vmatprep.subr.mxu0 0.0
    %6789 = vmatpush1.msra.mxu0 0.0
    %6790 = vmatprep.subr.mxu0 0.0
    %6791 = vmatpush1.msra.mxu0 0.0
    %6792 = vmatprep.subr.mxu0 0.0
    %6793 = vmatpush1.msra.mxu0 0.0
    %6794 = vmatprep.subr.mxu0 0.0
    %6795 = vmatpush1.msra.mxu0 0.0
    %6796 = vmatprep.subr.mxu0 0.0
    %6797 = vmatpush1.msra.mxu0 0.0
    %6798 = vmatprep.mubr.f32.mxu0 0.0
    %v6799 = vand.u32 %v6505, 4294901760
    %v6800 = vsub.f32 %v6505, %v6799
    %v6801 = vand.u32 %v6800, 4294901760
    %6802 = vmatmul.mubr.f32.gmra.mrb[0].mxu0 %v6801
    %v6803 = vpop.f32.mrb[0].mxu0
    %v6804 = vadd.f32 %v6730, %v6803
    %v6805 = vpop.f32.mrb[0].mxu0
    %6806 = vdwg.mxu0
    %6807 = vmatprep.subr.mxu0 0.0
    %v6808 = vand.u32 %v6502, 4294901760
    %v6809 = vsub.f32 %v6502, %v6808
    %v6810 = vand.u32 %v6809, 4294901760
    %6811 = vmatpush1.msra.mxu0 %v6810
    %6812 = vmatprep.subr.mxu0 0.0
    %6813 = vmatpush1.msra.mxu0 0.0
    %6814 = vmatprep.subr.mxu0 0.0
    %6815 = vmatpush1.msra.mxu0 0.0
    %6816 = vmatprep.subr.mxu0 0.0
    %6817 = vmatpush1.msra.mxu0 0.0
    %6818 = vmatprep.subr.mxu0 0.0
    %6819 = vmatpush1.msra.mxu0 0.0
    %6820 = vmatprep.subr.mxu0 0.0
    %6821 = vmatpush1.msra.mxu0 0.0
    %6822 = vmatprep.subr.mxu0 0.0
    %6823 = vmatpush1.msra.mxu0 0.0
    %6824 = vmatprep.subr.mxu0 0.0
    %6825 = vmatpush1.msra.mxu0 0.0
    %6826 = vmatprep.subr.mxu0 0.0
    %6827 = vmatpush1.msra.mxu0 0.0
    %6828 = vmatprep.subr.mxu0 0.0
    %6829 = vmatpush1.msra.mxu0 0.0
    %6830 = vmatprep.subr.mxu0 0.0
    %6831 = vmatpush1.msra.mxu0 0.0
    %6832 = vmatprep.subr.mxu0 0.0
    %6833 = vmatpush1.msra.mxu0 0.0
    %6834 = vmatprep.subr.mxu0 0.0
    %6835 = vmatpush1.msra.mxu0 0.0
    %6836 = vmatprep.subr.mxu0 0.0
    %6837 = vmatpush1.msra.mxu0 0.0
    %6838 = vmatprep.subr.mxu0 0.0
    %6839 = vmatpush1.msra.mxu0 0.0
    %6840 = vmatprep.subr.mxu0 0.0
    %6841 = vmatpush1.msra.mxu0 0.0
    %6842 = vmatprep.subr.mxu0 0.0
    %6843 = vmatpush1.msra.mxu0 0.0
    %6844 = vmatprep.subr.mxu0 0.0
    %6845 = vmatpush1.msra.mxu0 0.0
    %6846 = vmatprep.subr.mxu0 0.0
    %6847 = vmatpush1.msra.mxu0 0.0
    %6848 = vmatprep.subr.mxu0 0.0
    %6849 = vmatpush1.msra.mxu0 0.0
    %6850 = vmatprep.subr.mxu0 0.0
    %6851 = vmatpush1.msra.mxu0 0.0
    %6852 = vmatprep.subr.mxu0 0.0
    %6853 = vmatpush1.msra.mxu0 0.0
    %6854 = vmatprep.subr.mxu0 0.0
    %6855 = vmatpush1.msra.mxu0 0.0
    %6856 = vmatprep.subr.mxu0 0.0
    %6857 = vmatpush1.msra.mxu0 0.0
    %6858 = vmatprep.subr.mxu0 0.0
    %6859 = vmatpush1.msra.mxu0 0.0
    %6860 = vmatprep.subr.mxu0 0.0
    %6861 = vmatpush1.msra.mxu0 0.0
    %6862 = vmatprep.subr.mxu0 0.0
    %6863 = vmatpush1.msra.mxu0 0.0
    %6864 = vmatprep.subr.mxu0 0.0
    %6865 = vmatpush1.msra.mxu0 0.0
    %6866 = vmatprep.subr.mxu0 0.0
    %6867 = vmatpush1.msra.mxu0 0.0
    %6868 = vmatprep.subr.mxu0 0.0
    %6869 = vmatpush1.msra.mxu0 0.0
    %6870 = vmatprep.subr.mxu0 0.0
    %6871 = vmatpush1.msra.mxu0 0.0
    %6872 = vmatprep.subr.mxu0 0.0
    %6873 = vmatpush1.msra.mxu0 0.0
    %6874 = vmatprep.mubr.f32.mxu0 0.0
    %v6875 = vand.u32 %v6505, 4294901760
    %6876 = vmatmul.mubr.f32.gmra.mrb[0].mxu0 %v6875
    %v6877 = vpop.f32.mrb[0].mxu0
    %v6878 = vadd.f32 %v6804, %v6877
    %v6879 = vpop.f32.mrb[0].mxu0
    %6880 = vdwg.mxu0
    %6881 = vmatprep.subr.mxu0 0.0
    %v6882 = vand.u32 %v6502, 4294901760
    %6883 = vmatpush1.msra.mxu0 %v6882
    %6884 = vmatprep.subr.mxu0 0.0
    %6885 = vmatpush1.msra.mxu0 0.0
    %6886 = vmatprep.subr.mxu0 0.0
    %6887 = vmatpush1.msra.mxu0 0.0
    %6888 = vmatprep.subr.mxu0 0.0
    %6889 = vmatpush1.msra.mxu0 0.0
    %6890 = vmatprep.subr.mxu0 0.0
    %6891 = vmatpush1.msra.mxu0 0.0
    %6892 = vmatprep.subr.mxu0 0.0
    %6893 = vmatpush1.msra.mxu0 0.0
    %6894 = vmatprep.subr.mxu0 0.0
    %6895 = vmatpush1.msra.mxu0 0.0
    %6896 = vmatprep.subr.mxu0 0.0
    %6897 = vmatpush1.msra.mxu0 0.0
    %6898 = vmatprep.subr.mxu0 0.0
    %6899 = vmatpush1.msra.mxu0 0.0
    %6900 = vmatprep.subr.mxu0 0.0
    %6901 = vmatpush1.msra.mxu0 0.0
    %6902 = vmatprep.subr.mxu0 0.0
    %6903 = vmatpush1.msra.mxu0 0.0
    %6904 = vmatprep.subr.mxu0 0.0
    %6905 = vmatpush1.msra.mxu0 0.0
    %6906 = vmatprep.subr.mxu0 0.0
    %6907 = vmatpush1.msra.mxu0 0.0
    %6908 = vmatprep.subr.mxu0 0.0
    %6909 = vmatpush1.msra.mxu0 0.0
    %6910 = vmatprep.subr.mxu0 0.0
    %6911 = vmatpush1.msra.mxu0 0.0
    %6912 = vmatprep.subr.mxu0 0.0
    %6913 = vmatpush1.msra.mxu0 0.0
    %6914 = vmatprep.subr.mxu0 0.0
    %6915 = vmatpush1.msra.mxu0 0.0
    %6916 = vmatprep.subr.mxu0 0.0
    %6917 = vmatpush1.msra.mxu0 0.0
    %6918 = vmatprep.subr.mxu0 0.0
    %6919 = vmatpush1.msra.mxu0 0.0
    %6920 = vmatprep.subr.mxu0 0.0
    %6921 = vmatpush1.msra.mxu0 0.0
    %6922 = vmatprep.subr.mxu0 0.0
    %6923 = vmatpush1.msra.mxu0 0.0
    %6924 = vmatprep.subr.mxu0 0.0
    %6925 = vmatpush1.msra.mxu0 0.0
    %6926 = vmatprep.subr.mxu0 0.0
    %6927 = vmatpush1.msra.mxu0 0.0
    %6928 = vmatprep.subr.mxu0 0.0
    %6929 = vmatpush1.msra.mxu0 0.0
    %6930 = vmatprep.subr.mxu0 0.0
    %6931 = vmatpush1.msra.mxu0 0.0
    %6932 = vmatprep.subr.mxu0 0.0
    %6933 = vmatpush1.msra.mxu0 0.0
    %6934 = vmatprep.subr.mxu0 0.0
    %6935 = vmatpush1.msra.mxu0 0.0
    %6936 = vmatprep.subr.mxu0 0.0
    %6937 = vmatpush1.msra.mxu0 0.0
    %6938 = vmatprep.subr.mxu0 0.0
    %6939 = vmatpush1.msra.mxu0 0.0
    %6940 = vmatprep.subr.mxu0 0.0
    %6941 = vmatpush1.msra.mxu0 0.0
    %6942 = vmatprep.subr.mxu0 0.0
    %6943 = vmatpush1.msra.mxu0 0.0
    %6944 = vmatprep.subr.mxu0 0.0
    %6945 = vmatpush1.msra.mxu0 0.0
    %6946 = vmatprep.mubr.f32.mxu0 0.0
    %v6947 = vand.u32 %v6505, 4294901760
    %6948 = vmatmul.mubr.f32.gmra.mrb[0].mxu0 %v6947
    %v6949 = vpop.f32.mrb[0].mxu0
    %v6950 = vadd.f32 %v6878, %v6949
    %v6951 = vpop.f32.mrb[0].mxu0
    %6952 = vdwg.mxu0
    %6953 = vrot.lane.b32.xlu0 %v6033, 120
    %v6954 = vpop.permute.xlu0 %6953
    %6955 = vrot.lane.b32.xlu0 %v6033, 88
    %v6956 = vpop.permute.xlu0 %6955
    %v6957 = vsel %vm1190, %v6954, 0
    %v6959 = vsel %vm1190, %v6956, 0
    %6961 = vmatprep.subr.mxu0 0.0
    %v6962 = vand.u32 %v6959, 4294901760
    %6963 = vmatpush1.xpose.msra.mxu0 %v6962
    %6964 = vmatprep.subr.mxu0 0.0
    %6965 = vmatpush1.xpose.msra.mxu0 0.0
    %6966 = vmatprep.subr.mxu0 0.0
    %6967 = vmatpush1.xpose.msra.mxu0 0.0
    %6968 = vmatprep.subr.mxu0 0.0
    %6969 = vmatpush1.xpose.msra.mxu0 0.0
    %6970 = vmatprep.subr.mxu0 0.0
    %6971 = vmatpush1.xpose.msra.mxu0 0.0
    %6972 = vmatprep.subr.mxu0 0.0
    %6973 = vmatpush1.xpose.msra.mxu0 0.0
    %6974 = vmatprep.subr.mxu0 0.0
    %6975 = vmatpush1.xpose.msra.mxu0 0.0
    %6976 = vmatprep.subr.mxu0 0.0
    %6977 = vmatpush1.xpose.msra.mxu0 0.0
    %6978 = vmatprep.subr.mxu0 0.0
    %6979 = vmatpush1.xpose.msra.mxu0 0.0
    %6980 = vmatprep.subr.mxu0 0.0
    %6981 = vmatpush1.xpose.msra.mxu0 0.0
    %6982 = vmatprep.subr.mxu0 0.0
    %6983 = vmatpush1.xpose.msra.mxu0 0.0
    %6984 = vmatprep.subr.mxu0 0.0
    %6985 = vmatpush1.xpose.msra.mxu0 0.0
    %6986 = vmatprep.subr.mxu0 0.0
    %6987 = vmatpush1.xpose.msra.mxu0 0.0
    %6988 = vmatprep.subr.mxu0 0.0
    %6989 = vmatpush1.xpose.msra.mxu0 0.0
    %6990 = vmatprep.subr.mxu0 0.0
    %6991 = vmatpush1.xpose.msra.mxu0 0.0
    %6992 = vmatprep.subr.mxu0 0.0
    %6993 = vmatpush1.xpose.msra.mxu0 0.0
    %6994 = vmatprep.subr.mxu0 0.0
    %6995 = vmatpush1.xpose.msra.mxu0 0.0
    %6996 = vmatprep.subr.mxu0 0.0
    %6997 = vmatpush1.xpose.msra.mxu0 0.0
    %6998 = vmatprep.subr.mxu0 0.0
    %6999 = vmatpush1.xpose.msra.mxu0 0.0
    %7000 = vmatprep.subr.mxu0 0.0
    %7001 = vmatpush1.xpose.msra.mxu0 0.0
    %7002 = vmatprep.subr.mxu0 0.0
    %7003 = vmatpush1.xpose.msra.mxu0 0.0
    %7004 = vmatprep.subr.mxu0 0.0
    %7005 = vmatpush1.xpose.msra.mxu0 0.0
    %7006 = vmatprep.subr.mxu0 0.0
    %7007 = vmatpush1.xpose.msra.mxu0 0.0
    %7008 = vmatprep.subr.mxu0 0.0
    %7009 = vmatpush1.xpose.msra.mxu0 0.0
    %7010 = vmatprep.subr.mxu0 0.0
    %7011 = vmatpush1.xpose.msra.mxu0 0.0
    %7012 = vmatprep.subr.mxu0 0.0
    %7013 = vmatpush1.xpose.msra.mxu0 0.0
    %7014 = vmatprep.subr.mxu0 0.0
    %7015 = vmatpush1.xpose.msra.mxu0 0.0
    %7016 = vmatprep.subr.mxu0 0.0
    %7017 = vmatpush1.xpose.msra.mxu0 0.0
    %7018 = vmatprep.subr.mxu0 0.0
    %7019 = vmatpush1.xpose.msra.mxu0 0.0
    %7020 = vmatprep.subr.mxu0 0.0
    %7021 = vmatpush1.xpose.msra.mxu0 0.0
    %7022 = vmatprep.subr.mxu0 0.0
    %7023 = vmatpush1.xpose.msra.mxu0 0.0
    %7024 = vmatprep.subr.mxu0 0.0
    %7025 = vmatpush1.xpose.msra.mxu0 0.0
    %7026 = vmatprep.mubr.f32.mxu0 0.0
    %v7027 = vand.u32 %v6957, 4294901760
    %v7028 = vsub.f32 %v6957, %v7027
    %v7029 = vand.u32 %v7028, 4294901760
    %v7030 = vsub.f32 %v7028, %v7029
    %v7031 = vand.u32 %v7030, 4294901760
    %7032 = vmatmul.mubr.f32.gmra.mrb[0].mxu0 %v7031
    %v7033 = vpop.f32.mrb[0].mxu0
    %v7034 = vadd.f32 0.0, %v7033
    %v7035 = vpop.f32.mrb[0].mxu0
    %7036 = vdwg.mxu0
    %7037 = vmatprep.subr.mxu0 0.0
    %v7038 = vand.u32 %v6959, 4294901760
    %v7039 = vsub.f32 %v6959, %v7038
    %v7040 = vand.u32 %v7039, 4294901760
    %v7041 = vsub.f32 %v7039, %v7040
    %v7042 = vand.u32 %v7041, 4294901760
    %7043 = vmatpush1.xpose.msra.mxu0 %v7042
    %7044 = vmatprep.subr.mxu0 0.0
    %7045 = vmatpush1.xpose.msra.mxu0 0.0
    %7046 = vmatprep.subr.mxu0 0.0
    %7047 = vmatpush1.xpose.msra.mxu0 0.0
    %7048 = vmatprep.subr.mxu0 0.0
    %7049 = vmatpush1.xpose.msra.mxu0 0.0
    %7050 = vmatprep.subr.mxu0 0.0
    %7051 = vmatpush1.xpose.msra.mxu0 0.0
    %7052 = vmatprep.subr.mxu0 0.0
    %7053 = vmatpush1.xpose.msra.mxu0 0.0
    %7054 = vmatprep.subr.mxu0 0.0
    %7055 = vmatpush1.xpose.msra.mxu0 0.0
    %7056 = vmatprep.subr.mxu0 0.0
    %7057 = vmatpush1.xpose.msra.mxu0 0.0
    %7058 = vmatprep.subr.mxu0 0.0
    %7059 = vmatpush1.xpose.msra.mxu0 0.0
    %7060 = vmatprep.subr.mxu0 0.0
    %7061 = vmatpush1.xpose.msra.mxu0 0.0
    %7062 = vmatprep.subr.mxu0 0.0
    %7063 = vmatpush1.xpose.msra.mxu0 0.0
    %7064 = vmatprep.subr.mxu0 0.0
    %7065 = vmatpush1.xpose.msra.mxu0 0.0
    %7066 = vmatprep.subr.mxu0 0.0
    %7067 = vmatpush1.xpose.msra.mxu0 0.0
    %7068 = vmatprep.subr.mxu0 0.0
    %7069 = vmatpush1.xpose.msra.mxu0 0.0
    %7070 = vmatprep.subr.mxu0 0.0
    %7071 = vmatpush1.xpose.msra.mxu0 0.0
    %7072 = vmatprep.subr.mxu0 0.0
    %7073 = vmatpush1.xpose.msra.mxu0 0.0
    %7074 = vmatprep.subr.mxu0 0.0
    %7075 = vmatpush1.xpose.msra.mxu0 0.0
    %7076 = vmatprep.subr.mxu0 0.0
    %7077 = vmatpush1.xpose.msra.mxu0 0.0
    %7078 = vmatprep.subr.mxu0 0.0
    %7079 = vmatpush1.xpose.msra.mxu0 0.0
    %7080 = vmatprep.subr.mxu0 0.0
    %7081 = vmatpush1.xpose.msra.mxu0 0.0
    %7082 = vmatprep.subr.mxu0 0.0
    %7083 = vmatpush1.xpose.msra.mxu0 0.0
    %7084 = vmatprep.subr.mxu0 0.0
    %7085 = vmatpush1.xpose.msra.mxu0 0.0
    %7086 = vmatprep.subr.mxu0 0.0
    %7087 = vmatpush1.xpose.msra.mxu0 0.0
    %7088 = vmatprep.subr.mxu0 0.0
    %7089 = vmatpush1.xpose.msra.mxu0 0.0
    %7090 = vmatprep.subr.mxu0 0.0
    %7091 = vmatpush1.xpose.msra.mxu0 0.0
    %7092 = vmatprep.subr.mxu0 0.0
    %7093 = vmatpush1.xpose.msra.mxu0 0.0
    %7094 = vmatprep.subr.mxu0 0.0
    %7095 = vmatpush1.xpose.msra.mxu0 0.0
    %7096 = vmatprep.subr.mxu0 0.0
    %7097 = vmatpush1.xpose.msra.mxu0 0.0
    %7098 = vmatprep.subr.mxu0 0.0
    %7099 = vmatpush1.xpose.msra.mxu0 0.0
    %7100 = vmatprep.subr.mxu0 0.0
    %7101 = vmatpush1.xpose.msra.mxu0 0.0
    %7102 = vmatprep.subr.mxu0 0.0
    %7103 = vmatpush1.xpose.msra.mxu0 0.0
    %7104 = vmatprep.subr.mxu0 0.0
    %7105 = vmatpush1.xpose.msra.mxu0 0.0
    %7106 = vmatprep.mubr.f32.mxu0 0.0
    %v7107 = vand.u32 %v6957, 4294901760
    %7108 = vmatmul.mubr.f32.gmra.mrb[0].mxu0 %v7107
    %v7109 = vpop.f32.mrb[0].mxu0
    %v7110 = vadd.f32 %v7034, %v7109
    %v7111 = vpop.f32.mrb[0].mxu0
    %7112 = vdwg.mxu0
    %7113 = vmatprep.subr.mxu0 0.0
    %v7114 = vand.u32 %v6959, 4294901760
    %v7115 = vsub.f32 %v6959, %v7114
    %7116 = vmatpush1.xpose.msra.mxu0 %v7115
    %7117 = vmatprep.subr.mxu0 0.0
    %7118 = vmatpush1.xpose.msra.mxu0 0.0
    %7119 = vmatprep.subr.mxu0 0.0
    %7120 = vmatpush1.xpose.msra.mxu0 0.0
    %7121 = vmatprep.subr.mxu0 0.0
    %7122 = vmatpush1.xpose.msra.mxu0 0.0
    %7123 = vmatprep.subr.mxu0 0.0
    %7124 = vmatpush1.xpose.msra.mxu0 0.0
    %7125 = vmatprep.subr.mxu0 0.0
    %7126 = vmatpush1.xpose.msra.mxu0 0.0
    %7127 = vmatprep.subr.mxu0 0.0
    %7128 = vmatpush1.xpose.msra.mxu0 0.0
    %7129 = vmatprep.subr.mxu0 0.0
    %7130 = vmatpush1.xpose.msra.mxu0 0.0
    %7131 = vmatprep.subr.mxu0 0.0
    %7132 = vmatpush1.xpose.msra.mxu0 0.0
    %7133 = vmatprep.subr.mxu0 0.0
    %7134 = vmatpush1.xpose.msra.mxu0 0.0
    %7135 = vmatprep.subr.mxu0 0.0
    %7136 = vmatpush1.xpose.msra.mxu0 0.0
    %7137 = vmatprep.subr.mxu0 0.0
    %7138 = vmatpush1.xpose.msra.mxu0 0.0
    %7139 = vmatprep.subr.mxu0 0.0
    %7140 = vmatpush1.xpose.msra.mxu0 0.0
    %7141 = vmatprep.subr.mxu0 0.0
    %7142 = vmatpush1.xpose.msra.mxu0 0.0
    %7143 = vmatprep.subr.mxu0 0.0
    %7144 = vmatpush1.xpose.msra.mxu0 0.0
    %7145 = vmatprep.subr.mxu0 0.0
    %7146 = vmatpush1.xpose.msra.mxu0 0.0
    %7147 = vmatprep.subr.mxu0 0.0
    %7148 = vmatpush1.xpose.msra.mxu0 0.0
    %7149 = vmatprep.subr.mxu0 0.0
    %7150 = vmatpush1.xpose.msra.mxu0 0.0
    %7151 = vmatprep.subr.mxu0 0.0
    %7152 = vmatpush1.xpose.msra.mxu0 0.0
    %7153 = vmatprep.subr.mxu0 0.0
    %7154 = vmatpush1.xpose.msra.mxu0 0.0
    %7155 = vmatprep.subr.mxu0 0.0
    %7156 = vmatpush1.xpose.msra.mxu0 0.0
    %7157 = vmatprep.subr.mxu0 0.0
    %7158 = vmatpush1.xpose.msra.mxu0 0.0
    %7159 = vmatprep.subr.mxu0 0.0
    %7160 = vmatpush1.xpose.msra.mxu0 0.0
    %7161 = vmatprep.subr.mxu0 0.0
    %7162 = vmatpush1.xpose.msra.mxu0 0.0
    %7163 = vmatprep.subr.mxu0 0.0
    %7164 = vmatpush1.xpose.msra.mxu0 0.0
    %7165 = vmatprep.subr.mxu0 0.0
    %7166 = vmatpush1.xpose.msra.mxu0 0.0
    %7167 = vmatprep.subr.mxu0 0.0
    %7168 = vmatpush1.xpose.msra.mxu0 0.0
    %7169 = vmatprep.subr.mxu0 0.0
    %7170 = vmatpush1.xpose.msra.mxu0 0.0
    %7171 = vmatprep.subr.mxu0 0.0
    %7172 = vmatpush1.xpose.msra.mxu0 0.0
    %7173 = vmatprep.subr.mxu0 0.0
    %7174 = vmatpush1.xpose.msra.mxu0 0.0
    %7175 = vmatprep.subr.mxu0 0.0
    %7176 = vmatpush1.xpose.msra.mxu0 0.0
    %7177 = vmatprep.subr.mxu0 0.0
    %7178 = vmatpush1.xpose.msra.mxu0 0.0
    %7179 = vmatprep.mubr.f32.mxu0 0.0
    %v7180 = vand.u32 %v6957, 4294901760
    %v7181 = vsub.f32 %v6957, %v7180
    %7182 = vmatmul.mubr.f32.gmra.mrb[0].mxu0 %v7181
    %v7183 = vpop.f32.mrb[0].mxu0
    %v7184 = vadd.f32 %v7110, %v7183
    %v7185 = vpop.f32.mrb[0].mxu0
    %7186 = vdwg.mxu0
    %7187 = vmatprep.subr.mxu0 0.0
    %v7188 = vand.u32 %v6959, 4294901760
    %7189 = vmatpush1.xpose.msra.mxu0 %v7188
    %7190 = vmatprep.subr.mxu0 0.0
    %7191 = vmatpush1.xpose.msra.mxu0 0.0
    %7192 = vmatprep.subr.mxu0 0.0
    %7193 = vmatpush1.xpose.msra.mxu0 0.0
    %7194 = vmatprep.subr.mxu0 0.0
    %7195 = vmatpush1.xpose.msra.mxu0 0.0
    %7196 = vmatprep.subr.mxu0 0.0
    %7197 = vmatpush1.xpose.msra.mxu0 0.0
    %7198 = vmatprep.subr.mxu0 0.0
    %7199 = vmatpush1.xpose.msra.mxu0 0.0
    %7200 = vmatprep.subr.mxu0 0.0
    %7201 = vmatpush1.xpose.msra.mxu0 0.0
    %7202 = vmatprep.subr.mxu0 0.0
    %7203 = vmatpush1.xpose.msra.mxu0 0.0
    %7204 = vmatprep.subr.mxu0 0.0
    %7205 = vmatpush1.xpose.msra.mxu0 0.0
    %7206 = vmatprep.subr.mxu0 0.0
    %7207 = vmatpush1.xpose.msra.mxu0 0.0
    %7208 = vmatprep.subr.mxu0 0.0
    %7209 = vmatpush1.xpose.msra.mxu0 0.0
    %7210 = vmatprep.subr.mxu0 0.0
    %7211 = vmatpush1.xpose.msra.mxu0 0.0
    %7212 = vmatprep.subr.mxu0 0.0
    %7213 = vmatpush1.xpose.msra.mxu0 0.0
    %7214 = vmatprep.subr.mxu0 0.0
    %7215 = vmatpush1.xpose.msra.mxu0 0.0
    %7216 = vmatprep.subr.mxu0 0.0
    %7217 = vmatpush1.xpose.msra.mxu0 0.0
    %7218 = vmatprep.subr.mxu0 0.0
    %7219 = vmatpush1.xpose.msra.mxu0 0.0
    %7220 = vmatprep.subr.mxu0 0.0
    %7221 = vmatpush1.xpose.msra.mxu0 0.0
    %7222 = vmatprep.subr.mxu0 0.0
    %7223 = vmatpush1.xpose.msra.mxu0 0.0
    %7224 = vmatprep.subr.mxu0 0.0
    %7225 = vmatpush1.xpose.msra.mxu0 0.0
    %7226 = vmatprep.subr.mxu0 0.0
    %7227 = vmatpush1.xpose.msra.mxu0 0.0
    %7228 = vmatprep.subr.mxu0 0.0
    %7229 = vmatpush1.xpose.msra.mxu0 0.0
    %7230 = vmatprep.subr.mxu0 0.0
    %7231 = vmatpush1.xpose.msra.mxu0 0.0
    %7232 = vmatprep.subr.mxu0 0.0
    %7233 = vmatpush1.xpose.msra.mxu0 0.0
    %7234 = vmatprep.subr.mxu0 0.0
    %7235 = vmatpush1.xpose.msra.mxu0 0.0
    %7236 = vmatprep.subr.mxu0 0.0
    %7237 = vmatpush1.xpose.msra.mxu0 0.0
    %7238 = vmatprep.subr.mxu0 0.0
    %7239 = vmatpush1.xpose.msra.mxu0 0.0
    %7240 = vmatprep.subr.mxu0 0.0
    %7241 = vmatpush1.xpose.msra.mxu0 0.0
    %7242 = vmatprep.subr.mxu0 0.0
    %7243 = vmatpush1.xpose.msra.mxu0 0.0
    %7244 = vmatprep.subr.mxu0 0.0
    %7245 = vmatpush1.xpose.msra.mxu0 0.0
    %7246 = vmatprep.subr.mxu0 0.0
    %7247 = vmatpush1.xpose.msra.mxu0 0.0
    %7248 = vmatprep.subr.mxu0 0.0
    %7249 = vmatpush1.xpose.msra.mxu0 0.0
    %7250 = vmatprep.subr.mxu0 0.0
    %7251 = vmatpush1.xpose.msra.mxu0 0.0
    %7252 = vmatprep.mubr.f32.mxu0 0.0
    %v7253 = vand.u32 %v6957, 4294901760
    %v7254 = vsub.f32 %v6957, %v7253
    %v7255 = vand.u32 %v7254, 4294901760
    %7256 = vmatmul.mubr.f32.gmra.mrb[0].mxu0 %v7255
    %v7257 = vpop.f32.mrb[0].mxu0
    %v7258 = vadd.f32 %v7184, %v7257
    %v7259 = vpop.f32.mrb[0].mxu0
    %7260 = vdwg.mxu0
    %7261 = vmatprep.subr.mxu0 0.0
    %v7262 = vand.u32 %v6959, 4294901760
    %v7263 = vsub.f32 %v6959, %v7262
    %v7264 = vand.u32 %v7263, 4294901760
    %7265 = vmatpush1.xpose.msra.mxu0 %v7264
    %7266 = vmatprep.subr.mxu0 0.0
    %7267 = vmatpush1.xpose.msra.mxu0 0.0
    %7268 = vmatprep.subr.mxu0 0.0
    %7269 = vmatpush1.xpose.msra.mxu0 0.0
    %7270 = vmatprep.subr.mxu0 0.0
    %7271 = vmatpush1.xpose.msra.mxu0 0.0
    %7272 = vmatprep.subr.mxu0 0.0
    %7273 = vmatpush1.xpose.msra.mxu0 0.0
    %7274 = vmatprep.subr.mxu0 0.0
    %7275 = vmatpush1.xpose.msra.mxu0 0.0
    %7276 = vmatprep.subr.mxu0 0.0
    %7277 = vmatpush1.xpose.msra.mxu0 0.0
    %7278 = vmatprep.subr.mxu0 0.0
    %7279 = vmatpush1.xpose.msra.mxu0 0.0
    %7280 = vmatprep.subr.mxu0 0.0
    %7281 = vmatpush1.xpose.msra.mxu0 0.0
    %7282 = vmatprep.subr.mxu0 0.0
    %7283 = vmatpush1.xpose.msra.mxu0 0.0
    %7284 = vmatprep.subr.mxu0 0.0
    %7285 = vmatpush1.xpose.msra.mxu0 0.0
    %7286 = vmatprep.subr.mxu0 0.0
    %7287 = vmatpush1.xpose.msra.mxu0 0.0
    %7288 = vmatprep.subr.mxu0 0.0
    %7289 = vmatpush1.xpose.msra.mxu0 0.0
    %7290 = vmatprep.subr.mxu0 0.0
    %7291 = vmatpush1.xpose.msra.mxu0 0.0
    %7292 = vmatprep.subr.mxu0 0.0
    %7293 = vmatpush1.xpose.msra.mxu0 0.0
    %7294 = vmatprep.subr.mxu0 0.0
    %7295 = vmatpush1.xpose.msra.mxu0 0.0
    %7296 = vmatprep.subr.mxu0 0.0
    %7297 = vmatpush1.xpose.msra.mxu0 0.0
    %7298 = vmatprep.subr.mxu0 0.0
    %7299 = vmatpush1.xpose.msra.mxu0 0.0
    %7300 = vmatprep.subr.mxu0 0.0
    %7301 = vmatpush1.xpose.msra.mxu0 0.0
    %7302 = vmatprep.subr.mxu0 0.0
    %7303 = vmatpush1.xpose.msra.mxu0 0.0
    %7304 = vmatprep.subr.mxu0 0.0
    %7305 = vmatpush1.xpose.msra.mxu0 0.0
    %7306 = vmatprep.subr.mxu0 0.0
    %7307 = vmatpush1.xpose.msra.mxu0 0.0
    %7308 = vmatprep.subr.mxu0 0.0
    %7309 = vmatpush1.xpose.msra.mxu0 0.0
    %7310 = vmatprep.subr.mxu0 0.0
    %7311 = vmatpush1.xpose.msra.mxu0 0.0
    %7312 = vmatprep.subr.mxu0 0.0
    %7313 = vmatpush1.xpose.msra.mxu0 0.0
    %7314 = vmatprep.subr.mxu0 0.0
    %7315 = vmatpush1.xpose.msra.mxu0 0.0
    %7316 = vmatprep.subr.mxu0 0.0
    %7317 = vmatpush1.xpose.msra.mxu0 0.0
    %7318 = vmatprep.subr.mxu0 0.0
    %7319 = vmatpush1.xpose.msra.mxu0 0.0
    %7320 = vmatprep.subr.mxu0 0.0
    %7321 = vmatpush1.xpose.msra.mxu0 0.0
    %7322 = vmatprep.subr.mxu0 0.0
    %7323 = vmatpush1.xpose.msra.mxu0 0.0
    %7324 = vmatprep.subr.mxu0 0.0
    %7325 = vmatpush1.xpose.msra.mxu0 0.0
    %7326 = vmatprep.subr.mxu0 0.0
    %7327 = vmatpush1.xpose.msra.mxu0 0.0
    %7328 = vmatprep.mubr.f32.mxu0 0.0
    %v7329 = vand.u32 %v6957, 4294901760
    %7330 = vmatmul.mubr.f32.gmra.mrb[0].mxu0 %v7329
    %v7331 = vpop.f32.mrb[0].mxu0
    %v7332 = vadd.f32 %v7258, %v7331
    %v7333 = vpop.f32.mrb[0].mxu0
    %7334 = vdwg.mxu0
    %7335 = vmatprep.subr.mxu0 0.0
    %v7336 = vand.u32 %v6959, 4294901760
    %7337 = vmatpush1.xpose.msra.mxu0 %v7336
    %7338 = vmatprep.subr.mxu0 0.0
    %7339 = vmatpush1.xpose.msra.mxu0 0.0
    %7340 = vmatprep.subr.mxu0 0.0
    %7341 = vmatpush1.xpose.msra.mxu0 0.0
    %7342 = vmatprep.subr.mxu0 0.0
    %7343 = vmatpush1.xpose.msra.mxu0 0.0
    %7344 = vmatprep.subr.mxu0 0.0
    %7345 = vmatpush1.xpose.msra.mxu0 0.0
    %7346 = vmatprep.subr.mxu0 0.0
    %7347 = vmatpush1.xpose.msra.mxu0 0.0
    %7348 = vmatprep.subr.mxu0 0.0
    %7349 = vmatpush1.xpose.msra.mxu0 0.0
    %7350 = vmatprep.subr.mxu0 0.0
    %7351 = vmatpush1.xpose.msra.mxu0 0.0
    %7352 = vmatprep.subr.mxu0 0.0
    %7353 = vmatpush1.xpose.msra.mxu0 0.0
    %7354 = vmatprep.subr.mxu0 0.0
    %7355 = vmatpush1.xpose.msra.mxu0 0.0
    %7356 = vmatprep.subr.mxu0 0.0
    %7357 = vmatpush1.xpose.msra.mxu0 0.0
    %7358 = vmatprep.subr.mxu0 0.0
    %7359 = vmatpush1.xpose.msra.mxu0 0.0
    %7360 = vmatprep.subr.mxu0 0.0
    %7361 = vmatpush1.xpose.msra.mxu0 0.0
    %7362 = vmatprep.subr.mxu0 0.0
    %7363 = vmatpush1.xpose.msra.mxu0 0.0
    %7364 = vmatprep.subr.mxu0 0.0
    %7365 = vmatpush1.xpose.msra.mxu0 0.0
    %7366 = vmatprep.subr.mxu0 0.0
    %7367 = vmatpush1.xpose.msra.mxu0 0.0
    %7368 = vmatprep.subr.mxu0 0.0
    %7369 = vmatpush1.xpose.msra.mxu0 0.0
    %7370 = vmatprep.subr.mxu0 0.0
    %7371 = vmatpush1.xpose.msra.mxu0 0.0
    %7372 = vmatprep.subr.mxu0 0.0
    %7373 = vmatpush1.xpose.msra.mxu0 0.0
    %7374 = vmatprep.subr.mxu0 0.0
    %7375 = vmatpush1.xpose.msra.mxu0 0.0
    %7376 = vmatprep.subr.mxu0 0.0
    %7377 = vmatpush1.xpose.msra.mxu0 0.0
    %7378 = vmatprep.subr.mxu0 0.0
    %7379 = vmatpush1.xpose.msra.mxu0 0.0
    %7380 = vmatprep.subr.mxu0 0.0
    %7381 = vmatpush1.xpose.msra.mxu0 0.0
    %7382 = vmatprep.subr.mxu0 0.0
    %7383 = vmatpush1.xpose.msra.mxu0 0.0
    %7384 = vmatprep.subr.mxu0 0.0
    %7385 = vmatpush1.xpose.msra.mxu0 0.0
    %7386 = vmatprep.subr.mxu0 0.0
    %7387 = vmatpush1.xpose.msra.mxu0 0.0
    %7388 = vmatprep.subr.mxu0 0.0
    %7389 = vmatpush1.xpose.msra.mxu0 0.0
    %7390 = vmatprep.subr.mxu0 0.0
    %7391 = vmatpush1.xpose.msra.mxu0 0.0
    %7392 = vmatprep.subr.mxu0 0.0
    %7393 = vmatpush1.xpose.msra.mxu0 0.0
    %7394 = vmatprep.subr.mxu0 0.0
    %7395 = vmatpush1.xpose.msra.mxu0 0.0
    %7396 = vmatprep.subr.mxu0 0.0
    %7397 = vmatpush1.xpose.msra.mxu0 0.0
    %7398 = vmatprep.subr.mxu0 0.0
    %7399 = vmatpush1.xpose.msra.mxu0 0.0
    %7400 = vmatprep.mubr.f32.mxu0 0.0
    %v7401 = vand.u32 %v6957, 4294901760
    %7402 = vmatmul.mubr.f32.gmra.mrb[0].mxu0 %v7401
    %v7403 = vpop.f32.mrb[0].mxu0
    %v7404 = vadd.f32 %v7332, %v7403
    %v7405 = vpop.f32.mrb[0].mxu0
    %7406 = vdwg.mxu0
    %v7407 = vmul.f32 %v7404, 0.35355338
    %v7408 = vsel %vm1190, %v7407, -inf
    %7409 = vmax.xlane.f32.xlu0 %v7408
    %v7410 = vpop.xlane.xlu0 %7409
    %v7411 = vsub.f32 %v7407, %v7410
    %v7412 = vmul.f32 %v7411, 1.442695
    %v7413 = vpow.pop %v7412
    %v7414 = vsel %vm1190, %v7413, 0.0
    %7415 = vadd.xlane.f32.xlu0 %v7414
    %v7416 = vpop.xlane.xlu0 %7415
    %v7417 = vrcp.pop %v7416
    %v7418 = vmul.f32 %v7413, %v7417
    %7419 = vrot.lane.b32.xlu0 %v6033, 56
    %v7420 = vpop.permute.xlu0 %7419
    %v7423 = vsel %vm1190, %v7418, 0
    %7425 = vmatprep.subr.mxu0 0.0
    %v7426 = vand.u32 %v7420, 4294901760
    %7427 = vmatpush1.msra.mxu0 %v7426
    %7428 = vmatprep.subr.mxu0 0.0
    %7429 = vmatpush1.msra.mxu0 0.0
    %7430 = vmatprep.subr.mxu0 0.0
    %7431 = vmatpush1.msra.mxu0 0.0
    %7432 = vmatprep.subr.mxu0 0.0
    %7433 = vmatpush1.msra.mxu0 0.0
    %7434 = vmatprep.subr.mxu0 0.0
    %7435 = vmatpush1.msra.mxu0 0.0
    %7436 = vmatprep.subr.mxu0 0.0
    %7437 = vmatpush1.msra.mxu0 0.0
    %7438 = vmatprep.subr.mxu0 0.0
    %7439 = vmatpush1.msra.mxu0 0.0
    %7440 = vmatprep.subr.mxu0 0.0
    %7441 = vmatpush1.msra.mxu0 0.0
    %7442 = vmatprep.subr.mxu0 0.0
    %7443 = vmatpush1.msra.mxu0 0.0
    %7444 = vmatprep.subr.mxu0 0.0
    %7445 = vmatpush1.msra.mxu0 0.0
    %7446 = vmatprep.subr.mxu0 0.0
    %7447 = vmatpush1.msra.mxu0 0.0
    %7448 = vmatprep.subr.mxu0 0.0
    %7449 = vmatpush1.msra.mxu0 0.0
    %7450 = vmatprep.subr.mxu0 0.0
    %7451 = vmatpush1.msra.mxu0 0.0
    %7452 = vmatprep.subr.mxu0 0.0
    %7453 = vmatpush1.msra.mxu0 0.0
    %7454 = vmatprep.subr.mxu0 0.0
    %7455 = vmatpush1.msra.mxu0 0.0
    %7456 = vmatprep.subr.mxu0 0.0
    %7457 = vmatpush1.msra.mxu0 0.0
    %7458 = vmatprep.subr.mxu0 0.0
    %7459 = vmatpush1.msra.mxu0 0.0
    %7460 = vmatprep.subr.mxu0 0.0
    %7461 = vmatpush1.msra.mxu0 0.0
    %7462 = vmatprep.subr.mxu0 0.0
    %7463 = vmatpush1.msra.mxu0 0.0
    %7464 = vmatprep.subr.mxu0 0.0
    %7465 = vmatpush1.msra.mxu0 0.0
    %7466 = vmatprep.subr.mxu0 0.0
    %7467 = vmatpush1.msra.mxu0 0.0
    %7468 = vmatprep.subr.mxu0 0.0
    %7469 = vmatpush1.msra.mxu0 0.0
    %7470 = vmatprep.subr.mxu0 0.0
    %7471 = vmatpush1.msra.mxu0 0.0
    %7472 = vmatprep.subr.mxu0 0.0
    %7473 = vmatpush1.msra.mxu0 0.0
    %7474 = vmatprep.subr.mxu0 0.0
    %7475 = vmatpush1.msra.mxu0 0.0
    %7476 = vmatprep.subr.mxu0 0.0
    %7477 = vmatpush1.msra.mxu0 0.0
    %7478 = vmatprep.subr.mxu0 0.0
    %7479 = vmatpush1.msra.mxu0 0.0
    %7480 = vmatprep.subr.mxu0 0.0
    %7481 = vmatpush1.msra.mxu0 0.0
    %7482 = vmatprep.subr.mxu0 0.0
    %7483 = vmatpush1.msra.mxu0 0.0
    %7484 = vmatprep.subr.mxu0 0.0
    %7485 = vmatpush1.msra.mxu0 0.0
    %7486 = vmatprep.subr.mxu0 0.0
    %7487 = vmatpush1.msra.mxu0 0.0
    %7488 = vmatprep.subr.mxu0 0.0
    %7489 = vmatpush1.msra.mxu0 0.0
    %7490 = vmatprep.mubr.f32.mxu0 0.0
    %v7491 = vand.u32 %v7423, 4294901760
    %v7492 = vsub.f32 %v7423, %v7491
    %v7493 = vand.u32 %v7492, 4294901760
    %v7494 = vsub.f32 %v7492, %v7493
    %v7495 = vand.u32 %v7494, 4294901760
    %7496 = vmatmul.mubr.f32.gmra.mrb[0].mxu0 %v7495
    %v7497 = vpop.f32.mrb[0].mxu0
    %v7498 = vadd.f32 0.0, %v7497
    %v7499 = vpop.f32.mrb[0].mxu0
    %7500 = vdwg.mxu0
    %7501 = vmatprep.subr.mxu0 0.0
    %v7502 = vand.u32 %v7420, 4294901760
    %v7503 = vsub.f32 %v7420, %v7502
    %v7504 = vand.u32 %v7503, 4294901760
    %v7505 = vsub.f32 %v7503, %v7504
    %v7506 = vand.u32 %v7505, 4294901760
    %7507 = vmatpush1.msra.mxu0 %v7506
    %7508 = vmatprep.subr.mxu0 0.0
    %7509 = vmatpush1.msra.mxu0 0.0
    %7510 = vmatprep.subr.mxu0 0.0
    %7511 = vmatpush1.msra.mxu0 0.0
    %7512 = vmatprep.subr.mxu0 0.0
    %7513 = vmatpush1.msra.mxu0 0.0
    %7514 = vmatprep.subr.mxu0 0.0
    %7515 = vmatpush1.msra.mxu0 0.0
    %7516 = vmatprep.subr.mxu0 0.0
    %7517 = vmatpush1.msra.mxu0 0.0
    %7518 = vmatprep.subr.mxu0 0.0
    %7519 = vmatpush1.msra.mxu0 0.0
    %7520 = vmatprep.subr.mxu0 0.0
    %7521 = vmatpush1.msra.mxu0 0.0
    %7522 = vmatprep.subr.mxu0 0.0
    %7523 = vmatpush1.msra.mxu0 0.0
    %7524 = vmatprep.subr.mxu0 0.0
    %7525 = vmatpush1.msra.mxu0 0.0
    %7526 = vmatprep.subr.mxu0 0.0
    %7527 = vmatpush1.msra.mxu0 0.0
    %7528 = vmatprep.subr.mxu0 0.0
    %7529 = vmatpush1.msra.mxu0 0.0
    %7530 = vmatprep.subr.mxu0 0.0
    %7531 = vmatpush1.msra.mxu0 0.0
    %7532 = vmatprep.subr.mxu0 0.0
    %7533 = vmatpush1.msra.mxu0 0.0
    %7534 = vmatprep.subr.mxu0 0.0
    %7535 = vmatpush1.msra.mxu0 0.0
    %7536 = vmatprep.subr.mxu0 0.0
    %7537 = vmatpush1.msra.mxu0 0.0
    %7538 = vmatprep.subr.mxu0 0.0
    %7539 = vmatpush1.msra.mxu0 0.0
    %7540 = vmatprep.subr.mxu0 0.0
    %7541 = vmatpush1.msra.mxu0 0.0
    %7542 = vmatprep.subr.mxu0 0.0
    %7543 = vmatpush1.msra.mxu0 0.0
    %7544 = vmatprep.subr.mxu0 0.0
    %7545 = vmatpush1.msra.mxu0 0.0
    %7546 = vmatprep.subr.mxu0 0.0
    %7547 = vmatpush1.msra.mxu0 0.0
    %7548 = vmatprep.subr.mxu0 0.0
    %7549 = vmatpush1.msra.mxu0 0.0
    %7550 = vmatprep.subr.mxu0 0.0
    %7551 = vmatpush1.msra.mxu0 0.0
    %7552 = vmatprep.subr.mxu0 0.0
    %7553 = vmatpush1.msra.mxu0 0.0
    %7554 = vmatprep.subr.mxu0 0.0
    %7555 = vmatpush1.msra.mxu0 0.0
    %7556 = vmatprep.subr.mxu0 0.0
    %7557 = vmatpush1.msra.mxu0 0.0
    %7558 = vmatprep.subr.mxu0 0.0
    %7559 = vmatpush1.msra.mxu0 0.0
    %7560 = vmatprep.subr.mxu0 0.0
    %7561 = vmatpush1.msra.mxu0 0.0
    %7562 = vmatprep.subr.mxu0 0.0
    %7563 = vmatpush1.msra.mxu0 0.0
    %7564 = vmatprep.subr.mxu0 0.0
    %7565 = vmatpush1.msra.mxu0 0.0
    %7566 = vmatprep.subr.mxu0 0.0
    %7567 = vmatpush1.msra.mxu0 0.0
    %7568 = vmatprep.subr.mxu0 0.0
    %7569 = vmatpush1.msra.mxu0 0.0
    %7570 = vmatprep.mubr.f32.mxu0 0.0
    %v7571 = vand.u32 %v7423, 4294901760
    %7572 = vmatmul.mubr.f32.gmra.mrb[0].mxu0 %v7571
    %v7573 = vpop.f32.mrb[0].mxu0
    %v7574 = vadd.f32 %v7498, %v7573
    %v7575 = vpop.f32.mrb[0].mxu0
    %7576 = vdwg.mxu0
    %7577 = vmatprep.subr.mxu0 0.0
    %v7578 = vand.u32 %v7420, 4294901760
    %v7579 = vsub.f32 %v7420, %v7578
    %7580 = vmatpush1.msra.mxu0 %v7579
    %7581 = vmatprep.subr.mxu0 0.0
    %7582 = vmatpush1.msra.mxu0 0.0
    %7583 = vmatprep.subr.mxu0 0.0
    %7584 = vmatpush1.msra.mxu0 0.0
    %7585 = vmatprep.subr.mxu0 0.0
    %7586 = vmatpush1.msra.mxu0 0.0
    %7587 = vmatprep.subr.mxu0 0.0
    %7588 = vmatpush1.msra.mxu0 0.0
    %7589 = vmatprep.subr.mxu0 0.0
    %7590 = vmatpush1.msra.mxu0 0.0
    %7591 = vmatprep.subr.mxu0 0.0
    %7592 = vmatpush1.msra.mxu0 0.0
    %7593 = vmatprep.subr.mxu0 0.0
    %7594 = vmatpush1.msra.mxu0 0.0
    %7595 = vmatprep.subr.mxu0 0.0
    %7596 = vmatpush1.msra.mxu0 0.0
    %7597 = vmatprep.subr.mxu0 0.0
    %7598 = vmatpush1.msra.mxu0 0.0
    %7599 = vmatprep.subr.mxu0 0.0
    %7600 = vmatpush1.msra.mxu0 0.0
    %7601 = vmatprep.subr.mxu0 0.0
    %7602 = vmatpush1.msra.mxu0 0.0
    %7603 = vmatprep.subr.mxu0 0.0
    %7604 = vmatpush1.msra.mxu0 0.0
    %7605 = vmatprep.subr.mxu0 0.0
    %7606 = vmatpush1.msra.mxu0 0.0
    %7607 = vmatprep.subr.mxu0 0.0
    %7608 = vmatpush1.msra.mxu0 0.0
    %7609 = vmatprep.subr.mxu0 0.0
    %7610 = vmatpush1.msra.mxu0 0.0
    %7611 = vmatprep.subr.mxu0 0.0
    %7612 = vmatpush1.msra.mxu0 0.0
    %7613 = vmatprep.subr.mxu0 0.0
    %7614 = vmatpush1.msra.mxu0 0.0
    %7615 = vmatprep.subr.mxu0 0.0
    %7616 = vmatpush1.msra.mxu0 0.0
    %7617 = vmatprep.subr.mxu0 0.0
    %7618 = vmatpush1.msra.mxu0 0.0
    %7619 = vmatprep.subr.mxu0 0.0
    %7620 = vmatpush1.msra.mxu0 0.0
    %7621 = vmatprep.subr.mxu0 0.0
    %7622 = vmatpush1.msra.mxu0 0.0
    %7623 = vmatprep.subr.mxu0 0.0
    %7624 = vmatpush1.msra.mxu0 0.0
    %7625 = vmatprep.subr.mxu0 0.0
    %7626 = vmatpush1.msra.mxu0 0.0
    %7627 = vmatprep.subr.mxu0 0.0
    %7628 = vmatpush1.msra.mxu0 0.0
    %7629 = vmatprep.subr.mxu0 0.0
    %7630 = vmatpush1.msra.mxu0 0.0
    %7631 = vmatprep.subr.mxu0 0.0
    %7632 = vmatpush1.msra.mxu0 0.0
    %7633 = vmatprep.subr.mxu0 0.0
    %7634 = vmatpush1.msra.mxu0 0.0
    %7635 = vmatprep.subr.mxu0 0.0
    %7636 = vmatpush1.msra.mxu0 0.0
    %7637 = vmatprep.subr.mxu0 0.0
    %7638 = vmatpush1.msra.mxu0 0.0
    %7639 = vmatprep.subr.mxu0 0.0
    %7640 = vmatpush1.msra.mxu0 0.0
    %7641 = vmatprep.subr.mxu0 0.0
    %7642 = vmatpush1.msra.mxu0 0.0
    %7643 = vmatprep.mubr.f32.mxu0 0.0
    %v7644 = vand.u32 %v7423, 4294901760
    %v7645 = vsub.f32 %v7423, %v7644
    %7646 = vmatmul.mubr.f32.gmra.mrb[0].mxu0 %v7645
    %v7647 = vpop.f32.mrb[0].mxu0
    %v7648 = vadd.f32 %v7574, %v7647
    %v7649 = vpop.f32.mrb[0].mxu0
    %7650 = vdwg.mxu0
    %7651 = vmatprep.subr.mxu0 0.0
    %v7652 = vand.u32 %v7420, 4294901760
    %7653 = vmatpush1.msra.mxu0 %v7652
    %7654 = vmatprep.subr.mxu0 0.0
    %7655 = vmatpush1.msra.mxu0 0.0
    %7656 = vmatprep.subr.mxu0 0.0
    %7657 = vmatpush1.msra.mxu0 0.0
    %7658 = vmatprep.subr.mxu0 0.0
    %7659 = vmatpush1.msra.mxu0 0.0
    %7660 = vmatprep.subr.mxu0 0.0
    %7661 = vmatpush1.msra.mxu0 0.0
    %7662 = vmatprep.subr.mxu0 0.0
    %7663 = vmatpush1.msra.mxu0 0.0
    %7664 = vmatprep.subr.mxu0 0.0
    %7665 = vmatpush1.msra.mxu0 0.0
    %7666 = vmatprep.subr.mxu0 0.0
    %7667 = vmatpush1.msra.mxu0 0.0
    %7668 = vmatprep.subr.mxu0 0.0
    %7669 = vmatpush1.msra.mxu0 0.0
    %7670 = vmatprep.subr.mxu0 0.0
    %7671 = vmatpush1.msra.mxu0 0.0
    %7672 = vmatprep.subr.mxu0 0.0
    %7673 = vmatpush1.msra.mxu0 0.0
    %7674 = vmatprep.subr.mxu0 0.0
    %7675 = vmatpush1.msra.mxu0 0.0
    %7676 = vmatprep.subr.mxu0 0.0
    %7677 = vmatpush1.msra.mxu0 0.0
    %7678 = vmatprep.subr.mxu0 0.0
    %7679 = vmatpush1.msra.mxu0 0.0
    %7680 = vmatprep.subr.mxu0 0.0
    %7681 = vmatpush1.msra.mxu0 0.0
    %7682 = vmatprep.subr.mxu0 0.0
    %7683 = vmatpush1.msra.mxu0 0.0
    %7684 = vmatprep.subr.mxu0 0.0
    %7685 = vmatpush1.msra.mxu0 0.0
    %7686 = vmatprep.subr.mxu0 0.0
    %7687 = vmatpush1.msra.mxu0 0.0
    %7688 = vmatprep.subr.mxu0 0.0
    %7689 = vmatpush1.msra.mxu0 0.0
    %7690 = vmatprep.subr.mxu0 0.0
    %7691 = vmatpush1.msra.mxu0 0.0
    %7692 = vmatprep.subr.mxu0 0.0
    %7693 = vmatpush1.msra.mxu0 0.0
    %7694 = vmatprep.subr.mxu0 0.0
    %7695 = vmatpush1.msra.mxu0 0.0
    %7696 = vmatprep.subr.mxu0 0.0
    %7697 = vmatpush1.msra.mxu0 0.0
    %7698 = vmatprep.subr.mxu0 0.0
    %7699 = vmatpush1.msra.mxu0 0.0
    %7700 = vmatprep.subr.mxu0 0.0
    %7701 = vmatpush1.msra.mxu0 0.0
    %7702 = vmatprep.subr.mxu0 0.0
    %7703 = vmatpush1.msra.mxu0 0.0
    %7704 = vmatprep.subr.mxu0 0.0
    %7705 = vmatpush1.msra.mxu0 0.0
    %7706 = vmatprep.subr.mxu0 0.0
    %7707 = vmatpush1.msra.mxu0 0.0
    %7708 = vmatprep.subr.mxu0 0.0
    %7709 = vmatpush1.msra.mxu0 0.0
    %7710 = vmatprep.subr.mxu0 0.0
    %7711 = vmatpush1.msra.mxu0 0.0
    %7712 = vmatprep.subr.mxu0 0.0
    %7713 = vmatpush1.msra.mxu0 0.0
    %7714 = vmatprep.subr.mxu0 0.0
    %7715 = vmatpush1.msra.mxu0 0.0
    %7716 = vmatprep.mubr.f32.mxu0 0.0
    %v7717 = vand.u32 %v7423, 4294901760
    %v7718 = vsub.f32 %v7423, %v7717
    %v7719 = vand.u32 %v7718, 4294901760
    %7720 = vmatmul.mubr.f32.gmra.mrb[0].mxu0 %v7719
    %v7721 = vpop.f32.mrb[0].mxu0
    %v7722 = vadd.f32 %v7648, %v7721
    %v7723 = vpop.f32.mrb[0].mxu0
    %7724 = vdwg.mxu0
    %7725 = vmatprep.subr.mxu0 0.0
    %v7726 = vand.u32 %v7420, 4294901760
    %v7727 = vsub.f32 %v7420, %v7726
    %v7728 = vand.u32 %v7727, 4294901760
    %7729 = vmatpush1.msra.mxu0 %v7728
    %7730 = vmatprep.subr.mxu0 0.0
    %7731 = vmatpush1.msra.mxu0 0.0
    %7732 = vmatprep.subr.mxu0 0.0
    %7733 = vmatpush1.msra.mxu0 0.0
    %7734 = vmatprep.subr.mxu0 0.0
    %7735 = vmatpush1.msra.mxu0 0.0
    %7736 = vmatprep.subr.mxu0 0.0
    %7737 = vmatpush1.msra.mxu0 0.0
    %7738 = vmatprep.subr.mxu0 0.0
    %7739 = vmatpush1.msra.mxu0 0.0
    %7740 = vmatprep.subr.mxu0 0.0
    %7741 = vmatpush1.msra.mxu0 0.0
    %7742 = vmatprep.subr.mxu0 0.0
    %7743 = vmatpush1.msra.mxu0 0.0
    %7744 = vmatprep.subr.mxu0 0.0
    %7745 = vmatpush1.msra.mxu0 0.0
    %7746 = vmatprep.subr.mxu0 0.0
    %7747 = vmatpush1.msra.mxu0 0.0
    %7748 = vmatprep.subr.mxu0 0.0
    %7749 = vmatpush1.msra.mxu0 0.0
    %7750 = vmatprep.subr.mxu0 0.0
    %7751 = vmatpush1.msra.mxu0 0.0
    %7752 = vmatprep.subr.mxu0 0.0
    %7753 = vmatpush1.msra.mxu0 0.0
    %7754 = vmatprep.subr.mxu0 0.0
    %7755 = vmatpush1.msra.mxu0 0.0
    %7756 = vmatprep.subr.mxu0 0.0
    %7757 = vmatpush1.msra.mxu0 0.0
    %7758 = vmatprep.subr.mxu0 0.0
    %7759 = vmatpush1.msra.mxu0 0.0
    %7760 = vmatprep.subr.mxu0 0.0
    %7761 = vmatpush1.msra.mxu0 0.0
    %7762 = vmatprep.subr.mxu0 0.0
    %7763 = vmatpush1.msra.mxu0 0.0
    %7764 = vmatprep.subr.mxu0 0.0
    %7765 = vmatpush1.msra.mxu0 0.0
    %7766 = vmatprep.subr.mxu0 0.0
    %7767 = vmatpush1.msra.mxu0 0.0
    %7768 = vmatprep.subr.mxu0 0.0
    %7769 = vmatpush1.msra.mxu0 0.0
    %7770 = vmatprep.subr.mxu0 0.0
    %7771 = vmatpush1.msra.mxu0 0.0
    %7772 = vmatprep.subr.mxu0 0.0
    %7773 = vmatpush1.msra.mxu0 0.0
    %7774 = vmatprep.subr.mxu0 0.0
    %7775 = vmatpush1.msra.mxu0 0.0
    %7776 = vmatprep.subr.mxu0 0.0
    %7777 = vmatpush1.msra.mxu0 0.0
    %7778 = vmatprep.subr.mxu0 0.0
    %7779 = vmatpush1.msra.mxu0 0.0
    %7780 = vmatprep.subr.mxu0 0.0
    %7781 = vmatpush1.msra.mxu0 0.0
    %7782 = vmatprep.subr.mxu0 0.0
    %7783 = vmatpush1.msra.mxu0 0.0
    %7784 = vmatprep.subr.mxu0 0.0
    %7785 = vmatpush1.msra.mxu0 0.0
    %7786 = vmatprep.subr.mxu0 0.0
    %7787 = vmatpush1.msra.mxu0 0.0
    %7788 = vmatprep.subr.mxu0 0.0
    %7789 = vmatpush1.msra.mxu0 0.0
    %7790 = vmatprep.subr.mxu0 0.0
    %7791 = vmatpush1.msra.mxu0 0.0
    %7792 = vmatprep.mubr.f32.mxu0 0.0
    %v7793 = vand.u32 %v7423, 4294901760
    %7794 = vmatmul.mubr.f32.gmra.mrb[0].mxu0 %v7793
    %v7795 = vpop.f32.mrb[0].mxu0
    %v7796 = vadd.f32 %v7722, %v7795
    %v7797 = vpop.f32.mrb[0].mxu0
    %7798 = vdwg.mxu0
    %7799 = vmatprep.subr.mxu0 0.0
    %v7800 = vand.u32 %v7420, 4294901760
    %7801 = vmatpush1.msra.mxu0 %v7800
    %7802 = vmatprep.subr.mxu0 0.0
    %7803 = vmatpush1.msra.mxu0 0.0
    %7804 = vmatprep.subr.mxu0 0.0
    %7805 = vmatpush1.msra.mxu0 0.0
    %7806 = vmatprep.subr.mxu0 0.0
    %7807 = vmatpush1.msra.mxu0 0.0
    %7808 = vmatprep.subr.mxu0 0.0
    %7809 = vmatpush1.msra.mxu0 0.0
    %7810 = vmatprep.subr.mxu0 0.0
    %7811 = vmatpush1.msra.mxu0 0.0
    %7812 = vmatprep.subr.mxu0 0.0
    %7813 = vmatpush1.msra.mxu0 0.0
    %7814 = vmatprep.subr.mxu0 0.0
    %7815 = vmatpush1.msra.mxu0 0.0
    %7816 = vmatprep.subr.mxu0 0.0
    %7817 = vmatpush1.msra.mxu0 0.0
    %7818 = vmatprep.subr.mxu0 0.0
    %7819 = vmatpush1.msra.mxu0 0.0
    %7820 = vmatprep.subr.mxu0 0.0
    %7821 = vmatpush1.msra.mxu0 0.0
    %7822 = vmatprep.subr.mxu0 0.0
    %7823 = vmatpush1.msra.mxu0 0.0
    %7824 = vmatprep.subr.mxu0 0.0
    %7825 = vmatpush1.msra.mxu0 0.0
    %7826 = vmatprep.subr.mxu0 0.0
    %7827 = vmatpush1.msra.mxu0 0.0
    %7828 = vmatprep.subr.mxu0 0.0
    %7829 = vmatpush1.msra.mxu0 0.0
    %7830 = vmatprep.subr.mxu0 0.0
    %7831 = vmatpush1.msra.mxu0 0.0
    %7832 = vmatprep.subr.mxu0 0.0
    %7833 = vmatpush1.msra.mxu0 0.0
    %7834 = vmatprep.subr.mxu0 0.0
    %7835 = vmatpush1.msra.mxu0 0.0
    %7836 = vmatprep.subr.mxu0 0.0
    %7837 = vmatpush1.msra.mxu0 0.0
    %7838 = vmatprep.subr.mxu0 0.0
    %7839 = vmatpush1.msra.mxu0 0.0
    %7840 = vmatprep.subr.mxu0 0.0
    %7841 = vmatpush1.msra.mxu0 0.0
    %7842 = vmatprep.subr.mxu0 0.0
    %7843 = vmatpush1.msra.mxu0 0.0
    %7844 = vmatprep.subr.mxu0 0.0
    %7845 = vmatpush1.msra.mxu0 0.0
    %7846 = vmatprep.subr.mxu0 0.0
    %7847 = vmatpush1.msra.mxu0 0.0
    %7848 = vmatprep.subr.mxu0 0.0
    %7849 = vmatpush1.msra.mxu0 0.0
    %7850 = vmatprep.subr.mxu0 0.0
    %7851 = vmatpush1.msra.mxu0 0.0
    %7852 = vmatprep.subr.mxu0 0.0
    %7853 = vmatpush1.msra.mxu0 0.0
    %7854 = vmatprep.subr.mxu0 0.0
    %7855 = vmatpush1.msra.mxu0 0.0
    %7856 = vmatprep.subr.mxu0 0.0
    %7857 = vmatpush1.msra.mxu0 0.0
    %7858 = vmatprep.subr.mxu0 0.0
    %7859 = vmatpush1.msra.mxu0 0.0
    %7860 = vmatprep.subr.mxu0 0.0
    %7861 = vmatpush1.msra.mxu0 0.0
    %7862 = vmatprep.subr.mxu0 0.0
    %7863 = vmatpush1.msra.mxu0 0.0
    %7864 = vmatprep.mubr.f32.mxu0 0.0
    %v7865 = vand.u32 %v7423, 4294901760
    %7866 = vmatmul.mubr.f32.gmra.mrb[0].mxu0 %v7865
    %v7867 = vpop.f32.mrb[0].mxu0
    %v7868 = vadd.f32 %v7796, %v7867
    %v7869 = vpop.f32.mrb[0].mxu0
    %7870 = vdwg.mxu0
    %7871 = vrot.lane.b32.xlu0 %v6033, 112
    %v7872 = vpop.permute.xlu0 %7871
    %7873 = vrot.lane.b32.xlu0 %v6033, 80
    %v7874 = vpop.permute.xlu0 %7873
    %v7875 = vsel %vm1190, %v7872, 0
    %v7877 = vsel %vm1190, %v7874, 0
    %7879 = vmatprep.subr.mxu0 0.0
    %v7880 = vand.u32 %v7877, 4294901760
    %7881 = vmatpush1.xpose.msra.mxu0 %v7880
    %7882 = vmatprep.subr.mxu0 0.0
    %7883 = vmatpush1.xpose.msra.mxu0 0.0
    %7884 = vmatprep.subr.mxu0 0.0
    %7885 = vmatpush1.xpose.msra.mxu0 0.0
    %7886 = vmatprep.subr.mxu0 0.0
    %7887 = vmatpush1.xpose.msra.mxu0 0.0
    %7888 = vmatprep.subr.mxu0 0.0
    %7889 = vmatpush1.xpose.msra.mxu0 0.0
    %7890 = vmatprep.subr.mxu0 0.0
    %7891 = vmatpush1.xpose.msra.mxu0 0.0
    %7892 = vmatprep.subr.mxu0 0.0
    %7893 = vmatpush1.xpose.msra.mxu0 0.0
    %7894 = vmatprep.subr.mxu0 0.0
    %7895 = vmatpush1.xpose.msra.mxu0 0.0
    %7896 = vmatprep.subr.mxu0 0.0
    %7897 = vmatpush1.xpose.msra.mxu0 0.0
    %7898 = vmatprep.subr.mxu0 0.0
    %7899 = vmatpush1.xpose.msra.mxu0 0.0
    %7900 = vmatprep.subr.mxu0 0.0
    %7901 = vmatpush1.xpose.msra.mxu0 0.0
    %7902 = vmatprep.subr.mxu0 0.0
    %7903 = vmatpush1.xpose.msra.mxu0 0.0
    %7904 = vmatprep.subr.mxu0 0.0
    %7905 = vmatpush1.xpose.msra.mxu0 0.0
    %7906 = vmatprep.subr.mxu0 0.0
    %7907 = vmatpush1.xpose.msra.mxu0 0.0
    %7908 = vmatprep.subr.mxu0 0.0
    %7909 = vmatpush1.xpose.msra.mxu0 0.0
    %7910 = vmatprep.subr.mxu0 0.0
    %7911 = vmatpush1.xpose.msra.mxu0 0.0
    %7912 = vmatprep.subr.mxu0 0.0
    %7913 = vmatpush1.xpose.msra.mxu0 0.0
    %7914 = vmatprep.subr.mxu0 0.0
    %7915 = vmatpush1.xpose.msra.mxu0 0.0
    %7916 = vmatprep.subr.mxu0 0.0
    %7917 = vmatpush1.xpose.msra.mxu0 0.0
    %7918 = vmatprep.subr.mxu0 0.0
    %7919 = vmatpush1.xpose.msra.mxu0 0.0
    %7920 = vmatprep.subr.mxu0 0.0
    %7921 = vmatpush1.xpose.msra.mxu0 0.0
    %7922 = vmatprep.subr.mxu0 0.0
    %7923 = vmatpush1.xpose.msra.mxu0 0.0
    %7924 = vmatprep.subr.mxu0 0.0
    %7925 = vmatpush1.xpose.msra.mxu0 0.0
    %7926 = vmatprep.subr.mxu0 0.0
    %7927 = vmatpush1.xpose.msra.mxu0 0.0
    %7928 = vmatprep.subr.mxu0 0.0
    %7929 = vmatpush1.xpose.msra.mxu0 0.0
    %7930 = vmatprep.subr.mxu0 0.0
    %7931 = vmatpush1.xpose.msra.mxu0 0.0
    %7932 = vmatprep.subr.mxu0 0.0
    %7933 = vmatpush1.xpose.msra.mxu0 0.0
    %7934 = vmatprep.subr.mxu0 0.0
    %7935 = vmatpush1.xpose.msra.mxu0 0.0
    %7936 = vmatprep.subr.mxu0 0.0
    %7937 = vmatpush1.xpose.msra.mxu0 0.0
    %7938 = vmatprep.subr.mxu0 0.0
    %7939 = vmatpush1.xpose.msra.mxu0 0.0
    %7940 = vmatprep.subr.mxu0 0.0
    %7941 = vmatpush1.xpose.msra.mxu0 0.0
    %7942 = vmatprep.subr.mxu0 0.0
    %7943 = vmatpush1.xpose.msra.mxu0 0.0
    %7944 = vmatprep.mubr.f32.mxu0 0.0
    %v7945 = vand.u32 %v7875, 4294901760
    %v7946 = vsub.f32 %v7875, %v7945
    %v7947 = vand.u32 %v7946, 4294901760
    %v7948 = vsub.f32 %v7946, %v7947
    %v7949 = vand.u32 %v7948, 4294901760
    %7950 = vmatmul.mubr.f32.gmra.mrb[0].mxu0 %v7949
    %v7951 = vpop.f32.mrb[0].mxu0
    %v7952 = vadd.f32 0.0, %v7951
    %v7953 = vpop.f32.mrb[0].mxu0
    %7954 = vdwg.mxu0
    %7955 = vmatprep.subr.mxu0 0.0
    %v7956 = vand.u32 %v7877, 4294901760
    %v7957 = vsub.f32 %v7877, %v7956
    %v7958 = vand.u32 %v7957, 4294901760
    %v7959 = vsub.f32 %v7957, %v7958
    %v7960 = vand.u32 %v7959, 4294901760
    %7961 = vmatpush1.xpose.msra.mxu0 %v7960
    %7962 = vmatprep.subr.mxu0 0.0
    %7963 = vmatpush1.xpose.msra.mxu0 0.0
    %7964 = vmatprep.subr.mxu0 0.0
    %7965 = vmatpush1.xpose.msra.mxu0 0.0
    %7966 = vmatprep.subr.mxu0 0.0
    %7967 = vmatpush1.xpose.msra.mxu0 0.0
    %7968 = vmatprep.subr.mxu0 0.0
    %7969 = vmatpush1.xpose.msra.mxu0 0.0
    %7970 = vmatprep.subr.mxu0 0.0
    %7971 = vmatpush1.xpose.msra.mxu0 0.0
    %7972 = vmatprep.subr.mxu0 0.0
    %7973 = vmatpush1.xpose.msra.mxu0 0.0
    %7974 = vmatprep.subr.mxu0 0.0
    %7975 = vmatpush1.xpose.msra.mxu0 0.0
    %7976 = vmatprep.subr.mxu0 0.0
    %7977 = vmatpush1.xpose.msra.mxu0 0.0
    %7978 = vmatprep.subr.mxu0 0.0
    %7979 = vmatpush1.xpose.msra.mxu0 0.0
    %7980 = vmatprep.subr.mxu0 0.0
    %7981 = vmatpush1.xpose.msra.mxu0 0.0
    %7982 = vmatprep.subr.mxu0 0.0
    %7983 = vmatpush1.xpose.msra.mxu0 0.0
    %7984 = vmatprep.subr.mxu0 0.0
    %7985 = vmatpush1.xpose.msra.mxu0 0.0
    %7986 = vmatprep.subr.mxu0 0.0
    %7987 = vmatpush1.xpose.msra.mxu0 0.0
    %7988 = vmatprep.subr.mxu0 0.0
    %7989 = vmatpush1.xpose.msra.mxu0 0.0
    %7990 = vmatprep.subr.mxu0 0.0
    %7991 = vmatpush1.xpose.msra.mxu0 0.0
    %7992 = vmatprep.subr.mxu0 0.0
    %7993 = vmatpush1.xpose.msra.mxu0 0.0
    %7994 = vmatprep.subr.mxu0 0.0
    %7995 = vmatpush1.xpose.msra.mxu0 0.0
    %7996 = vmatprep.subr.mxu0 0.0
    %7997 = vmatpush1.xpose.msra.mxu0 0.0
    %7998 = vmatprep.subr.mxu0 0.0
    %7999 = vmatpush1.xpose.msra.mxu0 0.0
    %8000 = vmatprep.subr.mxu0 0.0
    %8001 = vmatpush1.xpose.msra.mxu0 0.0
    %8002 = vmatprep.subr.mxu0 0.0
    %8003 = vmatpush1.xpose.msra.mxu0 0.0
    %8004 = vmatprep.subr.mxu0 0.0
    %8005 = vmatpush1.xpose.msra.mxu0 0.0
    %8006 = vmatprep.subr.mxu0 0.0
    %8007 = vmatpush1.xpose.msra.mxu0 0.0
    %8008 = vmatprep.subr.mxu0 0.0
    %8009 = vmatpush1.xpose.msra.mxu0 0.0
    %8010 = vmatprep.subr.mxu0 0.0
    %8011 = vmatpush1.xpose.msra.mxu0 0.0
    %8012 = vmatprep.subr.mxu0 0.0
    %8013 = vmatpush1.xpose.msra.mxu0 0.0
    %8014 = vmatprep.subr.mxu0 0.0
    %8015 = vmatpush1.xpose.msra.mxu0 0.0
    %8016 = vmatprep.subr.mxu0 0.0
    %8017 = vmatpush1.xpose.msra.mxu0 0.0
    %8018 = vmatprep.subr.mxu0 0.0
    %8019 = vmatpush1.xpose.msra.mxu0 0.0
    %8020 = vmatprep.subr.mxu0 0.0
    %8021 = vmatpush1.xpose.msra.mxu0 0.0
    %8022 = vmatprep.subr.mxu0 0.0
    %8023 = vmatpush1.xpose.msra.mxu0 0.0
    %8024 = vmatprep.mubr.f32.mxu0 0.0
    %v8025 = vand.u32 %v7875, 4294901760
    %8026 = vmatmul.mubr.f32.gmra.mrb[0].mxu0 %v8025
    %v8027 = vpop.f32.mrb[0].mxu0
    %v8028 = vadd.f32 %v7952, %v8027
    %v8029 = vpop.f32.mrb[0].mxu0
    %8030 = vdwg.mxu0
    %8031 = vmatprep.subr.mxu0 0.0
    %v8032 = vand.u32 %v7877, 4294901760
    %v8033 = vsub.f32 %v7877, %v8032
    %8034 = vmatpush1.xpose.msra.mxu0 %v8033
    %8035 = vmatprep.subr.mxu0 0.0
    %8036 = vmatpush1.xpose.msra.mxu0 0.0
    %8037 = vmatprep.subr.mxu0 0.0
    %8038 = vmatpush1.xpose.msra.mxu0 0.0
    %8039 = vmatprep.subr.mxu0 0.0
    %8040 = vmatpush1.xpose.msra.mxu0 0.0
    %8041 = vmatprep.subr.mxu0 0.0
    %8042 = vmatpush1.xpose.msra.mxu0 0.0
    %8043 = vmatprep.subr.mxu0 0.0
    %8044 = vmatpush1.xpose.msra.mxu0 0.0
    %8045 = vmatprep.subr.mxu0 0.0
    %8046 = vmatpush1.xpose.msra.mxu0 0.0
    %8047 = vmatprep.subr.mxu0 0.0
    %8048 = vmatpush1.xpose.msra.mxu0 0.0
    %8049 = vmatprep.subr.mxu0 0.0
    %8050 = vmatpush1.xpose.msra.mxu0 0.0
    %8051 = vmatprep.subr.mxu0 0.0
    %8052 = vmatpush1.xpose.msra.mxu0 0.0
    %8053 = vmatprep.subr.mxu0 0.0
    %8054 = vmatpush1.xpose.msra.mxu0 0.0
    %8055 = vmatprep.subr.mxu0 0.0
    %8056 = vmatpush1.xpose.msra.mxu0 0.0
    %8057 = vmatprep.subr.mxu0 0.0
    %8058 = vmatpush1.xpose.msra.mxu0 0.0
    %8059 = vmatprep.subr.mxu0 0.0
    %8060 = vmatpush1.xpose.msra.mxu0 0.0
    %8061 = vmatprep.subr.mxu0 0.0
    %8062 = vmatpush1.xpose.msra.mxu0 0.0
    %8063 = vmatprep.subr.mxu0 0.0
    %8064 = vmatpush1.xpose.msra.mxu0 0.0
    %8065 = vmatprep.subr.mxu0 0.0
    %8066 = vmatpush1.xpose.msra.mxu0 0.0
    %8067 = vmatprep.subr.mxu0 0.0
    %8068 = vmatpush1.xpose.msra.mxu0 0.0
    %8069 = vmatprep.subr.mxu0 0.0
    %8070 = vmatpush1.xpose.msra.mxu0 0.0
    %8071 = vmatprep.subr.mxu0 0.0
    %8072 = vmatpush1.xpose.msra.mxu0 0.0
    %8073 = vmatprep.subr.mxu0 0.0
    %8074 = vmatpush1.xpose.msra.mxu0 0.0
    %8075 = vmatprep.subr.mxu0 0.0
    %8076 = vmatpush1.xpose.msra.mxu0 0.0
    %8077 = vmatprep.subr.mxu0 0.0
    %8078 = vmatpush1.xpose.msra.mxu0 0.0
    %8079 = vmatprep.subr.mxu0 0.0
    %8080 = vmatpush1.xpose.msra.mxu0 0.0
    %8081 = vmatprep.subr.mxu0 0.0
    %8082 = vmatpush1.xpose.msra.mxu0 0.0
    %8083 = vmatprep.subr.mxu0 0.0
    %8084 = vmatpush1.xpose.msra.mxu0 0.0
    %8085 = vmatprep.subr.mxu0 0.0
    %8086 = vmatpush1.xpose.msra.mxu0 0.0
    %8087 = vmatprep.subr.mxu0 0.0
    %8088 = vmatpush1.xpose.msra.mxu0 0.0
    %8089 = vmatprep.subr.mxu0 0.0
    %8090 = vmatpush1.xpose.msra.mxu0 0.0
    %8091 = vmatprep.subr.mxu0 0.0
    %8092 = vmatpush1.xpose.msra.mxu0 0.0
    %8093 = vmatprep.subr.mxu0 0.0
    %8094 = vmatpush1.xpose.msra.mxu0 0.0
    %8095 = vmatprep.subr.mxu0 0.0
    %8096 = vmatpush1.xpose.msra.mxu0 0.0
    %8097 = vmatprep.mubr.f32.mxu0 0.0
    %v8098 = vand.u32 %v7875, 4294901760
    %v8099 = vsub.f32 %v7875, %v8098
    %8100 = vmatmul.mubr.f32.gmra.mrb[0].mxu0 %v8099
    %v8101 = vpop.f32.mrb[0].mxu0
    %v8102 = vadd.f32 %v8028, %v8101
    %v8103 = vpop.f32.mrb[0].mxu0
    %8104 = vdwg.mxu0
    %8105 = vmatprep.subr.mxu0 0.0
    %v8106 = vand.u32 %v7877, 4294901760
    %8107 = vmatpush1.xpose.msra.mxu0 %v8106
    %8108 = vmatprep.subr.mxu0 0.0
    %8109 = vmatpush1.xpose.msra.mxu0 0.0
    %8110 = vmatprep.subr.mxu0 0.0
    %8111 = vmatpush1.xpose.msra.mxu0 0.0
    %8112 = vmatprep.subr.mxu0 0.0
    %8113 = vmatpush1.xpose.msra.mxu0 0.0
    %8114 = vmatprep.subr.mxu0 0.0
    %8115 = vmatpush1.xpose.msra.mxu0 0.0
    %8116 = vmatprep.subr.mxu0 0.0
    %8117 = vmatpush1.xpose.msra.mxu0 0.0
    %8118 = vmatprep.subr.mxu0 0.0
    %8119 = vmatpush1.xpose.msra.mxu0 0.0
    %8120 = vmatprep.subr.mxu0 0.0
    %8121 = vmatpush1.xpose.msra.mxu0 0.0
    %8122 = vmatprep.subr.mxu0 0.0
    %8123 = vmatpush1.xpose.msra.mxu0 0.0
    %8124 = vmatprep.subr.mxu0 0.0
    %8125 = vmatpush1.xpose.msra.mxu0 0.0
    %8126 = vmatprep.subr.mxu0 0.0
    %8127 = vmatpush1.xpose.msra.mxu0 0.0
    %8128 = vmatprep.subr.mxu0 0.0
    %8129 = vmatpush1.xpose.msra.mxu0 0.0
    %8130 = vmatprep.subr.mxu0 0.0
    %8131 = vmatpush1.xpose.msra.mxu0 0.0
    %8132 = vmatprep.subr.mxu0 0.0
    %8133 = vmatpush1.xpose.msra.mxu0 0.0
    %8134 = vmatprep.subr.mxu0 0.0
    %8135 = vmatpush1.xpose.msra.mxu0 0.0
    %8136 = vmatprep.subr.mxu0 0.0
    %8137 = vmatpush1.xpose.msra.mxu0 0.0
    %8138 = vmatprep.subr.mxu0 0.0
    %8139 = vmatpush1.xpose.msra.mxu0 0.0
    %8140 = vmatprep.subr.mxu0 0.0
    %8141 = vmatpush1.xpose.msra.mxu0 0.0
    %8142 = vmatprep.subr.mxu0 0.0
    %8143 = vmatpush1.xpose.msra.mxu0 0.0
    %8144 = vmatprep.subr.mxu0 0.0
    %8145 = vmatpush1.xpose.msra.mxu0 0.0
    %8146 = vmatprep.subr.mxu0 0.0
    %8147 = vmatpush1.xpose.msra.mxu0 0.0
    %8148 = vmatprep.subr.mxu0 0.0
    %8149 = vmatpush1.xpose.msra.mxu0 0.0
    %8150 = vmatprep.subr.mxu0 0.0
    %8151 = vmatpush1.xpose.msra.mxu0 0.0
    %8152 = vmatprep.subr.mxu0 0.0
    %8153 = vmatpush1.xpose.msra.mxu0 0.0
    %8154 = vmatprep.subr.mxu0 0.0
    %8155 = vmatpush1.xpose.msra.mxu0 0.0
    %8156 = vmatprep.subr.mxu0 0.0
    %8157 = vmatpush1.xpose.msra.mxu0 0.0
    %8158 = vmatprep.subr.mxu0 0.0
    %8159 = vmatpush1.xpose.msra.mxu0 0.0
    %8160 = vmatprep.subr.mxu0 0.0
    %8161 = vmatpush1.xpose.msra.mxu0 0.0
    %8162 = vmatprep.subr.mxu0 0.0
    %8163 = vmatpush1.xpose.msra.mxu0 0.0
    %8164 = vmatprep.subr.mxu0 0.0
    %8165 = vmatpush1.xpose.msra.mxu0 0.0
    %8166 = vmatprep.subr.mxu0 0.0
    %8167 = vmatpush1.xpose.msra.mxu0 0.0
    %8168 = vmatprep.subr.mxu0 0.0
    %8169 = vmatpush1.xpose.msra.mxu0 0.0
    %8170 = vmatprep.mubr.f32.mxu0 0.0
    %v8171 = vand.u32 %v7875, 4294901760
    %v8172 = vsub.f32 %v7875, %v8171
    %v8173 = vand.u32 %v8172, 4294901760
    %8174 = vmatmul.mubr.f32.gmra.mrb[0].mxu0 %v8173
    %v8175 = vpop.f32.mrb[0].mxu0
    %v8176 = vadd.f32 %v8102, %v8175
    %v8177 = vpop.f32.mrb[0].mxu0
    %8178 = vdwg.mxu0
    %8179 = vmatprep.subr.mxu0 0.0
    %v8180 = vand.u32 %v7877, 4294901760
    %v8181 = vsub.f32 %v7877, %v8180
    %v8182 = vand.u32 %v8181, 4294901760
    %8183 = vmatpush1.xpose.msra.mxu0 %v8182
    %8184 = vmatprep.subr.mxu0 0.0
    %8185 = vmatpush1.xpose.msra.mxu0 0.0
    %8186 = vmatprep.subr.mxu0 0.0
    %8187 = vmatpush1.xpose.msra.mxu0 0.0
    %8188 = vmatprep.subr.mxu0 0.0
    %8189 = vmatpush1.xpose.msra.mxu0 0.0
    %8190 = vmatprep.subr.mxu0 0.0
    %8191 = vmatpush1.xpose.msra.mxu0 0.0
    %8192 = vmatprep.subr.mxu0 0.0
    %8193 = vmatpush1.xpose.msra.mxu0 0.0
    %8194 = vmatprep.subr.mxu0 0.0
    %8195 = vmatpush1.xpose.msra.mxu0 0.0
    %8196 = vmatprep.subr.mxu0 0.0
    %8197 = vmatpush1.xpose.msra.mxu0 0.0
    %8198 = vmatprep.subr.mxu0 0.0
    %8199 = vmatpush1.xpose.msra.mxu0 0.0
    %8200 = vmatprep.subr.mxu0 0.0
    %8201 = vmatpush1.xpose.msra.mxu0 0.0
    %8202 = vmatprep.subr.mxu0 0.0
    %8203 = vmatpush1.xpose.msra.mxu0 0.0
    %8204 = vmatprep.subr.mxu0 0.0
    %8205 = vmatpush1.xpose.msra.mxu0 0.0
    %8206 = vmatprep.subr.mxu0 0.0
    %8207 = vmatpush1.xpose.msra.mxu0 0.0
    %8208 = vmatprep.subr.mxu0 0.0
    %8209 = vmatpush1.xpose.msra.mxu0 0.0
    %8210 = vmatprep.subr.mxu0 0.0
    %8211 = vmatpush1.xpose.msra.mxu0 0.0
    %8212 = vmatprep.subr.mxu0 0.0
    %8213 = vmatpush1.xpose.msra.mxu0 0.0
    %8214 = vmatprep.subr.mxu0 0.0
    %8215 = vmatpush1.xpose.msra.mxu0 0.0
    %8216 = vmatprep.subr.mxu0 0.0
    %8217 = vmatpush1.xpose.msra.mxu0 0.0
    %8218 = vmatprep.subr.mxu0 0.0
    %8219 = vmatpush1.xpose.msra.mxu0 0.0
    %8220 = vmatprep.subr.mxu0 0.0
    %8221 = vmatpush1.xpose.msra.mxu0 0.0
    %8222 = vmatprep.subr.mxu0 0.0
    %8223 = vmatpush1.xpose.msra.mxu0 0.0
    %8224 = vmatprep.subr.mxu0 0.0
    %8225 = vmatpush1.xpose.msra.mxu0 0.0
    %8226 = vmatprep.subr.mxu0 0.0
    %8227 = vmatpush1.xpose.msra.mxu0 0.0
    %8228 = vmatprep.subr.mxu0 0.0
    %8229 = vmatpush1.xpose.msra.mxu0 0.0
    %8230 = vmatprep.subr.mxu0 0.0
    %8231 = vmatpush1.xpose.msra.mxu0 0.0
    %8232 = vmatprep.subr.mxu0 0.0
    %8233 = vmatpush1.xpose.msra.mxu0 0.0
    %8234 = vmatprep.subr.mxu0 0.0
    %8235 = vmatpush1.xpose.msra.mxu0 0.0
    %8236 = vmatprep.subr.mxu0 0.0
    %8237 = vmatpush1.xpose.msra.mxu0 0.0
    %8238 = vmatprep.subr.mxu0 0.0
    %8239 = vmatpush1.xpose.msra.mxu0 0.0
    %8240 = vmatprep.subr.mxu0 0.0
    %8241 = vmatpush1.xpose.msra.mxu0 0.0
    %8242 = vmatprep.subr.mxu0 0.0
    %8243 = vmatpush1.xpose.msra.mxu0 0.0
    %8244 = vmatprep.subr.mxu0 0.0
    %8245 = vmatpush1.xpose.msra.mxu0 0.0
    %8246 = vmatprep.mubr.f32.mxu0 0.0
    %v8247 = vand.u32 %v7875, 4294901760
    %8248 = vmatmul.mubr.f32.gmra.mrb[0].mxu0 %v8247
    %v8249 = vpop.f32.mrb[0].mxu0
    %v8250 = vadd.f32 %v8176, %v8249
    %v8251 = vpop.f32.mrb[0].mxu0
    %8252 = vdwg.mxu0
    %8253 = vmatprep.subr.mxu0 0.0
    %v8254 = vand.u32 %v7877, 4294901760
    %8255 = vmatpush1.xpose.msra.mxu0 %v8254
    %8256 = vmatprep.subr.mxu0 0.0
    %8257 = vmatpush1.xpose.msra.mxu0 0.0
    %8258 = vmatprep.subr.mxu0 0.0
    %8259 = vmatpush1.xpose.msra.mxu0 0.0
    %8260 = vmatprep.subr.mxu0 0.0
    %8261 = vmatpush1.xpose.msra.mxu0 0.0
    %8262 = vmatprep.subr.mxu0 0.0
    %8263 = vmatpush1.xpose.msra.mxu0 0.0
    %8264 = vmatprep.subr.mxu0 0.0
    %8265 = vmatpush1.xpose.msra.mxu0 0.0
    %8266 = vmatprep.subr.mxu0 0.0
    %8267 = vmatpush1.xpose.msra.mxu0 0.0
    %8268 = vmatprep.subr.mxu0 0.0
    %8269 = vmatpush1.xpose.msra.mxu0 0.0
    %8270 = vmatprep.subr.mxu0 0.0
    %8271 = vmatpush1.xpose.msra.mxu0 0.0
    %8272 = vmatprep.subr.mxu0 0.0
    %8273 = vmatpush1.xpose.msra.mxu0 0.0
    %8274 = vmatprep.subr.mxu0 0.0
    %8275 = vmatpush1.xpose.msra.mxu0 0.0
    %8276 = vmatprep.subr.mxu0 0.0
    %8277 = vmatpush1.xpose.msra.mxu0 0.0
    %8278 = vmatprep.subr.mxu0 0.0
    %8279 = vmatpush1.xpose.msra.mxu0 0.0
    %8280 = vmatprep.subr.mxu0 0.0
    %8281 = vmatpush1.xpose.msra.mxu0 0.0
    %8282 = vmatprep.subr.mxu0 0.0
    %8283 = vmatpush1.xpose.msra.mxu0 0.0
    %8284 = vmatprep.subr.mxu0 0.0
    %8285 = vmatpush1.xpose.msra.mxu0 0.0
    %8286 = vmatprep.subr.mxu0 0.0
    %8287 = vmatpush1.xpose.msra.mxu0 0.0
    %8288 = vmatprep.subr.mxu0 0.0
    %8289 = vmatpush1.xpose.msra.mxu0 0.0
    %8290 = vmatprep.subr.mxu0 0.0
    %8291 = vmatpush1.xpose.msra.mxu0 0.0
    %8292 = vmatprep.subr.mxu0 0.0
    %8293 = vmatpush1.xpose.msra.mxu0 0.0
    %8294 = vmatprep.subr.mxu0 0.0
    %8295 = vmatpush1.xpose.msra.mxu0 0.0
    %8296 = vmatprep.subr.mxu0 0.0
    %8297 = vmatpush1.xpose.msra.mxu0 0.0
    %8298 = vmatprep.subr.mxu0 0.0
    %8299 = vmatpush1.xpose.msra.mxu0 0.0
    %8300 = vmatprep.subr.mxu0 0.0
    %8301 = vmatpush1.xpose.msra.mxu0 0.0
    %8302 = vmatprep.subr.mxu0 0.0
    %8303 = vmatpush1.xpose.msra.mxu0 0.0
    %8304 = vmatprep.subr.mxu0 0.0
    %8305 = vmatpush1.xpose.msra.mxu0 0.0
    %8306 = vmatprep.subr.mxu0 0.0
    %8307 = vmatpush1.xpose.msra.mxu0 0.0
    %8308 = vmatprep.subr.mxu0 0.0
    %8309 = vmatpush1.xpose.msra.mxu0 0.0
    %8310 = vmatprep.subr.mxu0 0.0
    %8311 = vmatpush1.xpose.msra.mxu0 0.0
    %8312 = vmatprep.subr.mxu0 0.0
    %8313 = vmatpush1.xpose.msra.mxu0 0.0
    %8314 = vmatprep.subr.mxu0 0.0
    %8315 = vmatpush1.xpose.msra.mxu0 0.0
    %8316 = vmatprep.subr.mxu0 0.0
    %8317 = vmatpush1.xpose.msra.mxu0 0.0
    %8318 = vmatprep.mubr.f32.mxu0 0.0
    %v8319 = vand.u32 %v7875, 4294901760
    %8320 = vmatmul.mubr.f32.gmra.mrb[0].mxu0 %v8319
    %v8321 = vpop.f32.mrb[0].mxu0
    %v8322 = vadd.f32 %v8250, %v8321
    %v8323 = vpop.f32.mrb[0].mxu0
    %8324 = vdwg.mxu0
    %v8325 = vmul.f32 %v8322, 0.35355338
    %v8326 = vsel %vm1190, %v8325, -inf
    %8327 = vmax.xlane.f32.xlu0 %v8326
    %v8328 = vpop.xlane.xlu0 %8327
    %v8329 = vsub.f32 %v8325, %v8328
    %v8330 = vmul.f32 %v8329, 1.442695
    %v8331 = vpow.pop %v8330
    %v8332 = vsel %vm1190, %v8331, 0.0
    %8333 = vadd.xlane.f32.xlu0 %v8332
    %v8334 = vpop.xlane.xlu0 %8333
    %v8335 = vrcp.pop %v8334
    %v8336 = vmul.f32 %v8331, %v8335
    %8337 = vrot.lane.b32.xlu0 %v6033, 48
    %v8338 = vpop.permute.xlu0 %8337
    %v8341 = vsel %vm1190, %v8336, 0
    %8343 = vmatprep.subr.mxu0 0.0
    %v8344 = vand.u32 %v8338, 4294901760
    %8345 = vmatpush1.msra.mxu0 %v8344
    %8346 = vmatprep.subr.mxu0 0.0
    %8347 = vmatpush1.msra.mxu0 0.0
    %8348 = vmatprep.subr.mxu0 0.0
    %8349 = vmatpush1.msra.mxu0 0.0
    %8350 = vmatprep.subr.mxu0 0.0
    %8351 = vmatpush1.msra.mxu0 0.0
    %8352 = vmatprep.subr.mxu0 0.0
    %8353 = vmatpush1.msra.mxu0 0.0
    %8354 = vmatprep.subr.mxu0 0.0
    %8355 = vmatpush1.msra.mxu0 0.0
    %8356 = vmatprep.subr.mxu0 0.0
    %8357 = vmatpush1.msra.mxu0 0.0
    %8358 = vmatprep.subr.mxu0 0.0
    %8359 = vmatpush1.msra.mxu0 0.0
    %8360 = vmatprep.subr.mxu0 0.0
    %8361 = vmatpush1.msra.mxu0 0.0
    %8362 = vmatprep.subr.mxu0 0.0
    %8363 = vmatpush1.msra.mxu0 0.0
    %8364 = vmatprep.subr.mxu0 0.0
    %8365 = vmatpush1.msra.mxu0 0.0
    %8366 = vmatprep.subr.mxu0 0.0
    %8367 = vmatpush1.msra.mxu0 0.0
    %8368 = vmatprep.subr.mxu0 0.0
    %8369 = vmatpush1.msra.mxu0 0.0
    %8370 = vmatprep.subr.mxu0 0.0
    %8371 = vmatpush1.msra.mxu0 0.0
    %8372 = vmatprep.subr.mxu0 0.0
    %8373 = vmatpush1.msra.mxu0 0.0
    %8374 = vmatprep.subr.mxu0 0.0
    %8375 = vmatpush1.msra.mxu0 0.0
    %8376 = vmatprep.subr.mxu0 0.0
    %8377 = vmatpush1.msra.mxu0 0.0
    %8378 = vmatprep.subr.mxu0 0.0
    %8379 = vmatpush1.msra.mxu0 0.0
    %8380 = vmatprep.subr.mxu0 0.0
    %8381 = vmatpush1.msra.mxu0 0.0
    %8382 = vmatprep.subr.mxu0 0.0
    %8383 = vmatpush1.msra.mxu0 0.0
    %8384 = vmatprep.subr.mxu0 0.0
    %8385 = vmatpush1.msra.mxu0 0.0
    %8386 = vmatprep.subr.mxu0 0.0
    %8387 = vmatpush1.msra.mxu0 0.0
    %8388 = vmatprep.subr.mxu0 0.0
    %8389 = vmatpush1.msra.mxu0 0.0
    %8390 = vmatprep.subr.mxu0 0.0
    %8391 = vmatpush1.msra.mxu0 0.0
    %8392 = vmatprep.subr.mxu0 0.0
    %8393 = vmatpush1.msra.mxu0 0.0
    %8394 = vmatprep.subr.mxu0 0.0
    %8395 = vmatpush1.msra.mxu0 0.0
    %8396 = vmatprep.subr.mxu0 0.0
    %8397 = vmatpush1.msra.mxu0 0.0
    %8398 = vmatprep.subr.mxu0 0.0
    %8399 = vmatpush1.msra.mxu0 0.0
    %8400 = vmatprep.subr.mxu0 0.0
    %8401 = vmatpush1.msra.mxu0 0.0
    %8402 = vmatprep.subr.mxu0 0.0
    %8403 = vmatpush1.msra.mxu0 0.0
    %8404 = vmatprep.subr.mxu0 0.0
    %8405 = vmatpush1.msra.mxu0 0.0
    %8406 = vmatprep.subr.mxu0 0.0
    %8407 = vmatpush1.msra.mxu0 0.0
    %8408 = vmatprep.mubr.f32.mxu0 0.0
    %v8409 = vand.u32 %v8341, 4294901760
    %v8410 = vsub.f32 %v8341, %v8409
    %v8411 = vand.u32 %v8410, 4294901760
    %v8412 = vsub.f32 %v8410, %v8411
    %v8413 = vand.u32 %v8412, 4294901760
    %8414 = vmatmul.mubr.f32.gmra.mrb[0].mxu0 %v8413
    %v8415 = vpop.f32.mrb[0].mxu0
    %v8416 = vadd.f32 0.0, %v8415
    %v8417 = vpop.f32.mrb[0].mxu0
    %8418 = vdwg.mxu0
    %8419 = vmatprep.subr.mxu0 0.0
    %v8420 = vand.u32 %v8338, 4294901760
    %v8421 = vsub.f32 %v8338, %v8420
    %v8422 = vand.u32 %v8421, 4294901760
    %v8423 = vsub.f32 %v8421, %v8422
    %v8424 = vand.u32 %v8423, 4294901760
    %8425 = vmatpush1.msra.mxu0 %v8424
    %8426 = vmatprep.subr.mxu0 0.0
    %8427 = vmatpush1.msra.mxu0 0.0
    %8428 = vmatprep.subr.mxu0 0.0
    %8429 = vmatpush1.msra.mxu0 0.0
    %8430 = vmatprep.subr.mxu0 0.0
    %8431 = vmatpush1.msra.mxu0 0.0
    %8432 = vmatprep.subr.mxu0 0.0
    %8433 = vmatpush1.msra.mxu0 0.0
    %8434 = vmatprep.subr.mxu0 0.0
    %8435 = vmatpush1.msra.mxu0 0.0
    %8436 = vmatprep.subr.mxu0 0.0
    %8437 = vmatpush1.msra.mxu0 0.0
    %8438 = vmatprep.subr.mxu0 0.0
    %8439 = vmatpush1.msra.mxu0 0.0
    %8440 = vmatprep.subr.mxu0 0.0
    %8441 = vmatpush1.msra.mxu0 0.0
    %8442 = vmatprep.subr.mxu0 0.0
    %8443 = vmatpush1.msra.mxu0 0.0
    %8444 = vmatprep.subr.mxu0 0.0
    %8445 = vmatpush1.msra.mxu0 0.0
    %8446 = vmatprep.subr.mxu0 0.0
    %8447 = vmatpush1.msra.mxu0 0.0
    %8448 = vmatprep.subr.mxu0 0.0
    %8449 = vmatpush1.msra.mxu0 0.0
    %8450 = vmatprep.subr.mxu0 0.0
    %8451 = vmatpush1.msra.mxu0 0.0
    %8452 = vmatprep.subr.mxu0 0.0
    %8453 = vmatpush1.msra.mxu0 0.0
    %8454 = vmatprep.subr.mxu0 0.0
    %8455 = vmatpush1.msra.mxu0 0.0
    %8456 = vmatprep.subr.mxu0 0.0
    %8457 = vmatpush1.msra.mxu0 0.0
    %8458 = vmatprep.subr.mxu0 0.0
    %8459 = vmatpush1.msra.mxu0 0.0
    %8460 = vmatprep.subr.mxu0 0.0
    %8461 = vmatpush1.msra.mxu0 0.0
    %8462 = vmatprep.subr.mxu0 0.0
    %8463 = vmatpush1.msra.mxu0 0.0
    %8464 = vmatprep.subr.mxu0 0.0
    %8465 = vmatpush1.msra.mxu0 0.0
    %8466 = vmatprep.subr.mxu0 0.0
    %8467 = vmatpush1.msra.mxu0 0.0
    %8468 = vmatprep.subr.mxu0 0.0
    %8469 = vmatpush1.msra.mxu0 0.0
    %8470 = vmatprep.subr.mxu0 0.0
    %8471 = vmatpush1.msra.mxu0 0.0
    %8472 = vmatprep.subr.mxu0 0.0
    %8473 = vmatpush1.msra.mxu0 0.0
    %8474 = vmatprep.subr.mxu0 0.0
    %8475 = vmatpush1.msra.mxu0 0.0
    %8476 = vmatprep.subr.mxu0 0.0
    %8477 = vmatpush1.msra.mxu0 0.0
    %8478 = vmatprep.subr.mxu0 0.0
    %8479 = vmatpush1.msra.mxu0 0.0
    %8480 = vmatprep.subr.mxu0 0.0
    %8481 = vmatpush1.msra.mxu0 0.0
    %8482 = vmatprep.subr.mxu0 0.0
    %8483 = vmatpush1.msra.mxu0 0.0
    %8484 = vmatprep.subr.mxu0 0.0
    %8485 = vmatpush1.msra.mxu0 0.0
    %8486 = vmatprep.subr.mxu0 0.0
    %8487 = vmatpush1.msra.mxu0 0.0
    %8488 = vmatprep.mubr.f32.mxu0 0.0
    %v8489 = vand.u32 %v8341, 4294901760
    %8490 = vmatmul.mubr.f32.gmra.mrb[0].mxu0 %v8489
    %v8491 = vpop.f32.mrb[0].mxu0
    %v8492 = vadd.f32 %v8416, %v8491
    %v8493 = vpop.f32.mrb[0].mxu0
    %8494 = vdwg.mxu0
    %8495 = vmatprep.subr.mxu0 0.0
    %v8496 = vand.u32 %v8338, 4294901760
    %v8497 = vsub.f32 %v8338, %v8496
    %8498 = vmatpush1.msra.mxu0 %v8497
    %8499 = vmatprep.subr.mxu0 0.0
    %8500 = vmatpush1.msra.mxu0 0.0
    %8501 = vmatprep.subr.mxu0 0.0
    %8502 = vmatpush1.msra.mxu0 0.0
    %8503 = vmatprep.subr.mxu0 0.0
    %8504 = vmatpush1.msra.mxu0 0.0
    %8505 = vmatprep.subr.mxu0 0.0
    %8506 = vmatpush1.msra.mxu0 0.0
    %8507 = vmatprep.subr.mxu0 0.0
    %8508 = vmatpush1.msra.mxu0 0.0
    %8509 = vmatprep.subr.mxu0 0.0
    %8510 = vmatpush1.msra.mxu0 0.0
    %8511 = vmatprep.subr.mxu0 0.0
    %8512 = vmatpush1.msra.mxu0 0.0
    %8513 = vmatprep.subr.mxu0 0.0
    %8514 = vmatpush1.msra.mxu0 0.0
    %8515 = vmatprep.subr.mxu0 0.0
    %8516 = vmatpush1.msra.mxu0 0.0
    %8517 = vmatprep.subr.mxu0 0.0
    %8518 = vmatpush1.msra.mxu0 0.0
    %8519 = vmatprep.subr.mxu0 0.0
    %8520 = vmatpush1.msra.mxu0 0.0
    %8521 = vmatprep.subr.mxu0 0.0
    %8522 = vmatpush1.msra.mxu0 0.0
    %8523 = vmatprep.subr.mxu0 0.0
    %8524 = vmatpush1.msra.mxu0 0.0
    %8525 = vmatprep.subr.mxu0 0.0
    %8526 = vmatpush1.msra.mxu0 0.0
    %8527 = vmatprep.subr.mxu0 0.0
    %8528 = vmatpush1.msra.mxu0 0.0
    %8529 = vmatprep.subr.mxu0 0.0
    %8530 = vmatpush1.msra.mxu0 0.0
    %8531 = vmatprep.subr.mxu0 0.0
    %8532 = vmatpush1.msra.mxu0 0.0
    %8533 = vmatprep.subr.mxu0 0.0
    %8534 = vmatpush1.msra.mxu0 0.0
    %8535 = vmatprep.subr.mxu0 0.0
    %8536 = vmatpush1.msra.mxu0 0.0
    %8537 = vmatprep.subr.mxu0 0.0
    %8538 = vmatpush1.msra.mxu0 0.0
    %8539 = vmatprep.subr.mxu0 0.0
    %8540 = vmatpush1.msra.mxu0 0.0
    %8541 = vmatprep.subr.mxu0 0.0
    %8542 = vmatpush1.msra.mxu0 0.0
    %8543 = vmatprep.subr.mxu0 0.0
    %8544 = vmatpush1.msra.mxu0 0.0
    %8545 = vmatprep.subr.mxu0 0.0
    %8546 = vmatpush1.msra.mxu0 0.0
    %8547 = vmatprep.subr.mxu0 0.0
    %8548 = vmatpush1.msra.mxu0 0.0
    %8549 = vmatprep.subr.mxu0 0.0
    %8550 = vmatpush1.msra.mxu0 0.0
    %8551 = vmatprep.subr.mxu0 0.0
    %8552 = vmatpush1.msra.mxu0 0.0
    %8553 = vmatprep.subr.mxu0 0.0
    %8554 = vmatpush1.msra.mxu0 0.0
    %8555 = vmatprep.subr.mxu0 0.0
    %8556 = vmatpush1.msra.mxu0 0.0
    %8557 = vmatprep.subr.mxu0 0.0
    %8558 = vmatpush1.msra.mxu0 0.0
    %8559 = vmatprep.subr.mxu0 0.0
    %8560 = vmatpush1.msra.mxu0 0.0
    %8561 = vmatprep.mubr.f32.mxu0 0.0
    %v8562 = vand.u32 %v8341, 4294901760
    %v8563 = vsub.f32 %v8341, %v8562
    %8564 = vmatmul.mubr.f32.gmra.mrb[0].mxu0 %v8563
    %v8565 = vpop.f32.mrb[0].mxu0
    %v8566 = vadd.f32 %v8492, %v8565
    %v8567 = vpop.f32.mrb[0].mxu0
    %8568 = vdwg.mxu0
    %8569 = vmatprep.subr.mxu0 0.0
    %v8570 = vand.u32 %v8338, 4294901760
    %8571 = vmatpush1.msra.mxu0 %v8570
    %8572 = vmatprep.subr.mxu0 0.0
    %8573 = vmatpush1.msra.mxu0 0.0
    %8574 = vmatprep.subr.mxu0 0.0
    %8575 = vmatpush1.msra.mxu0 0.0
    %8576 = vmatprep.subr.mxu0 0.0
    %8577 = vmatpush1.msra.mxu0 0.0
    %8578 = vmatprep.subr.mxu0 0.0
    %8579 = vmatpush1.msra.mxu0 0.0
    %8580 = vmatprep.subr.mxu0 0.0
    %8581 = vmatpush1.msra.mxu0 0.0
    %8582 = vmatprep.subr.mxu0 0.0
    %8583 = vmatpush1.msra.mxu0 0.0
    %8584 = vmatprep.subr.mxu0 0.0
    %8585 = vmatpush1.msra.mxu0 0.0
    %8586 = vmatprep.subr.mxu0 0.0
    %8587 = vmatpush1.msra.mxu0 0.0
    %8588 = vmatprep.subr.mxu0 0.0
    %8589 = vmatpush1.msra.mxu0 0.0
    %8590 = vmatprep.subr.mxu0 0.0
    %8591 = vmatpush1.msra.mxu0 0.0
    %8592 = vmatprep.subr.mxu0 0.0
    %8593 = vmatpush1.msra.mxu0 0.0
    %8594 = vmatprep.subr.mxu0 0.0
    %8595 = vmatpush1.msra.mxu0 0.0
    %8596 = vmatprep.subr.mxu0 0.0
    %8597 = vmatpush1.msra.mxu0 0.0
    %8598 = vmatprep.subr.mxu0 0.0
    %8599 = vmatpush1.msra.mxu0 0.0
    %8600 = vmatprep.subr.mxu0 0.0
    %8601 = vmatpush1.msra.mxu0 0.0
    %8602 = vmatprep.subr.mxu0 0.0
    %8603 = vmatpush1.msra.mxu0 0.0
    %8604 = vmatprep.subr.mxu0 0.0
    %8605 = vmatpush1.msra.mxu0 0.0
    %8606 = vmatprep.subr.mxu0 0.0
    %8607 = vmatpush1.msra.mxu0 0.0
    %8608 = vmatprep.subr.mxu0 0.0
    %8609 = vmatpush1.msra.mxu0 0.0
    %8610 = vmatprep.subr.mxu0 0.0
    %8611 = vmatpush1.msra.mxu0 0.0
    %8612 = vmatprep.subr.mxu0 0.0
    %8613 = vmatpush1.msra.mxu0 0.0
    %8614 = vmatprep.subr.mxu0 0.0
    %8615 = vmatpush1.msra.mxu0 0.0
    %8616 = vmatprep.subr.mxu0 0.0
    %8617 = vmatpush1.msra.mxu0 0.0
    %8618 = vmatprep.subr.mxu0 0.0
    %8619 = vmatpush1.msra.mxu0 0.0
    %8620 = vmatprep.subr.mxu0 0.0
    %8621 = vmatpush1.msra.mxu0 0.0
    %8622 = vmatprep.subr.mxu0 0.0
    %8623 = vmatpush1.msra.mxu0 0.0
    %8624 = vmatprep.subr.mxu0 0.0
    %8625 = vmatpush1.msra.mxu0 0.0
    %8626 = vmatprep.subr.mxu0 0.0
    %8627 = vmatpush1.msra.mxu0 0.0
    %8628 = vmatprep.subr.mxu0 0.0
    %8629 = vmatpush1.msra.mxu0 0.0
    %8630 = vmatprep.subr.mxu0 0.0
    %8631 = vmatpush1.msra.mxu0 0.0
    %8632 = vmatprep.subr.mxu0 0.0
    %8633 = vmatpush1.msra.mxu0 0.0
    %8634 = vmatprep.mubr.f32.mxu0 0.0
    %v8635 = vand.u32 %v8341, 4294901760
    %v8636 = vsub.f32 %v8341, %v8635
    %v8637 = vand.u32 %v8636, 4294901760
    %8638 = vmatmul.mubr.f32.gmra.mrb[0].mxu0 %v8637
    %v8639 = vpop.f32.mrb[0].mxu0
    %v8640 = vadd.f32 %v8566, %v8639
    %v8641 = vpop.f32.mrb[0].mxu0
    %8642 = vdwg.mxu0
    %8643 = vmatprep.subr.mxu0 0.0
    %v8644 = vand.u32 %v8338, 4294901760
    %v8645 = vsub.f32 %v8338, %v8644
    %v8646 = vand.u32 %v8645, 4294901760
    %8647 = vmatpush1.msra.mxu0 %v8646
    %8648 = vmatprep.subr.mxu0 0.0
    %8649 = vmatpush1.msra.mxu0 0.0
    %8650 = vmatprep.subr.mxu0 0.0
    %8651 = vmatpush1.msra.mxu0 0.0
    %8652 = vmatprep.subr.mxu0 0.0
    %8653 = vmatpush1.msra.mxu0 0.0
    %8654 = vmatprep.subr.mxu0 0.0
    %8655 = vmatpush1.msra.mxu0 0.0
    %8656 = vmatprep.subr.mxu0 0.0
    %8657 = vmatpush1.msra.mxu0 0.0
    %8658 = vmatprep.subr.mxu0 0.0
    %8659 = vmatpush1.msra.mxu0 0.0
    %8660 = vmatprep.subr.mxu0 0.0
    %8661 = vmatpush1.msra.mxu0 0.0
    %8662 = vmatprep.subr.mxu0 0.0
    %8663 = vmatpush1.msra.mxu0 0.0
    %8664 = vmatprep.subr.mxu0 0.0
    %8665 = vmatpush1.msra.mxu0 0.0
    %8666 = vmatprep.subr.mxu0 0.0
    %8667 = vmatpush1.msra.mxu0 0.0
    %8668 = vmatprep.subr.mxu0 0.0
    %8669 = vmatpush1.msra.mxu0 0.0
    %8670 = vmatprep.subr.mxu0 0.0
    %8671 = vmatpush1.msra.mxu0 0.0
    %8672 = vmatprep.subr.mxu0 0.0
    %8673 = vmatpush1.msra.mxu0 0.0
    %8674 = vmatprep.subr.mxu0 0.0
    %8675 = vmatpush1.msra.mxu0 0.0
    %8676 = vmatprep.subr.mxu0 0.0
    %8677 = vmatpush1.msra.mxu0 0.0
    %8678 = vmatprep.subr.mxu0 0.0
    %8679 = vmatpush1.msra.mxu0 0.0
    %8680 = vmatprep.subr.mxu0 0.0
    %8681 = vmatpush1.msra.mxu0 0.0
    %8682 = vmatprep.subr.mxu0 0.0
    %8683 = vmatpush1.msra.mxu0 0.0
    %8684 = vmatprep.subr.mxu0 0.0
    %8685 = vmatpush1.msra.mxu0 0.0
    %8686 = vmatprep.subr.mxu0 0.0
    %8687 = vmatpush1.msra.mxu0 0.0
    %8688 = vmatprep.subr.mxu0 0.0
    %8689 = vmatpush1.msra.mxu0 0.0
    %8690 = vmatprep.subr.mxu0 0.0
    %8691 = vmatpush1.msra.mxu0 0.0
    %8692 = vmatprep.subr.mxu0 0.0
    %8693 = vmatpush1.msra.mxu0 0.0
    %8694 = vmatprep.subr.mxu0 0.0
    %8695 = vmatpush1.msra.mxu0 0.0
    %8696 = vmatprep.subr.mxu0 0.0
    %8697 = vmatpush1.msra.mxu0 0.0
    %8698 = vmatprep.subr.mxu0 0.0
    %8699 = vmatpush1.msra.mxu0 0.0
    %8700 = vmatprep.subr.mxu0 0.0
    %8701 = vmatpush1.msra.mxu0 0.0
    %8702 = vmatprep.subr.mxu0 0.0
    %8703 = vmatpush1.msra.mxu0 0.0
    %8704 = vmatprep.subr.mxu0 0.0
    %8705 = vmatpush1.msra.mxu0 0.0
    %8706 = vmatprep.subr.mxu0 0.0
    %8707 = vmatpush1.msra.mxu0 0.0
    %8708 = vmatprep.subr.mxu0 0.0
    %8709 = vmatpush1.msra.mxu0 0.0
    %8710 = vmatprep.mubr.f32.mxu0 0.0
    %v8711 = vand.u32 %v8341, 4294901760
    %8712 = vmatmul.mubr.f32.gmra.mrb[0].mxu0 %v8711
    %v8713 = vpop.f32.mrb[0].mxu0
    %v8714 = vadd.f32 %v8640, %v8713
    %v8715 = vpop.f32.mrb[0].mxu0
    %8716 = vdwg.mxu0
    %8717 = vmatprep.subr.mxu0 0.0
    %v8718 = vand.u32 %v8338, 4294901760
    %8719 = vmatpush1.msra.mxu0 %v8718
    %8720 = vmatprep.subr.mxu0 0.0
    %8721 = vmatpush1.msra.mxu0 0.0
    %8722 = vmatprep.subr.mxu0 0.0
    %8723 = vmatpush1.msra.mxu0 0.0
    %8724 = vmatprep.subr.mxu0 0.0
    %8725 = vmatpush1.msra.mxu0 0.0
    %8726 = vmatprep.subr.mxu0 0.0
    %8727 = vmatpush1.msra.mxu0 0.0
    %8728 = vmatprep.subr.mxu0 0.0
    %8729 = vmatpush1.msra.mxu0 0.0
    %8730 = vmatprep.subr.mxu0 0.0
    %8731 = vmatpush1.msra.mxu0 0.0
    %8732 = vmatprep.subr.mxu0 0.0
    %8733 = vmatpush1.msra.mxu0 0.0
    %8734 = vmatprep.subr.mxu0 0.0
    %8735 = vmatpush1.msra.mxu0 0.0
    %8736 = vmatprep.subr.mxu0 0.0
    %8737 = vmatpush1.msra.mxu0 0.0
    %8738 = vmatprep.subr.mxu0 0.0
    %8739 = vmatpush1.msra.mxu0 0.0
    %8740 = vmatprep.subr.mxu0 0.0
    %8741 = vmatpush1.msra.mxu0 0.0
    %8742 = vmatprep.subr.mxu0 0.0
    %8743 = vmatpush1.msra.mxu0 0.0
    %8744 = vmatprep.subr.mxu0 0.0
    %8745 = vmatpush1.msra.mxu0 0.0
    %8746 = vmatprep.subr.mxu0 0.0
    %8747 = vmatpush1.msra.mxu0 0.0
    %8748 = vmatprep.subr.mxu0 0.0
    %8749 = vmatpush1.msra.mxu0 0.0
    %8750 = vmatprep.subr.mxu0 0.0
    %8751 = vmatpush1.msra.mxu0 0.0
    %8752 = vmatprep.subr.mxu0 0.0
    %8753 = vmatpush1.msra.mxu0 0.0
    %8754 = vmatprep.subr.mxu0 0.0
    %8755 = vmatpush1.msra.mxu0 0.0
    %8756 = vmatprep.subr.mxu0 0.0
    %8757 = vmatpush1.msra.mxu0 0.0
    %8758 = vmatprep.subr.mxu0 0.0
    %8759 = vmatpush1.msra.mxu0 0.0
    %8760 = vmatprep.subr.mxu0 0.0
    %8761 = vmatpush1.msra.mxu0 0.0
    %8762 = vmatprep.subr.mxu0 0.0
    %8763 = vmatpush1.msra.mxu0 0.0
    %8764 = vmatprep.subr.mxu0 0.0
    %8765 = vmatpush1.msra.mxu0 0.0
    %8766 = vmatprep.subr.mxu0 0.0
    %8767 = vmatpush1.msra.mxu0 0.0
    %8768 = vmatprep.subr.mxu0 0.0
    %8769 = vmatpush1.msra.mxu0 0.0
    %8770 = vmatprep.subr.mxu0 0.0
    %8771 = vmatpush1.msra.mxu0 0.0
    %8772 = vmatprep.subr.mxu0 0.0
    %8773 = vmatpush1.msra.mxu0 0.0
    %8774 = vmatprep.subr.mxu0 0.0
    %8775 = vmatpush1.msra.mxu0 0.0
    %8776 = vmatprep.subr.mxu0 0.0
    %8777 = vmatpush1.msra.mxu0 0.0
    %8778 = vmatprep.subr.mxu0 0.0
    %8779 = vmatpush1.msra.mxu0 0.0
    %8780 = vmatprep.subr.mxu0 0.0
    %8781 = vmatpush1.msra.mxu0 0.0
    %8782 = vmatprep.mubr.f32.mxu0 0.0
    %v8783 = vand.u32 %v8341, 4294901760
    %8784 = vmatmul.mubr.f32.gmra.mrb[0].mxu0 %v8783
    %v8785 = vpop.f32.mrb[0].mxu0
    %v8786 = vadd.f32 %v8714, %v8785
    %v8787 = vpop.f32.mrb[0].mxu0
    %8788 = vdwg.mxu0
    %8789 = vrot.lane.b32.xlu0 %v6033, 104
    %v8790 = vpop.permute.xlu0 %8789
    %8791 = vrot.lane.b32.xlu0 %v6033, 72
    %v8792 = vpop.permute.xlu0 %8791
    %v8793 = vsel %vm1190, %v8790, 0
    %v8795 = vsel %vm1190, %v8792, 0
    %8797 = vmatprep.subr.mxu0 0.0
    %v8798 = vand.u32 %v8795, 4294901760
    %8799 = vmatpush1.xpose.msra.mxu0 %v8798
    %8800 = vmatprep.subr.mxu0 0.0
    %8801 = vmatpush1.xpose.msra.mxu0 0.0
    %8802 = vmatprep.subr.mxu0 0.0
    %8803 = vmatpush1.xpose.msra.mxu0 0.0
    %8804 = vmatprep.subr.mxu0 0.0
    %8805 = vmatpush1.xpose.msra.mxu0 0.0
    %8806 = vmatprep.subr.mxu0 0.0
    %8807 = vmatpush1.xpose.msra.mxu0 0.0
    %8808 = vmatprep.subr.mxu0 0.0
    %8809 = vmatpush1.xpose.msra.mxu0 0.0
    %8810 = vmatprep.subr.mxu0 0.0
    %8811 = vmatpush1.xpose.msra.mxu0 0.0
    %8812 = vmatprep.subr.mxu0 0.0
    %8813 = vmatpush1.xpose.msra.mxu0 0.0
    %8814 = vmatprep.subr.mxu0 0.0
    %8815 = vmatpush1.xpose.msra.mxu0 0.0
    %8816 = vmatprep.subr.mxu0 0.0
    %8817 = vmatpush1.xpose.msra.mxu0 0.0
    %8818 = vmatprep.subr.mxu0 0.0
    %8819 = vmatpush1.xpose.msra.mxu0 0.0
    %8820 = vmatprep.subr.mxu0 0.0
    %8821 = vmatpush1.xpose.msra.mxu0 0.0
    %8822 = vmatprep.subr.mxu0 0.0
    %8823 = vmatpush1.xpose.msra.mxu0 0.0
    %8824 = vmatprep.subr.mxu0 0.0
    %8825 = vmatpush1.xpose.msra.mxu0 0.0
    %8826 = vmatprep.subr.mxu0 0.0
    %8827 = vmatpush1.xpose.msra.mxu0 0.0
    %8828 = vmatprep.subr.mxu0 0.0
    %8829 = vmatpush1.xpose.msra.mxu0 0.0
    %8830 = vmatprep.subr.mxu0 0.0
    %8831 = vmatpush1.xpose.msra.mxu0 0.0
    %8832 = vmatprep.subr.mxu0 0.0
    %8833 = vmatpush1.xpose.msra.mxu0 0.0
    %8834 = vmatprep.subr.mxu0 0.0
    %8835 = vmatpush1.xpose.msra.mxu0 0.0
    %8836 = vmatprep.subr.mxu0 0.0
    %8837 = vmatpush1.xpose.msra.mxu0 0.0
    %8838 = vmatprep.subr.mxu0 0.0
    %8839 = vmatpush1.xpose.msra.mxu0 0.0
    %8840 = vmatprep.subr.mxu0 0.0
    %8841 = vmatpush1.xpose.msra.mxu0 0.0
    %8842 = vmatprep.subr.mxu0 0.0
    %8843 = vmatpush1.xpose.msra.mxu0 0.0
    %8844 = vmatprep.subr.mxu0 0.0
    %8845 = vmatpush1.xpose.msra.mxu0 0.0
    %8846 = vmatprep.subr.mxu0 0.0
    %8847 = vmatpush1.xpose.msra.mxu0 0.0
    %8848 = vmatprep.subr.mxu0 0.0
    %8849 = vmatpush1.xpose.msra.mxu0 0.0
    %8850 = vmatprep.subr.mxu0 0.0
    %8851 = vmatpush1.xpose.msra.mxu0 0.0
    %8852 = vmatprep.subr.mxu0 0.0
    %8853 = vmatpush1.xpose.msra.mxu0 0.0
    %8854 = vmatprep.subr.mxu0 0.0
    %8855 = vmatpush1.xpose.msra.mxu0 0.0
    %8856 = vmatprep.subr.mxu0 0.0
    %8857 = vmatpush1.xpose.msra.mxu0 0.0
    %8858 = vmatprep.subr.mxu0 0.0
    %8859 = vmatpush1.xpose.msra.mxu0 0.0
    %8860 = vmatprep.subr.mxu0 0.0
    %8861 = vmatpush1.xpose.msra.mxu0 0.0
    %8862 = vmatprep.mubr.f32.mxu0 0.0
    %v8863 = vand.u32 %v8793, 4294901760
    %v8864 = vsub.f32 %v8793, %v8863
    %v8865 = vand.u32 %v8864, 4294901760
    %v8866 = vsub.f32 %v8864, %v8865
    %v8867 = vand.u32 %v8866, 4294901760
    %8868 = vmatmul.mubr.f32.gmra.mrb[0].mxu0 %v8867
    %v8869 = vpop.f32.mrb[0].mxu0
    %v8870 = vadd.f32 0.0, %v8869
    %v8871 = vpop.f32.mrb[0].mxu0
    %8872 = vdwg.mxu0
    %8873 = vmatprep.subr.mxu0 0.0
    %v8874 = vand.u32 %v8795, 4294901760
    %v8875 = vsub.f32 %v8795, %v8874
    %v8876 = vand.u32 %v8875, 4294901760
    %v8877 = vsub.f32 %v8875, %v8876
    %v8878 = vand.u32 %v8877, 4294901760
    %8879 = vmatpush1.xpose.msra.mxu0 %v8878
    %8880 = vmatprep.subr.mxu0 0.0
    %8881 = vmatpush1.xpose.msra.mxu0 0.0
    %8882 = vmatprep.subr.mxu0 0.0
    %8883 = vmatpush1.xpose.msra.mxu0 0.0
    %8884 = vmatprep.subr.mxu0 0.0
    %8885 = vmatpush1.xpose.msra.mxu0 0.0
    %8886 = vmatprep.subr.mxu0 0.0
    %8887 = vmatpush1.xpose.msra.mxu0 0.0
    %8888 = vmatprep.subr.mxu0 0.0
    %8889 = vmatpush1.xpose.msra.mxu0 0.0
    %8890 = vmatprep.subr.mxu0 0.0
    %8891 = vmatpush1.xpose.msra.mxu0 0.0
    %8892 = vmatprep.subr.mxu0 0.0
    %8893 = vmatpush1.xpose.msra.mxu0 0.0
    %8894 = vmatprep.subr.mxu0 0.0
    %8895 = vmatpush1.xpose.msra.mxu0 0.0
    %8896 = vmatprep.subr.mxu0 0.0
    %8897 = vmatpush1.xpose.msra.mxu0 0.0
    %8898 = vmatprep.subr.mxu0 0.0
    %8899 = vmatpush1.xpose.msra.mxu0 0.0
    %8900 = vmatprep.subr.mxu0 0.0
    %8901 = vmatpush1.xpose.msra.mxu0 0.0
    %8902 = vmatprep.subr.mxu0 0.0
    %8903 = vmatpush1.xpose.msra.mxu0 0.0
    %8904 = vmatprep.subr.mxu0 0.0
    %8905 = vmatpush1.xpose.msra.mxu0 0.0
    %8906 = vmatprep.subr.mxu0 0.0
    %8907 = vmatpush1.xpose.msra.mxu0 0.0
    %8908 = vmatprep.subr.mxu0 0.0
    %8909 = vmatpush1.xpose.msra.mxu0 0.0
    %8910 = vmatprep.subr.mxu0 0.0
    %8911 = vmatpush1.xpose.msra.mxu0 0.0
    %8912 = vmatprep.subr.mxu0 0.0
    %8913 = vmatpush1.xpose.msra.mxu0 0.0
    %8914 = vmatprep.subr.mxu0 0.0
    %8915 = vmatpush1.xpose.msra.mxu0 0.0
    %8916 = vmatprep.subr.mxu0 0.0
    %8917 = vmatpush1.xpose.msra.mxu0 0.0
    %8918 = vmatprep.subr.mxu0 0.0
    %8919 = vmatpush1.xpose.msra.mxu0 0.0
    %8920 = vmatprep.subr.mxu0 0.0
    %8921 = vmatpush1.xpose.msra.mxu0 0.0
    %8922 = vmatprep.subr.mxu0 0.0
    %8923 = vmatpush1.xpose.msra.mxu0 0.0
    %8924 = vmatprep.subr.mxu0 0.0
    %8925 = vmatpush1.xpose.msra.mxu0 0.0
    %8926 = vmatprep.subr.mxu0 0.0
    %8927 = vmatpush1.xpose.msra.mxu0 0.0
    %8928 = vmatprep.subr.mxu0 0.0
    %8929 = vmatpush1.xpose.msra.mxu0 0.0
    %8930 = vmatprep.subr.mxu0 0.0
    %8931 = vmatpush1.xpose.msra.mxu0 0.0
    %8932 = vmatprep.subr.mxu0 0.0
    %8933 = vmatpush1.xpose.msra.mxu0 0.0
    %8934 = vmatprep.subr.mxu0 0.0
    %8935 = vmatpush1.xpose.msra.mxu0 0.0
    %8936 = vmatprep.subr.mxu0 0.0
    %8937 = vmatpush1.xpose.msra.mxu0 0.0
    %8938 = vmatprep.subr.mxu0 0.0
    %8939 = vmatpush1.xpose.msra.mxu0 0.0
    %8940 = vmatprep.subr.mxu0 0.0
    %8941 = vmatpush1.xpose.msra.mxu0 0.0
    %8942 = vmatprep.mubr.f32.mxu0 0.0
    %v8943 = vand.u32 %v8793, 4294901760
    %8944 = vmatmul.mubr.f32.gmra.mrb[0].mxu0 %v8943
    %v8945 = vpop.f32.mrb[0].mxu0
    %v8946 = vadd.f32 %v8870, %v8945
    %v8947 = vpop.f32.mrb[0].mxu0
    %8948 = vdwg.mxu0
    %8949 = vmatprep.subr.mxu0 0.0
    %v8950 = vand.u32 %v8795, 4294901760
    %v8951 = vsub.f32 %v8795, %v8950
    %8952 = vmatpush1.xpose.msra.mxu0 %v8951
    %8953 = vmatprep.subr.mxu0 0.0
    %8954 = vmatpush1.xpose.msra.mxu0 0.0
    %8955 = vmatprep.subr.mxu0 0.0
    %8956 = vmatpush1.xpose.msra.mxu0 0.0
    %8957 = vmatprep.subr.mxu0 0.0
    %8958 = vmatpush1.xpose.msra.mxu0 0.0
    %8959 = vmatprep.subr.mxu0 0.0
    %8960 = vmatpush1.xpose.msra.mxu0 0.0
    %8961 = vmatprep.subr.mxu0 0.0
    %8962 = vmatpush1.xpose.msra.mxu0 0.0
    %8963 = vmatprep.subr.mxu0 0.0
    %8964 = vmatpush1.xpose.msra.mxu0 0.0
    %8965 = vmatprep.subr.mxu0 0.0
    %8966 = vmatpush1.xpose.msra.mxu0 0.0
    %8967 = vmatprep.subr.mxu0 0.0
    %8968 = vmatpush1.xpose.msra.mxu0 0.0
    %8969 = vmatprep.subr.mxu0 0.0
    %8970 = vmatpush1.xpose.msra.mxu0 0.0
    %8971 = vmatprep.subr.mxu0 0.0
    %8972 = vmatpush1.xpose.msra.mxu0 0.0
    %8973 = vmatprep.subr.mxu0 0.0
    %8974 = vmatpush1.xpose.msra.mxu0 0.0
    %8975 = vmatprep.subr.mxu0 0.0
    %8976 = vmatpush1.xpose.msra.mxu0 0.0
    %8977 = vmatprep.subr.mxu0 0.0
    %8978 = vmatpush1.xpose.msra.mxu0 0.0
    %8979 = vmatprep.subr.mxu0 0.0
    %8980 = vmatpush1.xpose.msra.mxu0 0.0
    %8981 = vmatprep.subr.mxu0 0.0
    %8982 = vmatpush1.xpose.msra.mxu0 0.0
    %8983 = vmatprep.subr.mxu0 0.0
    %8984 = vmatpush1.xpose.msra.mxu0 0.0
    %8985 = vmatprep.subr.mxu0 0.0
    %8986 = vmatpush1.xpose.msra.mxu0 0.0
    %8987 = vmatprep.subr.mxu0 0.0
    %8988 = vmatpush1.xpose.msra.mxu0 0.0
    %8989 = vmatprep.subr.mxu0 0.0
    %8990 = vmatpush1.xpose.msra.mxu0 0.0
    %8991 = vmatprep.subr.mxu0 0.0
    %8992 = vmatpush1.xpose.msra.mxu0 0.0
    %8993 = vmatprep.subr.mxu0 0.0
    %8994 = vmatpush1.xpose.msra.mxu0 0.0
    %8995 = vmatprep.subr.mxu0 0.0
    %8996 = vmatpush1.xpose.msra.mxu0 0.0
    %8997 = vmatprep.subr.mxu0 0.0
    %8998 = vmatpush1.xpose.msra.mxu0 0.0
    %8999 = vmatprep.subr.mxu0 0.0
    %9000 = vmatpush1.xpose.msra.mxu0 0.0
    %9001 = vmatprep.subr.mxu0 0.0
    %9002 = vmatpush1.xpose.msra.mxu0 0.0
    %9003 = vmatprep.subr.mxu0 0.0
    %9004 = vmatpush1.xpose.msra.mxu0 0.0
    %9005 = vmatprep.subr.mxu0 0.0
    %9006 = vmatpush1.xpose.msra.mxu0 0.0
    %9007 = vmatprep.subr.mxu0 0.0
    %9008 = vmatpush1.xpose.msra.mxu0 0.0
    %9009 = vmatprep.subr.mxu0 0.0
    %9010 = vmatpush1.xpose.msra.mxu0 0.0
    %9011 = vmatprep.subr.mxu0 0.0
    %9012 = vmatpush1.xpose.msra.mxu0 0.0
    %9013 = vmatprep.subr.mxu0 0.0
    %9014 = vmatpush1.xpose.msra.mxu0 0.0
    %9015 = vmatprep.mubr.f32.mxu0 0.0
    %v9016 = vand.u32 %v8793, 4294901760
    %v9017 = vsub.f32 %v8793, %v9016
    %9018 = vmatmul.mubr.f32.gmra.mrb[0].mxu0 %v9017
    %v9019 = vpop.f32.mrb[0].mxu0
    %v9020 = vadd.f32 %v8946, %v9019
    %v9021 = vpop.f32.mrb[0].mxu0
    %9022 = vdwg.mxu0
    %9023 = vmatprep.subr.mxu0 0.0
    %v9024 = vand.u32 %v8795, 4294901760
    %9025 = vmatpush1.xpose.msra.mxu0 %v9024
    %9026 = vmatprep.subr.mxu0 0.0
    %9027 = vmatpush1.xpose.msra.mxu0 0.0
    %9028 = vmatprep.subr.mxu0 0.0
    %9029 = vmatpush1.xpose.msra.mxu0 0.0
    %9030 = vmatprep.subr.mxu0 0.0
    %9031 = vmatpush1.xpose.msra.mxu0 0.0
    %9032 = vmatprep.subr.mxu0 0.0
    %9033 = vmatpush1.xpose.msra.mxu0 0.0
    %9034 = vmatprep.subr.mxu0 0.0
    %9035 = vmatpush1.xpose.msra.mxu0 0.0
    %9036 = vmatprep.subr.mxu0 0.0
    %9037 = vmatpush1.xpose.msra.mxu0 0.0
    %9038 = vmatprep.subr.mxu0 0.0
    %9039 = vmatpush1.xpose.msra.mxu0 0.0
    %9040 = vmatprep.subr.mxu0 0.0
    %9041 = vmatpush1.xpose.msra.mxu0 0.0
    %9042 = vmatprep.subr.mxu0 0.0
    %9043 = vmatpush1.xpose.msra.mxu0 0.0
    %9044 = vmatprep.subr.mxu0 0.0
    %9045 = vmatpush1.xpose.msra.mxu0 0.0
    %9046 = vmatprep.subr.mxu0 0.0
    %9047 = vmatpush1.xpose.msra.mxu0 0.0
    %9048 = vmatprep.subr.mxu0 0.0
    %9049 = vmatpush1.xpose.msra.mxu0 0.0
    %9050 = vmatprep.subr.mxu0 0.0
    %9051 = vmatpush1.xpose.msra.mxu0 0.0
    %9052 = vmatprep.subr.mxu0 0.0
    %9053 = vmatpush1.xpose.msra.mxu0 0.0
    %9054 = vmatprep.subr.mxu0 0.0
    %9055 = vmatpush1.xpose.msra.mxu0 0.0
    %9056 = vmatprep.subr.mxu0 0.0
    %9057 = vmatpush1.xpose.msra.mxu0 0.0
    %9058 = vmatprep.subr.mxu0 0.0
    %9059 = vmatpush1.xpose.msra.mxu0 0.0
    %9060 = vmatprep.subr.mxu0 0.0
    %9061 = vmatpush1.xpose.msra.mxu0 0.0
    %9062 = vmatprep.subr.mxu0 0.0
    %9063 = vmatpush1.xpose.msra.mxu0 0.0
    %9064 = vmatprep.subr.mxu0 0.0
    %9065 = vmatpush1.xpose.msra.mxu0 0.0
    %9066 = vmatprep.subr.mxu0 0.0
    %9067 = vmatpush1.xpose.msra.mxu0 0.0
    %9068 = vmatprep.subr.mxu0 0.0
    %9069 = vmatpush1.xpose.msra.mxu0 0.0
    %9070 = vmatprep.subr.mxu0 0.0
    %9071 = vmatpush1.xpose.msra.mxu0 0.0
    %9072 = vmatprep.subr.mxu0 0.0
    %9073 = vmatpush1.xpose.msra.mxu0 0.0
    %9074 = vmatprep.subr.mxu0 0.0
    %9075 = vmatpush1.xpose.msra.mxu0 0.0
    %9076 = vmatprep.subr.mxu0 0.0
    %9077 = vmatpush1.xpose.msra.mxu0 0.0
    %9078 = vmatprep.subr.mxu0 0.0
    %9079 = vmatpush1.xpose.msra.mxu0 0.0
    %9080 = vmatprep.subr.mxu0 0.0
    %9081 = vmatpush1.xpose.msra.mxu0 0.0
    %9082 = vmatprep.subr.mxu0 0.0
    %9083 = vmatpush1.xpose.msra.mxu0 0.0
    %9084 = vmatprep.subr.mxu0 0.0
    %9085 = vmatpush1.xpose.msra.mxu0 0.0
    %9086 = vmatprep.subr.mxu0 0.0
    %9087 = vmatpush1.xpose.msra.mxu0 0.0
    %9088 = vmatprep.mubr.f32.mxu0 0.0
    %v9089 = vand.u32 %v8793, 4294901760
    %v9090 = vsub.f32 %v8793, %v9089
    %v9091 = vand.u32 %v9090, 4294901760
    %9092 = vmatmul.mubr.f32.gmra.mrb[0].mxu0 %v9091
    %v9093 = vpop.f32.mrb[0].mxu0
    %v9094 = vadd.f32 %v9020, %v9093
    %v9095 = vpop.f32.mrb[0].mxu0
    %9096 = vdwg.mxu0
    %9097 = vmatprep.subr.mxu0 0.0
    %v9098 = vand.u32 %v8795, 4294901760
    %v9099 = vsub.f32 %v8795, %v9098
    %v9100 = vand.u32 %v9099, 4294901760
    %9101 = vmatpush1.xpose.msra.mxu0 %v9100
    %9102 = vmatprep.subr.mxu0 0.0
    %9103 = vmatpush1.xpose.msra.mxu0 0.0
    %9104 = vmatprep.subr.mxu0 0.0
    %9105 = vmatpush1.xpose.msra.mxu0 0.0
    %9106 = vmatprep.subr.mxu0 0.0
    %9107 = vmatpush1.xpose.msra.mxu0 0.0
    %9108 = vmatprep.subr.mxu0 0.0
    %9109 = vmatpush1.xpose.msra.mxu0 0.0
    %9110 = vmatprep.subr.mxu0 0.0
    %9111 = vmatpush1.xpose.msra.mxu0 0.0
    %9112 = vmatprep.subr.mxu0 0.0
    %9113 = vmatpush1.xpose.msra.mxu0 0.0
    %9114 = vmatprep.subr.mxu0 0.0
    %9115 = vmatpush1.xpose.msra.mxu0 0.0
    %9116 = vmatprep.subr.mxu0 0.0
    %9117 = vmatpush1.xpose.msra.mxu0 0.0
    %9118 = vmatprep.subr.mxu0 0.0
    %9119 = vmatpush1.xpose.msra.mxu0 0.0
    %9120 = vmatprep.subr.mxu0 0.0
    %9121 = vmatpush1.xpose.msra.mxu0 0.0
    %9122 = vmatprep.subr.mxu0 0.0
    %9123 = vmatpush1.xpose.msra.mxu0 0.0
    %9124 = vmatprep.subr.mxu0 0.0
    %9125 = vmatpush1.xpose.msra.mxu0 0.0
    %9126 = vmatprep.subr.mxu0 0.0
    %9127 = vmatpush1.xpose.msra.mxu0 0.0
    %9128 = vmatprep.subr.mxu0 0.0
    %9129 = vmatpush1.xpose.msra.mxu0 0.0
    %9130 = vmatprep.subr.mxu0 0.0
    %9131 = vmatpush1.xpose.msra.mxu0 0.0
    %9132 = vmatprep.subr.mxu0 0.0
    %9133 = vmatpush1.xpose.msra.mxu0 0.0
    %9134 = vmatprep.subr.mxu0 0.0
    %9135 = vmatpush1.xpose.msra.mxu0 0.0
    %9136 = vmatprep.subr.mxu0 0.0
    %9137 = vmatpush1.xpose.msra.mxu0 0.0
    %9138 = vmatprep.subr.mxu0 0.0
    %9139 = vmatpush1.xpose.msra.mxu0 0.0
    %9140 = vmatprep.subr.mxu0 0.0
    %9141 = vmatpush1.xpose.msra.mxu0 0.0
    %9142 = vmatprep.subr.mxu0 0.0
    %9143 = vmatpush1.xpose.msra.mxu0 0.0
    %9144 = vmatprep.subr.mxu0 0.0
    %9145 = vmatpush1.xpose.msra.mxu0 0.0
    %9146 = vmatprep.subr.mxu0 0.0
    %9147 = vmatpush1.xpose.msra.mxu0 0.0
    %9148 = vmatprep.subr.mxu0 0.0
    %9149 = vmatpush1.xpose.msra.mxu0 0.0
    %9150 = vmatprep.subr.mxu0 0.0
    %9151 = vmatpush1.xpose.msra.mxu0 0.0
    %9152 = vmatprep.subr.mxu0 0.0
    %9153 = vmatpush1.xpose.msra.mxu0 0.0
    %9154 = vmatprep.subr.mxu0 0.0
    %9155 = vmatpush1.xpose.msra.mxu0 0.0
    %9156 = vmatprep.subr.mxu0 0.0
    %9157 = vmatpush1.xpose.msra.mxu0 0.0
    %9158 = vmatprep.subr.mxu0 0.0
    %9159 = vmatpush1.xpose.msra.mxu0 0.0
    %9160 = vmatprep.subr.mxu0 0.0
    %9161 = vmatpush1.xpose.msra.mxu0 0.0
    %9162 = vmatprep.subr.mxu0 0.0
    %9163 = vmatpush1.xpose.msra.mxu0 0.0
    %9164 = vmatprep.mubr.f32.mxu0 0.0
    %v9165 = vand.u32 %v8793, 4294901760
    %9166 = vmatmul.mubr.f32.gmra.mrb[0].mxu0 %v9165
    %v9167 = vpop.f32.mrb[0].mxu0
    %v9168 = vadd.f32 %v9094, %v9167
    %v9169 = vpop.f32.mrb[0].mxu0
    %9170 = vdwg.mxu0
    %9171 = vmatprep.subr.mxu0 0.0
    %v9172 = vand.u32 %v8795, 4294901760
    %9173 = vmatpush1.xpose.msra.mxu0 %v9172
    %9174 = vmatprep.subr.mxu0 0.0
    %9175 = vmatpush1.xpose.msra.mxu0 0.0
    %9176 = vmatprep.subr.mxu0 0.0
    %9177 = vmatpush1.xpose.msra.mxu0 0.0
    %9178 = vmatprep.subr.mxu0 0.0
    %9179 = vmatpush1.xpose.msra.mxu0 0.0
    %9180 = vmatprep.subr.mxu0 0.0
    %9181 = vmatpush1.xpose.msra.mxu0 0.0
    %9182 = vmatprep.subr.mxu0 0.0
    %9183 = vmatpush1.xpose.msra.mxu0 0.0
    %9184 = vmatprep.subr.mxu0 0.0
    %9185 = vmatpush1.xpose.msra.mxu0 0.0
    %9186 = vmatprep.subr.mxu0 0.0
    %9187 = vmatpush1.xpose.msra.mxu0 0.0
    %9188 = vmatprep.subr.mxu0 0.0
    %9189 = vmatpush1.xpose.msra.mxu0 0.0
    %9190 = vmatprep.subr.mxu0 0.0
    %9191 = vmatpush1.xpose.msra.mxu0 0.0
    %9192 = vmatprep.subr.mxu0 0.0
    %9193 = vmatpush1.xpose.msra.mxu0 0.0
    %9194 = vmatprep.subr.mxu0 0.0
    %9195 = vmatpush1.xpose.msra.mxu0 0.0
    %9196 = vmatprep.subr.mxu0 0.0
    %9197 = vmatpush1.xpose.msra.mxu0 0.0
    %9198 = vmatprep.subr.mxu0 0.0
    %9199 = vmatpush1.xpose.msra.mxu0 0.0
    %9200 = vmatprep.subr.mxu0 0.0
    %9201 = vmatpush1.xpose.msra.mxu0 0.0
    %9202 = vmatprep.subr.mxu0 0.0
    %9203 = vmatpush1.xpose.msra.mxu0 0.0
    %9204 = vmatprep.subr.mxu0 0.0
    %9205 = vmatpush1.xpose.msra.mxu0 0.0
    %9206 = vmatprep.subr.mxu0 0.0
    %9207 = vmatpush1.xpose.msra.mxu0 0.0
    %9208 = vmatprep.subr.mxu0 0.0
    %9209 = vmatpush1.xpose.msra.mxu0 0.0
    %9210 = vmatprep.subr.mxu0 0.0
    %9211 = vmatpush1.xpose.msra.mxu0 0.0
    %9212 = vmatprep.subr.mxu0 0.0
    %9213 = vmatpush1.xpose.msra.mxu0 0.0
    %9214 = vmatprep.subr.mxu0 0.0
    %9215 = vmatpush1.xpose.msra.mxu0 0.0
    %9216 = vmatprep.subr.mxu0 0.0
    %9217 = vmatpush1.xpose.msra.mxu0 0.0
    %9218 = vmatprep.subr.mxu0 0.0
    %9219 = vmatpush1.xpose.msra.mxu0 0.0
    %9220 = vmatprep.subr.mxu0 0.0
    %9221 = vmatpush1.xpose.msra.mxu0 0.0
    %9222 = vmatprep.subr.mxu0 0.0
    %9223 = vmatpush1.xpose.msra.mxu0 0.0
    %9224 = vmatprep.subr.mxu0 0.0
    %9225 = vmatpush1.xpose.msra.mxu0 0.0
    %9226 = vmatprep.subr.mxu0 0.0
    %9227 = vmatpush1.xpose.msra.mxu0 0.0
    %9228 = vmatprep.subr.mxu0 0.0
    %9229 = vmatpush1.xpose.msra.mxu0 0.0
    %9230 = vmatprep.subr.mxu0 0.0
    %9231 = vmatpush1.xpose.msra.mxu0 0.0
    %9232 = vmatprep.subr.mxu0 0.0
    %9233 = vmatpush1.xpose.msra.mxu0 0.0
    %9234 = vmatprep.subr.mxu0 0.0
    %9235 = vmatpush1.xpose.msra.mxu0 0.0
    %9236 = vmatprep.mubr.f32.mxu0 0.0
    %v9237 = vand.u32 %v8793, 4294901760
    %9238 = vmatmul.mubr.f32.gmra.mrb[0].mxu0 %v9237
    %v9239 = vpop.f32.mrb[0].mxu0
    %v9240 = vadd.f32 %v9168, %v9239
    %v9241 = vpop.f32.mrb[0].mxu0
    %9242 = vdwg.mxu0
    %v9243 = vmul.f32 %v9240, 0.35355338
    %v9244 = vsel %vm1190, %v9243, -inf
    %9245 = vmax.xlane.f32.xlu0 %v9244
    %v9246 = vpop.xlane.xlu0 %9245
    %v9247 = vsub.f32 %v9243, %v9246
    %v9248 = vmul.f32 %v9247, 1.442695
    %v9249 = vpow.pop %v9248
    %v9250 = vsel %vm1190, %v9249, 0.0
    %9251 = vadd.xlane.f32.xlu0 %v9250
    %v9252 = vpop.xlane.xlu0 %9251
    %v9253 = vrcp.pop %v9252
    %v9254 = vmul.f32 %v9249, %v9253
    %9255 = vrot.lane.b32.xlu0 %v6033, 40
    %v9256 = vpop.permute.xlu0 %9255
    %v9259 = vsel %vm1190, %v9254, 0
    %9261 = vmatprep.subr.mxu0 0.0
    %v9262 = vand.u32 %v9256, 4294901760
    %9263 = vmatpush1.msra.mxu0 %v9262
    %9264 = vmatprep.subr.mxu0 0.0
    %9265 = vmatpush1.msra.mxu0 0.0
    %9266 = vmatprep.subr.mxu0 0.0
    %9267 = vmatpush1.msra.mxu0 0.0
    %9268 = vmatprep.subr.mxu0 0.0
    %9269 = vmatpush1.msra.mxu0 0.0
    %9270 = vmatprep.subr.mxu0 0.0
    %9271 = vmatpush1.msra.mxu0 0.0
    %9272 = vmatprep.subr.mxu0 0.0
    %9273 = vmatpush1.msra.mxu0 0.0
    %9274 = vmatprep.subr.mxu0 0.0
    %9275 = vmatpush1.msra.mxu0 0.0
    %9276 = vmatprep.subr.mxu0 0.0
    %9277 = vmatpush1.msra.mxu0 0.0
    %9278 = vmatprep.subr.mxu0 0.0
    %9279 = vmatpush1.msra.mxu0 0.0
    %9280 = vmatprep.subr.mxu0 0.0
    %9281 = vmatpush1.msra.mxu0 0.0
    %9282 = vmatprep.subr.mxu0 0.0
    %9283 = vmatpush1.msra.mxu0 0.0
    %9284 = vmatprep.subr.mxu0 0.0
    %9285 = vmatpush1.msra.mxu0 0.0
    %9286 = vmatprep.subr.mxu0 0.0
    %9287 = vmatpush1.msra.mxu0 0.0
    %9288 = vmatprep.subr.mxu0 0.0
    %9289 = vmatpush1.msra.mxu0 0.0
    %9290 = vmatprep.subr.mxu0 0.0
    %9291 = vmatpush1.msra.mxu0 0.0
    %9292 = vmatprep.subr.mxu0 0.0
    %9293 = vmatpush1.msra.mxu0 0.0
    %9294 = vmatprep.subr.mxu0 0.0
    %9295 = vmatpush1.msra.mxu0 0.0
    %9296 = vmatprep.subr.mxu0 0.0
    %9297 = vmatpush1.msra.mxu0 0.0
    %9298 = vmatprep.subr.mxu0 0.0
    %9299 = vmatpush1.msra.mxu0 0.0
    %9300 = vmatprep.subr.mxu0 0.0
    %9301 = vmatpush1.msra.mxu0 0.0
    %9302 = vmatprep.subr.mxu0 0.0
    %9303 = vmatpush1.msra.mxu0 0.0
    %9304 = vmatprep.subr.mxu0 0.0
    %9305 = vmatpush1.msra.mxu0 0.0
    %9306 = vmatprep.subr.mxu0 0.0
    %9307 = vmatpush1.msra.mxu0 0.0
    %9308 = vmatprep.subr.mxu0 0.0
    %9309 = vmatpush1.msra.mxu0 0.0
    %9310 = vmatprep.subr.mxu0 0.0
    %9311 = vmatpush1.msra.mxu0 0.0
    %9312 = vmatprep.subr.mxu0 0.0
    %9313 = vmatpush1.msra.mxu0 0.0
    %9314 = vmatprep.subr.mxu0 0.0
    %9315 = vmatpush1.msra.mxu0 0.0
    %9316 = vmatprep.subr.mxu0 0.0
    %9317 = vmatpush1.msra.mxu0 0.0
    %9318 = vmatprep.subr.mxu0 0.0
    %9319 = vmatpush1.msra.mxu0 0.0
    %9320 = vmatprep.subr.mxu0 0.0
    %9321 = vmatpush1.msra.mxu0 0.0
    %9322 = vmatprep.subr.mxu0 0.0
    %9323 = vmatpush1.msra.mxu0 0.0
    %9324 = vmatprep.subr.mxu0 0.0
    %9325 = vmatpush1.msra.mxu0 0.0
    %9326 = vmatprep.mubr.f32.mxu0 0.0
    %v9327 = vand.u32 %v9259, 4294901760
    %v9328 = vsub.f32 %v9259, %v9327
    %v9329 = vand.u32 %v9328, 4294901760
    %v9330 = vsub.f32 %v9328, %v9329
    %v9331 = vand.u32 %v9330, 4294901760
    %9332 = vmatmul.mubr.f32.gmra.mrb[0].mxu0 %v9331
    %v9333 = vpop.f32.mrb[0].mxu0
    %v9334 = vadd.f32 0.0, %v9333
    %v9335 = vpop.f32.mrb[0].mxu0
    %9336 = vdwg.mxu0
    %9337 = vmatprep.subr.mxu0 0.0
    %v9338 = vand.u32 %v9256, 4294901760
    %v9339 = vsub.f32 %v9256, %v9338
    %v9340 = vand.u32 %v9339, 4294901760
    %v9341 = vsub.f32 %v9339, %v9340
    %v9342 = vand.u32 %v9341, 4294901760
    %9343 = vmatpush1.msra.mxu0 %v9342
    %9344 = vmatprep.subr.mxu0 0.0
    %9345 = vmatpush1.msra.mxu0 0.0
    %9346 = vmatprep.subr.mxu0 0.0
    %9347 = vmatpush1.msra.mxu0 0.0
    %9348 = vmatprep.subr.mxu0 0.0
    %9349 = vmatpush1.msra.mxu0 0.0
    %9350 = vmatprep.subr.mxu0 0.0
    %9351 = vmatpush1.msra.mxu0 0.0
    %9352 = vmatprep.subr.mxu0 0.0
    %9353 = vmatpush1.msra.mxu0 0.0
    %9354 = vmatprep.subr.mxu0 0.0
    %9355 = vmatpush1.msra.mxu0 0.0
    %9356 = vmatprep.subr.mxu0 0.0
    %9357 = vmatpush1.msra.mxu0 0.0
    %9358 = vmatprep.subr.mxu0 0.0
    %9359 = vmatpush1.msra.mxu0 0.0
    %9360 = vmatprep.subr.mxu0 0.0
    %9361 = vmatpush1.msra.mxu0 0.0
    %9362 = vmatprep.subr.mxu0 0.0
    %9363 = vmatpush1.msra.mxu0 0.0
    %9364 = vmatprep.subr.mxu0 0.0
    %9365 = vmatpush1.msra.mxu0 0.0
    %9366 = vmatprep.subr.mxu0 0.0
    %9367 = vmatpush1.msra.mxu0 0.0
    %9368 = vmatprep.subr.mxu0 0.0
    %9369 = vmatpush1.msra.mxu0 0.0
    %9370 = vmatprep.subr.mxu0 0.0
    %9371 = vmatpush1.msra.mxu0 0.0
    %9372 = vmatprep.subr.mxu0 0.0
    %9373 = vmatpush1.msra.mxu0 0.0
    %9374 = vmatprep.subr.mxu0 0.0
    %9375 = vmatpush1.msra.mxu0 0.0
    %9376 = vmatprep.subr.mxu0 0.0
    %9377 = vmatpush1.msra.mxu0 0.0
    %9378 = vmatprep.subr.mxu0 0.0
    %9379 = vmatpush1.msra.mxu0 0.0
    %9380 = vmatprep.subr.mxu0 0.0
    %9381 = vmatpush1.msra.mxu0 0.0
    %9382 = vmatprep.subr.mxu0 0.0
    %9383 = vmatpush1.msra.mxu0 0.0
    %9384 = vmatprep.subr.mxu0 0.0
    %9385 = vmatpush1.msra.mxu0 0.0
    %9386 = vmatprep.subr.mxu0 0.0
    %9387 = vmatpush1.msra.mxu0 0.0
    %9388 = vmatprep.subr.mxu0 0.0
    %9389 = vmatpush1.msra.mxu0 0.0
    %9390 = vmatprep.subr.mxu0 0.0
    %9391 = vmatpush1.msra.mxu0 0.0
    %9392 = vmatprep.subr.mxu0 0.0
    %9393 = vmatpush1.msra.mxu0 0.0
    %9394 = vmatprep.subr.mxu0 0.0
    %9395 = vmatpush1.msra.mxu0 0.0
    %9396 = vmatprep.subr.mxu0 0.0
    %9397 = vmatpush1.msra.mxu0 0.0
    %9398 = vmatprep.subr.mxu0 0.0
    %9399 = vmatpush1.msra.mxu0 0.0
    %9400 = vmatprep.subr.mxu0 0.0
    %9401 = vmatpush1.msra.mxu0 0.0
    %9402 = vmatprep.subr.mxu0 0.0
    %9403 = vmatpush1.msra.mxu0 0.0
    %9404 = vmatprep.subr.mxu0 0.0
    %9405 = vmatpush1.msra.mxu0 0.0
    %9406 = vmatprep.mubr.f32.mxu0 0.0
    %v9407 = vand.u32 %v9259, 4294901760
    %9408 = vmatmul.mubr.f32.gmra.mrb[0].mxu0 %v9407
    %v9409 = vpop.f32.mrb[0].mxu0
    %v9410 = vadd.f32 %v9334, %v9409
    %v9411 = vpop.f32.mrb[0].mxu0
    %9412 = vdwg.mxu0
    %9413 = vmatprep.subr.mxu0 0.0
    %v9414 = vand.u32 %v9256, 4294901760
    %v9415 = vsub.f32 %v9256, %v9414
    %9416 = vmatpush1.msra.mxu0 %v9415
    %9417 = vmatprep.subr.mxu0 0.0
    %9418 = vmatpush1.msra.mxu0 0.0
    %9419 = vmatprep.subr.mxu0 0.0
    %9420 = vmatpush1.msra.mxu0 0.0
    %9421 = vmatprep.subr.mxu0 0.0
    %9422 = vmatpush1.msra.mxu0 0.0
    %9423 = vmatprep.subr.mxu0 0.0
    %9424 = vmatpush1.msra.mxu0 0.0
    %9425 = vmatprep.subr.mxu0 0.0
    %9426 = vmatpush1.msra.mxu0 0.0
    %9427 = vmatprep.subr.mxu0 0.0
    %9428 = vmatpush1.msra.mxu0 0.0
    %9429 = vmatprep.subr.mxu0 0.0
    %9430 = vmatpush1.msra.mxu0 0.0
    %9431 = vmatprep.subr.mxu0 0.0
    %9432 = vmatpush1.msra.mxu0 0.0
    %9433 = vmatprep.subr.mxu0 0.0
    %9434 = vmatpush1.msra.mxu0 0.0
    %9435 = vmatprep.subr.mxu0 0.0
    %9436 = vmatpush1.msra.mxu0 0.0
    %9437 = vmatprep.subr.mxu0 0.0
    %9438 = vmatpush1.msra.mxu0 0.0
    %9439 = vmatprep.subr.mxu0 0.0
    %9440 = vmatpush1.msra.mxu0 0.0
    %9441 = vmatprep.subr.mxu0 0.0
    %9442 = vmatpush1.msra.mxu0 0.0
    %9443 = vmatprep.subr.mxu0 0.0
    %9444 = vmatpush1.msra.mxu0 0.0
    %9445 = vmatprep.subr.mxu0 0.0
    %9446 = vmatpush1.msra.mxu0 0.0
    %9447 = vmatprep.subr.mxu0 0.0
    %9448 = vmatpush1.msra.mxu0 0.0
    %9449 = vmatprep.subr.mxu0 0.0
    %9450 = vmatpush1.msra.mxu0 0.0
    %9451 = vmatprep.subr.mxu0 0.0
    %9452 = vmatpush1.msra.mxu0 0.0
    %9453 = vmatprep.subr.mxu0 0.0
    %9454 = vmatpush1.msra.mxu0 0.0
    %9455 = vmatprep.subr.mxu0 0.0
    %9456 = vmatpush1.msra.mxu0 0.0
    %9457 = vmatprep.subr.mxu0 0.0
    %9458 = vmatpush1.msra.mxu0 0.0
    %9459 = vmatprep.subr.mxu0 0.0
    %9460 = vmatpush1.msra.mxu0 0.0
    %9461 = vmatprep.subr.mxu0 0.0
    %9462 = vmatpush1.msra.mxu0 0.0
    %9463 = vmatprep.subr.mxu0 0.0
    %9464 = vmatpush1.msra.mxu0 0.0
    %9465 = vmatprep.subr.mxu0 0.0
    %9466 = vmatpush1.msra.mxu0 0.0
    %9467 = vmatprep.subr.mxu0 0.0
    %9468 = vmatpush1.msra.mxu0 0.0
    %9469 = vmatprep.subr.mxu0 0.0
    %9470 = vmatpush1.msra.mxu0 0.0
    %9471 = vmatprep.subr.mxu0 0.0
    %9472 = vmatpush1.msra.mxu0 0.0
    %9473 = vmatprep.subr.mxu0 0.0
    %9474 = vmatpush1.msra.mxu0 0.0
    %9475 = vmatprep.subr.mxu0 0.0
    %9476 = vmatpush1.msra.mxu0 0.0
    %9477 = vmatprep.subr.mxu0 0.0
    %9478 = vmatpush1.msra.mxu0 0.0
    %9479 = vmatprep.mubr.f32.mxu0 0.0
    %v9480 = vand.u32 %v9259, 4294901760
    %v9481 = vsub.f32 %v9259, %v9480
    %9482 = vmatmul.mubr.f32.gmra.mrb[0].mxu0 %v9481
    %v9483 = vpop.f32.mrb[0].mxu0
    %v9484 = vadd.f32 %v9410, %v9483
    %v9485 = vpop.f32.mrb[0].mxu0
    %9486 = vdwg.mxu0
    %9487 = vmatprep.subr.mxu0 0.0
    %v9488 = vand.u32 %v9256, 4294901760
    %9489 = vmatpush1.msra.mxu0 %v9488
    %9490 = vmatprep.subr.mxu0 0.0
    %9491 = vmatpush1.msra.mxu0 0.0
    %9492 = vmatprep.subr.mxu0 0.0
    %9493 = vmatpush1.msra.mxu0 0.0
    %9494 = vmatprep.subr.mxu0 0.0
    %9495 = vmatpush1.msra.mxu0 0.0
    %9496 = vmatprep.subr.mxu0 0.0
    %9497 = vmatpush1.msra.mxu0 0.0
    %9498 = vmatprep.subr.mxu0 0.0
    %9499 = vmatpush1.msra.mxu0 0.0
    %9500 = vmatprep.subr.mxu0 0.0
    %9501 = vmatpush1.msra.mxu0 0.0
    %9502 = vmatprep.subr.mxu0 0.0
    %9503 = vmatpush1.msra.mxu0 0.0
    %9504 = vmatprep.subr.mxu0 0.0
    %9505 = vmatpush1.msra.mxu0 0.0
    %9506 = vmatprep.subr.mxu0 0.0
    %9507 = vmatpush1.msra.mxu0 0.0
    %9508 = vmatprep.subr.mxu0 0.0
    %9509 = vmatpush1.msra.mxu0 0.0
    %9510 = vmatprep.subr.mxu0 0.0
    %9511 = vmatpush1.msra.mxu0 0.0
    %9512 = vmatprep.subr.mxu0 0.0
    %9513 = vmatpush1.msra.mxu0 0.0
    %9514 = vmatprep.subr.mxu0 0.0
    %9515 = vmatpush1.msra.mxu0 0.0
    %9516 = vmatprep.subr.mxu0 0.0
    %9517 = vmatpush1.msra.mxu0 0.0
    %9518 = vmatprep.subr.mxu0 0.0
    %9519 = vmatpush1.msra.mxu0 0.0
    %9520 = vmatprep.subr.mxu0 0.0
    %9521 = vmatpush1.msra.mxu0 0.0
    %9522 = vmatprep.subr.mxu0 0.0
    %9523 = vmatpush1.msra.mxu0 0.0
    %9524 = vmatprep.subr.mxu0 0.0
    %9525 = vmatpush1.msra.mxu0 0.0
    %9526 = vmatprep.subr.mxu0 0.0
    %9527 = vmatpush1.msra.mxu0 0.0
    %9528 = vmatprep.subr.mxu0 0.0
    %9529 = vmatpush1.msra.mxu0 0.0
    %9530 = vmatprep.subr.mxu0 0.0
    %9531 = vmatpush1.msra.mxu0 0.0
    %9532 = vmatprep.subr.mxu0 0.0
    %9533 = vmatpush1.msra.mxu0 0.0
    %9534 = vmatprep.subr.mxu0 0.0
    %9535 = vmatpush1.msra.mxu0 0.0
    %9536 = vmatprep.subr.mxu0 0.0
    %9537 = vmatpush1.msra.mxu0 0.0
    %9538 = vmatprep.subr.mxu0 0.0
    %9539 = vmatpush1.msra.mxu0 0.0
    %9540 = vmatprep.subr.mxu0 0.0
    %9541 = vmatpush1.msra.mxu0 0.0
    %9542 = vmatprep.subr.mxu0 0.0
    %9543 = vmatpush1.msra.mxu0 0.0
    %9544 = vmatprep.subr.mxu0 0.0
    %9545 = vmatpush1.msra.mxu0 0.0
    %9546 = vmatprep.subr.mxu0 0.0
    %9547 = vmatpush1.msra.mxu0 0.0
    %9548 = vmatprep.subr.mxu0 0.0
    %9549 = vmatpush1.msra.mxu0 0.0
    %9550 = vmatprep.subr.mxu0 0.0
    %9551 = vmatpush1.msra.mxu0 0.0
    %9552 = vmatprep.mubr.f32.mxu0 0.0
    %v9553 = vand.u32 %v9259, 4294901760
    %v9554 = vsub.f32 %v9259, %v9553
    %v9555 = vand.u32 %v9554, 4294901760
    %9556 = vmatmul.mubr.f32.gmra.mrb[0].mxu0 %v9555
    %v9557 = vpop.f32.mrb[0].mxu0
    %v9558 = vadd.f32 %v9484, %v9557
    %v9559 = vpop.f32.mrb[0].mxu0
    %9560 = vdwg.mxu0
    %9561 = vmatprep.subr.mxu0 0.0
    %v9562 = vand.u32 %v9256, 4294901760
    %v9563 = vsub.f32 %v9256, %v9562
    %v9564 = vand.u32 %v9563, 4294901760
    %9565 = vmatpush1.msra.mxu0 %v9564
    %9566 = vmatprep.subr.mxu0 0.0
    %9567 = vmatpush1.msra.mxu0 0.0
    %9568 = vmatprep.subr.mxu0 0.0
    %9569 = vmatpush1.msra.mxu0 0.0
    %9570 = vmatprep.subr.mxu0 0.0
    %9571 = vmatpush1.msra.mxu0 0.0
    %9572 = vmatprep.subr.mxu0 0.0
    %9573 = vmatpush1.msra.mxu0 0.0
    %9574 = vmatprep.subr.mxu0 0.0
    %9575 = vmatpush1.msra.mxu0 0.0
    %9576 = vmatprep.subr.mxu0 0.0
    %9577 = vmatpush1.msra.mxu0 0.0
    %9578 = vmatprep.subr.mxu0 0.0
    %9579 = vmatpush1.msra.mxu0 0.0
    %9580 = vmatprep.subr.mxu0 0.0
    %9581 = vmatpush1.msra.mxu0 0.0
    %9582 = vmatprep.subr.mxu0 0.0
    %9583 = vmatpush1.msra.mxu0 0.0
    %9584 = vmatprep.subr.mxu0 0.0
    %9585 = vmatpush1.msra.mxu0 0.0
    %9586 = vmatprep.subr.mxu0 0.0
    %9587 = vmatpush1.msra.mxu0 0.0
    %9588 = vmatprep.subr.mxu0 0.0
    %9589 = vmatpush1.msra.mxu0 0.0
    %9590 = vmatprep.subr.mxu0 0.0
    %9591 = vmatpush1.msra.mxu0 0.0
    %9592 = vmatprep.subr.mxu0 0.0
    %9593 = vmatpush1.msra.mxu0 0.0
    %9594 = vmatprep.subr.mxu0 0.0
    %9595 = vmatpush1.msra.mxu0 0.0
    %9596 = vmatprep.subr.mxu0 0.0
    %9597 = vmatpush1.msra.mxu0 0.0
    %9598 = vmatprep.subr.mxu0 0.0
    %9599 = vmatpush1.msra.mxu0 0.0
    %9600 = vmatprep.subr.mxu0 0.0
    %9601 = vmatpush1.msra.mxu0 0.0
    %9602 = vmatprep.subr.mxu0 0.0
    %9603 = vmatpush1.msra.mxu0 0.0
    %9604 = vmatprep.subr.mxu0 0.0
    %9605 = vmatpush1.msra.mxu0 0.0
    %9606 = vmatprep.subr.mxu0 0.0
    %9607 = vmatpush1.msra.mxu0 0.0
    %9608 = vmatprep.subr.mxu0 0.0
    %9609 = vmatpush1.msra.mxu0 0.0
    %9610 = vmatprep.subr.mxu0 0.0
    %9611 = vmatpush1.msra.mxu0 0.0
    %9612 = vmatprep.subr.mxu0 0.0
    %9613 = vmatpush1.msra.mxu0 0.0
    %9614 = vmatprep.subr.mxu0 0.0
    %9615 = vmatpush1.msra.mxu0 0.0
    %9616 = vmatprep.subr.mxu0 0.0
    %9617 = vmatpush1.msra.mxu0 0.0
    %9618 = vmatprep.subr.mxu0 0.0
    %9619 = vmatpush1.msra.mxu0 0.0
    %9620 = vmatprep.subr.mxu0 0.0
    %9621 = vmatpush1.msra.mxu0 0.0
    %9622 = vmatprep.subr.mxu0 0.0
    %9623 = vmatpush1.msra.mxu0 0.0
    %9624 = vmatprep.subr.mxu0 0.0
    %9625 = vmatpush1.msra.mxu0 0.0
    %9626 = vmatprep.subr.mxu0 0.0
    %9627 = vmatpush1.msra.mxu0 0.0
    %9628 = vmatprep.mubr.f32.mxu0 0.0
    %v9629 = vand.u32 %v9259, 4294901760
    %9630 = vmatmul.mubr.f32.gmra.mrb[0].mxu0 %v9629
    %v9631 = vpop.f32.mrb[0].mxu0
    %v9632 = vadd.f32 %v9558, %v9631
    %v9633 = vpop.f32.mrb[0].mxu0
    %9634 = vdwg.mxu0
    %9635 = vmatprep.subr.mxu0 0.0
    %v9636 = vand.u32 %v9256, 4294901760
    %9637 = vmatpush1.msra.mxu0 %v9636
    %9638 = vmatprep.subr.mxu0 0.0
    %9639 = vmatpush1.msra.mxu0 0.0
    %9640 = vmatprep.subr.mxu0 0.0
    %9641 = vmatpush1.msra.mxu0 0.0
    %9642 = vmatprep.subr.mxu0 0.0
    %9643 = vmatpush1.msra.mxu0 0.0
    %9644 = vmatprep.subr.mxu0 0.0
    %9645 = vmatpush1.msra.mxu0 0.0
    %9646 = vmatprep.subr.mxu0 0.0
    %9647 = vmatpush1.msra.mxu0 0.0
    %9648 = vmatprep.subr.mxu0 0.0
    %9649 = vmatpush1.msra.mxu0 0.0
    %9650 = vmatprep.subr.mxu0 0.0
    %9651 = vmatpush1.msra.mxu0 0.0
    %9652 = vmatprep.subr.mxu0 0.0
    %9653 = vmatpush1.msra.mxu0 0.0
    %9654 = vmatprep.subr.mxu0 0.0
    %9655 = vmatpush1.msra.mxu0 0.0
    %9656 = vmatprep.subr.mxu0 0.0
    %9657 = vmatpush1.msra.mxu0 0.0
    %9658 = vmatprep.subr.mxu0 0.0
    %9659 = vmatpush1.msra.mxu0 0.0
    %9660 = vmatprep.subr.mxu0 0.0
    %9661 = vmatpush1.msra.mxu0 0.0
    %9662 = vmatprep.subr.mxu0 0.0
    %9663 = vmatpush1.msra.mxu0 0.0
    %9664 = vmatprep.subr.mxu0 0.0
    %9665 = vmatpush1.msra.mxu0 0.0
    %9666 = vmatprep.subr.mxu0 0.0
    %9667 = vmatpush1.msra.mxu0 0.0
    %9668 = vmatprep.subr.mxu0 0.0
    %9669 = vmatpush1.msra.mxu0 0.0
    %9670 = vmatprep.subr.mxu0 0.0
    %9671 = vmatpush1.msra.mxu0 0.0
    %9672 = vmatprep.subr.mxu0 0.0
    %9673 = vmatpush1.msra.mxu0 0.0
    %9674 = vmatprep.subr.mxu0 0.0
    %9675 = vmatpush1.msra.mxu0 0.0
    %9676 = vmatprep.subr.mxu0 0.0
    %9677 = vmatpush1.msra.mxu0 0.0
    %9678 = vmatprep.subr.mxu0 0.0
    %9679 = vmatpush1.msra.mxu0 0.0
    %9680 = vmatprep.subr.mxu0 0.0
    %9681 = vmatpush1.msra.mxu0 0.0
    %9682 = vmatprep.subr.mxu0 0.0
    %9683 = vmatpush1.msra.mxu0 0.0
    %9684 = vmatprep.subr.mxu0 0.0
    %9685 = vmatpush1.msra.mxu0 0.0
    %9686 = vmatprep.subr.mxu0 0.0
    %9687 = vmatpush1.msra.mxu0 0.0
    %9688 = vmatprep.subr.mxu0 0.0
    %9689 = vmatpush1.msra.mxu0 0.0
    %9690 = vmatprep.subr.mxu0 0.0
    %9691 = vmatpush1.msra.mxu0 0.0
    %9692 = vmatprep.subr.mxu0 0.0
    %9693 = vmatpush1.msra.mxu0 0.0
    %9694 = vmatprep.subr.mxu0 0.0
    %9695 = vmatpush1.msra.mxu0 0.0
    %9696 = vmatprep.subr.mxu0 0.0
    %9697 = vmatpush1.msra.mxu0 0.0
    %9698 = vmatprep.subr.mxu0 0.0
    %9699 = vmatpush1.msra.mxu0 0.0
    %9700 = vmatprep.mubr.f32.mxu0 0.0
    %v9701 = vand.u32 %v9259, 4294901760
    %9702 = vmatmul.mubr.f32.gmra.mrb[0].mxu0 %v9701
    %v9703 = vpop.f32.mrb[0].mxu0
    %v9704 = vadd.f32 %v9632, %v9703
    %v9705 = vpop.f32.mrb[0].mxu0
    %9706 = vdwg.mxu0
    %9708 = vrot.lane.b32.xlu0 %v7868, 8
    %v9709 = vpop.permute.xlu0 %9708
    %9712 = vrot.lane.b32.xlu0 %v8786, 16
    %v9713 = vpop.permute.xlu0 %9712
    %9716 = vrot.lane.b32.xlu0 %v9704, 24
    %v9717 = vpop.permute.xlu0 %9716
    %v9719 = vsel %vm1190, %v6950, %v9709
    %v9720 = vsel %vm4872, %v9719, %v9713
    %v9721 = vsel %vm4874, %v9720, %v9717
    %s9722 = scalar_lea.vmem %s5, 32
    %v9723 = vld [vmem:[%s9722] sm:$0xff]
    %v9724 = vld [vmem:[%s9722 + $0x8] sm:$0xff]
    %v9725 = vld [vmem:[%s9722 + $0x10] sm:$0xff]
    %v9726 = vld [vmem:[%s9722 + $0x18] sm:$0xff]
    %s9727 = scalar_lea.vmem %s6, 1
    %v9728 = vld [vmem:[%s9727] sm:$0x1]
    %v9730 = vlaneseq
    %v9731 = vshrl.u32 %v9730, 7
    %v9732 = vsub.s32 0, %v9731
    %v9733 = vrot.slane %v9728, %v9732
    %v9736 = vsel %vm39, %v9721, 0
    %v9739 = vsel %vm39, %v9723, 0
    %v9742 = vsel %vm39, %v9724, 0
    %v9745 = vsel %vm39, %v9725, 0
    %v9748 = vsel %vm39, %v9726, 0
    %9750 = vmatprep.subr.mxu0 0.0
    %v9751 = vand.u32 %v9739, 4294901760
    %9752 = vmatpush1.xpose.msra.mxu0 %v9751
    %9753 = vmatprep.subr.mxu0 0.0
    %v9754 = vand.u32 %v9742, 4294901760
    %9755 = vmatpush1.xpose.msra.mxu0 %v9754
    %9756 = vmatprep.subr.mxu0 0.0
    %v9757 = vand.u32 %v9745, 4294901760
    %9758 = vmatpush1.xpose.msra.mxu0 %v9757
    %9759 = vmatprep.subr.mxu0 0.0
    %v9760 = vand.u32 %v9748, 4294901760
    %9761 = vmatpush1.xpose.msra.mxu0 %v9760
    %9762 = vmatprep.subr.mxu0 0.0
    %9763 = vmatpush1.xpose.msra.mxu0 0.0
    %9764 = vmatprep.subr.mxu0 0.0
    %9765 = vmatpush1.xpose.msra.mxu0 0.0
    %9766 = vmatprep.subr.mxu0 0.0
    %9767 = vmatpush1.xpose.msra.mxu0 0.0
    %9768 = vmatprep.subr.mxu0 0.0
    %9769 = vmatpush1.xpose.msra.mxu0 0.0
    %9770 = vmatprep.subr.mxu0 0.0
    %9771 = vmatpush1.xpose.msra.mxu0 0.0
    %9772 = vmatprep.subr.mxu0 0.0
    %9773 = vmatpush1.xpose.msra.mxu0 0.0
    %9774 = vmatprep.subr.mxu0 0.0
    %9775 = vmatpush1.xpose.msra.mxu0 0.0
    %9776 = vmatprep.subr.mxu0 0.0
    %9777 = vmatpush1.xpose.msra.mxu0 0.0
    %9778 = vmatprep.subr.mxu0 0.0
    %9779 = vmatpush1.xpose.msra.mxu0 0.0
    %9780 = vmatprep.subr.mxu0 0.0
    %9781 = vmatpush1.xpose.msra.mxu0 0.0
    %9782 = vmatprep.subr.mxu0 0.0
    %9783 = vmatpush1.xpose.msra.mxu0 0.0
    %9784 = vmatprep.subr.mxu0 0.0
    %9785 = vmatpush1.xpose.msra.mxu0 0.0
    %9786 = vmatprep.subr.mxu0 0.0
    %9787 = vmatpush1.xpose.msra.mxu0 0.0
    %9788 = vmatprep.subr.mxu0 0.0
    %9789 = vmatpush1.xpose.msra.mxu0 0.0
    %9790 = vmatprep.subr.mxu0 0.0
    %9791 = vmatpush1.xpose.msra.mxu0 0.0
    %9792 = vmatprep.subr.mxu0 0.0
    %9793 = vmatpush1.xpose.msra.mxu0 0.0
    %9794 = vmatprep.subr.mxu0 0.0
    %9795 = vmatpush1.xpose.msra.mxu0 0.0
    %9796 = vmatprep.subr.mxu0 0.0
    %9797 = vmatpush1.xpose.msra.mxu0 0.0
    %9798 = vmatprep.subr.mxu0 0.0
    %9799 = vmatpush1.xpose.msra.mxu0 0.0
    %9800 = vmatprep.subr.mxu0 0.0
    %9801 = vmatpush1.xpose.msra.mxu0 0.0
    %9802 = vmatprep.subr.mxu0 0.0
    %9803 = vmatpush1.xpose.msra.mxu0 0.0
    %9804 = vmatprep.subr.mxu0 0.0
    %9805 = vmatpush1.xpose.msra.mxu0 0.0
    %9806 = vmatprep.subr.mxu0 0.0
    %9807 = vmatpush1.xpose.msra.mxu0 0.0
    %9808 = vmatprep.subr.mxu0 0.0
    %9809 = vmatpush1.xpose.msra.mxu0 0.0
    %9810 = vmatprep.subr.mxu0 0.0
    %9811 = vmatpush1.xpose.msra.mxu0 0.0
    %9812 = vmatprep.subr.mxu0 0.0
    %9813 = vmatpush1.xpose.msra.mxu0 0.0
    %9814 = vmatprep.subr.mxu0 0.0
    %9815 = vmatpush1.xpose.msra.mxu0 0.0
    %9816 = vmatprep.subr.mxu0 0.0
    %9817 = vmatpush1.xpose.msra.mxu0 0.0
    %9818 = vmatprep.mubr.f32.mxu0 0.0
    %v9819 = vand.u32 %v9736, 4294901760
    %v9820 = vsub.f32 %v9736, %v9819
    %v9821 = vand.u32 %v9820, 4294901760
    %v9822 = vsub.f32 %v9820, %v9821
    %v9823 = vand.u32 %v9822, 4294901760
    %9824 = vmatmul.mubr.f32.gmra.mrb[0].mxu0 %v9823
    %v9825 = vpop.f32.mrb[0].mxu0
    %v9826 = vadd.f32 %v9733, %v9825
    %v9827 = vpop.f32.mrb[0].mxu0
    %9828 = vdwg.mxu0
    %9829 = vmatprep.subr.mxu0 0.0
    %v9830 = vand.u32 %v9739, 4294901760
    %v9831 = vsub.f32 %v9739, %v9830
    %v9832 = vand.u32 %v9831, 4294901760
    %v9833 = vsub.f32 %v9831, %v9832
    %v9834 = vand.u32 %v9833, 4294901760
    %9835 = vmatpush1.xpose.msra.mxu0 %v9834
    %9836 = vmatprep.subr.mxu0 0.0
    %v9837 = vand.u32 %v9742, 4294901760
    %v9838 = vsub.f32 %v9742, %v9837
    %v9839 = vand.u32 %v9838, 4294901760
    %v9840 = vsub.f32 %v9838, %v9839
    %v9841 = vand.u32 %v9840, 4294901760
    %9842 = vmatpush1.xpose.msra.mxu0 %v9841
    %9843 = vmatprep.subr.mxu0 0.0
    %v9844 = vand.u32 %v9745, 4294901760
    %v9845 = vsub.f32 %v9745, %v9844
    %v9846 = vand.u32 %v9845, 4294901760
    %v9847 = vsub.f32 %v9845, %v9846
    %v9848 = vand.u32 %v9847, 4294901760
    %9849 = vmatpush1.xpose.msra.mxu0 %v9848
    %9850 = vmatprep.subr.mxu0 0.0
    %v9851 = vand.u32 %v9748, 4294901760
    %v9852 = vsub.f32 %v9748, %v9851
    %v9853 = vand.u32 %v9852, 4294901760
    %v9854 = vsub.f32 %v9852, %v9853
    %v9855 = vand.u32 %v9854, 4294901760
    %9856 = vmatpush1.xpose.msra.mxu0 %v9855
    %9857 = vmatprep.subr.mxu0 0.0
    %9858 = vmatpush1.xpose.msra.mxu0 0.0
    %9859 = vmatprep.subr.mxu0 0.0
    %9860 = vmatpush1.xpose.msra.mxu0 0.0
    %9861 = vmatprep.subr.mxu0 0.0
    %9862 = vmatpush1.xpose.msra.mxu0 0.0
    %9863 = vmatprep.subr.mxu0 0.0
    %9864 = vmatpush1.xpose.msra.mxu0 0.0
    %9865 = vmatprep.subr.mxu0 0.0
    %9866 = vmatpush1.xpose.msra.mxu0 0.0
    %9867 = vmatprep.subr.mxu0 0.0
    %9868 = vmatpush1.xpose.msra.mxu0 0.0
    %9869 = vmatprep.subr.mxu0 0.0
    %9870 = vmatpush1.xpose.msra.mxu0 0.0
    %9871 = vmatprep.subr.mxu0 0.0
    %9872 = vmatpush1.xpose.msra.mxu0 0.0
    %9873 = vmatprep.subr.mxu0 0.0
    %9874 = vmatpush1.xpose.msra.mxu0 0.0
    %9875 = vmatprep.subr.mxu0 0.0
    %9876 = vmatpush1.xpose.msra.mxu0 0.0
    %9877 = vmatprep.subr.mxu0 0.0
    %9878 = vmatpush1.xpose.msra.mxu0 0.0
    %9879 = vmatprep.subr.mxu0 0.0
    %9880 = vmatpush1.xpose.msra.mxu0 0.0
    %9881 = vmatprep.subr.mxu0 0.0
    %9882 = vmatpush1.xpose.msra.mxu0 0.0
    %9883 = vmatprep.subr.mxu0 0.0
    %9884 = vmatpush1.xpose.msra.mxu0 0.0
    %9885 = vmatprep.subr.mxu0 0.0
    %9886 = vmatpush1.xpose.msra.mxu0 0.0
    %9887 = vmatprep.subr.mxu0 0.0
    %9888 = vmatpush1.xpose.msra.mxu0 0.0
    %9889 = vmatprep.subr.mxu0 0.0
    %9890 = vmatpush1.xpose.msra.mxu0 0.0
    %9891 = vmatprep.subr.mxu0 0.0
    %9892 = vmatpush1.xpose.msra.mxu0 0.0
    %9893 = vmatprep.subr.mxu0 0.0
    %9894 = vmatpush1.xpose.msra.mxu0 0.0
    %9895 = vmatprep.subr.mxu0 0.0
    %9896 = vmatpush1.xpose.msra.mxu0 0.0
    %9897 = vmatprep.subr.mxu0 0.0
    %9898 = vmatpush1.xpose.msra.mxu0 0.0
    %9899 = vmatprep.subr.mxu0 0.0
    %9900 = vmatpush1.xpose.msra.mxu0 0.0
    %9901 = vmatprep.subr.mxu0 0.0
    %9902 = vmatpush1.xpose.msra.mxu0 0.0
    %9903 = vmatprep.subr.mxu0 0.0
    %9904 = vmatpush1.xpose.msra.mxu0 0.0
    %9905 = vmatprep.subr.mxu0 0.0
    %9906 = vmatpush1.xpose.msra.mxu0 0.0
    %9907 = vmatprep.subr.mxu0 0.0
    %9908 = vmatpush1.xpose.msra.mxu0 0.0
    %9909 = vmatprep.subr.mxu0 0.0
    %9910 = vmatpush1.xpose.msra.mxu0 0.0
    %9911 = vmatprep.subr.mxu0 0.0
    %9912 = vmatpush1.xpose.msra.mxu0 0.0
    %9913 = vmatprep.mubr.f32.mxu0 0.0
    %v9914 = vand.u32 %v9736, 4294901760
    %9915 = vmatmul.mubr.f32.gmra.mrb[0].mxu0 %v9914
    %v9916 = vpop.f32.mrb[0].mxu0
    %v9917 = vadd.f32 %v9826, %v9916
    %v9918 = vpop.f32.mrb[0].mxu0
    %9919 = vdwg.mxu0
    %9920 = vmatprep.subr.mxu0 0.0
    %v9921 = vand.u32 %v9739, 4294901760
    %v9922 = vsub.f32 %v9739, %v9921
    %9923 = vmatpush1.xpose.msra.mxu0 %v9922
    %9924 = vmatprep.subr.mxu0 0.0
    %v9925 = vand.u32 %v9742, 4294901760
    %v9926 = vsub.f32 %v9742, %v9925
    %9927 = vmatpush1.xpose.msra.mxu0 %v9926
    %9928 = vmatprep.subr.mxu0 0.0
    %v9929 = vand.u32 %v9745, 4294901760
    %v9930 = vsub.f32 %v9745, %v9929
    %9931 = vmatpush1.xpose.msra.mxu0 %v9930
    %9932 = vmatprep.subr.mxu0 0.0
    %v9933 = vand.u32 %v9748, 4294901760
    %v9934 = vsub.f32 %v9748, %v9933
    %9935 = vmatpush1.xpose.msra.mxu0 %v9934
    %9936 = vmatprep.subr.mxu0 0.0
    %9937 = vmatpush1.xpose.msra.mxu0 0.0
    %9938 = vmatprep.subr.mxu0 0.0
    %9939 = vmatpush1.xpose.msra.mxu0 0.0
    %9940 = vmatprep.subr.mxu0 0.0
    %9941 = vmatpush1.xpose.msra.mxu0 0.0
    %9942 = vmatprep.subr.mxu0 0.0
    %9943 = vmatpush1.xpose.msra.mxu0 0.0
    %9944 = vmatprep.subr.mxu0 0.0
    %9945 = vmatpush1.xpose.msra.mxu0 0.0
    %9946 = vmatprep.subr.mxu0 0.0
    %9947 = vmatpush1.xpose.msra.mxu0 0.0
    %9948 = vmatprep.subr.mxu0 0.0
    %9949 = vmatpush1.xpose.msra.mxu0 0.0
    %9950 = vmatprep.subr.mxu0 0.0
    %9951 = vmatpush1.xpose.msra.mxu0 0.0
    %9952 = vmatprep.subr.mxu0 0.0
    %9953 = vmatpush1.xpose.msra.mxu0 0.0
    %9954 = vmatprep.subr.mxu0 0.0
    %9955 = vmatpush1.xpose.msra.mxu0 0.0
    %9956 = vmatprep.subr.mxu0 0.0
    %9957 = vmatpush1.xpose.msra.mxu0 0.0
    %9958 = vmatprep.subr.mxu0 0.0
    %9959 = vmatpush1.xpose.msra.mxu0 0.0
    %9960 = vmatprep.subr.mxu0 0.0
    %9961 = vmatpush1.xpose.msra.mxu0 0.0
    %9962 = vmatprep.subr.mxu0 0.0
    %9963 = vmatpush1.xpose.msra.mxu0 0.0
    %9964 = vmatprep.subr.mxu0 0.0
    %9965 = vmatpush1.xpose.msra.mxu0 0.0
    %9966 = vmatprep.subr.mxu0 0.0
    %9967 = vmatpush1.xpose.msra.mxu0 0.0
    %9968 = vmatprep.subr.mxu0 0.0
    %9969 = vmatpush1.xpose.msra.mxu0 0.0
    %9970 = vmatprep.subr.mxu0 0.0
    %9971 = vmatpush1.xpose.msra.mxu0 0.0
    %9972 = vmatprep.subr.mxu0 0.0
    %9973 = vmatpush1.xpose.msra.mxu0 0.0
    %9974 = vmatprep.subr.mxu0 0.0
    %9975 = vmatpush1.xpose.msra.mxu0 0.0
    %9976 = vmatprep.subr.mxu0 0.0
    %9977 = vmatpush1.xpose.msra.mxu0 0.0
    %9978 = vmatprep.subr.mxu0 0.0
    %9979 = vmatpush1.xpose.msra.mxu0 0.0
    %9980 = vmatprep.subr.mxu0 0.0
    %9981 = vmatpush1.xpose.msra.mxu0 0.0
    %9982 = vmatprep.subr.mxu0 0.0
    %9983 = vmatpush1.xpose.msra.mxu0 0.0
    %9984 = vmatprep.subr.mxu0 0.0
    %9985 = vmatpush1.xpose.msra.mxu0 0.0
    %9986 = vmatprep.subr.mxu0 0.0
    %9987 = vmatpush1.xpose.msra.mxu0 0.0
    %9988 = vmatprep.subr.mxu0 0.0
    %9989 = vmatpush1.xpose.msra.mxu0 0.0
    %9990 = vmatprep.subr.mxu0 0.0
    %9991 = vmatpush1.xpose.msra.mxu0 0.0
    %9992 = vmatprep.mubr.f32.mxu0 0.0
    %v9993 = vand.u32 %v9736, 4294901760
    %v9994 = vsub.f32 %v9736, %v9993
    %9995 = vmatmul.mubr.f32.gmra.mrb[0].mxu0 %v9994
    %v9996 = vpop.f32.mrb[0].mxu0
    %v9997 = vadd.f32 %v9917, %v9996
    %v9998 = vpop.f32.mrb[0].mxu0
    %9999 = vdwg.mxu0
    %10000 = vmatprep.subr.mxu0 0.0
    %v10001 = vand.u32 %v9739, 4294901760
    %10002 = vmatpush1.xpose.msra.mxu0 %v10001
    %10003 = vmatprep.subr.mxu0 0.0
    %v10004 = vand.u32 %v9742, 4294901760
    %10005 = vmatpush1.xpose.msra.mxu0 %v10004
    %10006 = vmatprep.subr.mxu0 0.0
    %v10007 = vand.u32 %v9745, 4294901760
    %10008 = vmatpush1.xpose.msra.mxu0 %v10007
    %10009 = vmatprep.subr.mxu0 0.0
    %v10010 = vand.u32 %v9748, 4294901760
    %10011 = vmatpush1.xpose.msra.mxu0 %v10010
    %10012 = vmatprep.subr.mxu0 0.0
    %10013 = vmatpush1.xpose.msra.mxu0 0.0
    %10014 = vmatprep.subr.mxu0 0.0
    %10015 = vmatpush1.xpose.msra.mxu0 0.0
    %10016 = vmatprep.subr.mxu0 0.0
    %10017 = vmatpush1.xpose.msra.mxu0 0.0
    %10018 = vmatprep.subr.mxu0 0.0
    %10019 = vmatpush1.xpose.msra.mxu0 0.0
    %10020 = vmatprep.subr.mxu0 0.0
    %10021 = vmatpush1.xpose.msra.mxu0 0.0
    %10022 = vmatprep.subr.mxu0 0.0
    %10023 = vmatpush1.xpose.msra.mxu0 0.0
    %10024 = vmatprep.subr.mxu0 0.0
    %10025 = vmatpush1.xpose.msra.mxu0 0.0
    %10026 = vmatprep.subr.mxu0 0.0
    %10027 = vmatpush1.xpose.msra.mxu0 0.0
    %10028 = vmatprep.subr.mxu0 0.0
    %10029 = vmatpush1.xpose.msra.mxu0 0.0
    %10030 = vmatprep.subr.mxu0 0.0
    %10031 = vmatpush1.xpose.msra.mxu0 0.0
    %10032 = vmatprep.subr.mxu0 0.0
    %10033 = vmatpush1.xpose.msra.mxu0 0.0
    %10034 = vmatprep.subr.mxu0 0.0
    %10035 = vmatpush1.xpose.msra.mxu0 0.0
    %10036 = vmatprep.subr.mxu0 0.0
    %10037 = vmatpush1.xpose.msra.mxu0 0.0
    %10038 = vmatprep.subr.mxu0 0.0
    %10039 = vmatpush1.xpose.msra.mxu0 0.0
    %10040 = vmatprep.subr.mxu0 0.0
    %10041 = vmatpush1.xpose.msra.mxu0 0.0
    %10042 = vmatprep.subr.mxu0 0.0
    %10043 = vmatpush1.xpose.msra.mxu0 0.0
    %10044 = vmatprep.subr.mxu0 0.0
    %10045 = vmatpush1.xpose.msra.mxu0 0.0
    %10046 = vmatprep.subr.mxu0 0.0
    %10047 = vmatpush1.xpose.msra.mxu0 0.0
    %10048 = vmatprep.subr.mxu0 0.0
    %10049 = vmatpush1.xpose.msra.mxu0 0.0
    %10050 = vmatprep.subr.mxu0 0.0
    %10051 = vmatpush1.xpose.msra.mxu0 0.0
    %10052 = vmatprep.subr.mxu0 0.0
    %10053 = vmatpush1.xpose.msra.mxu0 0.0
    %10054 = vmatprep.subr.mxu0 0.0
    %10055 = vmatpush1.xpose.msra.mxu0 0.0
    %10056 = vmatprep.subr.mxu0 0.0
    %10057 = vmatpush1.xpose.msra.mxu0 0.0
    %10058 = vmatprep.subr.mxu0 0.0
    %10059 = vmatpush1.xpose.msra.mxu0 0.0
    %10060 = vmatprep.subr.mxu0 0.0
    %10061 = vmatpush1.xpose.msra.mxu0 0.0
    %10062 = vmatprep.subr.mxu0 0.0
    %10063 = vmatpush1.xpose.msra.mxu0 0.0
    %10064 = vmatprep.subr.mxu0 0.0
    %10065 = vmatpush1.xpose.msra.mxu0 0.0
    %10066 = vmatprep.subr.mxu0 0.0
    %10067 = vmatpush1.xpose.msra.mxu0 0.0
    %10068 = vmatprep.mubr.f32.mxu0 0.0
    %v10069 = vand.u32 %v9736, 4294901760
    %v10070 = vsub.f32 %v9736, %v10069
    %v10071 = vand.u32 %v10070, 4294901760
    %10072 = vmatmul.mubr.f32.gmra.mrb[0].mxu0 %v10071
    %v10073 = vpop.f32.mrb[0].mxu0
    %v10074 = vadd.f32 %v9997, %v10073
    %v10075 = vpop.f32.mrb[0].mxu0
    %10076 = vdwg.mxu0
    %10077 = vmatprep.subr.mxu0 0.0
    %v10078 = vand.u32 %v9739, 4294901760
    %v10079 = vsub.f32 %v9739, %v10078
    %v10080 = vand.u32 %v10079, 4294901760
    %10081 = vmatpush1.xpose.msra.mxu0 %v10080
    %10082 = vmatprep.subr.mxu0 0.0
    %v10083 = vand.u32 %v9742, 4294901760
    %v10084 = vsub.f32 %v9742, %v10083
    %v10085 = vand.u32 %v10084, 4294901760
    %10086 = vmatpush1.xpose.msra.mxu0 %v10085
    %10087 = vmatprep.subr.mxu0 0.0
    %v10088 = vand.u32 %v9745, 4294901760
    %v10089 = vsub.f32 %v9745, %v10088
    %v10090 = vand.u32 %v10089, 4294901760
    %10091 = vmatpush1.xpose.msra.mxu0 %v10090
    %10092 = vmatprep.subr.mxu0 0.0
    %v10093 = vand.u32 %v9748, 4294901760
    %v10094 = vsub.f32 %v9748, %v10093
    %v10095 = vand.u32 %v10094, 4294901760
    %10096 = vmatpush1.xpose.msra.mxu0 %v10095
    %10097 = vmatprep.subr.mxu0 0.0
    %10098 = vmatpush1.xpose.msra.mxu0 0.0
    %10099 = vmatprep.subr.mxu0 0.0
    %10100 = vmatpush1.xpose.msra.mxu0 0.0
    %10101 = vmatprep.subr.mxu0 0.0
    %10102 = vmatpush1.xpose.msra.mxu0 0.0
    %10103 = vmatprep.subr.mxu0 0.0
    %10104 = vmatpush1.xpose.msra.mxu0 0.0
    %10105 = vmatprep.subr.mxu0 0.0
    %10106 = vmatpush1.xpose.msra.mxu0 0.0
    %10107 = vmatprep.subr.mxu0 0.0
    %10108 = vmatpush1.xpose.msra.mxu0 0.0
    %10109 = vmatprep.subr.mxu0 0.0
    %10110 = vmatpush1.xpose.msra.mxu0 0.0
    %10111 = vmatprep.subr.mxu0 0.0
    %10112 = vmatpush1.xpose.msra.mxu0 0.0
    %10113 = vmatprep.subr.mxu0 0.0
    %10114 = vmatpush1.xpose.msra.mxu0 0.0
    %10115 = vmatprep.subr.mxu0 0.0
    %10116 = vmatpush1.xpose.msra.mxu0 0.0
    %10117 = vmatprep.subr.mxu0 0.0
    %10118 = vmatpush1.xpose.msra.mxu0 0.0
    %10119 = vmatprep.subr.mxu0 0.0
    %10120 = vmatpush1.xpose.msra.mxu0 0.0
    %10121 = vmatprep.subr.mxu0 0.0
    %10122 = vmatpush1.xpose.msra.mxu0 0.0
    %10123 = vmatprep.subr.mxu0 0.0
    %10124 = vmatpush1.xpose.msra.mxu0 0.0
    %10125 = vmatprep.subr.mxu0 0.0
    %10126 = vmatpush1.xpose.msra.mxu0 0.0
    %10127 = vmatprep.subr.mxu0 0.0
    %10128 = vmatpush1.xpose.msra.mxu0 0.0
    %10129 = vmatprep.subr.mxu0 0.0
    %10130 = vmatpush1.xpose.msra.mxu0 0.0
    %10131 = vmatprep.subr.mxu0 0.0
    %10132 = vmatpush1.xpose.msra.mxu0 0.0
    %10133 = vmatprep.subr.mxu0 0.0
    %10134 = vmatpush1.xpose.msra.mxu0 0.0
    %10135 = vmatprep.subr.mxu0 0.0
    %10136 = vmatpush1.xpose.msra.mxu0 0.0
    %10137 = vmatprep.subr.mxu0 0.0
    %10138 = vmatpush1.xpose.msra.mxu0 0.0
    %10139 = vmatprep.subr.mxu0 0.0
    %10140 = vmatpush1.xpose.msra.mxu0 0.0
    %10141 = vmatprep.subr.mxu0 0.0
    %10142 = vmatpush1.xpose.msra.mxu0 0.0
    %10143 = vmatprep.subr.mxu0 0.0
    %10144 = vmatpush1.xpose.msra.mxu0 0.0
    %10145 = vmatprep.subr.mxu0 0.0
    %10146 = vmatpush1.xpose.msra.mxu0 0.0
    %10147 = vmatprep.subr.mxu0 0.0
    %10148 = vmatpush1.xpose.msra.mxu0 0.0
    %10149 = vmatprep.subr.mxu0 0.0
    %10150 = vmatpush1.xpose.msra.mxu0 0.0
    %10151 = vmatprep.subr.mxu0 0.0
    %10152 = vmatpush1.xpose.msra.mxu0 0.0
    %10153 = vmatprep.mubr.f32.mxu0 0.0
    %v10154 = vand.u32 %v9736, 4294901760
    %10155 = vmatmul.mubr.f32.gmra.mrb[0].mxu0 %v10154
    %v10156 = vpop.f32.mrb[0].mxu0
    %v10157 = vadd.f32 %v10074, %v10156
    %v10158 = vpop.f32.mrb[0].mxu0
    %10159 = vdwg.mxu0
    %10160 = vmatprep.subr.mxu0 0.0
    %v10161 = vand.u32 %v9739, 4294901760
    %10162 = vmatpush1.xpose.msra.mxu0 %v10161
    %10163 = vmatprep.subr.mxu0 0.0
    %v10164 = vand.u32 %v9742, 4294901760
    %10165 = vmatpush1.xpose.msra.mxu0 %v10164
    %10166 = vmatprep.subr.mxu0 0.0
    %v10167 = vand.u32 %v9745, 4294901760
    %10168 = vmatpush1.xpose.msra.mxu0 %v10167
    %10169 = vmatprep.subr.mxu0 0.0
    %v10170 = vand.u32 %v9748, 4294901760
    %10171 = vmatpush1.xpose.msra.mxu0 %v10170
    %10172 = vmatprep.subr.mxu0 0.0
    %10173 = vmatpush1.xpose.msra.mxu0 0.0
    %10174 = vmatprep.subr.mxu0 0.0
    %10175 = vmatpush1.xpose.msra.mxu0 0.0
    %10176 = vmatprep.subr.mxu0 0.0
    %10177 = vmatpush1.xpose.msra.mxu0 0.0
    %10178 = vmatprep.subr.mxu0 0.0
    %10179 = vmatpush1.xpose.msra.mxu0 0.0
    %10180 = vmatprep.subr.mxu0 0.0
    %10181 = vmatpush1.xpose.msra.mxu0 0.0
    %10182 = vmatprep.subr.mxu0 0.0
    %10183 = vmatpush1.xpose.msra.mxu0 0.0
    %10184 = vmatprep.subr.mxu0 0.0
    %10185 = vmatpush1.xpose.msra.mxu0 0.0
    %10186 = vmatprep.subr.mxu0 0.0
    %10187 = vmatpush1.xpose.msra.mxu0 0.0
    %10188 = vmatprep.subr.mxu0 0.0
    %10189 = vmatpush1.xpose.msra.mxu0 0.0
    %10190 = vmatprep.subr.mxu0 0.0
    %10191 = vmatpush1.xpose.msra.mxu0 0.0
    %10192 = vmatprep.subr.mxu0 0.0
    %10193 = vmatpush1.xpose.msra.mxu0 0.0
    %10194 = vmatprep.subr.mxu0 0.0
    %10195 = vmatpush1.xpose.msra.mxu0 0.0
    %10196 = vmatprep.subr.mxu0 0.0
    %10197 = vmatpush1.xpose.msra.mxu0 0.0
    %10198 = vmatprep.subr.mxu0 0.0
    %10199 = vmatpush1.xpose.msra.mxu0 0.0
    %10200 = vmatprep.subr.mxu0 0.0
    %10201 = vmatpush1.xpose.msra.mxu0 0.0
    %10202 = vmatprep.subr.mxu0 0.0
    %10203 = vmatpush1.xpose.msra.mxu0 0.0
    %10204 = vmatprep.subr.mxu0 0.0
    %10205 = vmatpush1.xpose.msra.mxu0 0.0
    %10206 = vmatprep.subr.mxu0 0.0
    %10207 = vmatpush1.xpose.msra.mxu0 0.0
    %10208 = vmatprep.subr.mxu0 0.0
    %10209 = vmatpush1.xpose.msra.mxu0 0.0
    %10210 = vmatprep.subr.mxu0 0.0
    %10211 = vmatpush1.xpose.msra.mxu0 0.0
    %10212 = vmatprep.subr.mxu0 0.0
    %10213 = vmatpush1.xpose.msra.mxu0 0.0
    %10214 = vmatprep.subr.mxu0 0.0
    %10215 = vmatpush1.xpose.msra.mxu0 0.0
    %10216 = vmatprep.subr.mxu0 0.0
    %10217 = vmatpush1.xpose.msra.mxu0 0.0
    %10218 = vmatprep.subr.mxu0 0.0
    %10219 = vmatpush1.xpose.msra.mxu0 0.0
    %10220 = vmatprep.subr.mxu0 0.0
    %10221 = vmatpush1.xpose.msra.mxu0 0.0
    %10222 = vmatprep.subr.mxu0 0.0
    %10223 = vmatpush1.xpose.msra.mxu0 0.0
    %10224 = vmatprep.subr.mxu0 0.0
    %10225 = vmatpush1.xpose.msra.mxu0 0.0
    %10226 = vmatprep.subr.mxu0 0.0
    %10227 = vmatpush1.xpose.msra.mxu0 0.0
    %10228 = vmatprep.mubr.f32.mxu0 0.0
    %v10229 = vand.u32 %v9736, 4294901760
    %10230 = vmatmul.mubr.f32.gmra.mrb[0].mxu0 %v10229
    %v10231 = vpop.f32.mrb[0].mxu0
    %v10232 = vadd.f32 %v10157, %v10231
    %v10233 = vpop.f32.mrb[0].mxu0
    %10234 = vdwg.mxu0
    %v10235 = vsel %vm39, %v10232, 0.0
    %v10236 = vrot.slane %v10235, 4
    %v10237 = vadd.f32 %v10235, %v10236
    %v10238 = vrot.slane %v10237, 2
    %v10239 = vadd.f32 %v10237, %v10238
    %v10240 = vrot.slane %v10239, 1
    %v10241 = vadd.f32 %v10239, %v10240
    %v10242 = vrcp.pop 8.0
    %v10243 = vmul.f32 %v10241, %v10242
    %vm10244 = vcmask 253952
    %10245 = vst.msk [vmem:[#allocation2] sm:$0x1] %vm10244, %v10243
    // Predicated region
    $region30: #{tpu_custom_call.1} parent=1 // pred_check
      _
    $region31: #{tpu_custom_call.1} parent=1 // pred_check_branch
      %10247 = sbr.rel (0) target = $region33
    $region32: #{tpu_custom_call.1} parent=1 // pred_region
      %s10249 = ssub.s32 16, 16
      %10250 = vsyncadd [#allocation3], %s10249
      %s10252 = sshll.u32 [#allocation2], 4
      %s10253 = int_to_ptr.vmem [resolvable:$true] %s10252
      %10255 = dma.vmem_to_hbm [thread:$0]  %s10253, 16, %s7, [#allocation3]
    $region33: #{tpu_custom_call.1} parent=1 // pred_fallthru
      _
    // Predicated region
    $region34: #{tpu_custom_call.1} parent=1 // pred_check
      _
    $region35: #{tpu_custom_call.1} parent=1 // pred_check_branch
      %10257 = sbr.rel (0) target = $region37
    $region36: #{tpu_custom_call.1} parent=1 // pred_region
      %10258 = dma.done [#allocation3], 16
    $region37: #{tpu_custom_call.1} parent=1 // pred_fallthru
      _
    %10259 = vsyncpa [#allocation3], 1

</llo_original>
